<compile_context>
chip_gen: v5e
topology: v5e:2x2
jax: 0.10.0
libtpu: 0.0.40
codegen_flags: <defaults>
</compile_context>

<pallas_src>
import numpy as np
import jax
import jax.numpy as jnp
from jax.experimental import pallas as pl
from jax.experimental.pallas import tpu as pltpu

EPS = 1e-5          # PyTorch BatchNorm2d default eps


def _round_up(n, m):
    return ((n + m - 1) // m) * m


# ----------------------------- Pallas kernels ------------------------------

def _mm_bias_kernel(a_ref, b_ref, shift_ref, o_ref):
    """One lane tile: o = a @ b + shift (shift broadcast over lanes).

    a: (M, K) bf16 (BN scale pre-folded), b: (K, TN) bf16 columns,
    shift: (M, 1) f32 (conv bias + BN shift folded), o: (M, TN) f32.
    """
    o_ref[...] = (jnp.dot(a_ref[...], b_ref[...],
                          preferred_element_type=jnp.float32)
                  + shift_ref[...])


def _mm_bias(a, b, shift):
    """(a @ b) + shift[:, None] with the big N axis tiled on TPU lanes.

    1–2 tiles per call: two equal 128-multiple tiles for large N (one per
    v7x TensorCore, few serial steps on v5e/v6e), one tile for tiny N.
    """
    M, K = a.shape
    N = b.shape[1]
    n_tiles = 1 if N <= 256 else 2
    tn = _round_up(-(-N // n_tiles), 128)
    n_pad = tn * n_tiles
    if n_pad != N:
        b = jnp.pad(b, ((0, 0), (0, n_pad - N)))
    out = pl.pallas_call(
        _mm_bias_kernel,
        out_shape=jax.ShapeDtypeStruct((M, n_pad), jnp.float32),
        grid=(n_tiles,),
        in_specs=[
            pl.BlockSpec((M, K), lambda j: (0, 0)),
            pl.BlockSpec((K, tn), lambda j: (0, j)),
            pl.BlockSpec((M, 1), lambda j: (0, 0)),
        ],
        out_specs=pl.BlockSpec((M, tn), lambda j: (0, j)),
        compiler_params=pltpu.CompilerParams(
            dimension_semantics=("parallel",)),
    )(a.astype(jnp.bfloat16), b.astype(jnp.bfloat16),
      shift.reshape(M, 1).astype(jnp.float32))
    return out[:, :N] if n_pad != N else out


def _bilinear_kernel(x_ref, rh_ref, rwt_ref, o_ref):
    """A block of planes per grid step: out_g = Rh @ x_g @ Rw^T.

    H-interp per plane (ref-indexed loads), then the per-plane results are
    stacked along sublanes (out_h is a multiple of 8, so the concat offsets
    are tile-aligned) and the larger W-interp matmul runs once, batched; the
    store is one lane-dense write of the whole output block.
    """
    planes = [jnp.dot(rh_ref[...], x_ref[g], preferred_element_type=jnp.float32)
              for g in range(x_ref.shape[0])]
    u = planes[0] if len(planes) == 1 else jnp.concatenate(planes, axis=0)
    o_ref[...] = jnp.dot(u, rwt_ref[...], preferred_element_type=jnp.float32)


# --------------------------- bilinear interpolation -------------------------

def _interp_matrix(in_size, out_size):
    """Row-interp matrix for F.interpolate(mode='bilinear', align_corners=False)."""
    scale = in_size / out_size
    o = np.arange(out_size, dtype=np.float64)
    src = np.maximum((o + 0.5) * scale - 0.5, 0.0)
    i0 = np.minimum(np.floor(src).astype(np.int64), in_size - 1)
    i1 = np.minimum(i0 + 1, in_size - 1)
    l1 = (src - i0).astype(np.float32)
    l0 = (1.0 - l1).astype(np.float32)
    r = np.zeros((out_size, in_size), dtype=np.float32)
    np.add.at(r, (np.arange(out_size), i0), l0)
    np.add.at(r, (np.arange(out_size), i1), l1)
    return r


def _pick_gb(G, out_h, out_w, vmem_cap_bytes=4 << 20):
    """Planes per grid step: largest divisor of G whose f32 output block fits
    the cap while keeping >= 2 grid steps (pipelining + v7x's second core)."""
    best = 1
    for d in range(1, G + 1):
        if G % d:
            continue
        if d * out_h * out_w * 4 > vmem_cap_bytes:
            continue
        if G >= 2 and G // d < 2:
            continue
        best = d
    return best


def _bilinear_resize_planes(x, out_h, out_w):
    """x: (C, B, H, W) -> (C, B, out_h, out_w); PyTorch bilinear, align_corners=False."""
    C, B, H, W = x.shape
    G = C * B
    rh = jnp.asarray(_interp_matrix(H, out_h))        # (out_h, H)
    rwt = jnp.asarray(_interp_matrix(W, out_w)).T     # (W, out_w)
    gb = _pick_gb(G, out_h, out_w)
    out = pl.pallas_call(
        _bilinear_kernel,
        out_shape=jax.ShapeDtypeStruct((G * out_h, out_w), jnp.float32),
        grid=(G // gb,),
        in_specs=[
            pl.BlockSpec((gb, H, W), lambda n: (n, 0, 0)),
            pl.BlockSpec((out_h, H), lambda n: (0, 0)),
            pl.BlockSpec((W, out_w), lambda n: (0, 0)),
        ],
        out_specs=pl.BlockSpec((gb * out_h, out_w), lambda n: (n, 0)),
        compiler_params=pltpu.CompilerParams(
            dimension_semantics=("parallel",)),
    )(x.reshape(G, H, W), rh, rwt)
    return out.reshape(C, B, out_h, out_w)


# ------------------------- conv layers (glue + kernel) ----------------------

def _im2col_cbhw(x, kh, kw, stride):
    """x: (C, B, H, W) -> (C*kh*kw, B*Ho*Wo) columns (valid padding).

    Taps are stacked as (C, kh*kw, B, Ho, Wo) so the final reshape is a free
    (contiguous) view — no 5-D relayout of the expanded column tensor.
    """
    C, B, H, W = x.shape
    Ho = (H - kh) // stride + 1
    Wo = (W - kw) // stride + 1
    taps = [x[:, :,
              ki:ki + stride * (Ho - 1) + 1:stride,
              kj:kj + stride * (Wo - 1) + 1:stride]
            for ki in range(kh) for kj in range(kw)]          # each (C,B,Ho,Wo)
    cols = jnp.stack(taps, axis=1).reshape(C * kh * kw, B * Ho * Wo)
    return cols, Ho, Wo


def _conv2d_bn(x, w, b, bn, stride):
    """Conv2d(k, stride, valid) + BatchNorm2d(eval) [+ Dropout2d(eval)=id].

    x: (Cin, B, H, W) channel-major; w: (Cout, Cin, kh, kw).  Returns
    (Cout, B, Ho, Wo).  Columns are built directly in bf16.
    """
    gamma, beta, mean, var = bn
    scale = gamma / jnp.sqrt(var + EPS)
    w_f = w * scale[:, None, None, None]
    shift_f = b * scale + beta - mean * scale
    Cout, Cin, kh, kw = w.shape
    B = x.shape[1]
    cols, Ho, Wo = _im2col_cbhw(x.astype(jnp.bfloat16), kh, kw, stride)
    out = _mm_bias(w_f.reshape(Cout, -1), cols, shift_f)      # (Cout, B*Ho*Wo)
    return out.reshape(Cout, B, Ho, Wo)


def _conv_transpose2d_bn(x, w, b, bn):
    """ConvTranspose2d(k=5, stride=2, output_padding=1) + BatchNorm2d(eval).

    All four output-parity sub-convolutions in ONE matmul: shared ((2,2),(2,2))
    pad, shared 3x3 stride-1 im2col, and the four flipped / BN-folded parity
    sub-kernels (front-zero-padded to 3x3) stacked into a (4*Cout, Cin*9) LHS.
    x: (Cin, B, H, W); w: (Cin, Cout, 5, 5) (PyTorch ConvTranspose layout).
    """
    Cin, B, H, W = x.shape
    Cout = w.shape[1]
    gamma, beta, mean, var = bn
    scale = gamma / jnp.sqrt(var + EPS)
    shift_f = b * scale + beta - mean * scale                  # (Cout,)

    subs = []
    for ri in (0, 1):
        for rj in (0, 1):
            wsub = w[:, :, ri::2, rj::2]                       # (Cin,Cout,khs,kws)
            wc = jnp.flip(wsub, (2, 3)).transpose(1, 0, 2, 3)  # (Cout,Cin,khs,kws)
            wc = jnp.pad(wc, ((0, 0), (0, 0), (ri, 0), (rj, 0)))  # front-pad -> 3x3
            subs.append(wc * scale[:, None, None, None])
    lhs = jnp.stack(subs, axis=0).reshape(4 * Cout, Cin * 9)   # parity-major rows
    shift4 = jnp.tile(shift_f, 4)

    xp = jnp.pad(x.astype(jnp.bfloat16), ((0, 0), (0, 0), (2, 2), (2, 2)))
    cols, Hh, Wh = _im2col_cbhw(xp, 3, 3, 1)                   # Hh = H+2, Wh = W+2
    out = _mm_bias(lhs, cols, shift4)                          # (4*Cout, B*Hh*Wh)

    # Interleave parities: y[c, b, 2u+ri, 2v+rj] = res[ri, rj, c, b, u, v]
    res = out.reshape(2, 2, Cout, B, Hh, Wh)
    y = res.transpose(2, 3, 4, 0, 5, 1).reshape(Cout, B, 2 * Hh, 2 * Wh)
    return y


# ------------------------------ parameters ----------------------------------

def init_params(key, style_dim=27):
    keys = iter(jax.random.split(key, 64))

    def nrm(shape, s=0.1):
        return s * jax.random.normal(next(keys), shape, jnp.float32)

    def bn(c):
        return (1.0 + 0.1 * jax.random.normal(next(keys), (c,), jnp.float32),   # gamma
                0.1 * jax.random.normal(next(keys), (c,), jnp.float32),          # beta
                0.1 * jax.random.normal(next(keys), (c,), jnp.float32),          # running_mean
                1.0 + 0.1 * jax.random.uniform(next(keys), (c,), jnp.float32))   # running_var

    return dict(
        enc=[(nrm((3, 3, 5, 5)), nrm((3,)), bn(3)),
             (nrm((3, 3, 5, 5)), nrm((3,)), bn(3)),
             (nrm((3, 3, 5, 5)), nrm((3,)), bn(3)),
             (nrm((1, 3, 5, 5)), nrm((1,)), bn(1))],
        style_w=nrm((16 * 16, style_dim)),            # nn.Linear(27, 256).weight
        style_b=nrm((16 * 16,)),
        dec=[(nrm((2, 3, 5, 5)), nrm((3,)), bn(3)),   # ConvTranspose: (Cin, Cout, 5, 5)
             (nrm((3, 3, 5, 5)), nrm((3,)), bn(3)),
             (nrm((3, 3, 5, 5)), nrm((3,)), bn(3)),
             (nrm((3, 3, 5, 5)), nrm((3,)), bn(3))],
    )


# ------------------------------- forward ------------------------------------

def wiki_autoencoder2_forward(params, x, style):
    B = x.shape[0]
    # NCHW -> channel-major (C, B, H, W) once; convs stay in this layout.
    h = jnp.transpose(x, (1, 0, 2, 3))

    # Encoder: 4 x (Conv2d(5, stride=2) -> BatchNorm2d -> Dropout2d[eval])
    for (w, b, bn) in params['enc']:
        h = _conv2d_bn(h, w, b, bn, stride=2)
    encoded = h                                              # (1, B, he, we)
    he, we = encoded.shape[2], encoded.shape[3]

    # Style: Linear(27 -> 256) -> view(B,1,16,16) -> bilinear to (he, we).
    # The bilinear resize is folded into the Linear weights at trace time
    # (kron of the two interp matrices); no Pallas launch for this O(1K) op.
    rh = jnp.asarray(_interp_matrix(16, he))                 # (he, 16)
    rw = jnp.asarray(_interp_matrix(16, we))                 # (we, 16)
    w_img = params['style_w'].reshape(16, 16, -1)            # (h, w, style_dim)
    w_fold = jnp.einsum('oh,pw,hwj->opj', rh, rw, w_img).reshape(he * we, -1)
    b_fold = (rh @ params['style_b'].reshape(16, 16) @ rw.T).reshape(he * we)
    se = style @ w_fold.T + b_fold                           # (B, he*we)
    se = se.reshape(B, he, we)[None]                         # (1, B, he, we)

    h = jnp.concatenate([encoded, se], axis=0)               # (2, B, he, we)

    # Decoder: 4 x (ConvTranspose2d(5, s=2, output_padding=1) -> BatchNorm2d)
    for (w, b, bn) in params['dec']:
        h = _conv_transpose2d_bn(h, w, b, bn)

    out = _bilinear_resize_planes(h, 416, 416)               # (C, B, 416, 416)
    return jnp.transpose(out, (1, 0, 2, 3))                  # -> NCHW


# ------------------------- pure-JAX reference (check) ------------------------

def _ref_forward(params, x, style):
    def bn_apply(y, bn):
        g, bt, m, v = bn
        s = g / jnp.sqrt(v + EPS)
        return y * s.reshape(1, -1, 1, 1) + (bt - m * s).reshape(1, -1, 1, 1)

    h = x
    for (w, b, bn) in params['enc']:
        h = jax.lax.conv_general_dilated(h, w, (2, 2), 'VALID',
                                         dimension_numbers=('NCHW', 'OIHW', 'NCHW'))
        h = bn_apply(h + b.reshape(1, -1, 1, 1), bn)
    enc = h

    se = style @ params['style_w'].T + params['style_b']
    se = se.reshape(x.shape[0], 1, 16, 16)
    rh = jnp.asarray(_interp_matrix(16, enc.shape[2]))
    rw = jnp.asarray(_interp_matrix(16, enc.shape[3]))
    se = jnp.einsum('oh,nchw,pw->ncop', rh, se, rw)
    h = jnp.concatenate([enc, se], axis=1)

    for (w, b, bn) in params['dec']:
        wf = jnp.flip(w, axis=(2, 3)).transpose(1, 0, 2, 3)
        h = jax.lax.conv_general_dilated(h, wf, (1, 1), ((4, 5), (4, 5)),
                                         lhs_dilation=(2, 2),
                                         dimension_numbers=('NCHW', 'OIHW', 'NCHW'))
        h = bn_apply(h + b.reshape(1, -1, 1, 1), bn)

    rh = jnp.asarray(_interp_matrix(h.shape[2], 416))
    rw = jnp.asarray(_interp_matrix(h.shape[3], 416))
    return jnp.einsum('oh,nchw,pw->ncop', rh, h, rw)


# --------------------------------- main --------------------------------------

if __name__ == "__main__":
    key = jax.random.PRNGKey(0)
    kp, kx, ks = jax.random.split(key, 3)
    params = init_params(kp)

    # Small but structurally valid input: four stride-2 k=5 convs need >= 61
    # spatial; 96 -> 46 -> 21 -> 9 -> 3 encoded spatial size.
    B, H, W = 2, 96, 96
    x = jax.random.normal(kx, (B, 3, H, W), jnp.float32)
    style = jax.random.normal(ks, (B, 27), jnp.float32)

    out = jax.block_until_ready(jax.jit(wiki_autoencoder2_forward)(params, x, style))
    assert out.shape == (B, 3, 416, 416), out.shape
    assert bool(jnp.all(jnp.isfinite(out)))

    ref = jax.block_until_ready(jax.jit(_ref_forward)(params, x, style))
    np.testing.assert_allclose(np.asarray(out), np.asarray(ref), rtol=5e-2, atol=5e-2)

    print("KERNEL_OK")
</pallas_src>

<mosaic_0001>
module attributes {stable_mosaic.version = 11 : i64} {
  func.func @_mm_bias_kernel(%arg0: i32, %arg1: memref<3x75xbf16, #tpu.memory_space<vmem>>, %arg2: memref<75x2176xbf16, #tpu.memory_space<vmem>>, %arg3: memref<3x1xf32, #tpu.memory_space<vmem>>, %arg4: memref<3x2176xf32, #tpu.memory_space<vmem>>) attributes {dimension_semantics = [#tpu.dimension_semantics<parallel>], iteration_bounds = array<i64: 2>, scalar_prefetch = 0 : i64, scratch_operands = 0 : i64, tpu.core_type = #tpu.core_type<tc>, window_params = [{pipeline_mode = #tpu.pipeline_mode<synchronous>, transform_indices = @transform_0, window_bounds = array<i64: 3, 75>}, {transform_indices = @transform_1, window_bounds = array<i64: 75, 2176>}, {pipeline_mode = #tpu.pipeline_mode<synchronous>, transform_indices = @transform_2, window_bounds = array<i64: 3, 1>}, {transform_indices = @transform_3, window_bounds = array<i64: 3, 2176>}]} {
    %c0 = arith.constant 0 : index
    %c0_0 = arith.constant 0 : index
    %0 = vector.load %arg1[%c0, %c0_0] : memref<3x75xbf16, #tpu.memory_space<vmem>>, vector<3x75xbf16>
    %c0_1 = arith.constant 0 : index
    %c0_2 = arith.constant 0 : index
    %1 = vector.load %arg2[%c0_1, %c0_2] : memref<75x2176xbf16, #tpu.memory_space<vmem>>, vector<75x2176xbf16>
    %cst = arith.constant dense<0.000000e+00> : vector<3x2176xf32>
    %2 = tpu.matmul %0, %1, %cst {dimension_numbers = #tpu.dot_dimension_numbers<[1], [0], [0], [1], [0, 0, 1, 1], [], []>} : vector<3x75xbf16>, vector<75x2176xbf16>, vector<3x2176xf32> -> vector<3x2176xf32>
    %c0_3 = arith.constant 0 : index
    %c0_4 = arith.constant 0 : index
    %3 = vector.load %arg3[%c0_3, %c0_4] : memref<3x1xf32, #tpu.memory_space<vmem>>, vector<3x1xf32>
    %4 = vector.broadcast %3 : vector<3x1xf32> to vector<3x2176xf32>
    %5 = arith.addf %2, %4 : vector<3x2176xf32>
    %c0_5 = arith.constant 0 : index
    %c0_6 = arith.constant 0 : index
    %6 = vector.load %arg4[%c0_5, %c0_6] : memref<3x2176xf32, #tpu.memory_space<vmem>>, vector<3x2176xf32>
    tpu.vector_store %arg4[%c0_5, %c0_6], %5 {strides = array<i32>} : memref<3x2176xf32, #tpu.memory_space<vmem>>, vector<3x2176xf32>,
    return
  }
  func.func @transform_0(%arg0: i32) -> (i32, i32) {
    %c0_i32 = arith.constant 0 : i32
    %c0_i32_0 = arith.constant 0 : i32
    %c0_i32_1 = arith.constant 0 : i32
    return %c0_i32, %c0_i32_0 : i32, i32
  }
  func.func @transform_1(%arg0: i32) -> (i32, i32) {
    %c0_i32 = arith.constant 0 : i32
    %c0_i32_0 = arith.constant 0 : i32
    return %c0_i32, %arg0 : i32, i32
  }
  func.func @transform_2(%arg0: i32) -> (i32, i32) {
    %c0_i32 = arith.constant 0 : i32
    %c0_i32_0 = arith.constant 0 : i32
    %c0_i32_1 = arith.constant 0 : i32
    return %c0_i32, %c0_i32_0 : i32, i32
  }
  func.func @transform_3(%arg0: i32) -> (i32, i32) {
    %c0_i32 = arith.constant 0 : i32
    %c0_i32_0 = arith.constant 0 : i32
    return %c0_i32, %arg0 : i32, i32
  }
}

module attributes {stable_mosaic.version = 11 : i64} {
  func.func @_mm_bias_kernel(%arg0: i32, %arg1: memref<3x75xbf16, #tpu.memory_space<vmem>>, %arg2: memref<75x512xbf16, #tpu.memory_space<vmem>>, %arg3: memref<3x1xf32, #tpu.memory_space<vmem>>, %arg4: memref<3x512xf32, #tpu.memory_space<vmem>>) attributes {dimension_semantics = [#tpu.dimension_semantics<parallel>], iteration_bounds = array<i64: 2>, scalar_prefetch = 0 : i64, scratch_operands = 0 : i64, tpu.core_type = #tpu.core_type<tc>, window_params = [{pipeline_mode = #tpu.pipeline_mode<synchronous>, transform_indices = @transform_0, window_bounds = array<i64: 3, 75>}, {transform_indices = @transform_1, window_bounds = array<i64: 75, 512>}, {pipeline_mode = #tpu.pipeline_mode<synchronous>, transform_indices = @transform_2, window_bounds = array<i64: 3, 1>}, {transform_indices = @transform_3, window_bounds = array<i64: 3, 512>}]} {
    %c0 = arith.constant 0 : index
    %c0_0 = arith.constant 0 : index
    %0 = vector.load %arg1[%c0, %c0_0] : memref<3x75xbf16, #tpu.memory_space<vmem>>, vector<3x75xbf16>
    %c0_1 = arith.constant 0 : index
    %c0_2 = arith.constant 0 : index
    %1 = vector.load %arg2[%c0_1, %c0_2] : memref<75x512xbf16, #tpu.memory_space<vmem>>, vector<75x512xbf16>
    %cst = arith.constant dense<0.000000e+00> : vector<3x512xf32>
    %2 = tpu.matmul %0, %1, %cst {dimension_numbers = #tpu.dot_dimension_numbers<[1], [0], [0], [1], [0, 0, 1, 1], [], []>} : vector<3x75xbf16>, vector<75x512xbf16>, vector<3x512xf32> -> vector<3x512xf32>
    %c0_3 = arith.constant 0 : index
    %c0_4 = arith.constant 0 : index
    %3 = vector.load %arg3[%c0_3, %c0_4] : memref<3x1xf32, #tpu.memory_space<vmem>>, vector<3x1xf32>
    %4 = vector.broadcast %3 : vector<3x1xf32> to vector<3x512xf32>
    %5 = arith.addf %2, %4 : vector<3x512xf32>
    %c0_5 = arith.constant 0 : index
    %c0_6 = arith.constant 0 : index
    %6 = vector.load %arg4[%c0_5, %c0_6] : memref<3x512xf32, #tpu.memory_space<vmem>>, vector<3x512xf32>
    tpu.vector_store %arg4[%c0_5, %c0_6], %5 {strides = array<i32>} : memref<3x512xf32, #tpu.memory_space<vmem>>, vector<3x512xf32>,
    return
  }
  func.func @transform_0(%arg0: i32) -> (i32, i32) {
    %c0_i32 = arith.constant 0 : i32
    %c0_i32_0 = arith.constant 0 : i32
    %c0_i32_1 = arith.constant 0 : i32
    return %c0_i32, %c0_i32_0 : i32, i32
  }
  func.func @transform_1(%arg0: i32) -> (i32, i32) {
    %c0_i32 = arith.constant 0 : i32
    %c0_i32_0 = arith.constant 0 : i32
    return %c0_i32, %arg0 : i32, i32
  }
  func.func @transform_2(%arg0: i32) -> (i32, i32) {
    %c0_i32 = arith.constant 0 : i32
    %c0_i32_0 = arith.constant 0 : i32
    %c0_i32_1 = arith.constant 0 : i32
    return %c0_i32, %c0_i32_0 : i32, i32
  }
  func.func @transform_3(%arg0: i32) -> (i32, i32) {
    %c0_i32 = arith.constant 0 : i32
    %c0_i32_0 = arith.constant 0 : i32
    return %c0_i32, %arg0 : i32, i32
  }
}

module attributes {stable_mosaic.version = 11 : i64} {
  func.func @_mm_bias_kernel(%arg0: i32, %arg1: memref<3x75xbf16, #tpu.memory_space<vmem>>, %arg2: memref<75x256xbf16, #tpu.memory_space<vmem>>, %arg3: memref<3x1xf32, #tpu.memory_space<vmem>>, %arg4: memref<3x256xf32, #tpu.memory_space<vmem>>) attributes {dimension_semantics = [#tpu.dimension_semantics<parallel>], iteration_bounds = array<i64: 1>, scalar_prefetch = 0 : i64, scratch_operands = 0 : i64, tpu.core_type = #tpu.core_type<tc>, window_params = [{pipeline_mode = #tpu.pipeline_mode<synchronous>, transform_indices = @transform_0, window_bounds = array<i64: 3, 75>}, {transform_indices = @transform_1, window_bounds = array<i64: 75, 256>}, {pipeline_mode = #tpu.pipeline_mode<synchronous>, transform_indices = @transform_2, window_bounds = array<i64: 3, 1>}, {transform_indices = @transform_3, window_bounds = array<i64: 3, 256>}]} {
    %c0 = arith.constant 0 : index
    %c0_0 = arith.constant 0 : index
    %0 = vector.load %arg1[%c0, %c0_0] : memref<3x75xbf16, #tpu.memory_space<vmem>>, vector<3x75xbf16>
    %c0_1 = arith.constant 0 : index
    %c0_2 = arith.constant 0 : index
    %1 = vector.load %arg2[%c0_1, %c0_2] : memref<75x256xbf16, #tpu.memory_space<vmem>>, vector<75x256xbf16>
    %cst = arith.constant dense<0.000000e+00> : vector<3x256xf32>
    %2 = tpu.matmul %0, %1, %cst {dimension_numbers = #tpu.dot_dimension_numbers<[1], [0], [0], [1], [0, 0, 1, 1], [], []>} : vector<3x75xbf16>, vector<75x256xbf16>, vector<3x256xf32> -> vector<3x256xf32>
    %c0_3 = arith.constant 0 : index
    %c0_4 = arith.constant 0 : index
    %3 = vector.load %arg3[%c0_3, %c0_4] : memref<3x1xf32, #tpu.memory_space<vmem>>, vector<3x1xf32>
    %4 = vector.broadcast %3 : vector<3x1xf32> to vector<3x256xf32>
    %5 = arith.addf %2, %4 : vector<3x256xf32>
    %c0_5 = arith.constant 0 : index
    %c0_6 = arith.constant 0 : index
    %6 = vector.load %arg4[%c0_5, %c0_6] : memref<3x256xf32, #tpu.memory_space<vmem>>, vector<3x256xf32>
    tpu.vector_store %arg4[%c0_5, %c0_6], %5 {strides = array<i32>} : memref<3x256xf32, #tpu.memory_space<vmem>>, vector<3x256xf32>,
    return
  }
  func.func @transform_0(%arg0: i32) -> (i32, i32) {
    %c0_i32 = arith.constant 0 : i32
    %c0_i32_0 = arith.constant 0 : i32
    %c0_i32_1 = arith.constant 0 : i32
    return %c0_i32, %c0_i32_0 : i32, i32
  }
  func.func @transform_1(%arg0: i32) -> (i32, i32) {
    %c0_i32 = arith.constant 0 : i32
    %c0_i32_0 = arith.constant 0 : i32
    return %c0_i32, %arg0 : i32, i32
  }
  func.func @transform_2(%arg0: i32) -> (i32, i32) {
    %c0_i32 = arith.constant 0 : i32
    %c0_i32_0 = arith.constant 0 : i32
    %c0_i32_1 = arith.constant 0 : i32
    return %c0_i32, %c0_i32_0 : i32, i32
  }
  func.func @transform_3(%arg0: i32) -> (i32, i32) {
    %c0_i32 = arith.constant 0 : i32
    %c0_i32_0 = arith.constant 0 : i32
    return %c0_i32, %arg0 : i32, i32
  }
}

module attributes {stable_mosaic.version = 11 : i64} {
  func.func @_mm_bias_kernel(%arg0: i32, %arg1: memref<1x75xbf16, #tpu.memory_space<vmem>>, %arg2: memref<75x128xbf16, #tpu.memory_space<vmem>>, %arg3: memref<1x1xf32, #tpu.memory_space<vmem>>, %arg4: memref<1x128xf32, #tpu.memory_space<vmem>>) attributes {dimension_semantics = [#tpu.dimension_semantics<parallel>], iteration_bounds = array<i64: 1>, scalar_prefetch = 0 : i64, scratch_operands = 0 : i64, tpu.core_type = #tpu.core_type<tc>, window_params = [{pipeline_mode = #tpu.pipeline_mode<synchronous>, transform_indices = @transform_0, window_bounds = array<i64: 1, 75>}, {transform_indices = @transform_1, window_bounds = array<i64: 75, 128>}, {pipeline_mode = #tpu.pipeline_mode<synchronous>, transform_indices = @transform_2, window_bounds = array<i64: 1, 1>}, {transform_indices = @transform_3, window_bounds = array<i64: 1, 128>}]} {
    %c0 = arith.constant 0 : index
    %c0_0 = arith.constant 0 : index
    %0 = vector.load %arg1[%c0, %c0_0] : memref<1x75xbf16, #tpu.memory_space<vmem>>, vector<1x75xbf16>
    %c0_1 = arith.constant 0 : index
    %c0_2 = arith.constant 0 : index
    %1 = vector.load %arg2[%c0_1, %c0_2] : memref<75x128xbf16, #tpu.memory_space<vmem>>, vector<75x128xbf16>
    %cst = arith.constant dense<0.000000e+00> : vector<1x128xf32>
    %2 = tpu.matmul %0, %1, %cst {dimension_numbers = #tpu.dot_dimension_numbers<[1], [0], [0], [1], [0, 0, 1, 1], [], []>} : vector<1x75xbf16>, vector<75x128xbf16>, vector<1x128xf32> -> vector<1x128xf32>
    %c0_3 = arith.constant 0 : index
    %c0_4 = arith.constant 0 : index
    %3 = vector.load %arg3[%c0_3, %c0_4] : memref<1x1xf32, #tpu.memory_space<vmem>>, vector<1x1xf32>
    %4 = vector.broadcast %3 : vector<1x1xf32> to vector<1x128xf32>
    %5 = arith.addf %2, %4 : vector<1x128xf32>
    %c0_5 = arith.constant 0 : index
    %c0_6 = arith.constant 0 : index
    %6 = vector.load %arg4[%c0_5, %c0_6] : memref<1x128xf32, #tpu.memory_space<vmem>>, vector<1x128xf32>
    tpu.vector_store %arg4[%c0_5, %c0_6], %5 {strides = array<i32>} : memref<1x128xf32, #tpu.memory_space<vmem>>, vector<1x128xf32>,
    return
  }
  func.func @transform_0(%arg0: i32) -> (i32, i32) {
    %c0_i32 = arith.constant 0 : i32
    %c0_i32_0 = arith.constant 0 : i32
    %c0_i32_1 = arith.constant 0 : i32
    return %c0_i32, %c0_i32_0 : i32, i32
  }
  func.func @transform_1(%arg0: i32) -> (i32, i32) {
    %c0_i32 = arith.constant 0 : i32
    %c0_i32_0 = arith.constant 0 : i32
    return %c0_i32, %arg0 : i32, i32
  }
  func.func @transform_2(%arg0: i32) -> (i32, i32) {
    %c0_i32 = arith.constant 0 : i32
    %c0_i32_0 = arith.constant 0 : i32
    %c0_i32_1 = arith.constant 0 : i32
    return %c0_i32, %c0_i32_0 : i32, i32
  }
  func.func @transform_3(%arg0: i32) -> (i32, i32) {
    %c0_i32 = arith.constant 0 : i32
    %c0_i32_0 = arith.constant 0 : i32
    return %c0_i32, %arg0 : i32, i32
  }
}

module attributes {stable_mosaic.version = 11 : i64} {
  func.func @_mm_bias_kernel(%arg0: i32, %arg1: memref<12x18xbf16, #tpu.memory_space<vmem>>, %arg2: memref<18x128xbf16, #tpu.memory_space<vmem>>, %arg3: memref<12x1xf32, #tpu.memory_space<vmem>>, %arg4: memref<12x128xf32, #tpu.memory_space<vmem>>) attributes {dimension_semantics = [#tpu.dimension_semantics<parallel>], iteration_bounds = array<i64: 1>, scalar_prefetch = 0 : i64, scratch_operands = 0 : i64, tpu.core_type = #tpu.core_type<tc>, window_params = [{pipeline_mode = #tpu.pipeline_mode<synchronous>, transform_indices = @transform_0, window_bounds = array<i64: 12, 18>}, {transform_indices = @transform_1, window_bounds = array<i64: 18, 128>}, {pipeline_mode = #tpu.pipeline_mode<synchronous>, transform_indices = @transform_2, window_bounds = array<i64: 12, 1>}, {transform_indices = @transform_3, window_bounds = array<i64: 12, 128>}]} {
    %c0 = arith.constant 0 : index
    %c0_0 = arith.constant 0 : index
    %0 = vector.load %arg1[%c0, %c0_0] : memref<12x18xbf16, #tpu.memory_space<vmem>>, vector<12x18xbf16>
    %c0_1 = arith.constant 0 : index
    %c0_2 = arith.constant 0 : index
    %1 = vector.load %arg2[%c0_1, %c0_2] : memref<18x128xbf16, #tpu.memory_space<vmem>>, vector<18x128xbf16>
    %cst = arith.constant dense<0.000000e+00> : vector<12x128xf32>
    %2 = tpu.matmul %0, %1, %cst {dimension_numbers = #tpu.dot_dimension_numbers<[1], [0], [0], [1], [0, 0, 1, 1], [], []>} : vector<12x18xbf16>, vector<18x128xbf16>, vector<12x128xf32> -> vector<12x128xf32>
    %c0_3 = arith.constant 0 : index
    %c0_4 = arith.constant 0 : index
    %3 = vector.load %arg3[%c0_3, %c0_4] : memref<12x1xf32, #tpu.memory_space<vmem>>, vector<12x1xf32>
    %4 = vector.broadcast %3 : vector<12x1xf32> to vector<12x128xf32>
    %5 = arith.addf %2, %4 : vector<12x128xf32>
    %c0_5 = arith.constant 0 : index
    %c0_6 = arith.constant 0 : index
    %6 = vector.load %arg4[%c0_5, %c0_6] : memref<12x128xf32, #tpu.memory_space<vmem>>, vector<12x128xf32>
    tpu.vector_store %arg4[%c0_5, %c0_6], %5 {strides = array<i32>} : memref<12x128xf32, #tpu.memory_space<vmem>>, vector<12x128xf32>,
    return
  }
  func.func @transform_0(%arg0: i32) -> (i32, i32) {
    %c0_i32 = arith.constant 0 : i32
    %c0_i32_0 = arith.constant 0 : i32
    %c0_i32_1 = arith.constant 0 : i32
    return %c0_i32, %c0_i32_0 : i32, i32
  }
  func.func @transform_1(%arg0: i32) -> (i32, i32) {
    %c0_i32 = arith.constant 0 : i32
    %c0_i32_0 = arith.constant 0 : i32
    return %c0_i32, %arg0 : i32, i32
  }
  func.func @transform_2(%arg0: i32) -> (i32, i32) {
    %c0_i32 = arith.constant 0 : i32
    %c0_i32_0 = arith.constant 0 : i32
    %c0_i32_1 = arith.constant 0 : i32
    return %c0_i32, %c0_i32_0 : i32, i32
  }
  func.func @transform_3(%arg0: i32) -> (i32, i32) {
    %c0_i32 = arith.constant 0 : i32
    %c0_i32_0 = arith.constant 0 : i32
    return %c0_i32, %arg0 : i32, i32
  }
}

module attributes {stable_mosaic.version = 11 : i64} {
  func.func @_mm_bias_kernel(%arg0: i32, %arg1: memref<12x27xbf16, #tpu.memory_space<vmem>>, %arg2: memref<27x256xbf16, #tpu.memory_space<vmem>>, %arg3: memref<12x1xf32, #tpu.memory_space<vmem>>, %arg4: memref<12x256xf32, #tpu.memory_space<vmem>>) attributes {dimension_semantics = [#tpu.dimension_semantics<parallel>], iteration_bounds = array<i64: 2>, scalar_prefetch = 0 : i64, scratch_operands = 0 : i64, tpu.core_type = #tpu.core_type<tc>, window_params = [{pipeline_mode = #tpu.pipeline_mode<synchronous>, transform_indices = @transform_0, window_bounds = array<i64: 12, 27>}, {transform_indices = @transform_1, window_bounds = array<i64: 27, 256>}, {pipeline_mode = #tpu.pipeline_mode<synchronous>, transform_indices = @transform_2, window_bounds = array<i64: 12, 1>}, {transform_indices = @transform_3, window_bounds = array<i64: 12, 256>}]} {
    %c0 = arith.constant 0 : index
    %c0_0 = arith.constant 0 : index
    %0 = vector.load %arg1[%c0, %c0_0] : memref<12x27xbf16, #tpu.memory_space<vmem>>, vector<12x27xbf16>
    %c0_1 = arith.constant 0 : index
    %c0_2 = arith.constant 0 : index
    %1 = vector.load %arg2[%c0_1, %c0_2] : memref<27x256xbf16, #tpu.memory_space<vmem>>, vector<27x256xbf16>
    %cst = arith.constant dense<0.000000e+00> : vector<12x256xf32>
    %2 = tpu.matmul %0, %1, %cst {dimension_numbers = #tpu.dot_dimension_numbers<[1], [0], [0], [1], [0, 0, 1, 1], [], []>} : vector<12x27xbf16>, vector<27x256xbf16>, vector<12x256xf32> -> vector<12x256xf32>
    %c0_3 = arith.constant 0 : index
    %c0_4 = arith.constant 0 : index
    %3 = vector.load %arg3[%c0_3, %c0_4] : memref<12x1xf32, #tpu.memory_space<vmem>>, vector<12x1xf32>
    %4 = vector.broadcast %3 : vector<12x1xf32> to vector<12x256xf32>
    %5 = arith.addf %2, %4 : vector<12x256xf32>
    %c0_5 = arith.constant 0 : index
    %c0_6 = arith.constant 0 : index
    %6 = vector.load %arg4[%c0_5, %c0_6] : memref<12x256xf32, #tpu.memory_space<vmem>>, vector<12x256xf32>
    tpu.vector_store %arg4[%c0_5, %c0_6], %5 {strides = array<i32>} : memref<12x256xf32, #tpu.memory_space<vmem>>, vector<12x256xf32>,
    return
  }
  func.func @transform_0(%arg0: i32) -> (i32, i32) {
    %c0_i32 = arith.constant 0 : i32
    %c0_i32_0 = arith.constant 0 : i32
    %c0_i32_1 = arith.constant 0 : i32
    return %c0_i32, %c0_i32_0 : i32, i32
  }
  func.func @transform_1(%arg0: i32) -> (i32, i32) {
    %c0_i32 = arith.constant 0 : i32
    %c0_i32_0 = arith.constant 0 : i32
    return %c0_i32, %arg0 : i32, i32
  }
  func.func @transform_2(%arg0: i32) -> (i32, i32) {
    %c0_i32 = arith.constant 0 : i32
    %c0_i32_0 = arith.constant 0 : i32
    %c0_i32_1 = arith.constant 0 : i32
    return %c0_i32, %c0_i32_0 : i32, i32
  }
  func.func @transform_3(%arg0: i32) -> (i32, i32) {
    %c0_i32 = arith.constant 0 : i32
    %c0_i32_0 = arith.constant 0 : i32
    return %c0_i32, %arg0 : i32, i32
  }
}

module attributes {stable_mosaic.version = 11 : i64} {
  func.func @_mm_bias_kernel(%arg0: i32, %arg1: memref<12x27xbf16, #tpu.memory_space<vmem>>, %arg2: memref<27x768xbf16, #tpu.memory_space<vmem>>, %arg3: memref<12x1xf32, #tpu.memory_space<vmem>>, %arg4: memref<12x768xf32, #tpu.memory_space<vmem>>) attributes {dimension_semantics = [#tpu.dimension_semantics<parallel>], iteration_bounds = array<i64: 2>, scalar_prefetch = 0 : i64, scratch_operands = 0 : i64, tpu.core_type = #tpu.core_type<tc>, window_params = [{pipeline_mode = #tpu.pipeline_mode<synchronous>, transform_indices = @transform_0, window_bounds = array<i64: 12, 27>}, {transform_indices = @transform_1, window_bounds = array<i64: 27, 768>}, {pipeline_mode = #tpu.pipeline_mode<synchronous>, transform_indices = @transform_2, window_bounds = array<i64: 12, 1>}, {transform_indices = @transform_3, window_bounds = array<i64: 12, 768>}]} {
    %c0 = arith.constant 0 : index
    %c0_0 = arith.constant 0 : index
    %0 = vector.load %arg1[%c0, %c0_0] : memref<12x27xbf16, #tpu.memory_space<vmem>>, vector<12x27xbf16>
    %c0_1 = arith.constant 0 : index
    %c0_2 = arith.constant 0 : index
    %1 = vector.load %arg2[%c0_1, %c0_2] : memref<27x768xbf16, #tpu.memory_space<vmem>>, vector<27x768xbf16>
    %cst = arith.constant dense<0.000000e+00> : vector<12x768xf32>
    %2 = tpu.matmul %0, %1, %cst {dimension_numbers = #tpu.dot_dimension_numbers<[1], [0], [0], [1], [0, 0, 1, 1], [], []>} : vector<12x27xbf16>, vector<27x768xbf16>, vector<12x768xf32> -> vector<12x768xf32>
    %c0_3 = arith.constant 0 : index
    %c0_4 = arith.constant 0 : index
    %3 = vector.load %arg3[%c0_3, %c0_4] : memref<12x1xf32, #tpu.memory_space<vmem>>, vector<12x1xf32>
    %4 = vector.broadcast %3 : vector<12x1xf32> to vector<12x768xf32>
    %5 = arith.addf %2, %4 : vector<12x768xf32>
    %c0_5 = arith.constant 0 : index
    %c0_6 = arith.constant 0 : index
    %6 = vector.load %arg4[%c0_5, %c0_6] : memref<12x768xf32, #tpu.memory_space<vmem>>, vector<12x768xf32>
    tpu.vector_store %arg4[%c0_5, %c0_6], %5 {strides = array<i32>} : memref<12x768xf32, #tpu.memory_space<vmem>>, vector<12x768xf32>,
    return
  }
  func.func @transform_0(%arg0: i32) -> (i32, i32) {
    %c0_i32 = arith.constant 0 : i32
    %c0_i32_0 = arith.constant 0 : i32
    %c0_i32_1 = arith.constant 0 : i32
    return %c0_i32, %c0_i32_0 : i32, i32
  }
  func.func @transform_1(%arg0: i32) -> (i32, i32) {
    %c0_i32 = arith.constant 0 : i32
    %c0_i32_0 = arith.constant 0 : i32
    return %c0_i32, %arg0 : i32, i32
  }
  func.func @transform_2(%arg0: i32) -> (i32, i32) {
    %c0_i32 = arith.constant 0 : i32
    %c0_i32_0 = arith.constant 0 : i32
    %c0_i32_1 = arith.constant 0 : i32
    return %c0_i32, %c0_i32_0 : i32, i32
  }
  func.func @transform_3(%arg0: i32) -> (i32, i32) {
    %c0_i32 = arith.constant 0 : i32
    %c0_i32_0 = arith.constant 0 : i32
    return %c0_i32, %arg0 : i32, i32
  }
}

module attributes {stable_mosaic.version = 11 : i64} {
  func.func @_mm_bias_kernel(%arg0: i32, %arg1: memref<12x27xbf16, #tpu.memory_space<vmem>>, %arg2: memref<27x2944xbf16, #tpu.memory_space<vmem>>, %arg3: memref<12x1xf32, #tpu.memory_space<vmem>>, %arg4: memref<12x2944xf32, #tpu.memory_space<vmem>>) attributes {dimension_semantics = [#tpu.dimension_semantics<parallel>], iteration_bounds = array<i64: 2>, scalar_prefetch = 0 : i64, scratch_operands = 0 : i64, tpu.core_type = #tpu.core_type<tc>, window_params = [{pipeline_mode = #tpu.pipeline_mode<synchronous>, transform_indices = @transform_0, window_bounds = array<i64: 12, 27>}, {transform_indices = @transform_1, window_bounds = array<i64: 27, 2944>}, {pipeline_mode = #tpu.pipeline_mode<synchronous>, transform_indices = @transform_2, window_bounds = array<i64: 12, 1>}, {transform_indices = @transform_3, window_bounds = array<i64: 12, 2944>}]} {
    %c0 = arith.constant 0 : index
    %c0_0 = arith.constant 0 : index
    %0 = vector.load %arg1[%c0, %c0_0] : memref<12x27xbf16, #tpu.memory_space<vmem>>, vector<12x27xbf16>
    %c0_1 = arith.constant 0 : index
    %c0_2 = arith.constant 0 : index
    %1 = vector.load %arg2[%c0_1, %c0_2] : memref<27x2944xbf16, #tpu.memory_space<vmem>>, vector<27x2944xbf16>
    %cst = arith.constant dense<0.000000e+00> : vector<12x2944xf32>
    %2 = tpu.matmul %0, %1, %cst {dimension_numbers = #tpu.dot_dimension_numbers<[1], [0], [0], [1], [0, 0, 1, 1], [], []>} : vector<12x27xbf16>, vector<27x2944xbf16>, vector<12x2944xf32> -> vector<12x2944xf32>
    %c0_3 = arith.constant 0 : index
    %c0_4 = arith.constant 0 : index
    %3 = vector.load %arg3[%c0_3, %c0_4] : memref<12x1xf32, #tpu.memory_space<vmem>>, vector<12x1xf32>
    %4 = vector.broadcast %3 : vector<12x1xf32> to vector<12x2944xf32>
    %5 = arith.addf %2, %4 : vector<12x2944xf32>
    %c0_5 = arith.constant 0 : index
    %c0_6 = arith.constant 0 : index
    %6 = vector.load %arg4[%c0_5, %c0_6] : memref<12x2944xf32, #tpu.memory_space<vmem>>, vector<12x2944xf32>
    tpu.vector_store %arg4[%c0_5, %c0_6], %5 {strides = array<i32>} : memref<12x2944xf32, #tpu.memory_space<vmem>>, vector<12x2944xf32>,
    return
  }
  func.func @transform_0(%arg0: i32) -> (i32, i32) {
    %c0_i32 = arith.constant 0 : i32
    %c0_i32_0 = arith.constant 0 : i32
    %c0_i32_1 = arith.constant 0 : i32
    return %c0_i32, %c0_i32_0 : i32, i32
  }
  func.func @transform_1(%arg0: i32) -> (i32, i32) {
    %c0_i32 = arith.constant 0 : i32
    %c0_i32_0 = arith.constant 0 : i32
    return %c0_i32, %arg0 : i32, i32
  }
  func.func @transform_2(%arg0: i32) -> (i32, i32) {
    %c0_i32 = arith.constant 0 : i32
    %c0_i32_0 = arith.constant 0 : i32
    %c0_i32_1 = arith.constant 0 : i32
    return %c0_i32, %c0_i32_0 : i32, i32
  }
  func.func @transform_3(%arg0: i32) -> (i32, i32) {
    %c0_i32 = arith.constant 0 : i32
    %c0_i32_0 = arith.constant 0 : i32
    return %c0_i32, %arg0 : i32, i32
  }
}

module attributes {stable_mosaic.version = 11 : i64} {
  func.func @_bilinear_kernel(%arg0: i32, %arg1: memref<3x108x108xf32, #tpu.memory_space<vmem>>, %arg2: memref<416x108xf32, #tpu.memory_space<vmem>>, %arg3: memref<108x416xf32, #tpu.memory_space<vmem>>, %arg4: memref<1248x416xf32, #tpu.memory_space<vmem>>) attributes {dimension_semantics = [#tpu.dimension_semantics<parallel>], iteration_bounds = array<i64: 2>, scalar_prefetch = 0 : i64, scratch_operands = 0 : i64, tpu.core_type = #tpu.core_type<tc>, window_params = [{transform_indices = @transform_0, window_bounds = array<i64: 3, 108, 108>}, {pipeline_mode = #tpu.pipeline_mode<synchronous>, transform_indices = @transform_1, window_bounds = array<i64: 416, 108>}, {pipeline_mode = #tpu.pipeline_mode<synchronous>, transform_indices = @transform_2, window_bounds = array<i64: 108, 416>}, {transform_indices = @transform_3, window_bounds = array<i64: 1248, 416>}]} {
    %c0 = arith.constant 0 : index
    %c0_0 = arith.constant 0 : index
    %0 = vector.load %arg2[%c0, %c0_0] : memref<416x108xf32, #tpu.memory_space<vmem>>, vector<416x108xf32>
    %c0_1 = arith.constant 0 : index
    %c0_2 = arith.constant 0 : index
    %c0_3 = arith.constant 0 : index
    %1 = vector.load %arg1[%c0_1, %c0_2, %c0_3] : memref<3x108x108xf32, #tpu.memory_space<vmem>>, vector<1x108x108xf32>
    %2 = vector.shape_cast %1 : vector<1x108x108xf32> to vector<108x108xf32>
    %cst = arith.constant dense<0.000000e+00> : vector<416x108xf32>
    %3 = tpu.matmul %0, %2, %cst {dimension_numbers = #tpu.dot_dimension_numbers<[1], [0], [0], [1], [0, 0, 1, 1], [], []>} : vector<416x108xf32>, vector<108x108xf32>, vector<416x108xf32> -> vector<416x108xf32>
    %c0_4 = arith.constant 0 : index
    %c0_5 = arith.constant 0 : index
    %4 = vector.load %arg2[%c0_4, %c0_5] : memref<416x108xf32, #tpu.memory_space<vmem>>, vector<416x108xf32>
    %c1 = arith.constant 1 : index
    %c0_6 = arith.constant 0 : index
    %c0_7 = arith.constant 0 : index
    %5 = vector.load %arg1[%c1, %c0_6, %c0_7] : memref<3x108x108xf32, #tpu.memory_space<vmem>>, vector<1x108x108xf32>
    %6 = vector.shape_cast %5 : vector<1x108x108xf32> to vector<108x108xf32>
    %cst_8 = arith.constant dense<0.000000e+00> : vector<416x108xf32>
    %7 = tpu.matmul %4, %6, %cst_8 {dimension_numbers = #tpu.dot_dimension_numbers<[1], [0], [0], [1], [0, 0, 1, 1], [], []>} : vector<416x108xf32>, vector<108x108xf32>, vector<416x108xf32> -> vector<416x108xf32>
    %c0_9 = arith.constant 0 : index
    %c0_10 = arith.constant 0 : index
    %8 = vector.load %arg2[%c0_9, %c0_10] : memref<416x108xf32, #tpu.memory_space<vmem>>, vector<416x108xf32>
    %c2 = arith.constant 2 : index
    %c0_11 = arith.constant 0 : index
    %c0_12 = arith.constant 0 : index
    %9 = vector.load %arg1[%c2, %c0_11, %c0_12] : memref<3x108x108xf32, #tpu.memory_space<vmem>>, vector<1x108x108xf32>
    %10 = vector.shape_cast %9 : vector<1x108x108xf32> to vector<108x108xf32>
    %cst_13 = arith.constant dense<0.000000e+00> : vector<416x108xf32>
    %11 = tpu.matmul %8, %10, %cst_13 {dimension_numbers = #tpu.dot_dimension_numbers<[1], [0], [0], [1], [0, 0, 1, 1], [], []>} : vector<416x108xf32>, vector<108x108xf32>, vector<416x108xf32> -> vector<416x108xf32>
    %12 = tpu.concatenate %3, %7, %11 in 0 : vector<416x108xf32>, vector<416x108xf32>, vector<416x108xf32> -> vector<1248x108xf32>
    %c0_14 = arith.constant 0 : index
    %c0_15 = arith.constant 0 : index
    %13 = vector.load %arg3[%c0_14, %c0_15] : memref<108x416xf32, #tpu.memory_space<vmem>>, vector<108x416xf32>
    %cst_16 = arith.constant dense<0.000000e+00> : vector<1248x416xf32>
    %14 = tpu.matmul %12, %13, %cst_16 {dimension_numbers = #tpu.dot_dimension_numbers<[1], [0], [0], [1], [0, 0, 1, 1], [], []>} : vector<1248x108xf32>, vector<108x416xf32>, vector<1248x416xf32> -> vector<1248x416xf32>
    %c0_17 = arith.constant 0 : index
    %c0_18 = arith.constant 0 : index
    %15 = vector.load %arg4[%c0_17, %c0_18] : memref<1248x416xf32, #tpu.memory_space<vmem>>, vector<1248x416xf32>
    tpu.vector_store %arg4[%c0_17, %c0_18], %14 {strides = array<i32>} : memref<1248x416xf32, #tpu.memory_space<vmem>>, vector<1248x416xf32>,
    return
  }
  func.func @transform_0(%arg0: i32) -> (i32, i32, i32) {
    %c0_i32 = arith.constant 0 : i32
    %c0_i32_0 = arith.constant 0 : i32
    %c0_i32_1 = arith.constant 0 : i32
    return %arg0, %c0_i32, %c0_i32_0 : i32, i32, i32
  }
  func.func @transform_1(%arg0: i32) -> (i32, i32) {
    %c0_i32 = arith.constant 0 : i32
    %c0_i32_0 = arith.constant 0 : i32
    %c0_i32_1 = arith.constant 0 : i32
    return %c0_i32, %c0_i32_0 : i32, i32
  }
  func.func @transform_2(%arg0: i32) -> (i32, i32) {
    %c0_i32 = arith.constant 0 : i32
    %c0_i32_0 = arith.constant 0 : i32
    %c0_i32_1 = arith.constant 0 : i32
    return %c0_i32, %c0_i32_0 : i32, i32
  }
  func.func @transform_3(%arg0: i32) -> (i32, i32) {
    %c0_i32 = arith.constant 0 : i32
    %c0_i32_0 = arith.constant 0 : i32
    return %arg0, %c0_i32 : i32, i32
  }
}

</mosaic_0001>

<llo_original>
// kernel: tile.38
$region0: #{tile.38}
  #allocation0 [shape = 's32[1]{0}', space=sflag, size = 0x4, scoped, tag = 'scoped memory for tile.38']
  %s0 = inlined_call_operand.vmem [shape: f32[3], index: 0, kind: input, shape index: {}]
  %s1 = inlined_call_operand.vmem [shape: f32[4,3], index: 1, kind: output, shape index: {}]
  // Predicated region
  $region2: #{tile.38} parent=0 // pred_check
    _
  $region3: #{tile.38} parent=0 // pred_check_branch
    %3 = sbr.rel (0) target = $region5
  $region4: #{tile.38} parent=0 // pred_region
    _
  $region5: #{tile.38} parent=0 // pred_fallthru
    _
  %v4 = vld [vmem:[%s0] ss:$0 sm:$0xff]
  %5 = vst [vmem:[%s1] sm:$0xf] %v4

// kernel: tile.0
$region0: #{tile.0}
  %s0 = inlined_call_operand.vmem [shape: f32[4,3], index: 0, kind: input, shape index: {}]
  %s1 = inlined_call_operand.vmem [shape: f32[12,1], index: 1, kind: output, shape index: {}]
  $region1: #{tile.0} parent=0
    #allocation0 [shape = 'u8[4096]{0}', space=vmem, size = 0x1000, scoped, tag = 'scoped mem for input reshape']
    %s3 = ssub.s32 16, 1
    %v4 = vld [vmem:[%s0] sm:%s3]
    %5 = vst [vmem:[#allocation0] sm:%s3] %v4
    %v6 = vld [vmem:[#allocation0] sm:$0xf]
    %vm7 = vcmask 7168
    %8 = vst.msk [vmem:[%s1] ss:$3 sm:$0xf] %vm7, %v6
    %v9 = vld [vmem:[#allocation0] sm:$0xf]
    %10 = vrot.lane.b32.xlu0 %v9, 127
    %v11 = vpop.permute.xlu0 %10
    %vm12 = vcmask 7168
    %s13 = scalar_lea.vmem %s1, 1
    %14 = vst.msk [vmem:[%s13] ss:$3 sm:$0xf] %vm12, %v11
    %v15 = vld [vmem:[#allocation0] sm:$0xf]
    %16 = vrot.lane.b32.xlu0 %v15, 126
    %v17 = vpop.permute.xlu0 %16
    %vm18 = vcmask 7168
    %s19 = scalar_lea.vmem %s1, 2
    %20 = vst.msk [vmem:[%s19] ss:$3 sm:$0xf] %vm18, %v17

// kernel: wiki_autoencoder2_forward.9
$region0: #{wiki_autoencoder2_forward.9}
  #allocation0 [shape = 'u32[]', space=smem, size = 0x4, offset = 0x4, fixed_abs, tag = 'smem constant byte address 0x4 - core index']
  #allocation1 [shape = 'u32[72,128]{1,0:T(1,128)}', space=vmem, size = 0x9000, scoped, tag = 'internal scratch']
  %s0 = inlined_call_operand.vmem [shape: bf16[3,75], index: 0, kind: input, shape index: {}]
  %s1 = inlined_call_operand.vmem [shape: bf16[75,4352], index: 1, kind: input, shape index: {}]
  %s2 = inlined_call_operand.vmem [shape: f32[3,1], index: 2, kind: input, shape index: {}]
  %s3 = inlined_call_operand.vmem [shape: f32[3,4352], index: 3, kind: output, shape index: {}]
  %s4 = sld [smem:[#allocation0]]
  $region71: #{wiki_autoencoder2_forward.9} parent=0
    _
  %s6 = ssub.s32 1, %s4
  %s7 = scalar_select 0, %s6, %s4
  $region1: #{wiki_autoencoder2_forward.9} parent=0
    #allocation2 [shape = 'u8[696320]{0}', space=vmem, size = 0xaa000, scoped, tag = 'input window, operand 1']
    loop: start=0, step=1, limit=4
    $region2: #{wiki_autoencoder2_forward.9} parent=1 // loop_pre_header
      _
    $region3: #{wiki_autoencoder2_forward.9} parent=1 // loop_header
      %s9 = sphi 0, %s13
      %p10 = scmp.ge.s32.totalorder %s9, 4
      %s17 = sphi 0, %s17
      %s19 = sphi 0, %s17
      %s20 = sphi 0, %s19
      %s34 = sphi 0, %s20
      %s40 = sphi 0, %s42
      %s43 = sphi 0, %s40
      %s44 = sphi 0, %s43
      %s60 = sphi 0, %s44
      %s64 = sphi 0, %s64
      %s66 = sphi 0, %s64
      %s67 = sphi 0, %s66
      %s81 = sphi 0, %s67
      %s87 = sphi 0, %s89
      %s90 = sphi 0, %s87
      %s91 = sphi 0, %s90
      %s107 = sphi 0, %s91
    $region4: #{wiki_autoencoder2_forward.9} parent=1 // loop_header_branch
      %12 = sbr.rel (%p10) target = $region8
    $region5: #{wiki_autoencoder2_forward.9} parent=1 // loop_body
      %s14 = ssub.s32 %s9, 1
      %s15 = ssub.s32 %s9, 2
      %s16 = sadd.s32 %s9, 1
      %s18 = sadd.s32 %s17, 1
      %p21 = scmp.eq.s32.totalorder %s9, 1
      %p22 = scmp.ne.s32.totalorder %s17, %s19
      %p23 = scmp.eq.s32.totalorder %s9, 0
      %p24 = por %p22, %p23
      %p25 = scmp.ne.s32.totalorder %s17, %s19
      %p26 = scmp.eq.s32.totalorder %s14, 1
      %p27 = por %p25, %p26
      %p28 = scmp.ne.s32.totalorder %s19, %s20
      %p29 = scmp.eq.s32.totalorder %s14, 0
      %p30 = por %p28, %p29
      %p31 = scmp.ne.s32.totalorder %s19, %s20
      %p32 = scmp.eq.s32.totalorder %s15, 1
      %p33 = por %p31, %p32
      %p35 = scmp.ne.s32.totalorder %s20, %s34
      %p36 = scmp.eq.s32.totalorder %s15, 0
      %p37 = por %p35, %p36
      %s38 = ssub.s32 %s9, %s16
      %p39 = scmp.eq.s32.totalorder %s38, 0
      %s41 = sadd.s32 %s40, 1
      %s42 = scalar_select %p39, %s40, %s41
      %p45 = pneg %p39
      %p46 = scmp.eq.s32.totalorder %s9, 1
      %p47 = por %p45, %p46
      %p48 = scmp.ne.s32.totalorder %s40, %s43
      %p49 = scmp.eq.s32.totalorder %s9, 0
      %p50 = por %p48, %p49
      %p51 = scmp.ne.s32.totalorder %s40, %s43
      %p52 = scmp.eq.s32.totalorder %s14, 1
      %p53 = por %p51, %p52
      %p54 = scmp.ne.s32.totalorder %s43, %s44
      %p55 = scmp.eq.s32.totalorder %s14, 0
      %p56 = por %p54, %p55
      %p57 = scmp.ne.s32.totalorder %s43, %s44
      %p58 = scmp.eq.s32.totalorder %s15, 1
      %p59 = por %p57, %p58
      %p61 = scmp.ne.s32.totalorder %s44, %s60
      %p62 = scmp.eq.s32.totalorder %s15, 0
      %p63 = por %p61, %p62
      %s65 = sadd.s32 %s64, 1
      %p68 = scmp.eq.s32.totalorder %s9, 1
      %p69 = scmp.ne.s32.totalorder %s64, %s66
      %p70 = scmp.eq.s32.totalorder %s9, 0
      %p71 = por %p69, %p70
      %p72 = scmp.ne.s32.totalorder %s64, %s66
      %p73 = scmp.eq.s32.totalorder %s14, 1
      %p74 = por %p72, %p73
      %p75 = scmp.ne.s32.totalorder %s66, %s67
      %p76 = scmp.eq.s32.totalorder %s14, 0
      %p77 = por %p75, %p76
      %p78 = scmp.ne.s32.totalorder %s66, %s67
      %p79 = scmp.eq.s32.totalorder %s15, 1
      %p80 = por %p78, %p79
      %p82 = scmp.ne.s32.totalorder %s67, %s81
      %p83 = scmp.eq.s32.totalorder %s15, 0
      %p84 = por %p82, %p83
      %s85 = ssub.s32 %s9, %s16
      %p86 = scmp.eq.s32.totalorder %s85, 0
      %s88 = sadd.s32 %s87, 1
      %s89 = scalar_select %p86, %s87, %s88
      %p92 = pneg %p86
      %p93 = scmp.eq.s32.totalorder %s9, 1
      %p94 = por %p92, %p93
      %p95 = scmp.ne.s32.totalorder %s87, %s90
      %p96 = scmp.eq.s32.totalorder %s9, 0
      %p97 = por %p95, %p96
      %p98 = scmp.ne.s32.totalorder %s87, %s90
      %p99 = scmp.eq.s32.totalorder %s14, 1
      %p100 = por %p98, %p99
      %p101 = scmp.ne.s32.totalorder %s90, %s91
      %p102 = scmp.eq.s32.totalorder %s14, 0
      %p103 = por %p101, %p102
      %p104 = scmp.ne.s32.totalorder %s90, %s91
      %p105 = scmp.eq.s32.totalorder %s15, 1
      %p106 = por %p104, %p105
      %p108 = scmp.ne.s32.totalorder %s91, %s107
      %p109 = scmp.eq.s32.totalorder %s15, 0
      %p110 = por %p108, %p109
      %p111 = scmp.le.s32.totalorder 1, %s9
      %p112 = scmp.lt.s32.totalorder %s9, 3
      %p113 = pnand %p111, %p112
      %p114 = pneg %p113
      // Predicated region
      $region9: #{wiki_autoencoder2_forward.9} parent=5 // pred_check
        _
      $region10: #{wiki_autoencoder2_forward.9} parent=5 // pred_check_branch
        %116 = sbr.rel (%p113) target = $region12
      $region11: #{wiki_autoencoder2_forward.9} parent=5 // pred_region
        %s117 = ssub.s32 %s9, 1
        // Predicated region
        $region13: #{wiki_autoencoder2_forward.9} parent=11 // pred_check
          %p118 = pneg %p30
        $region14: #{wiki_autoencoder2_forward.9} parent=11 // pred_check_branch
          %120 = sbr.rel (%p118) target = $region16
        $region15: #{wiki_autoencoder2_forward.9} parent=11 // pred_region
          _
        $region16: #{wiki_autoencoder2_forward.9} parent=11 // pred_fallthru
          _
        // Predicated region
        $region17: #{wiki_autoencoder2_forward.9} parent=11 // pred_check
          %p121 = pneg %p77
        $region18: #{wiki_autoencoder2_forward.9} parent=11 // pred_check_branch
          %123 = sbr.rel (%p121) target = $region20
        $region19: #{wiki_autoencoder2_forward.9} parent=11 // pred_region
          _
        $region20: #{wiki_autoencoder2_forward.9} parent=11 // pred_fallthru
          _
      $region12: #{wiki_autoencoder2_forward.9} parent=5 // pred_fallthru
        _
      %p124 = scmp.lt.s32.totalorder %s9, 2
      // Predicated region
      $region21: #{wiki_autoencoder2_forward.9} parent=5 // pred_check
        %p125 = pneg %p124
      $region22: #{wiki_autoencoder2_forward.9} parent=5 // pred_check_branch
        %127 = sbr.rel (%p125) target = $region24
      $region23: #{wiki_autoencoder2_forward.9} parent=5 // pred_region
        // Predicated region
        $region25: #{wiki_autoencoder2_forward.9} parent=23 // pred_check
          %p128 = pneg %p50
        $region26: #{wiki_autoencoder2_forward.9} parent=23 // pred_check_branch
          %130 = sbr.rel (%p128) target = $region28
        $region27: #{wiki_autoencoder2_forward.9} parent=23 // pred_region
          %s131 = sand.u32 %s40, 1
          %s132 = sand.u32 %s40, 1
          %s133 = smul.addr %s132, 680
          %s134 = scalar_lea.vmem [#allocation2], %s133
          %s135 = smul.u32 17, %s9
          %s136 = smul.addr %s135, 4
          %s137 = scalar_lea.vmem %s1, %s136
          // Predicated region
          $region29: #{wiki_autoencoder2_forward.9} parent=27 // pred_check
            _
          $region30: #{wiki_autoencoder2_forward.9} parent=27 // pred_check_branch
            %139 = sbr.rel (0) target = $region32
          $region31: #{wiki_autoencoder2_forward.9} parent=27 // pred_region
            // Predicated region
            $region33: #{wiki_autoencoder2_forward.9} parent=31 // pred_check
              _
            $region34: #{wiki_autoencoder2_forward.9} parent=31 // pred_check_branch
              %141 = sbr.rel (0) target = $region36
            $region35: #{wiki_autoencoder2_forward.9} parent=31 // pred_region
              %s142 = scalar_lea.vmem %s137, 64
              %s143 = scalar_lea.vmem %s134, 64 [#allocation2]
              loop: start=0, step=1, limit=1
              $region37: #{wiki_autoencoder2_forward.9} parent=35 // loop_pre_header
                _
              $region38: #{wiki_autoencoder2_forward.9} parent=35 // loop_header
                %s145 = sphi 0, %s149
                %p146 = scmp.ge.s32.totalorder %s145, 1
                %s150 = sphi %s137, %s137
                %s151 = sphi %s134, %s134
              $region39: #{wiki_autoencoder2_forward.9} parent=35 // loop_header_branch
                %148 = sbr.rel (%p146) target = $region43
              $region40: #{wiki_autoencoder2_forward.9} parent=35 // loop_body
                %v152 = vld [vmem:[%s150] sm:$0xff]
                %153 = vst [vmem:[%s151] sm:$0xff] %v152
                %v154 = vld [vmem:[%s150 + $0x8] sm:$0xff]
                %155 = vst [vmem:[%s151 + $0x8] sm:$0xff] %v154
                %v156 = vld [vmem:[%s150 + $0x10] sm:$0xff]
                %157 = vst [vmem:[%s151 + $0x10] sm:$0xff] %v156
                %v158 = vld [vmem:[%s150 + $0x18] sm:$0xff]
                %159 = vst [vmem:[%s151 + $0x18] sm:$0xff] %v158
                %v160 = vld [vmem:[%s150 + $0x20] sm:$0xff]
                %161 = vst [vmem:[%s151 + $0x20] sm:$0xff] %v160
                %v162 = vld [vmem:[%s150 + $0x28] sm:$0xff]
                %163 = vst [vmem:[%s151 + $0x28] sm:$0xff] %v162
                %v164 = vld [vmem:[%s150 + $0x30] sm:$0xff]
                %165 = vst [vmem:[%s151 + $0x30] sm:$0xff] %v164
                %v166 = vld [vmem:[%s150 + $0x38] sm:$0xff]
                %167 = vst [vmem:[%s151 + $0x38] sm:$0xff] %v166
                %v168 = vld [vmem:[%s150 + $0x88] sm:$0xff]
                %169 = vst [vmem:[%s151 + $0x44] sm:$0xff] %v168
                %v170 = vld [vmem:[%s150 + $0x90] sm:$0xff]
                %171 = vst [vmem:[%s151 + $0x4c] sm:$0xff] %v170
                %v172 = vld [vmem:[%s150 + $0x98] sm:$0xff]
                %173 = vst [vmem:[%s151 + $0x54] sm:$0xff] %v172
                %v174 = vld [vmem:[%s150 + $0xa0] sm:$0xff]
                %175 = vst [vmem:[%s151 + $0x5c] sm:$0xff] %v174
                %v176 = vld [vmem:[%s150 + $0xa8] sm:$0xff]
                %177 = vst [vmem:[%s151 + $0x64] sm:$0xff] %v176
                %v178 = vld [vmem:[%s150 + $0xb0] sm:$0xff]
                %179 = vst [vmem:[%s151 + $0x6c] sm:$0xff] %v178
                %v180 = vld [vmem:[%s150 + $0xb8] sm:$0xff]
                %181 = vst [vmem:[%s151 + $0x74] sm:$0xff] %v180
                %v182 = vld [vmem:[%s150 + $0xc0] sm:$0xff]
                %183 = vst [vmem:[%s151 + $0x7c] sm:$0xff] %v182
                %v184 = vld [vmem:[%s150 + $0x110] sm:$0xff]
                %185 = vst [vmem:[%s151 + $0x88] sm:$0xff] %v184
                %v186 = vld [vmem:[%s150 + $0x118] sm:$0xff]
                %187 = vst [vmem:[%s151 + $0x90] sm:$0xff] %v186
                %v188 = vld [vmem:[%s150 + $0x120] sm:$0xff]
                %189 = vst [vmem:[%s151 + $0x98] sm:$0xff] %v188
                %v190 = vld [vmem:[%s150 + $0x128] sm:$0xff]
                %191 = vst [vmem:[%s151 + $0xa0] sm:$0xff] %v190
                %v192 = vld [vmem:[%s150 + $0x130] sm:$0xff]
                %193 = vst [vmem:[%s151 + $0xa8] sm:$0xff] %v192
                %v194 = vld [vmem:[%s150 + $0x138] sm:$0xff]
                %195 = vst [vmem:[%s151 + $0xb0] sm:$0xff] %v194
                %v196 = vld [vmem:[%s150 + $0x140] sm:$0xff]
                %197 = vst [vmem:[%s151 + $0xb8] sm:$0xff] %v196
                %v198 = vld [vmem:[%s150 + $0x148] sm:$0xff]
                %199 = vst [vmem:[%s151 + $0xc0] sm:$0xff] %v198
                %v200 = vld [vmem:[%s150 + $0x198] sm:$0xff]
                %201 = vst [vmem:[%s151 + $0xcc] sm:$0xff] %v200
                %v202 = vld [vmem:[%s150 + $0x1a0] sm:$0xff]
                %203 = vst [vmem:[%s151 + $0xd4] sm:$0xff] %v202
                %v204 = vld [vmem:[%s150 + $0x1a8] sm:$0xff]
                %205 = vst [vmem:[%s151 + $0xdc] sm:$0xff] %v204
                %v206 = vld [vmem:[%s150 + $0x1b0] sm:$0xff]
                %207 = vst [vmem:[%s151 + $0xe4] sm:$0xff] %v206
                %v208 = vld [vmem:[%s150 + $0x1b8] sm:$0xff]
                %209 = vst [vmem:[%s151 + $0xec] sm:$0xff] %v208
                %v210 = vld [vmem:[%s150 + $0x1c0] sm:$0xff]
                %211 = vst [vmem:[%s151 + $0xf4] sm:$0xff] %v210
                %v212 = vld [vmem:[%s150 + $0x1c8] sm:$0xff]
                %213 = vst [vmem:[%s151 + $0xfc] sm:$0xff] %v212
                %v214 = vld [vmem:[%s150 + $0x1d0] sm:$0xff]
                %215 = vst [vmem:[%s151 + $0x104] sm:$0xff] %v214
                %v216 = vld [vmem:[%s150 + $0x220] sm:$0xff]
                %217 = vst [vmem:[%s151 + $0x110] sm:$0xff] %v216
                %v218 = vld [vmem:[%s150 + $0x228] sm:$0xff]
                %219 = vst [vmem:[%s151 + $0x118] sm:$0xff] %v218
                %v220 = vld [vmem:[%s150 + $0x230] sm:$0xff]
                %221 = vst [vmem:[%s151 + $0x120] sm:$0xff] %v220
                %v222 = vld [vmem:[%s150 + $0x238] sm:$0xff]
                %223 = vst [vmem:[%s151 + $0x128] sm:$0xff] %v222
                %v224 = vld [vmem:[%s150 + $0x240] sm:$0xff]
                %225 = vst [vmem:[%s151 + $0x130] sm:$0xff] %v224
                %v226 = vld [vmem:[%s150 + $0x248] sm:$0xff]
                %227 = vst [vmem:[%s151 + $0x138] sm:$0xff] %v226
                %v228 = vld [vmem:[%s150 + $0x250] sm:$0xff]
                %229 = vst [vmem:[%s151 + $0x140] sm:$0xff] %v228
                %v230 = vld [vmem:[%s150 + $0x258] sm:$0xff]
                %231 = vst [vmem:[%s151 + $0x148] sm:$0xff] %v230
                %v232 = vld [vmem:[%s150 + $0x2a8] sm:$0xff]
                %233 = vst [vmem:[%s151 + $0x154] sm:$0xff] %v232
                %v234 = vld [vmem:[%s150 + $0x2b0] sm:$0xff]
                %235 = vst [vmem:[%s151 + $0x15c] sm:$0xff] %v234
                %v236 = vld [vmem:[%s150 + $0x2b8] sm:$0xff]
                %237 = vst [vmem:[%s151 + $0x164] sm:$0xff] %v236
                %v238 = vld [vmem:[%s150 + $0x2c0] sm:$0xff]
                %239 = vst [vmem:[%s151 + $0x16c] sm:$0xff] %v238
                %v240 = vld [vmem:[%s150 + $0x2c8] sm:$0xff]
                %241 = vst [vmem:[%s151 + $0x174] sm:$0xff] %v240
                %v242 = vld [vmem:[%s150 + $0x2d0] sm:$0xff]
                %243 = vst [vmem:[%s151 + $0x17c] sm:$0xff] %v242
                %v244 = vld [vmem:[%s150 + $0x2d8] sm:$0xff]
                %245 = vst [vmem:[%s151 + $0x184] sm:$0xff] %v244
                %v246 = vld [vmem:[%s150 + $0x2e0] sm:$0xff]
                %247 = vst [vmem:[%s151 + $0x18c] sm:$0xff] %v246
                %v248 = vld [vmem:[%s150 + $0x330] sm:$0xff]
                %249 = vst [vmem:[%s151 + $0x198] sm:$0xff] %v248
                %v250 = vld [vmem:[%s150 + $0x338] sm:$0xff]
                %251 = vst [vmem:[%s151 + $0x1a0] sm:$0xff] %v250
                %v252 = vld [vmem:[%s150 + $0x340] sm:$0xff]
                %253 = vst [vmem:[%s151 + $0x1a8] sm:$0xff] %v252
                %v254 = vld [vmem:[%s150 + $0x348] sm:$0xff]
                %255 = vst [vmem:[%s151 + $0x1b0] sm:$0xff] %v254
                %v256 = vld [vmem:[%s150 + $0x350] sm:$0xff]
                %257 = vst [vmem:[%s151 + $0x1b8] sm:$0xff] %v256
                %v258 = vld [vmem:[%s150 + $0x358] sm:$0xff]
                %259 = vst [vmem:[%s151 + $0x1c0] sm:$0xff] %v258
                %v260 = vld [vmem:[%s150 + $0x360] sm:$0xff]
                %261 = vst [vmem:[%s151 + $0x1c8] sm:$0xff] %v260
                %v262 = vld [vmem:[%s150 + $0x368] sm:$0xff]
                %263 = vst [vmem:[%s151 + $0x1d0] sm:$0xff] %v262
                %v264 = vld [vmem:[%s150 + $0x3b8] sm:$0xff]
                %265 = vst [vmem:[%s151 + $0x1dc] sm:$0xff] %v264
                %v266 = vld [vmem:[%s150 + $0x3c0] sm:$0xff]
                %267 = vst [vmem:[%s151 + $0x1e4] sm:$0xff] %v266
                %v268 = vld [vmem:[%s150 + $0x3c8] sm:$0xff]
                %269 = vst [vmem:[%s151 + $0x1ec] sm:$0xff] %v268
                %v270 = vld [vmem:[%s150 + $0x3d0] sm:$0xff]
                %271 = vst [vmem:[%s151 + $0x1f4] sm:$0xff] %v270
                %v272 = vld [vmem:[%s150 + $0x3d8] sm:$0xff]
                %273 = vst [vmem:[%s151 + $0x1fc] sm:$0xff] %v272
                %v274 = vld [vmem:[%s150 + $0x3e0] sm:$0xff]
                %275 = vst [vmem:[%s151 + $0x204] sm:$0xff] %v274
                %v276 = vld [vmem:[%s150 + $0x3e8] sm:$0xff]
                %277 = vst [vmem:[%s151 + $0x20c] sm:$0xff] %v276
                %v278 = vld [vmem:[%s150 + $0x3f0] sm:$0xff]
                %279 = vst [vmem:[%s151 + $0x214] sm:$0xff] %v278
                %v280 = vld [vmem:[%s150 + $0x440] sm:$0xff]
                %281 = vst [vmem:[%s151 + $0x220] sm:$0xff] %v280
                %v282 = vld [vmem:[%s150 + $0x448] sm:$0xff]
                %283 = vst [vmem:[%s151 + $0x228] sm:$0xff] %v282
                %v284 = vld [vmem:[%s150 + $0x450] sm:$0xff]
                %285 = vst [vmem:[%s151 + $0x230] sm:$0xff] %v284
                %v286 = vld [vmem:[%s150 + $0x458] sm:$0xff]
                %287 = vst [vmem:[%s151 + $0x238] sm:$0xff] %v286
                %v288 = vld [vmem:[%s150 + $0x460] sm:$0xff]
                %289 = vst [vmem:[%s151 + $0x240] sm:$0xff] %v288
                %v290 = vld [vmem:[%s150 + $0x468] sm:$0xff]
                %291 = vst [vmem:[%s151 + $0x248] sm:$0xff] %v290
                %v292 = vld [vmem:[%s150 + $0x470] sm:$0xff]
                %293 = vst [vmem:[%s151 + $0x250] sm:$0xff] %v292
                %v294 = vld [vmem:[%s150 + $0x478] sm:$0xff]
                %295 = vst [vmem:[%s151 + $0x258] sm:$0xff] %v294
                %v296 = vld [vmem:[%s150 + $0x4c8] sm:$0xff]
                %297 = vst [vmem:[%s151 + $0x264] sm:$0xff] %v296
                %v298 = vld [vmem:[%s150 + $0x4d0] sm:$0xff]
                %299 = vst [vmem:[%s151 + $0x26c] sm:$0xff] %v298
                %v300 = vld [vmem:[%s150 + $0x4d8] sm:$0xff]
                %301 = vst [vmem:[%s151 + $0x274] sm:$0xff] %v300
                %v302 = vld [vmem:[%s150 + $0x4e0] sm:$0xff]
                %303 = vst [vmem:[%s151 + $0x27c] sm:$0xff] %v302
                %v304 = vld [vmem:[%s150 + $0x4e8] sm:$0xff]
                %305 = vst [vmem:[%s151 + $0x284] sm:$0xff] %v304
                %v306 = vld [vmem:[%s150 + $0x4f0] sm:$0xff]
                %307 = vst [vmem:[%s151 + $0x28c] sm:$0xff] %v306
                %v308 = vld [vmem:[%s150 + $0x4f8] sm:$0xff]
                %309 = vst [vmem:[%s151 + $0x294] sm:$0xff] %v308
                %v310 = vld [vmem:[%s150 + $0x500] sm:$0xff]
                %311 = vst [vmem:[%s151 + $0x29c] sm:$0xff] %v310
              $region41: #{wiki_autoencoder2_forward.9} parent=35 // loop_footer
                %s149 = sadd.s32 1, %s145
              $region42: #{wiki_autoencoder2_forward.9} parent=35 // loop_footer_branch
                %144 = sbr.rel target = $region38
              $region43: #{wiki_autoencoder2_forward.9} parent=35 // loop_exit
                _
              %s313 = ssub.s32 16, 1
              loop: start=0, step=1, limit=1
              $region44: #{wiki_autoencoder2_forward.9} parent=35 // loop_pre_header
                _
              $region45: #{wiki_autoencoder2_forward.9} parent=35 // loop_header
                %s315 = sphi 0, %s319
                %p316 = scmp.ge.s32.totalorder %s315, 1
                %s320 = sphi %s142, %s142
                %s321 = sphi %s143, %s143
              $region46: #{wiki_autoencoder2_forward.9} parent=35 // loop_header_branch
                %318 = sbr.rel (%p316) target = $region50
              $region47: #{wiki_autoencoder2_forward.9} parent=35 // loop_body
                %v322 = vld [vmem:[%s320] sm:%s313]
                %323 = vst [vmem:[%s321] sm:%s313] %v322
                %v324 = vld [vmem:[%s320 + $0x88] sm:%s313]
                %325 = vst [vmem:[%s321 + $0x44] sm:%s313] %v324
                %v326 = vld [vmem:[%s320 + $0x110] sm:%s313]
                %327 = vst [vmem:[%s321 + $0x88] sm:%s313] %v326
                %v328 = vld [vmem:[%s320 + $0x198] sm:%s313]
                %329 = vst [vmem:[%s321 + $0xcc] sm:%s313] %v328
                %v330 = vld [vmem:[%s320 + $0x220] sm:%s313]
                %331 = vst [vmem:[%s321 + $0x110] sm:%s313] %v330
                %v332 = vld [vmem:[%s320 + $0x2a8] sm:%s313]
                %333 = vst [vmem:[%s321 + $0x154] sm:%s313] %v332
                %v334 = vld [vmem:[%s320 + $0x330] sm:%s313]
                %335 = vst [vmem:[%s321 + $0x198] sm:%s313] %v334
                %v336 = vld [vmem:[%s320 + $0x3b8] sm:%s313]
                %337 = vst [vmem:[%s321 + $0x1dc] sm:%s313] %v336
                %v338 = vld [vmem:[%s320 + $0x440] sm:%s313]
                %339 = vst [vmem:[%s321 + $0x220] sm:%s313] %v338
                %v340 = vld [vmem:[%s320 + $0x4c8] sm:%s313]
                %341 = vst [vmem:[%s321 + $0x264] sm:%s313] %v340
              $region48: #{wiki_autoencoder2_forward.9} parent=35 // loop_footer
                %s319 = sadd.s32 1, %s315
              $region49: #{wiki_autoencoder2_forward.9} parent=35 // loop_footer_branch
                %314 = sbr.rel target = $region45
              $region50: #{wiki_autoencoder2_forward.9} parent=35 // loop_exit
                _
            $region36: #{wiki_autoencoder2_forward.9} parent=31 // pred_fallthru
              _
          $region32: #{wiki_autoencoder2_forward.9} parent=27 // pred_fallthru
            _
          %342 = vnop
        $region28: #{wiki_autoencoder2_forward.9} parent=23 // pred_fallthru
          _
      $region24: #{wiki_autoencoder2_forward.9} parent=5 // pred_fallthru
        _
      %p343 = scmp.le.s32.totalorder 1, %s9
      %p344 = scmp.lt.s32.totalorder %s9, 3
      %p345 = pnand %p343, %p344
      %p346 = pneg %p345
      // Predicated region
      $region51: #{wiki_autoencoder2_forward.9} parent=5 // pred_check
        _
      $region52: #{wiki_autoencoder2_forward.9} parent=5 // pred_check_branch
        %348 = sbr.rel (%p345) target = $region54
      $region53: #{wiki_autoencoder2_forward.9} parent=5 // pred_region
        %s349 = ssub.s32 %s9, 1
        %s350 = sand.u32 %s43, 1
        %s351 = sand.u32 %s43, 1
        %s352 = smul.addr %s351, 680
        %s353 = scalar_lea.vmem [#allocation2], %s352
        // Predicated region
        $region55: #{wiki_autoencoder2_forward.9} parent=53 // pred_check
          %p354 = pneg %p56
        $region56: #{wiki_autoencoder2_forward.9} parent=53 // pred_check_branch
          %356 = sbr.rel (%p354) target = $region58
        $region57: #{wiki_autoencoder2_forward.9} parent=53 // pred_region
          _
        $region58: #{wiki_autoencoder2_forward.9} parent=53 // pred_fallthru
          _
        %p357 = pneg %p30
        %p358 = pneg %p27
        %s359 = sand.u32 %s43, 1
        %s360 = sand.u32 %s43, 1
        %s361 = smul.addr %s360, 680
        %s362 = scalar_lea.vmem [#allocation2], %s361
        %p363 = pneg %p56
        %p364 = pneg %p53
        %p365 = pneg %p77
        %p366 = pneg %p74
        %p367 = pneg %p103
        %p368 = pneg %p100
        %s369 = smul.u32 17, %s14
        %p370 = scmp.lt.s32.totalorder %s369, 33
        %s371 = scalar_select %p370, %s369, 33
        %s372 = smul.addr %s371, 4
        %s373 = scalar_lea.vmem %s3, %s372
        %s374 = smul.u32 17, %s14
        %s375 = smul.u32 17, %s14
        %p376 = scmp.lt.s32.totalorder %s375, 33
        %s377 = scalar_select %p376, %s375, 33
        %s378 = smul.addr %s377, 4
        %s379 = scalar_lea.vmem %s3, %s378
        %s380 = smul.u32 17, %s14
        %v382 = vld [vmem:[%s0] sm:$0x3]
        %v383 = vld [vmem:[%s353] sm:$0xff]
        %v384 = vld [vmem:[%s353 + $0x8] sm:$0xff]
        %v385 = vld [vmem:[%s353 + $0x10] sm:$0xff]
        %v386 = vld [vmem:[%s353 + $0x18] sm:$0xff]
        %v387 = vld [vmem:[%s353 + $0x20] sm:$0xff]
        %v388 = vld [vmem:[%s353 + $0x28] sm:$0xff]
        %v389 = vld [vmem:[%s353 + $0x30] sm:$0xff]
        %v390 = vld [vmem:[%s353 + $0x38] sm:$0xff]
        %v391 = vld [vmem:[%s353 + $0x40] sm:$0xf]
        %v392 = vld [vmem:[%s353 + $0x44] sm:$0xff]
        %v393 = vld [vmem:[%s353 + $0x4c] sm:$0xff]
        %v394 = vld [vmem:[%s353 + $0x54] sm:$0xff]
        %v395 = vld [vmem:[%s353 + $0x5c] sm:$0xff]
        %v396 = vld [vmem:[%s353 + $0x64] sm:$0xff]
        %v397 = vld [vmem:[%s353 + $0x6c] sm:$0xff]
        %v398 = vld [vmem:[%s353 + $0x74] sm:$0xff]
        %v399 = vld [vmem:[%s353 + $0x7c] sm:$0xff]
        %v400 = vld [vmem:[%s353 + $0x84] sm:$0xf]
        %v401 = vld [vmem:[%s353 + $0x88] sm:$0xff]
        %v402 = vld [vmem:[%s353 + $0x90] sm:$0xff]
        %v403 = vld [vmem:[%s353 + $0x98] sm:$0xff]
        %v404 = vld [vmem:[%s353 + $0xa0] sm:$0xff]
        %v405 = vld [vmem:[%s353 + $0xa8] sm:$0xff]
        %v406 = vld [vmem:[%s353 + $0xb0] sm:$0xff]
        %v407 = vld [vmem:[%s353 + $0xb8] sm:$0xff]
        %v408 = vld [vmem:[%s353 + $0xc0] sm:$0xff]
        %v409 = vld [vmem:[%s353 + $0xc8] sm:$0xf]
        %v410 = vld [vmem:[%s353 + $0xcc] sm:$0xff]
        %v411 = vld [vmem:[%s353 + $0xd4] sm:$0xff]
        %v412 = vld [vmem:[%s353 + $0xdc] sm:$0xff]
        %v413 = vld [vmem:[%s353 + $0xe4] sm:$0xff]
        %v414 = vld [vmem:[%s353 + $0xec] sm:$0xff]
        %v415 = vld [vmem:[%s353 + $0xf4] sm:$0xff]
        %v416 = vld [vmem:[%s353 + $0xfc] sm:$0xff]
        %v417 = vld [vmem:[%s353 + $0x104] sm:$0xff]
        %v418 = vld [vmem:[%s353 + $0x10c] sm:$0xf]
        %v419 = vld [vmem:[%s353 + $0x110] sm:$0xff]
        %v420 = vld [vmem:[%s353 + $0x118] sm:$0xff]
        %v421 = vld [vmem:[%s353 + $0x120] sm:$0xff]
        %v422 = vld [vmem:[%s353 + $0x128] sm:$0xff]
        %v423 = vld [vmem:[%s353 + $0x130] sm:$0xff]
        %v424 = vld [vmem:[%s353 + $0x138] sm:$0xff]
        %v425 = vld [vmem:[%s353 + $0x140] sm:$0xff]
        %v426 = vld [vmem:[%s353 + $0x148] sm:$0xff]
        %v427 = vld [vmem:[%s353 + $0x150] sm:$0xf]
        %v428 = vld [vmem:[%s353 + $0x154] sm:$0xff]
        %v429 = vld [vmem:[%s353 + $0x15c] sm:$0xff]
        %v430 = vld [vmem:[%s353 + $0x164] sm:$0xff]
        %v431 = vld [vmem:[%s353 + $0x16c] sm:$0xff]
        %v432 = vld [vmem:[%s353 + $0x174] sm:$0xff]
        %v433 = vld [vmem:[%s353 + $0x17c] sm:$0xff]
        %v434 = vld [vmem:[%s353 + $0x184] sm:$0xff]
        %v435 = vld [vmem:[%s353 + $0x18c] sm:$0xff]
        %v436 = vld [vmem:[%s353 + $0x194] sm:$0xf]
        %v437 = vld [vmem:[%s353 + $0x198] sm:$0xff]
        %v438 = vld [vmem:[%s353 + $0x1a0] sm:$0xff]
        %v439 = vld [vmem:[%s353 + $0x1a8] sm:$0xff]
        %v440 = vld [vmem:[%s353 + $0x1b0] sm:$0xff]
        %v441 = vld [vmem:[%s353 + $0x1b8] sm:$0xff]
        %v442 = vld [vmem:[%s353 + $0x1c0] sm:$0xff]
        %v443 = vld [vmem:[%s353 + $0x1c8] sm:$0xff]
        %v444 = vld [vmem:[%s353 + $0x1d0] sm:$0xff]
        %v445 = vld [vmem:[%s353 + $0x1d8] sm:$0xf]
        %v446 = vld [vmem:[%s353 + $0x1dc] sm:$0xff]
        %v447 = vld [vmem:[%s353 + $0x1e4] sm:$0xff]
        %v448 = vld [vmem:[%s353 + $0x1ec] sm:$0xff]
        %v449 = vld [vmem:[%s353 + $0x1f4] sm:$0xff]
        %v450 = vld [vmem:[%s353 + $0x1fc] sm:$0xff]
        %v451 = vld [vmem:[%s353 + $0x204] sm:$0xff]
        %v452 = vld [vmem:[%s353 + $0x20c] sm:$0xff]
        %v453 = vld [vmem:[%s353 + $0x214] sm:$0xff]
        %v454 = vld [vmem:[%s353 + $0x21c] sm:$0xf]
        %v455 = vld [vmem:[%s353 + $0x220] sm:$0xff]
        %v456 = vld [vmem:[%s353 + $0x228] sm:$0xff]
        %v457 = vld [vmem:[%s353 + $0x230] sm:$0xff]
        %v458 = vld [vmem:[%s353 + $0x238] sm:$0xff]
        %v459 = vld [vmem:[%s353 + $0x240] sm:$0xff]
        %v460 = vld [vmem:[%s353 + $0x248] sm:$0xff]
        %v461 = vld [vmem:[%s353 + $0x250] sm:$0xff]
        %v462 = vld [vmem:[%s353 + $0x258] sm:$0xff]
        %v463 = vld [vmem:[%s353 + $0x260] sm:$0xf]
        %v464 = vld [vmem:[%s353 + $0x264] sm:$0x33]
        %v465 = vld [vmem:[%s353 + $0x26c] sm:$0x33]
        %v466 = vld [vmem:[%s353 + $0x274] sm:$0x33]
        %v467 = vld [vmem:[%s353 + $0x27c] sm:$0x33]
        %v468 = vld [vmem:[%s353 + $0x284] sm:$0x33]
        %v469 = vld [vmem:[%s353 + $0x28c] sm:$0x33]
        %v470 = vld [vmem:[%s353 + $0x294] sm:$0x33]
        %v471 = vld [vmem:[%s353 + $0x29c] sm:$0x33]
        %v472 = vld [vmem:[%s353 + $0x2a4] sm:$0x3]
        %v473 = vld [vmem:[%s2] sm:$0x7]
        %475 = vset.pattern.permute.xlu0 0
        %476 = vperm.xlu0 %475, %v473
        %v477 = vpop.permute.xlu0 %476
        %v569 = vunpack.c.l.b16 %v383
        %v570 = vunpack.c.h.b16 %v383
        %v571 = vunpack.c.l.b16 %v384
        %v572 = vunpack.c.h.b16 %v384
        %v573 = vunpack.c.l.b16 %v385
        %v574 = vunpack.c.h.b16 %v385
        %v575 = vunpack.c.l.b16 %v386
        %v576 = vunpack.c.h.b16 %v386
        %v577 = vunpack.c.l.b16 %v387
        %v578 = vunpack.c.h.b16 %v387
        %v579 = vunpack.c.l.b16 %v388
        %v580 = vunpack.c.h.b16 %v388
        %v581 = vunpack.c.l.b16 %v389
        %v582 = vunpack.c.h.b16 %v389
        %v583 = vunpack.c.l.b16 %v390
        %v584 = vunpack.c.h.b16 %v390
        %v585 = vunpack.c.l.b16 %v391
        %v586 = vunpack.c.l.b16 %v392
        %v587 = vunpack.c.h.b16 %v392
        %v588 = vunpack.c.l.b16 %v393
        %v589 = vunpack.c.h.b16 %v393
        %v590 = vunpack.c.l.b16 %v394
        %v591 = vunpack.c.h.b16 %v394
        %v592 = vunpack.c.l.b16 %v395
        %v593 = vunpack.c.h.b16 %v395
        %v594 = vunpack.c.l.b16 %v396
        %v595 = vunpack.c.h.b16 %v396
        %v596 = vunpack.c.l.b16 %v397
        %v597 = vunpack.c.h.b16 %v397
        %v598 = vunpack.c.l.b16 %v398
        %v599 = vunpack.c.h.b16 %v398
        %v600 = vunpack.c.l.b16 %v399
        %v601 = vunpack.c.h.b16 %v399
        %v602 = vunpack.c.l.b16 %v400
        %v603 = vunpack.c.l.b16 %v401
        %v604 = vunpack.c.h.b16 %v401
        %v605 = vunpack.c.l.b16 %v402
        %v606 = vunpack.c.h.b16 %v402
        %v607 = vunpack.c.l.b16 %v403
        %v608 = vunpack.c.h.b16 %v403
        %v609 = vunpack.c.l.b16 %v404
        %v610 = vunpack.c.h.b16 %v404
        %v611 = vunpack.c.l.b16 %v405
        %v612 = vunpack.c.h.b16 %v405
        %v613 = vunpack.c.l.b16 %v406
        %v614 = vunpack.c.h.b16 %v406
        %v615 = vunpack.c.l.b16 %v407
        %v616 = vunpack.c.h.b16 %v407
        %v617 = vunpack.c.l.b16 %v408
        %v618 = vunpack.c.h.b16 %v408
        %v619 = vunpack.c.l.b16 %v409
        %v620 = vunpack.c.l.b16 %v410
        %v621 = vunpack.c.h.b16 %v410
        %v622 = vunpack.c.l.b16 %v411
        %v623 = vunpack.c.h.b16 %v411
        %v624 = vunpack.c.l.b16 %v412
        %v625 = vunpack.c.h.b16 %v412
        %v626 = vunpack.c.l.b16 %v413
        %v627 = vunpack.c.h.b16 %v413
        %v628 = vunpack.c.l.b16 %v414
        %v629 = vunpack.c.h.b16 %v414
        %v630 = vunpack.c.l.b16 %v415
        %v631 = vunpack.c.h.b16 %v415
        %v632 = vunpack.c.l.b16 %v416
        %v633 = vunpack.c.h.b16 %v416
        %v634 = vunpack.c.l.b16 %v417
        %v635 = vunpack.c.h.b16 %v417
        %v636 = vunpack.c.l.b16 %v418
        %v637 = vunpack.c.l.b16 %v419
        %v638 = vunpack.c.h.b16 %v419
        %v639 = vunpack.c.l.b16 %v420
        %v640 = vunpack.c.h.b16 %v420
        %v641 = vunpack.c.l.b16 %v421
        %v642 = vunpack.c.h.b16 %v421
        %v643 = vunpack.c.l.b16 %v422
        %v644 = vunpack.c.h.b16 %v422
        %v645 = vunpack.c.l.b16 %v423
        %v646 = vunpack.c.h.b16 %v423
        %v647 = vunpack.c.l.b16 %v424
        %v648 = vunpack.c.h.b16 %v424
        %v649 = vunpack.c.l.b16 %v425
        %v650 = vunpack.c.h.b16 %v425
        %v651 = vunpack.c.l.b16 %v426
        %v652 = vunpack.c.h.b16 %v426
        %v653 = vunpack.c.l.b16 %v427
        %v654 = vunpack.c.l.b16 %v428
        %v655 = vunpack.c.h.b16 %v428
        %v656 = vunpack.c.l.b16 %v429
        %v657 = vunpack.c.h.b16 %v429
        %v658 = vunpack.c.l.b16 %v430
        %v659 = vunpack.c.h.b16 %v430
        %v660 = vunpack.c.l.b16 %v431
        %v661 = vunpack.c.h.b16 %v431
        %v662 = vunpack.c.l.b16 %v432
        %v663 = vunpack.c.h.b16 %v432
        %v664 = vunpack.c.l.b16 %v433
        %v665 = vunpack.c.h.b16 %v433
        %v666 = vunpack.c.l.b16 %v434
        %v667 = vunpack.c.h.b16 %v434
        %v668 = vunpack.c.l.b16 %v435
        %v669 = vunpack.c.h.b16 %v435
        %v670 = vunpack.c.l.b16 %v436
        %v671 = vunpack.c.l.b16 %v437
        %v672 = vunpack.c.h.b16 %v437
        %v673 = vunpack.c.l.b16 %v438
        %v674 = vunpack.c.h.b16 %v438
        %v675 = vunpack.c.l.b16 %v439
        %v676 = vunpack.c.h.b16 %v439
        %v677 = vunpack.c.l.b16 %v440
        %v678 = vunpack.c.h.b16 %v440
        %v679 = vunpack.c.l.b16 %v441
        %v680 = vunpack.c.h.b16 %v441
        %v681 = vunpack.c.l.b16 %v442
        %v682 = vunpack.c.h.b16 %v442
        %v683 = vunpack.c.l.b16 %v443
        %v684 = vunpack.c.h.b16 %v443
        %v685 = vunpack.c.l.b16 %v444
        %v686 = vunpack.c.h.b16 %v444
        %v687 = vunpack.c.l.b16 %v445
        %v688 = vunpack.c.l.b16 %v446
        %v689 = vunpack.c.h.b16 %v446
        %v690 = vunpack.c.l.b16 %v447
        %v691 = vunpack.c.h.b16 %v447
        %v692 = vunpack.c.l.b16 %v448
        %v693 = vunpack.c.h.b16 %v448
        %v694 = vunpack.c.l.b16 %v449
        %v695 = vunpack.c.h.b16 %v449
        %v696 = vunpack.c.l.b16 %v450
        %v697 = vunpack.c.h.b16 %v450
        %v698 = vunpack.c.l.b16 %v451
        %v699 = vunpack.c.h.b16 %v451
        %v700 = vunpack.c.l.b16 %v452
        %v701 = vunpack.c.h.b16 %v452
        %v702 = vunpack.c.l.b16 %v453
        %v703 = vunpack.c.h.b16 %v453
        %v704 = vunpack.c.l.b16 %v454
        %v705 = vunpack.c.l.b16 %v455
        %v706 = vunpack.c.h.b16 %v455
        %v707 = vunpack.c.l.b16 %v456
        %v708 = vunpack.c.h.b16 %v456
        %v709 = vunpack.c.l.b16 %v457
        %v710 = vunpack.c.h.b16 %v457
        %v711 = vunpack.c.l.b16 %v458
        %v712 = vunpack.c.h.b16 %v458
        %v713 = vunpack.c.l.b16 %v459
        %v714 = vunpack.c.h.b16 %v459
        %v715 = vunpack.c.l.b16 %v460
        %v716 = vunpack.c.h.b16 %v460
        %v717 = vunpack.c.l.b16 %v461
        %v718 = vunpack.c.h.b16 %v461
        %v719 = vunpack.c.l.b16 %v462
        %v720 = vunpack.c.h.b16 %v462
        %v721 = vunpack.c.l.b16 %v463
        %v722 = vunpack.c.l.b16 %v464
        %v723 = vunpack.c.h.b16 %v464
        %v724 = vunpack.c.l.b16 %v465
        %v725 = vunpack.c.h.b16 %v465
        %v726 = vunpack.c.l.b16 %v466
        %v727 = vunpack.c.h.b16 %v466
        %v728 = vunpack.c.l.b16 %v467
        %v729 = vunpack.c.h.b16 %v467
        %v730 = vunpack.c.l.b16 %v468
        %v731 = vunpack.c.h.b16 %v468
        %v732 = vunpack.c.l.b16 %v469
        %v733 = vunpack.c.h.b16 %v469
        %v734 = vunpack.c.l.b16 %v470
        %v735 = vunpack.c.h.b16 %v470
        %v736 = vunpack.c.l.b16 %v471
        %v737 = vunpack.c.h.b16 %v471
        %v738 = vunpack.c.l.b16 %v472
        %v739 = vpack.c.b16 %v586, %v569
        %v740 = vpack.c.b16 %v587, %v570
        %v741 = vpack.c.b16 %v588, %v571
        %v742 = vpack.c.b16 %v589, %v572
        %v743 = vpack.c.b16 %v590, %v573
        %v744 = vpack.c.b16 %v591, %v574
        %v745 = vpack.c.b16 %v592, %v575
        %v746 = vpack.c.b16 %v593, %v576
        %v747 = vpack.c.b16 %v594, %v577
        %v748 = vpack.c.b16 %v595, %v578
        %v749 = vpack.c.b16 %v596, %v579
        %v750 = vpack.c.b16 %v597, %v580
        %v751 = vpack.c.b16 %v598, %v581
        %v752 = vpack.c.b16 %v599, %v582
        %v753 = vpack.c.b16 %v600, %v583
        %v754 = vpack.c.b16 %v601, %v584
        %v755 = vpack.c.b16 %v602, %v585
        %v756 = vpack.c.b16 %v620, %v603
        %v757 = vpack.c.b16 %v621, %v604
        %v758 = vpack.c.b16 %v622, %v605
        %v759 = vpack.c.b16 %v623, %v606
        %v760 = vpack.c.b16 %v624, %v607
        %v761 = vpack.c.b16 %v625, %v608
        %v762 = vpack.c.b16 %v626, %v609
        %v763 = vpack.c.b16 %v627, %v610
        %v764 = vpack.c.b16 %v628, %v611
        %v765 = vpack.c.b16 %v629, %v612
        %v766 = vpack.c.b16 %v630, %v613
        %v767 = vpack.c.b16 %v631, %v614
        %v768 = vpack.c.b16 %v632, %v615
        %v769 = vpack.c.b16 %v633, %v616
        %v770 = vpack.c.b16 %v634, %v617
        %v771 = vpack.c.b16 %v635, %v618
        %v772 = vpack.c.b16 %v636, %v619
        %v773 = vpack.c.b16 %v654, %v637
        %v774 = vpack.c.b16 %v655, %v638
        %v775 = vpack.c.b16 %v656, %v639
        %v776 = vpack.c.b16 %v657, %v640
        %v777 = vpack.c.b16 %v658, %v641
        %v778 = vpack.c.b16 %v659, %v642
        %v779 = vpack.c.b16 %v660, %v643
        %v780 = vpack.c.b16 %v661, %v644
        %v781 = vpack.c.b16 %v662, %v645
        %v782 = vpack.c.b16 %v663, %v646
        %v783 = vpack.c.b16 %v664, %v647
        %v784 = vpack.c.b16 %v665, %v648
        %v785 = vpack.c.b16 %v666, %v649
        %v786 = vpack.c.b16 %v667, %v650
        %v787 = vpack.c.b16 %v668, %v651
        %v788 = vpack.c.b16 %v669, %v652
        %v789 = vpack.c.b16 %v670, %v653
        %v790 = vpack.c.b16 %v688, %v671
        %v791 = vpack.c.b16 %v689, %v672
        %v792 = vpack.c.b16 %v690, %v673
        %v793 = vpack.c.b16 %v691, %v674
        %v794 = vpack.c.b16 %v692, %v675
        %v795 = vpack.c.b16 %v693, %v676
        %v796 = vpack.c.b16 %v694, %v677
        %v797 = vpack.c.b16 %v695, %v678
        %v798 = vpack.c.b16 %v696, %v679
        %v799 = vpack.c.b16 %v697, %v680
        %v800 = vpack.c.b16 %v698, %v681
        %v801 = vpack.c.b16 %v699, %v682
        %v802 = vpack.c.b16 %v700, %v683
        %v803 = vpack.c.b16 %v701, %v684
        %v804 = vpack.c.b16 %v702, %v685
        %v805 = vpack.c.b16 %v703, %v686
        %v806 = vpack.c.b16 %v704, %v687
        %v807 = vpack.c.b16 %v722, %v705
        %v808 = vpack.c.b16 %v723, %v706
        %v809 = vpack.c.b16 %v724, %v707
        %v810 = vpack.c.b16 %v725, %v708
        %v811 = vpack.c.b16 %v726, %v709
        %v812 = vpack.c.b16 %v727, %v710
        %v813 = vpack.c.b16 %v728, %v711
        %v814 = vpack.c.b16 %v729, %v712
        %v815 = vpack.c.b16 %v730, %v713
        %v816 = vpack.c.b16 %v731, %v714
        %v817 = vpack.c.b16 %v732, %v715
        %v818 = vpack.c.b16 %v733, %v716
        %v819 = vpack.c.b16 %v734, %v717
        %v820 = vpack.c.b16 %v735, %v718
        %v821 = vpack.c.b16 %v736, %v719
        %v822 = vpack.c.b16 %v737, %v720
        %v823 = vpack.c.b16 %v738, %v721
        %vm892 = vcmask 613376
        %v894 = vsel %vm892, %v382, 0
        %vm896 = vcmask 1044480
        %vm897 = vcmask 1045504
        %v898 = vsel %vm896, 4294967295, 65535
        %v899 = vsel %vm897, %v898, 0
        %v901 = vand.u32 %v807, %v899
        %v904 = vand.u32 %v808, %v899
        %v907 = vand.u32 %v809, %v899
        %v910 = vand.u32 %v810, %v899
        %v913 = vand.u32 %v811, %v899
        %v916 = vand.u32 %v812, %v899
        %v919 = vand.u32 %v813, %v899
        %v922 = vand.u32 %v814, %v899
        %v925 = vand.u32 %v815, %v899
        %v928 = vand.u32 %v816, %v899
        %v931 = vand.u32 %v817, %v899
        %v934 = vand.u32 %v818, %v899
        %v937 = vand.u32 %v819, %v899
        %v940 = vand.u32 %v820, %v899
        %v943 = vand.u32 %v821, %v899
        %v946 = vand.u32 %v822, %v899
        %v949 = vand.u32 %v823, %v899
        %951 = vmatpush.bf16.msra.mxu0 0
        %952 = vmatpush.bf16.msra.mxu0 0
        %953 = vmatpush.bf16.msra.mxu0 0
        %954 = vmatpush.bf16.msra.mxu0 %v901
        %955 = vmatpush.bf16.msra.mxu0 %v790
        %956 = vmatpush.bf16.msra.mxu0 %v773
        %957 = vmatpush.bf16.msra.mxu0 %v756
        %958 = vmatpush.bf16.msra.mxu0 %v739
        %959 = vmatmul.bf16.gmra.mxu0 %v894
        %v960 = vpop.f32.mrf.mxu0
        %v961 = vadd.f32 %v477, %v960
        %v962 = vpop.f32.mrf.mxu0
        %963 = vdwg.mxu0
        %964 = vmatpush.bf16.msra.mxu0 0
        %965 = vmatpush.bf16.msra.mxu0 0
        %966 = vmatpush.bf16.msra.mxu0 0
        %967 = vmatpush.bf16.msra.mxu0 %v904
        %968 = vmatpush.bf16.msra.mxu0 %v791
        %969 = vmatpush.bf16.msra.mxu0 %v774
        %970 = vmatpush.bf16.msra.mxu0 %v757
        %971 = vmatpush.bf16.msra.mxu0 %v740
        %972 = vmatmul.bf16.gmra.mxu0 %v894
        %v973 = vpop.f32.mrf.mxu0
        %v974 = vadd.f32 %v477, %v973
        %v975 = vpop.f32.mrf.mxu0
        %976 = vdwg.mxu0
        %977 = vmatpush.bf16.msra.mxu0 0
        %978 = vmatpush.bf16.msra.mxu0 0
        %979 = vmatpush.bf16.msra.mxu0 0
        %980 = vmatpush.bf16.msra.mxu0 %v907
        %981 = vmatpush.bf16.msra.mxu0 %v792
        %982 = vmatpush.bf16.msra.mxu0 %v775
        %983 = vmatpush.bf16.msra.mxu0 %v758
        %984 = vmatpush.bf16.msra.mxu0 %v741
        %985 = vmatmul.bf16.gmra.mxu0 %v894
        %v986 = vpop.f32.mrf.mxu0
        %v987 = vadd.f32 %v477, %v986
        %v988 = vpop.f32.mrf.mxu0
        %989 = vdwg.mxu0
        %990 = vmatpush.bf16.msra.mxu0 0
        %991 = vmatpush.bf16.msra.mxu0 0
        %992 = vmatpush.bf16.msra.mxu0 0
        %993 = vmatpush.bf16.msra.mxu0 %v910
        %994 = vmatpush.bf16.msra.mxu0 %v793
        %995 = vmatpush.bf16.msra.mxu0 %v776
        %996 = vmatpush.bf16.msra.mxu0 %v759
        %997 = vmatpush.bf16.msra.mxu0 %v742
        %998 = vmatmul.bf16.gmra.mxu0 %v894
        %v999 = vpop.f32.mrf.mxu0
        %v1000 = vadd.f32 %v477, %v999
        %v1001 = vpop.f32.mrf.mxu0
        %1002 = vdwg.mxu0
        %1003 = vmatpush.bf16.msra.mxu0 0
        %1004 = vmatpush.bf16.msra.mxu0 0
        %1005 = vmatpush.bf16.msra.mxu0 0
        %1006 = vmatpush.bf16.msra.mxu0 %v913
        %1007 = vmatpush.bf16.msra.mxu0 %v794
        %1008 = vmatpush.bf16.msra.mxu0 %v777
        %1009 = vmatpush.bf16.msra.mxu0 %v760
        %1010 = vmatpush.bf16.msra.mxu0 %v743
        %1011 = vmatmul.bf16.gmra.mxu0 %v894
        %v1012 = vpop.f32.mrf.mxu0
        %v1013 = vadd.f32 %v477, %v1012
        %v1014 = vpop.f32.mrf.mxu0
        %1015 = vdwg.mxu0
        %1016 = vmatpush.bf16.msra.mxu0 0
        %1017 = vmatpush.bf16.msra.mxu0 0
        %1018 = vmatpush.bf16.msra.mxu0 0
        %1019 = vmatpush.bf16.msra.mxu0 %v916
        %1020 = vmatpush.bf16.msra.mxu0 %v795
        %1021 = vmatpush.bf16.msra.mxu0 %v778
        %1022 = vmatpush.bf16.msra.mxu0 %v761
        %1023 = vmatpush.bf16.msra.mxu0 %v744
        %1024 = vmatmul.bf16.gmra.mxu0 %v894
        %v1025 = vpop.f32.mrf.mxu0
        %v1026 = vadd.f32 %v477, %v1025
        %v1027 = vpop.f32.mrf.mxu0
        %1028 = vdwg.mxu0
        %1029 = vmatpush.bf16.msra.mxu0 0
        %1030 = vmatpush.bf16.msra.mxu0 0
        %1031 = vmatpush.bf16.msra.mxu0 0
        %1032 = vmatpush.bf16.msra.mxu0 %v919
        %1033 = vmatpush.bf16.msra.mxu0 %v796
        %1034 = vmatpush.bf16.msra.mxu0 %v779
        %1035 = vmatpush.bf16.msra.mxu0 %v762
        %1036 = vmatpush.bf16.msra.mxu0 %v745
        %1037 = vmatmul.bf16.gmra.mxu0 %v894
        %v1038 = vpop.f32.mrf.mxu0
        %v1039 = vadd.f32 %v477, %v1038
        %v1040 = vpop.f32.mrf.mxu0
        %1041 = vdwg.mxu0
        %1042 = vmatpush.bf16.msra.mxu0 0
        %1043 = vmatpush.bf16.msra.mxu0 0
        %1044 = vmatpush.bf16.msra.mxu0 0
        %1045 = vmatpush.bf16.msra.mxu0 %v922
        %1046 = vmatpush.bf16.msra.mxu0 %v797
        %1047 = vmatpush.bf16.msra.mxu0 %v780
        %1048 = vmatpush.bf16.msra.mxu0 %v763
        %1049 = vmatpush.bf16.msra.mxu0 %v746
        %1050 = vmatmul.bf16.gmra.mxu0 %v894
        %v1051 = vpop.f32.mrf.mxu0
        %v1052 = vadd.f32 %v477, %v1051
        %v1053 = vpop.f32.mrf.mxu0
        %1054 = vdwg.mxu0
        %1055 = vmatpush.bf16.msra.mxu0 0
        %1056 = vmatpush.bf16.msra.mxu0 0
        %1057 = vmatpush.bf16.msra.mxu0 0
        %1058 = vmatpush.bf16.msra.mxu0 %v925
        %1059 = vmatpush.bf16.msra.mxu0 %v798
        %1060 = vmatpush.bf16.msra.mxu0 %v781
        %1061 = vmatpush.bf16.msra.mxu0 %v764
        %1062 = vmatpush.bf16.msra.mxu0 %v747
        %1063 = vmatmul.bf16.gmra.mxu0 %v894
        %v1064 = vpop.f32.mrf.mxu0
        %v1065 = vadd.f32 %v477, %v1064
        %v1066 = vpop.f32.mrf.mxu0
        %1067 = vdwg.mxu0
        %1068 = vmatpush.bf16.msra.mxu0 0
        %1069 = vmatpush.bf16.msra.mxu0 0
        %1070 = vmatpush.bf16.msra.mxu0 0
        %1071 = vmatpush.bf16.msra.mxu0 %v928
        %1072 = vmatpush.bf16.msra.mxu0 %v799
        %1073 = vmatpush.bf16.msra.mxu0 %v782
        %1074 = vmatpush.bf16.msra.mxu0 %v765
        %1075 = vmatpush.bf16.msra.mxu0 %v748
        %1076 = vmatmul.bf16.gmra.mxu0 %v894
        %v1077 = vpop.f32.mrf.mxu0
        %v1078 = vadd.f32 %v477, %v1077
        %v1079 = vpop.f32.mrf.mxu0
        %1080 = vdwg.mxu0
        %1081 = vmatpush.bf16.msra.mxu0 0
        %1082 = vmatpush.bf16.msra.mxu0 0
        %1083 = vmatpush.bf16.msra.mxu0 0
        %1084 = vmatpush.bf16.msra.mxu0 %v931
        %1085 = vmatpush.bf16.msra.mxu0 %v800
        %1086 = vmatpush.bf16.msra.mxu0 %v783
        %1087 = vmatpush.bf16.msra.mxu0 %v766
        %1088 = vmatpush.bf16.msra.mxu0 %v749
        %1089 = vmatmul.bf16.gmra.mxu0 %v894
        %v1090 = vpop.f32.mrf.mxu0
        %v1091 = vadd.f32 %v477, %v1090
        %v1092 = vpop.f32.mrf.mxu0
        %1093 = vdwg.mxu0
        %1094 = vmatpush.bf16.msra.mxu0 0
        %1095 = vmatpush.bf16.msra.mxu0 0
        %1096 = vmatpush.bf16.msra.mxu0 0
        %1097 = vmatpush.bf16.msra.mxu0 %v934
        %1098 = vmatpush.bf16.msra.mxu0 %v801
        %1099 = vmatpush.bf16.msra.mxu0 %v784
        %1100 = vmatpush.bf16.msra.mxu0 %v767
        %1101 = vmatpush.bf16.msra.mxu0 %v750
        %1102 = vmatmul.bf16.gmra.mxu0 %v894
        %v1103 = vpop.f32.mrf.mxu0
        %v1104 = vadd.f32 %v477, %v1103
        %v1105 = vpop.f32.mrf.mxu0
        %1106 = vdwg.mxu0
        %1107 = vmatpush.bf16.msra.mxu0 0
        %1108 = vmatpush.bf16.msra.mxu0 0
        %1109 = vmatpush.bf16.msra.mxu0 0
        %1110 = vmatpush.bf16.msra.mxu0 %v937
        %1111 = vmatpush.bf16.msra.mxu0 %v802
        %1112 = vmatpush.bf16.msra.mxu0 %v785
        %1113 = vmatpush.bf16.msra.mxu0 %v768
        %1114 = vmatpush.bf16.msra.mxu0 %v751
        %1115 = vmatmul.bf16.gmra.mxu0 %v894
        %v1116 = vpop.f32.mrf.mxu0
        %v1117 = vadd.f32 %v477, %v1116
        %v1118 = vpop.f32.mrf.mxu0
        %1119 = vdwg.mxu0
        %1120 = vmatpush.bf16.msra.mxu0 0
        %1121 = vmatpush.bf16.msra.mxu0 0
        %1122 = vmatpush.bf16.msra.mxu0 0
        %1123 = vmatpush.bf16.msra.mxu0 %v940
        %1124 = vmatpush.bf16.msra.mxu0 %v803
        %1125 = vmatpush.bf16.msra.mxu0 %v786
        %1126 = vmatpush.bf16.msra.mxu0 %v769
        %1127 = vmatpush.bf16.msra.mxu0 %v752
        %1128 = vmatmul.bf16.gmra.mxu0 %v894
        %v1129 = vpop.f32.mrf.mxu0
        %v1130 = vadd.f32 %v477, %v1129
        %v1131 = vpop.f32.mrf.mxu0
        %1132 = vdwg.mxu0
        %1133 = vmatpush.bf16.msra.mxu0 0
        %1134 = vmatpush.bf16.msra.mxu0 0
        %1135 = vmatpush.bf16.msra.mxu0 0
        %1136 = vmatpush.bf16.msra.mxu0 %v943
        %1137 = vmatpush.bf16.msra.mxu0 %v804
        %1138 = vmatpush.bf16.msra.mxu0 %v787
        %1139 = vmatpush.bf16.msra.mxu0 %v770
        %1140 = vmatpush.bf16.msra.mxu0 %v753
        %1141 = vmatmul.bf16.gmra.mxu0 %v894
        %v1142 = vpop.f32.mrf.mxu0
        %v1143 = vadd.f32 %v477, %v1142
        %v1144 = vpop.f32.mrf.mxu0
        %1145 = vdwg.mxu0
        %1146 = vmatpush.bf16.msra.mxu0 0
        %1147 = vmatpush.bf16.msra.mxu0 0
        %1148 = vmatpush.bf16.msra.mxu0 0
        %1149 = vmatpush.bf16.msra.mxu0 %v946
        %1150 = vmatpush.bf16.msra.mxu0 %v805
        %1151 = vmatpush.bf16.msra.mxu0 %v788
        %1152 = vmatpush.bf16.msra.mxu0 %v771
        %1153 = vmatpush.bf16.msra.mxu0 %v754
        %1154 = vmatmul.bf16.gmra.mxu0 %v894
        %v1155 = vpop.f32.mrf.mxu0
        %v1156 = vadd.f32 %v477, %v1155
        %v1157 = vpop.f32.mrf.mxu0
        %1158 = vdwg.mxu0
        %1159 = vmatpush.bf16.msra.mxu0 0
        %1160 = vmatpush.bf16.msra.mxu0 0
        %1161 = vmatpush.bf16.msra.mxu0 0
        %1162 = vmatpush.bf16.msra.mxu0 %v949
        %1163 = vmatpush.bf16.msra.mxu0 %v806
        %1164 = vmatpush.bf16.msra.mxu0 %v789
        %1165 = vmatpush.bf16.msra.mxu0 %v772
        %1166 = vmatpush.bf16.msra.mxu0 %v755
        %1167 = vmatmul.bf16.gmra.mxu0 %v894
        %v1168 = vpop.f32.mrf.mxu0
        %v1169 = vadd.f32 %v477, %v1168
        %v1170 = vpop.f32.mrf.mxu0
        %1171 = vdwg.mxu0
        %v1188 = vrot.slane %v974, 4
        %v1189 = vrot.slane %v1000, 4
        %v1190 = vrot.slane %v1026, 4
        %v1191 = vrot.slane %v1052, 4
        %v1192 = vrot.slane %v1078, 4
        %v1193 = vrot.slane %v1104, 4
        %v1194 = vrot.slane %v1130, 4
        %v1195 = vrot.slane %v1156, 4
        %vm1196 = vcmask 1043456
        %v1197 = vsel %vm1196, %v961, %v1188
        %v1198 = vsel %vm1196, %v987, %v1189
        %v1199 = vsel %vm1196, %v1013, %v1190
        %v1200 = vsel %vm1196, %v1039, %v1191
        %v1201 = vsel %vm1196, %v1065, %v1192
        %v1202 = vsel %vm1196, %v1091, %v1193
        %v1203 = vsel %vm1196, %v1117, %v1194
        %v1204 = vsel %vm1196, %v1143, %v1195
        %1213 = vst [vmem:[%s379] sm:$0x77] %v1197
        %1214 = vst [vmem:[%s379 + $0x8] sm:$0x77] %v1198
        %1215 = vst [vmem:[%s379 + $0x10] sm:$0x77] %v1199
        %1216 = vst [vmem:[%s379 + $0x18] sm:$0x77] %v1200
        %1217 = vst [vmem:[%s379 + $0x20] sm:$0x77] %v1201
        %1218 = vst [vmem:[%s379 + $0x28] sm:$0x77] %v1202
        %1219 = vst [vmem:[%s379 + $0x30] sm:$0x77] %v1203
        %1220 = vst [vmem:[%s379 + $0x38] sm:$0x77] %v1204
        %1221 = vst [vmem:[%s379 + $0x40] sm:$0x7] %v1169
        %s1222 = smul.u32 17, %s14
        %p1223 = scmp.lt.s32.totalorder %s1222, 33
        %s1224 = scalar_select %p1223, %s1222, 33
        %s1225 = smul.addr %s1224, 4
        %s1226 = scalar_lea.vmem %s3, %s1225
        // Predicated region
        $region59: #{wiki_autoencoder2_forward.9} parent=53 // pred_check
          %p1227 = pneg %p100
        $region60: #{wiki_autoencoder2_forward.9} parent=53 // pred_check_branch
          %1229 = sbr.rel (%p1227) target = $region62
        $region61: #{wiki_autoencoder2_forward.9} parent=53 // pred_region
          %s1230 = smul.u32 17, %s14
        $region62: #{wiki_autoencoder2_forward.9} parent=53 // pred_fallthru
          _
      $region54: #{wiki_autoencoder2_forward.9} parent=5 // pred_fallthru
        _
      %p1231 = scmp.le.s32.totalorder 2, %s9
      // Predicated region
      $region63: #{wiki_autoencoder2_forward.9} parent=5 // pred_check
        %p1232 = pneg %p1231
      $region64: #{wiki_autoencoder2_forward.9} parent=5 // pred_check_branch
        %1234 = sbr.rel (%p1232) target = $region66
      $region65: #{wiki_autoencoder2_forward.9} parent=5 // pred_region
        %s1235 = ssub.s32 %s9, 2
        // Predicated region
        $region67: #{wiki_autoencoder2_forward.9} parent=65 // pred_check
          %p1236 = pneg %p106
        $region68: #{wiki_autoencoder2_forward.9} parent=65 // pred_check_branch
          %1238 = sbr.rel (%p1236) target = $region70
        $region69: #{wiki_autoencoder2_forward.9} parent=65 // pred_region
          %s1239 = smul.u32 17, %s15
          %p1240 = scmp.lt.s32.totalorder %s1239, 33
          %s1241 = scalar_select %p1240, %s1239, 33
          %s1242 = smul.addr %s1241, 4
          %s1243 = scalar_lea.vmem %s3, %s1242
        $region70: #{wiki_autoencoder2_forward.9} parent=65 // pred_fallthru
          _
      $region66: #{wiki_autoencoder2_forward.9} parent=5 // pred_fallthru
        _
    $region6: #{wiki_autoencoder2_forward.9} parent=1 // loop_footer
      %s13 = sadd.s32 1, %s9
    $region7: #{wiki_autoencoder2_forward.9} parent=1 // loop_footer_branch
      %8 = sbr.rel target = $region3
    $region8: #{wiki_autoencoder2_forward.9} parent=1 // loop_exit
      _

// kernel: wiki_autoencoder2_forward.10
$region0: #{wiki_autoencoder2_forward.10}
  #allocation0 [shape = 'u32[]', space=smem, size = 0x4, offset = 0x4, fixed_abs, tag = 'smem constant byte address 0x4 - core index']
  #allocation1 [shape = 'u32[72,128]{1,0:T(1,128)}', space=vmem, size = 0x9000, scoped, tag = 'internal scratch']
  %s0 = inlined_call_operand.vmem [shape: bf16[3,75], index: 0, kind: input, shape index: {}]
  %s1 = inlined_call_operand.vmem [shape: bf16[75,1024], index: 1, kind: input, shape index: {}]
  %s2 = inlined_call_operand.vmem [shape: f32[3,1], index: 2, kind: input, shape index: {}]
  %s3 = inlined_call_operand.vmem [shape: f32[3,1024], index: 3, kind: output, shape index: {}]
  %s4 = sld [smem:[#allocation0]]
  $region68: #{wiki_autoencoder2_forward.10} parent=0
    _
  %s6 = ssub.s32 1, %s4
  %s7 = scalar_select 0, %s6, %s4
  $region1: #{wiki_autoencoder2_forward.10} parent=0
    #allocation2 [shape = 'u8[163840]{0}', space=vmem, size = 0x28000, scoped, tag = 'input window, operand 1']
    loop: start=0, step=1, limit=4
    $region2: #{wiki_autoencoder2_forward.10} parent=1 // loop_pre_header
      _
    $region3: #{wiki_autoencoder2_forward.10} parent=1 // loop_header
      %s9 = sphi 0, %s13
      %p10 = scmp.ge.s32.totalorder %s9, 4
      %s17 = sphi 0, %s17
      %s19 = sphi 0, %s17
      %s20 = sphi 0, %s19
      %s34 = sphi 0, %s20
      %s40 = sphi 0, %s42
      %s43 = sphi 0, %s40
      %s44 = sphi 0, %s43
      %s60 = sphi 0, %s44
      %s64 = sphi 0, %s64
      %s66 = sphi 0, %s64
      %s67 = sphi 0, %s66
      %s81 = sphi 0, %s67
      %s87 = sphi 0, %s89
      %s90 = sphi 0, %s87
      %s91 = sphi 0, %s90
      %s107 = sphi 0, %s91
    $region4: #{wiki_autoencoder2_forward.10} parent=1 // loop_header_branch
      %12 = sbr.rel (%p10) target = $region8
    $region5: #{wiki_autoencoder2_forward.10} parent=1 // loop_body
      %s14 = ssub.s32 %s9, 1
      %s15 = ssub.s32 %s9, 2
      %s16 = sadd.s32 %s9, 1
      %s18 = sadd.s32 %s17, 1
      %p21 = scmp.eq.s32.totalorder %s9, 1
      %p22 = scmp.ne.s32.totalorder %s17, %s19
      %p23 = scmp.eq.s32.totalorder %s9, 0
      %p24 = por %p22, %p23
      %p25 = scmp.ne.s32.totalorder %s17, %s19
      %p26 = scmp.eq.s32.totalorder %s14, 1
      %p27 = por %p25, %p26
      %p28 = scmp.ne.s32.totalorder %s19, %s20
      %p29 = scmp.eq.s32.totalorder %s14, 0
      %p30 = por %p28, %p29
      %p31 = scmp.ne.s32.totalorder %s19, %s20
      %p32 = scmp.eq.s32.totalorder %s15, 1
      %p33 = por %p31, %p32
      %p35 = scmp.ne.s32.totalorder %s20, %s34
      %p36 = scmp.eq.s32.totalorder %s15, 0
      %p37 = por %p35, %p36
      %s38 = ssub.s32 %s9, %s16
      %p39 = scmp.eq.s32.totalorder %s38, 0
      %s41 = sadd.s32 %s40, 1
      %s42 = scalar_select %p39, %s40, %s41
      %p45 = pneg %p39
      %p46 = scmp.eq.s32.totalorder %s9, 1
      %p47 = por %p45, %p46
      %p48 = scmp.ne.s32.totalorder %s40, %s43
      %p49 = scmp.eq.s32.totalorder %s9, 0
      %p50 = por %p48, %p49
      %p51 = scmp.ne.s32.totalorder %s40, %s43
      %p52 = scmp.eq.s32.totalorder %s14, 1
      %p53 = por %p51, %p52
      %p54 = scmp.ne.s32.totalorder %s43, %s44
      %p55 = scmp.eq.s32.totalorder %s14, 0
      %p56 = por %p54, %p55
      %p57 = scmp.ne.s32.totalorder %s43, %s44
      %p58 = scmp.eq.s32.totalorder %s15, 1
      %p59 = por %p57, %p58
      %p61 = scmp.ne.s32.totalorder %s44, %s60
      %p62 = scmp.eq.s32.totalorder %s15, 0
      %p63 = por %p61, %p62
      %s65 = sadd.s32 %s64, 1
      %p68 = scmp.eq.s32.totalorder %s9, 1
      %p69 = scmp.ne.s32.totalorder %s64, %s66
      %p70 = scmp.eq.s32.totalorder %s9, 0
      %p71 = por %p69, %p70
      %p72 = scmp.ne.s32.totalorder %s64, %s66
      %p73 = scmp.eq.s32.totalorder %s14, 1
      %p74 = por %p72, %p73
      %p75 = scmp.ne.s32.totalorder %s66, %s67
      %p76 = scmp.eq.s32.totalorder %s14, 0
      %p77 = por %p75, %p76
      %p78 = scmp.ne.s32.totalorder %s66, %s67
      %p79 = scmp.eq.s32.totalorder %s15, 1
      %p80 = por %p78, %p79
      %p82 = scmp.ne.s32.totalorder %s67, %s81
      %p83 = scmp.eq.s32.totalorder %s15, 0
      %p84 = por %p82, %p83
      %s85 = ssub.s32 %s9, %s16
      %p86 = scmp.eq.s32.totalorder %s85, 0
      %s88 = sadd.s32 %s87, 1
      %s89 = scalar_select %p86, %s87, %s88
      %p92 = pneg %p86
      %p93 = scmp.eq.s32.totalorder %s9, 1
      %p94 = por %p92, %p93
      %p95 = scmp.ne.s32.totalorder %s87, %s90
      %p96 = scmp.eq.s32.totalorder %s9, 0
      %p97 = por %p95, %p96
      %p98 = scmp.ne.s32.totalorder %s87, %s90
      %p99 = scmp.eq.s32.totalorder %s14, 1
      %p100 = por %p98, %p99
      %p101 = scmp.ne.s32.totalorder %s90, %s91
      %p102 = scmp.eq.s32.totalorder %s14, 0
      %p103 = por %p101, %p102
      %p104 = scmp.ne.s32.totalorder %s90, %s91
      %p105 = scmp.eq.s32.totalorder %s15, 1
      %p106 = por %p104, %p105
      %p108 = scmp.ne.s32.totalorder %s91, %s107
      %p109 = scmp.eq.s32.totalorder %s15, 0
      %p110 = por %p108, %p109
      %p111 = scmp.le.s32.totalorder 1, %s9
      %p112 = scmp.lt.s32.totalorder %s9, 3
      %p113 = pnand %p111, %p112
      %p114 = pneg %p113
      // Predicated region
      $region9: #{wiki_autoencoder2_forward.10} parent=5 // pred_check
        _
      $region10: #{wiki_autoencoder2_forward.10} parent=5 // pred_check_branch
        %116 = sbr.rel (%p113) target = $region12
      $region11: #{wiki_autoencoder2_forward.10} parent=5 // pred_region
        %s117 = ssub.s32 %s9, 1
        // Predicated region
        $region13: #{wiki_autoencoder2_forward.10} parent=11 // pred_check
          %p118 = pneg %p30
        $region14: #{wiki_autoencoder2_forward.10} parent=11 // pred_check_branch
          %120 = sbr.rel (%p118) target = $region16
        $region15: #{wiki_autoencoder2_forward.10} parent=11 // pred_region
          _
        $region16: #{wiki_autoencoder2_forward.10} parent=11 // pred_fallthru
          _
        // Predicated region
        $region17: #{wiki_autoencoder2_forward.10} parent=11 // pred_check
          %p121 = pneg %p77
        $region18: #{wiki_autoencoder2_forward.10} parent=11 // pred_check_branch
          %123 = sbr.rel (%p121) target = $region20
        $region19: #{wiki_autoencoder2_forward.10} parent=11 // pred_region
          _
        $region20: #{wiki_autoencoder2_forward.10} parent=11 // pred_fallthru
          _
      $region12: #{wiki_autoencoder2_forward.10} parent=5 // pred_fallthru
        _
      %p124 = scmp.lt.s32.totalorder %s9, 2
      // Predicated region
      $region21: #{wiki_autoencoder2_forward.10} parent=5 // pred_check
        %p125 = pneg %p124
      $region22: #{wiki_autoencoder2_forward.10} parent=5 // pred_check_branch
        %127 = sbr.rel (%p125) target = $region24
      $region23: #{wiki_autoencoder2_forward.10} parent=5 // pred_region
        // Predicated region
        $region25: #{wiki_autoencoder2_forward.10} parent=23 // pred_check
          %p128 = pneg %p50
        $region26: #{wiki_autoencoder2_forward.10} parent=23 // pred_check_branch
          %130 = sbr.rel (%p128) target = $region28
        $region27: #{wiki_autoencoder2_forward.10} parent=23 // pred_region
          %s131 = sand.u32 %s40, 1
          %s132 = sand.u32 %s40, 1
          %s133 = smul.addr %s132, 160
          %s134 = scalar_lea.vmem [#allocation2], %s133
          %s135 = smul.u32 4, %s9
          %s136 = smul.addr %s135, 4
          %s137 = scalar_lea.vmem %s1, %s136
          // Predicated region
          $region29: #{wiki_autoencoder2_forward.10} parent=27 // pred_check
            _
          $region30: #{wiki_autoencoder2_forward.10} parent=27 // pred_check_branch
            %139 = sbr.rel (0) target = $region32
          $region31: #{wiki_autoencoder2_forward.10} parent=27 // pred_region
            // Predicated region
            $region33: #{wiki_autoencoder2_forward.10} parent=31 // pred_check
              _
            $region34: #{wiki_autoencoder2_forward.10} parent=31 // pred_check_branch
              %141 = sbr.rel (0) target = $region36
            $region35: #{wiki_autoencoder2_forward.10} parent=31 // pred_region
              loop: start=0, step=1, limit=1
              $region37: #{wiki_autoencoder2_forward.10} parent=35 // loop_pre_header
                _
              $region38: #{wiki_autoencoder2_forward.10} parent=35 // loop_header
                %s143 = sphi 0, %s147
                %p144 = scmp.ge.s32.totalorder %s143, 1
                %s148 = sphi %s137, %s137
                %s149 = sphi %s134, %s134
              $region39: #{wiki_autoencoder2_forward.10} parent=35 // loop_header_branch
                %146 = sbr.rel (%p144) target = $region43
              $region40: #{wiki_autoencoder2_forward.10} parent=35 // loop_body
                %v150 = vld [vmem:[%s148] sm:$0xff]
                %151 = vst [vmem:[%s149] sm:$0xff] %v150
                %v152 = vld [vmem:[%s148 + $0x8] sm:$0xff]
                %153 = vst [vmem:[%s149 + $0x8] sm:$0xff] %v152
                %v154 = vld [vmem:[%s148 + $0x20] sm:$0xff]
                %155 = vst [vmem:[%s149 + $0x10] sm:$0xff] %v154
                %v156 = vld [vmem:[%s148 + $0x28] sm:$0xff]
                %157 = vst [vmem:[%s149 + $0x18] sm:$0xff] %v156
                %v158 = vld [vmem:[%s148 + $0x40] sm:$0xff]
                %159 = vst [vmem:[%s149 + $0x20] sm:$0xff] %v158
                %v160 = vld [vmem:[%s148 + $0x48] sm:$0xff]
                %161 = vst [vmem:[%s149 + $0x28] sm:$0xff] %v160
                %v162 = vld [vmem:[%s148 + $0x60] sm:$0xff]
                %163 = vst [vmem:[%s149 + $0x30] sm:$0xff] %v162
                %v164 = vld [vmem:[%s148 + $0x68] sm:$0xff]
                %165 = vst [vmem:[%s149 + $0x38] sm:$0xff] %v164
                %v166 = vld [vmem:[%s148 + $0x80] sm:$0xff]
                %167 = vst [vmem:[%s149 + $0x40] sm:$0xff] %v166
                %v168 = vld [vmem:[%s148 + $0x88] sm:$0xff]
                %169 = vst [vmem:[%s149 + $0x48] sm:$0xff] %v168
                %v170 = vld [vmem:[%s148 + $0xa0] sm:$0xff]
                %171 = vst [vmem:[%s149 + $0x50] sm:$0xff] %v170
                %v172 = vld [vmem:[%s148 + $0xa8] sm:$0xff]
                %173 = vst [vmem:[%s149 + $0x58] sm:$0xff] %v172
                %v174 = vld [vmem:[%s148 + $0xc0] sm:$0xff]
                %175 = vst [vmem:[%s149 + $0x60] sm:$0xff] %v174
                %v176 = vld [vmem:[%s148 + $0xc8] sm:$0xff]
                %177 = vst [vmem:[%s149 + $0x68] sm:$0xff] %v176
                %v178 = vld [vmem:[%s148 + $0xe0] sm:$0xff]
                %179 = vst [vmem:[%s149 + $0x70] sm:$0xff] %v178
                %v180 = vld [vmem:[%s148 + $0xe8] sm:$0xff]
                %181 = vst [vmem:[%s149 + $0x78] sm:$0xff] %v180
                %v182 = vld [vmem:[%s148 + $0x100] sm:$0xff]
                %183 = vst [vmem:[%s149 + $0x80] sm:$0xff] %v182
                %v184 = vld [vmem:[%s148 + $0x108] sm:$0xff]
                %185 = vst [vmem:[%s149 + $0x88] sm:$0xff] %v184
                %v186 = vld [vmem:[%s148 + $0x120] sm:$0xff]
                %187 = vst [vmem:[%s149 + $0x90] sm:$0xff] %v186
                %v188 = vld [vmem:[%s148 + $0x128] sm:$0xff]
                %189 = vst [vmem:[%s149 + $0x98] sm:$0xff] %v188
              $region41: #{wiki_autoencoder2_forward.10} parent=35 // loop_footer
                %s147 = sadd.s32 1, %s143
              $region42: #{wiki_autoencoder2_forward.10} parent=35 // loop_footer_branch
                %142 = sbr.rel target = $region38
              $region43: #{wiki_autoencoder2_forward.10} parent=35 // loop_exit
                _
            $region36: #{wiki_autoencoder2_forward.10} parent=31 // pred_fallthru
              _
            // Predicated region
            $region44: #{wiki_autoencoder2_forward.10} parent=31 // pred_check
              _
            $region45: #{wiki_autoencoder2_forward.10} parent=31 // pred_check_branch
              %191 = sbr.rel target = $region47
            $region46: #{wiki_autoencoder2_forward.10} parent=31 // pred_region
              _
            $region47: #{wiki_autoencoder2_forward.10} parent=31 // pred_fallthru
              _
          $region32: #{wiki_autoencoder2_forward.10} parent=27 // pred_fallthru
            _
          %192 = vnop
        $region28: #{wiki_autoencoder2_forward.10} parent=23 // pred_fallthru
          _
      $region24: #{wiki_autoencoder2_forward.10} parent=5 // pred_fallthru
        _
      %p193 = scmp.le.s32.totalorder 1, %s9
      %p194 = scmp.lt.s32.totalorder %s9, 3
      %p195 = pnand %p193, %p194
      %p196 = pneg %p195
      // Predicated region
      $region48: #{wiki_autoencoder2_forward.10} parent=5 // pred_check
        _
      $region49: #{wiki_autoencoder2_forward.10} parent=5 // pred_check_branch
        %198 = sbr.rel (%p195) target = $region51
      $region50: #{wiki_autoencoder2_forward.10} parent=5 // pred_region
        %s199 = ssub.s32 %s9, 1
        %s200 = sand.u32 %s43, 1
        %s201 = sand.u32 %s43, 1
        %s202 = smul.addr %s201, 160
        %s203 = scalar_lea.vmem [#allocation2], %s202
        // Predicated region
        $region52: #{wiki_autoencoder2_forward.10} parent=50 // pred_check
          %p204 = pneg %p56
        $region53: #{wiki_autoencoder2_forward.10} parent=50 // pred_check_branch
          %206 = sbr.rel (%p204) target = $region55
        $region54: #{wiki_autoencoder2_forward.10} parent=50 // pred_region
          _
        $region55: #{wiki_autoencoder2_forward.10} parent=50 // pred_fallthru
          _
        %p207 = pneg %p30
        %p208 = pneg %p27
        %s209 = sand.u32 %s43, 1
        %s210 = sand.u32 %s43, 1
        %s211 = smul.addr %s210, 160
        %s212 = scalar_lea.vmem [#allocation2], %s211
        %p213 = pneg %p56
        %p214 = pneg %p53
        %p215 = pneg %p77
        %p216 = pneg %p74
        %p217 = pneg %p103
        %p218 = pneg %p100
        %s219 = smul.u32 4, %s14
        %p220 = scmp.lt.s32.totalorder %s219, 7
        %s221 = scalar_select %p220, %s219, 7
        %s222 = smul.addr %s221, 4
        %s223 = scalar_lea.vmem %s3, %s222
        %s224 = smul.u32 4, %s14
        %s225 = smul.u32 4, %s14
        %p226 = scmp.lt.s32.totalorder %s225, 7
        %s227 = scalar_select %p226, %s225, 7
        %s228 = smul.addr %s227, 4
        %s229 = scalar_lea.vmem %s3, %s228
        %s230 = smul.u32 4, %s14
        %v232 = vld [vmem:[%s0] sm:$0x3]
        %v233 = vld [vmem:[%s203] sm:$0xff]
        %v234 = vld [vmem:[%s203 + $0x8] sm:$0xff]
        %v235 = vld [vmem:[%s203 + $0x10] sm:$0xff]
        %v236 = vld [vmem:[%s203 + $0x18] sm:$0xff]
        %v237 = vld [vmem:[%s203 + $0x20] sm:$0xff]
        %v238 = vld [vmem:[%s203 + $0x28] sm:$0xff]
        %v239 = vld [vmem:[%s203 + $0x30] sm:$0xff]
        %v240 = vld [vmem:[%s203 + $0x38] sm:$0xff]
        %v241 = vld [vmem:[%s203 + $0x40] sm:$0xff]
        %v242 = vld [vmem:[%s203 + $0x48] sm:$0xff]
        %v243 = vld [vmem:[%s203 + $0x50] sm:$0xff]
        %v244 = vld [vmem:[%s203 + $0x58] sm:$0xff]
        %v245 = vld [vmem:[%s203 + $0x60] sm:$0xff]
        %v246 = vld [vmem:[%s203 + $0x68] sm:$0xff]
        %v247 = vld [vmem:[%s203 + $0x70] sm:$0xff]
        %v248 = vld [vmem:[%s203 + $0x78] sm:$0xff]
        %v249 = vld [vmem:[%s203 + $0x80] sm:$0xff]
        %v250 = vld [vmem:[%s203 + $0x88] sm:$0xff]
        %v251 = vld [vmem:[%s203 + $0x90] sm:$0x33]
        %v252 = vld [vmem:[%s203 + $0x98] sm:$0x33]
        %v253 = vld [vmem:[%s2] sm:$0x7]
        %255 = vset.pattern.permute.xlu0 0
        %256 = vperm.xlu0 %255, %v253
        %v257 = vpop.permute.xlu0 %256
        %v279 = vunpack.c.l.b16 %v233
        %v280 = vunpack.c.h.b16 %v233
        %v281 = vunpack.c.l.b16 %v234
        %v282 = vunpack.c.h.b16 %v234
        %v283 = vunpack.c.l.b16 %v235
        %v284 = vunpack.c.h.b16 %v235
        %v285 = vunpack.c.l.b16 %v236
        %v286 = vunpack.c.h.b16 %v236
        %v287 = vunpack.c.l.b16 %v237
        %v288 = vunpack.c.h.b16 %v237
        %v289 = vunpack.c.l.b16 %v238
        %v290 = vunpack.c.h.b16 %v238
        %v291 = vunpack.c.l.b16 %v239
        %v292 = vunpack.c.h.b16 %v239
        %v293 = vunpack.c.l.b16 %v240
        %v294 = vunpack.c.h.b16 %v240
        %v295 = vunpack.c.l.b16 %v241
        %v296 = vunpack.c.h.b16 %v241
        %v297 = vunpack.c.l.b16 %v242
        %v298 = vunpack.c.h.b16 %v242
        %v299 = vunpack.c.l.b16 %v243
        %v300 = vunpack.c.h.b16 %v243
        %v301 = vunpack.c.l.b16 %v244
        %v302 = vunpack.c.h.b16 %v244
        %v303 = vunpack.c.l.b16 %v245
        %v304 = vunpack.c.h.b16 %v245
        %v305 = vunpack.c.l.b16 %v246
        %v306 = vunpack.c.h.b16 %v246
        %v307 = vunpack.c.l.b16 %v247
        %v308 = vunpack.c.h.b16 %v247
        %v309 = vunpack.c.l.b16 %v248
        %v310 = vunpack.c.h.b16 %v248
        %v311 = vunpack.c.l.b16 %v249
        %v312 = vunpack.c.h.b16 %v249
        %v313 = vunpack.c.l.b16 %v250
        %v314 = vunpack.c.h.b16 %v250
        %v315 = vunpack.c.l.b16 %v251
        %v316 = vunpack.c.h.b16 %v251
        %v317 = vunpack.c.l.b16 %v252
        %v318 = vunpack.c.h.b16 %v252
        %v319 = vpack.c.b16 %v283, %v279
        %v320 = vpack.c.b16 %v284, %v280
        %v321 = vpack.c.b16 %v285, %v281
        %v322 = vpack.c.b16 %v286, %v282
        %v323 = vpack.c.b16 %v291, %v287
        %v324 = vpack.c.b16 %v292, %v288
        %v325 = vpack.c.b16 %v293, %v289
        %v326 = vpack.c.b16 %v294, %v290
        %v327 = vpack.c.b16 %v299, %v295
        %v328 = vpack.c.b16 %v300, %v296
        %v329 = vpack.c.b16 %v301, %v297
        %v330 = vpack.c.b16 %v302, %v298
        %v331 = vpack.c.b16 %v307, %v303
        %v332 = vpack.c.b16 %v308, %v304
        %v333 = vpack.c.b16 %v309, %v305
        %v334 = vpack.c.b16 %v310, %v306
        %v335 = vpack.c.b16 %v315, %v311
        %v336 = vpack.c.b16 %v316, %v312
        %v337 = vpack.c.b16 %v317, %v313
        %v338 = vpack.c.b16 %v318, %v314
        %vm355 = vcmask 613376
        %v357 = vsel %vm355, %v232, 0
        %vm359 = vcmask 1044480
        %vm360 = vcmask 1045504
        %v361 = vsel %vm359, 4294967295, 65535
        %v362 = vsel %vm360, %v361, 0
        %v364 = vand.u32 %v335, %v362
        %v367 = vand.u32 %v336, %v362
        %v370 = vand.u32 %v337, %v362
        %v373 = vand.u32 %v338, %v362
        %375 = vmatpush.bf16.msra.mxu0 0
        %376 = vmatpush.bf16.msra.mxu0 0
        %377 = vmatpush.bf16.msra.mxu0 0
        %378 = vmatpush.bf16.msra.mxu0 %v364
        %379 = vmatpush.bf16.msra.mxu0 %v331
        %380 = vmatpush.bf16.msra.mxu0 %v327
        %381 = vmatpush.bf16.msra.mxu0 %v323
        %382 = vmatpush.bf16.msra.mxu0 %v319
        %383 = vmatmul.bf16.gmra.mxu0 %v357
        %v384 = vpop.f32.mrf.mxu0
        %v385 = vadd.f32 %v257, %v384
        %v386 = vpop.f32.mrf.mxu0
        %387 = vdwg.mxu0
        %388 = vmatpush.bf16.msra.mxu0 0
        %389 = vmatpush.bf16.msra.mxu0 0
        %390 = vmatpush.bf16.msra.mxu0 0
        %391 = vmatpush.bf16.msra.mxu0 %v367
        %392 = vmatpush.bf16.msra.mxu0 %v332
        %393 = vmatpush.bf16.msra.mxu0 %v328
        %394 = vmatpush.bf16.msra.mxu0 %v324
        %395 = vmatpush.bf16.msra.mxu0 %v320
        %396 = vmatmul.bf16.gmra.mxu0 %v357
        %v397 = vpop.f32.mrf.mxu0
        %v398 = vadd.f32 %v257, %v397
        %v399 = vpop.f32.mrf.mxu0
        %400 = vdwg.mxu0
        %401 = vmatpush.bf16.msra.mxu0 0
        %402 = vmatpush.bf16.msra.mxu0 0
        %403 = vmatpush.bf16.msra.mxu0 0
        %404 = vmatpush.bf16.msra.mxu0 %v370
        %405 = vmatpush.bf16.msra.mxu0 %v333
        %406 = vmatpush.bf16.msra.mxu0 %v329
        %407 = vmatpush.bf16.msra.mxu0 %v325
        %408 = vmatpush.bf16.msra.mxu0 %v321
        %409 = vmatmul.bf16.gmra.mxu0 %v357
        %v410 = vpop.f32.mrf.mxu0
        %v411 = vadd.f32 %v257, %v410
        %v412 = vpop.f32.mrf.mxu0
        %413 = vdwg.mxu0
        %414 = vmatpush.bf16.msra.mxu0 0
        %415 = vmatpush.bf16.msra.mxu0 0
        %416 = vmatpush.bf16.msra.mxu0 0
        %417 = vmatpush.bf16.msra.mxu0 %v373
        %418 = vmatpush.bf16.msra.mxu0 %v334
        %419 = vmatpush.bf16.msra.mxu0 %v330
        %420 = vmatpush.bf16.msra.mxu0 %v326
        %421 = vmatpush.bf16.msra.mxu0 %v322
        %422 = vmatmul.bf16.gmra.mxu0 %v357
        %v423 = vpop.f32.mrf.mxu0
        %v424 = vadd.f32 %v257, %v423
        %v425 = vpop.f32.mrf.mxu0
        %426 = vdwg.mxu0
        %v431 = vrot.slane %v398, 4
        %v432 = vrot.slane %v424, 4
        %vm433 = vcmask 1043456
        %v434 = vsel %vm433, %v385, %v431
        %v435 = vsel %vm433, %v411, %v432
        %438 = vst [vmem:[%s229] sm:$0x77] %v434
        %439 = vst [vmem:[%s229 + $0x8] sm:$0x77] %v435
        %s440 = smul.u32 4, %s14
        %p441 = scmp.lt.s32.totalorder %s440, 7
        %s442 = scalar_select %p441, %s440, 7
        %s443 = smul.addr %s442, 4
        %s444 = scalar_lea.vmem %s3, %s443
        // Predicated region
        $region56: #{wiki_autoencoder2_forward.10} parent=50 // pred_check
          %p445 = pneg %p100
        $region57: #{wiki_autoencoder2_forward.10} parent=50 // pred_check_branch
          %447 = sbr.rel (%p445) target = $region59
        $region58: #{wiki_autoencoder2_forward.10} parent=50 // pred_region
          %s448 = smul.u32 4, %s14
        $region59: #{wiki_autoencoder2_forward.10} parent=50 // pred_fallthru
          _
      $region51: #{wiki_autoencoder2_forward.10} parent=5 // pred_fallthru
        _
      %p449 = scmp.le.s32.totalorder 2, %s9
      // Predicated region
      $region60: #{wiki_autoencoder2_forward.10} parent=5 // pred_check
        %p450 = pneg %p449
      $region61: #{wiki_autoencoder2_forward.10} parent=5 // pred_check_branch
        %452 = sbr.rel (%p450) target = $region63
      $region62: #{wiki_autoencoder2_forward.10} parent=5 // pred_region
        %s453 = ssub.s32 %s9, 2
        // Predicated region
        $region64: #{wiki_autoencoder2_forward.10} parent=62 // pred_check
          %p454 = pneg %p106
        $region65: #{wiki_autoencoder2_forward.10} parent=62 // pred_check_branch
          %456 = sbr.rel (%p454) target = $region67
        $region66: #{wiki_autoencoder2_forward.10} parent=62 // pred_region
          %s457 = smul.u32 4, %s15
          %p458 = scmp.lt.s32.totalorder %s457, 7
          %s459 = scalar_select %p458, %s457, 7
          %s460 = smul.addr %s459, 4
          %s461 = scalar_lea.vmem %s3, %s460
        $region67: #{wiki_autoencoder2_forward.10} parent=62 // pred_fallthru
          _
      $region63: #{wiki_autoencoder2_forward.10} parent=5 // pred_fallthru
        _
    $region6: #{wiki_autoencoder2_forward.10} parent=1 // loop_footer
      %s13 = sadd.s32 1, %s9
    $region7: #{wiki_autoencoder2_forward.10} parent=1 // loop_footer_branch
      %8 = sbr.rel target = $region3
    $region8: #{wiki_autoencoder2_forward.10} parent=1 // loop_exit
      _

// kernel: wiki_autoencoder2_forward.11
$region0: #{wiki_autoencoder2_forward.11}
  #allocation0 [shape = 'u32[]', space=smem, size = 0x4, offset = 0x4, fixed_abs, tag = 'smem constant byte address 0x4 - core index']
  #allocation1 [shape = 'u32[72,128]{1,0:T(1,128)}', space=vmem, size = 0x9000, scoped, tag = 'internal scratch']
  %s0 = inlined_call_operand.vmem [shape: bf16[3,75], index: 0, kind: input, shape index: {}]
  %s1 = inlined_call_operand.vmem [shape: bf16[75,256], index: 1, kind: input, shape index: {}]
  %s2 = inlined_call_operand.vmem [shape: f32[3,1], index: 2, kind: input, shape index: {}]
  %s3 = inlined_call_operand.vmem [shape: f32[3,256], index: 3, kind: output, shape index: {}]
  %s4 = sld [smem:[#allocation0]]
  $region22: #{wiki_autoencoder2_forward.11} parent=0
    _
  %s6 = ssub.s32 1, %s4
  %s7 = scalar_select 0, %s6, %s4
  // Predicated region
  $region2: #{wiki_autoencoder2_forward.11} parent=0 // pred_check
    _
  $region3: #{wiki_autoencoder2_forward.11} parent=0 // pred_check_branch
    %9 = sbr.rel (0) target = $region5
  $region4: #{wiki_autoencoder2_forward.11} parent=0 // pred_region
    _
  $region5: #{wiki_autoencoder2_forward.11} parent=0 // pred_fallthru
    _
  // Predicated region
  $region6: #{wiki_autoencoder2_forward.11} parent=0 // pred_check
    _
  $region7: #{wiki_autoencoder2_forward.11} parent=0 // pred_check_branch
    %11 = sbr.rel (0) target = $region9
  $region8: #{wiki_autoencoder2_forward.11} parent=0 // pred_region
    _
  $region9: #{wiki_autoencoder2_forward.11} parent=0 // pred_fallthru
    _
  // Predicated region
  $region10: #{wiki_autoencoder2_forward.11} parent=0 // pred_check
    _
  $region11: #{wiki_autoencoder2_forward.11} parent=0 // pred_check_branch
    %13 = sbr.rel (0) target = $region13
  $region12: #{wiki_autoencoder2_forward.11} parent=0 // pred_region
    _
  $region13: #{wiki_autoencoder2_forward.11} parent=0 // pred_fallthru
    _
  %v15 = vld [vmem:[%s0] sm:$0x3]
  %v16 = vld [vmem:[%s1] sm:$0xff]
  %v17 = vld [vmem:[%s1 + $0x8] sm:$0xff]
  %v18 = vld [vmem:[%s1 + $0x10] sm:$0xff]
  %v19 = vld [vmem:[%s1 + $0x18] sm:$0xff]
  %v20 = vld [vmem:[%s1 + $0x20] sm:$0xff]
  %v21 = vld [vmem:[%s1 + $0x28] sm:$0xff]
  %v22 = vld [vmem:[%s1 + $0x30] sm:$0xff]
  %v23 = vld [vmem:[%s1 + $0x38] sm:$0xff]
  %v24 = vld [vmem:[%s1 + $0x40] sm:$0xff]
  %v25 = vld [vmem:[%s1 + $0x48] sm:$0x33]
  %v26 = vld [vmem:[%s2] sm:$0x7]
  %28 = vset.pattern.permute.xlu0 0
  %29 = vperm.xlu0 %28, %v26
  %v30 = vpop.permute.xlu0 %29
  %v42 = vunpack.c.l.b16 %v16
  %v43 = vunpack.c.h.b16 %v16
  %v44 = vunpack.c.l.b16 %v17
  %v45 = vunpack.c.h.b16 %v17
  %v46 = vunpack.c.l.b16 %v18
  %v47 = vunpack.c.h.b16 %v18
  %v48 = vunpack.c.l.b16 %v19
  %v49 = vunpack.c.h.b16 %v19
  %v50 = vunpack.c.l.b16 %v20
  %v51 = vunpack.c.h.b16 %v20
  %v52 = vunpack.c.l.b16 %v21
  %v53 = vunpack.c.h.b16 %v21
  %v54 = vunpack.c.l.b16 %v22
  %v55 = vunpack.c.h.b16 %v22
  %v56 = vunpack.c.l.b16 %v23
  %v57 = vunpack.c.h.b16 %v23
  %v58 = vunpack.c.l.b16 %v24
  %v59 = vunpack.c.h.b16 %v24
  %v60 = vunpack.c.l.b16 %v25
  %v61 = vunpack.c.h.b16 %v25
  %v62 = vpack.c.b16 %v44, %v42
  %v63 = vpack.c.b16 %v45, %v43
  %v64 = vpack.c.b16 %v48, %v46
  %v65 = vpack.c.b16 %v49, %v47
  %v66 = vpack.c.b16 %v52, %v50
  %v67 = vpack.c.b16 %v53, %v51
  %v68 = vpack.c.b16 %v56, %v54
  %v69 = vpack.c.b16 %v57, %v55
  %v70 = vpack.c.b16 %v60, %v58
  %v71 = vpack.c.b16 %v61, %v59
  %vm80 = vcmask 613376
  %v82 = vsel %vm80, %v15, 0
  %vm84 = vcmask 1044480
  %vm85 = vcmask 1045504
  %v86 = vsel %vm84, 4294967295, 65535
  %v87 = vsel %vm85, %v86, 0
  %v89 = vand.u32 %v70, %v87
  %v92 = vand.u32 %v71, %v87
  %94 = vmatpush.bf16.msra.mxu0 0
  %95 = vmatpush.bf16.msra.mxu0 0
  %96 = vmatpush.bf16.msra.mxu0 0
  %97 = vmatpush.bf16.msra.mxu0 %v89
  %98 = vmatpush.bf16.msra.mxu0 %v68
  %99 = vmatpush.bf16.msra.mxu0 %v66
  %100 = vmatpush.bf16.msra.mxu0 %v64
  %101 = vmatpush.bf16.msra.mxu0 %v62
  %102 = vmatmul.bf16.gmra.mxu0 %v82
  %v103 = vpop.f32.mrf.mxu0
  %v104 = vadd.f32 %v30, %v103
  %v105 = vpop.f32.mrf.mxu0
  %106 = vdwg.mxu0
  %107 = vmatpush.bf16.msra.mxu0 0
  %108 = vmatpush.bf16.msra.mxu0 0
  %109 = vmatpush.bf16.msra.mxu0 0
  %110 = vmatpush.bf16.msra.mxu0 %v92
  %111 = vmatpush.bf16.msra.mxu0 %v69
  %112 = vmatpush.bf16.msra.mxu0 %v67
  %113 = vmatpush.bf16.msra.mxu0 %v65
  %114 = vmatpush.bf16.msra.mxu0 %v63
  %115 = vmatmul.bf16.gmra.mxu0 %v82
  %v116 = vpop.f32.mrf.mxu0
  %v117 = vadd.f32 %v30, %v116
  %v118 = vpop.f32.mrf.mxu0
  %119 = vdwg.mxu0
  %v122 = vrot.slane %v117, 4
  %vm123 = vcmask 1043456
  %v124 = vsel %vm123, %v104, %v122
  %126 = vst [vmem:[%s3] sm:$0x77] %v124
  // Predicated region
  $region14: #{wiki_autoencoder2_forward.11} parent=0 // pred_check
    _
  $region15: #{wiki_autoencoder2_forward.11} parent=0 // pred_check_branch
    %128 = sbr.rel (0) target = $region17
  $region16: #{wiki_autoencoder2_forward.11} parent=0 // pred_region
    _
  $region17: #{wiki_autoencoder2_forward.11} parent=0 // pred_fallthru
    _
  // Predicated region
  $region18: #{wiki_autoencoder2_forward.11} parent=0 // pred_check
    _
  $region19: #{wiki_autoencoder2_forward.11} parent=0 // pred_check_branch
    %130 = sbr.rel (0) target = $region21
  $region20: #{wiki_autoencoder2_forward.11} parent=0 // pred_region
    _
  $region21: #{wiki_autoencoder2_forward.11} parent=0 // pred_fallthru
    _

// kernel: wiki_autoencoder2_forward.12
$region0: #{wiki_autoencoder2_forward.12}
  #allocation0 [shape = 'u32[]', space=smem, size = 0x4, offset = 0x4, fixed_abs, tag = 'smem constant byte address 0x4 - core index']
  #allocation1 [shape = 'u32[72,128]{1,0:T(1,128)}', space=vmem, size = 0x9000, scoped, tag = 'internal scratch']
  #allocation2 [shape = 'f32[1,1]{1,0:T(1,128)S(1)}', space=vmem, size = 0x200, scoped, tag = 'scoped memory for wiki_autoencoder2_forward.12']
  %s0 = inlined_call_operand.vmem [shape: bf16[1,75], index: 0, kind: input, shape index: {}]
  %s1 = inlined_call_operand.vmem [shape: bf16[75,128], index: 1, kind: input, shape index: {}]
  %s2 = inlined_call_operand.<no memory space> [shape: f32[1,1], index: 2, kind: input, shape index: {}]
  %s3 = inlined_call_operand.vmem [shape: f32[1,128], index: 3, kind: output, shape index: {}]
  %s4 = sld [smem:[#allocation0]]
  $region22: #{wiki_autoencoder2_forward.12} parent=0
    _
  %s6 = ssub.s32 1, %s4
  %s7 = scalar_select 0, %s6, %s4
  %v8 = vstv %s2
  %9 = vst [vmem:[#allocation2] sm:$0x1] %v8
  // Predicated region
  $region2: #{wiki_autoencoder2_forward.12} parent=0 // pred_check
    _
  $region3: #{wiki_autoencoder2_forward.12} parent=0 // pred_check_branch
    %11 = sbr.rel (0) target = $region5
  $region4: #{wiki_autoencoder2_forward.12} parent=0 // pred_region
    _
  $region5: #{wiki_autoencoder2_forward.12} parent=0 // pred_fallthru
    _
  // Predicated region
  $region6: #{wiki_autoencoder2_forward.12} parent=0 // pred_check
    _
  $region7: #{wiki_autoencoder2_forward.12} parent=0 // pred_check_branch
    %13 = sbr.rel (0) target = $region9
  $region8: #{wiki_autoencoder2_forward.12} parent=0 // pred_region
    _
  $region9: #{wiki_autoencoder2_forward.12} parent=0 // pred_fallthru
    _
  // Predicated region
  $region10: #{wiki_autoencoder2_forward.12} parent=0 // pred_check
    _
  $region11: #{wiki_autoencoder2_forward.12} parent=0 // pred_check_branch
    %15 = sbr.rel (0) target = $region13
  $region12: #{wiki_autoencoder2_forward.12} parent=0 // pred_region
    _
  $region13: #{wiki_autoencoder2_forward.12} parent=0 // pred_fallthru
    _
  %v17 = vld [vmem:[%s0] sm:$0x1]
  %v18 = vld [vmem:[%s1] sm:$0xf]
  %v19 = vld [vmem:[%s1 + $0x4] sm:$0xf]
  %v20 = vld [vmem:[%s1 + $0x8] sm:$0xf]
  %v21 = vld [vmem:[%s1 + $0xc] sm:$0xf]
  %v22 = vld [vmem:[%s1 + $0x10] sm:$0xf]
  %v23 = vld [vmem:[%s1 + $0x14] sm:$0xf]
  %v24 = vld [vmem:[%s1 + $0x18] sm:$0xf]
  %v25 = vld [vmem:[%s1 + $0x1c] sm:$0xf]
  %v26 = vld [vmem:[%s1 + $0x20] sm:$0xf]
  %v27 = vld [vmem:[%s1 + $0x24] sm:$0x3]
  %v28 = vld [vmem:[#allocation2] sm:$0x1]
  %30 = vset.pattern.permute.xlu0 0
  %31 = vperm.xlu0 %30, %v28
  %v32 = vpop.permute.xlu0 %31
  %v34 = vperm.slane %v32, 0
  %v45 = vunpack.c.l.b16 %v18
  %v46 = vunpack.c.l.b16 %v19
  %v47 = vunpack.c.l.b16 %v20
  %v48 = vunpack.c.l.b16 %v21
  %v49 = vunpack.c.l.b16 %v22
  %v50 = vunpack.c.l.b16 %v23
  %v51 = vunpack.c.l.b16 %v24
  %v52 = vunpack.c.l.b16 %v25
  %v53 = vunpack.c.l.b16 %v26
  %v54 = vunpack.c.l.b16 %v27
  %v55 = vpack.c.b16 %v46, %v45
  %v56 = vpack.c.b16 %v48, %v47
  %v57 = vpack.c.b16 %v50, %v49
  %v58 = vpack.c.b16 %v52, %v51
  %v59 = vpack.c.b16 %v54, %v53
  %vm64 = vcmask 613376
  %v66 = vsel %vm64, %v17, 0
  %vm68 = vcmask 1044480
  %vm69 = vcmask 1045504
  %v70 = vsel %vm68, 4294967295, 65535
  %v71 = vsel %vm69, %v70, 0
  %v73 = vand.u32 %v59, %v71
  %75 = vmatpush.bf16.msra.mxu0 0
  %76 = vmatpush.bf16.msra.mxu0 0
  %77 = vmatpush.bf16.msra.mxu0 0
  %78 = vmatpush.bf16.msra.mxu0 %v73
  %79 = vmatpush.bf16.msra.mxu0 %v58
  %80 = vmatpush.bf16.msra.mxu0 %v57
  %81 = vmatpush.bf16.msra.mxu0 %v56
  %82 = vmatpush.bf16.msra.mxu0 %v55
  %83 = vmatmul.bf16.gmra.mxu0 %v66
  %v84 = vpop.f32.mrf.mxu0
  %v85 = vadd.f32 %v34, %v84
  %v86 = vpop.f32.mrf.mxu0
  %87 = vdwg.mxu0
  %88 = vst [vmem:[%s3] sm:$0x1] %v85
  // Predicated region
  $region14: #{wiki_autoencoder2_forward.12} parent=0 // pred_check
    _
  $region15: #{wiki_autoencoder2_forward.12} parent=0 // pred_check_branch
    %90 = sbr.rel (0) target = $region17
  $region16: #{wiki_autoencoder2_forward.12} parent=0 // pred_region
    _
  $region17: #{wiki_autoencoder2_forward.12} parent=0 // pred_fallthru
    _
  // Predicated region
  $region18: #{wiki_autoencoder2_forward.12} parent=0 // pred_check
    _
  $region19: #{wiki_autoencoder2_forward.12} parent=0 // pred_check_branch
    %92 = sbr.rel (0) target = $region21
  $region20: #{wiki_autoencoder2_forward.12} parent=0 // pred_region
    _
  $region21: #{wiki_autoencoder2_forward.12} parent=0 // pred_fallthru
    _

// kernel: wiki_autoencoder2_forward.13
$region0: #{wiki_autoencoder2_forward.13}
  #allocation0 [shape = 'u32[]', space=smem, size = 0x4, offset = 0x4, fixed_abs, tag = 'smem constant byte address 0x4 - core index']
  #allocation1 [shape = 'u32[72,128]{1,0:T(1,128)}', space=vmem, size = 0x9000, scoped, tag = 'internal scratch']
  %s0 = inlined_call_operand.vmem [shape: bf16[12,18], index: 0, kind: input, shape index: {}]
  %s1 = inlined_call_operand.vmem [shape: bf16[18,128], index: 1, kind: input, shape index: {}]
  %s2 = inlined_call_operand.vmem [shape: f32[12,1], index: 2, kind: input, shape index: {}]
  %s3 = inlined_call_operand.vmem [shape: f32[12,128], index: 3, kind: output, shape index: {}]
  %s4 = sld [smem:[#allocation0]]
  $region22: #{wiki_autoencoder2_forward.13} parent=0
    _
  %s6 = ssub.s32 1, %s4
  %s7 = scalar_select 0, %s6, %s4
  // Predicated region
  $region2: #{wiki_autoencoder2_forward.13} parent=0 // pred_check
    _
  $region3: #{wiki_autoencoder2_forward.13} parent=0 // pred_check_branch
    %9 = sbr.rel (0) target = $region5
  $region4: #{wiki_autoencoder2_forward.13} parent=0 // pred_region
    _
  $region5: #{wiki_autoencoder2_forward.13} parent=0 // pred_fallthru
    _
  // Predicated region
  $region6: #{wiki_autoencoder2_forward.13} parent=0 // pred_check
    _
  $region7: #{wiki_autoencoder2_forward.13} parent=0 // pred_check_branch
    %11 = sbr.rel (0) target = $region9
  $region8: #{wiki_autoencoder2_forward.13} parent=0 // pred_region
    _
  $region9: #{wiki_autoencoder2_forward.13} parent=0 // pred_fallthru
    _
  // Predicated region
  $region10: #{wiki_autoencoder2_forward.13} parent=0 // pred_check
    _
  $region11: #{wiki_autoencoder2_forward.13} parent=0 // pred_check_branch
    %13 = sbr.rel (0) target = $region13
  $region12: #{wiki_autoencoder2_forward.13} parent=0 // pred_region
    _
  $region13: #{wiki_autoencoder2_forward.13} parent=0 // pred_fallthru
    _
  %v15 = vld [vmem:[%s0] sm:$0xf]
  %v16 = vld [vmem:[%s0 + $0x4] sm:$0x3]
  %v17 = vld [vmem:[%s1] sm:$0xf]
  %v18 = vld [vmem:[%s1 + $0x4] sm:$0xf]
  %v19 = vld [vmem:[%s1 + $0x8] sm:$0x1]
  %v20 = vld [vmem:[%s2] sm:$0xff]
  %v21 = vld [vmem:[%s2 + $0x8] sm:$0xf]
  %23 = vset.pattern.permute.xlu0 0
  %24 = vperm.xlu0 %23, %v20
  %v25 = vpop.permute.xlu0 %24
  %28 = vset.pattern.permute.xlu0 0
  %29 = vperm.xlu0 %28, %v21
  %v30 = vpop.permute.xlu0 %29
  %v34 = vunpack.c.l.b16 %v15
  %v35 = vunpack.c.l.b16 %v16
  %v36 = vpack.c.b16 %v35, %v34
  %v40 = vunpack.c.l.b16 %v17
  %v41 = vunpack.c.l.b16 %v18
  %v42 = vunpack.c.l.b16 %v19
  %v43 = vpack.c.b16 %v41, %v40
  %v44 = vpack.c.b16 %v42, %v42
  %vm46 = vcmask 146432
  %v48 = vsel %vm46, %v36, 0
  %vm50 = vcmask 1040384
  %v52 = vsel %vm50, %v44, 0
  %54 = vmatpush.bf16.msra.mxu0 0
  %55 = vmatpush.bf16.msra.mxu0 0
  %56 = vmatpush.bf16.msra.mxu0 0
  %57 = vmatpush.bf16.msra.mxu0 0
  %58 = vmatpush.bf16.msra.mxu0 0
  %59 = vmatpush.bf16.msra.mxu0 0
  %60 = vmatpush.bf16.msra.mxu0 %v52
  %61 = vmatpush.bf16.msra.mxu0 %v43
  %62 = vmatmul.bf16.gmra.mxu0 %v48
  %v63 = vpop.f32.mrf.mxu0
  %v64 = vadd.f32 %v25, %v63
  %v65 = vpop.f32.mrf.mxu0
  %v66 = vadd.f32 %v30, %v65
  %67 = vdwg.mxu0
  %68 = vst [vmem:[%s3] sm:$0xff] %v64
  %69 = vst [vmem:[%s3 + $0x8] sm:$0xf] %v66
  // Predicated region
  $region14: #{wiki_autoencoder2_forward.13} parent=0 // pred_check
    _
  $region15: #{wiki_autoencoder2_forward.13} parent=0 // pred_check_branch
    %71 = sbr.rel (0) target = $region17
  $region16: #{wiki_autoencoder2_forward.13} parent=0 // pred_region
    _
  $region17: #{wiki_autoencoder2_forward.13} parent=0 // pred_fallthru
    _
  // Predicated region
  $region18: #{wiki_autoencoder2_forward.13} parent=0 // pred_check
    _
  $region19: #{wiki_autoencoder2_forward.13} parent=0 // pred_check_branch
    %73 = sbr.rel (0) target = $region21
  $region20: #{wiki_autoencoder2_forward.13} parent=0 // pred_region
    _
  $region21: #{wiki_autoencoder2_forward.13} parent=0 // pred_fallthru
    _

// kernel: wiki_autoencoder2_forward.14
$region0: #{wiki_autoencoder2_forward.14}
  #allocation0 [shape = 'u32[]', space=smem, size = 0x4, offset = 0x4, fixed_abs, tag = 'smem constant byte address 0x4 - core index']
  #allocation1 [shape = 'u32[72,128]{1,0:T(1,128)}', space=vmem, size = 0x9000, scoped, tag = 'internal scratch']
  %s0 = inlined_call_operand.vmem [shape: bf16[12,27], index: 0, kind: input, shape index: {}]
  %s1 = inlined_call_operand.vmem [shape: bf16[27,512], index: 1, kind: input, shape index: {}]
  %s2 = inlined_call_operand.vmem [shape: f32[12,1], index: 2, kind: input, shape index: {}]
  %s3 = inlined_call_operand.vmem [shape: f32[12,512], index: 3, kind: output, shape index: {}]
  %s4 = sld [smem:[#allocation0]]
  $region102: #{wiki_autoencoder2_forward.14} parent=0
    _
  %s6 = ssub.s32 1, %s4
  %s7 = scalar_select 0, %s6, %s4
  $region1: #{wiki_autoencoder2_forward.14} parent=0
    #allocation2 [shape = 'u8[32768]{0}', space=vmem, size = 0x8000, scoped, tag = 'input window, operand 1']
    #allocation3 [shape = 'u8[32768]{0}', space=vmem, size = 0x8000, scoped, tag = 'output window, operand 0']
    loop: start=0, step=1, limit=4
    $region2: #{wiki_autoencoder2_forward.14} parent=1 // loop_pre_header
      _
    $region3: #{wiki_autoencoder2_forward.14} parent=1 // loop_header
      %s9 = sphi 0, %s13
      %p10 = scmp.ge.s32.totalorder %s9, 4
      %s17 = sphi 0, %s17
      %s19 = sphi 0, %s17
      %s20 = sphi 0, %s19
      %s34 = sphi 0, %s20
      %s40 = sphi 0, %s42
      %s43 = sphi 0, %s40
      %s44 = sphi 0, %s43
      %s60 = sphi 0, %s44
      %s64 = sphi 0, %s64
      %s66 = sphi 0, %s64
      %s67 = sphi 0, %s66
      %s81 = sphi 0, %s67
      %s87 = sphi 0, %s89
      %s90 = sphi 0, %s87
      %s91 = sphi 0, %s90
      %s107 = sphi 0, %s91
    $region4: #{wiki_autoencoder2_forward.14} parent=1 // loop_header_branch
      %12 = sbr.rel (%p10) target = $region8
    $region5: #{wiki_autoencoder2_forward.14} parent=1 // loop_body
      %s14 = ssub.s32 %s9, 1
      %s15 = ssub.s32 %s9, 2
      %s16 = sadd.s32 %s9, 1
      %s18 = sadd.s32 %s17, 1
      %p21 = scmp.eq.s32.totalorder %s9, 1
      %p22 = scmp.ne.s32.totalorder %s17, %s19
      %p23 = scmp.eq.s32.totalorder %s9, 0
      %p24 = por %p22, %p23
      %p25 = scmp.ne.s32.totalorder %s17, %s19
      %p26 = scmp.eq.s32.totalorder %s14, 1
      %p27 = por %p25, %p26
      %p28 = scmp.ne.s32.totalorder %s19, %s20
      %p29 = scmp.eq.s32.totalorder %s14, 0
      %p30 = por %p28, %p29
      %p31 = scmp.ne.s32.totalorder %s19, %s20
      %p32 = scmp.eq.s32.totalorder %s15, 1
      %p33 = por %p31, %p32
      %p35 = scmp.ne.s32.totalorder %s20, %s34
      %p36 = scmp.eq.s32.totalorder %s15, 0
      %p37 = por %p35, %p36
      %s38 = ssub.s32 %s9, %s16
      %p39 = scmp.eq.s32.totalorder %s38, 0
      %s41 = sadd.s32 %s40, 1
      %s42 = scalar_select %p39, %s40, %s41
      %p45 = pneg %p39
      %p46 = scmp.eq.s32.totalorder %s9, 1
      %p47 = por %p45, %p46
      %p48 = scmp.ne.s32.totalorder %s40, %s43
      %p49 = scmp.eq.s32.totalorder %s9, 0
      %p50 = por %p48, %p49
      %p51 = scmp.ne.s32.totalorder %s40, %s43
      %p52 = scmp.eq.s32.totalorder %s14, 1
      %p53 = por %p51, %p52
      %p54 = scmp.ne.s32.totalorder %s43, %s44
      %p55 = scmp.eq.s32.totalorder %s14, 0
      %p56 = por %p54, %p55
      %p57 = scmp.ne.s32.totalorder %s43, %s44
      %p58 = scmp.eq.s32.totalorder %s15, 1
      %p59 = por %p57, %p58
      %p61 = scmp.ne.s32.totalorder %s44, %s60
      %p62 = scmp.eq.s32.totalorder %s15, 0
      %p63 = por %p61, %p62
      %s65 = sadd.s32 %s64, 1
      %p68 = scmp.eq.s32.totalorder %s9, 1
      %p69 = scmp.ne.s32.totalorder %s64, %s66
      %p70 = scmp.eq.s32.totalorder %s9, 0
      %p71 = por %p69, %p70
      %p72 = scmp.ne.s32.totalorder %s64, %s66
      %p73 = scmp.eq.s32.totalorder %s14, 1
      %p74 = por %p72, %p73
      %p75 = scmp.ne.s32.totalorder %s66, %s67
      %p76 = scmp.eq.s32.totalorder %s14, 0
      %p77 = por %p75, %p76
      %p78 = scmp.ne.s32.totalorder %s66, %s67
      %p79 = scmp.eq.s32.totalorder %s15, 1
      %p80 = por %p78, %p79
      %p82 = scmp.ne.s32.totalorder %s67, %s81
      %p83 = scmp.eq.s32.totalorder %s15, 0
      %p84 = por %p82, %p83
      %s85 = ssub.s32 %s9, %s16
      %p86 = scmp.eq.s32.totalorder %s85, 0
      %s88 = sadd.s32 %s87, 1
      %s89 = scalar_select %p86, %s87, %s88
      %p92 = pneg %p86
      %p93 = scmp.eq.s32.totalorder %s9, 1
      %p94 = por %p92, %p93
      %p95 = scmp.ne.s32.totalorder %s87, %s90
      %p96 = scmp.eq.s32.totalorder %s9, 0
      %p97 = por %p95, %p96
      %p98 = scmp.ne.s32.totalorder %s87, %s90
      %p99 = scmp.eq.s32.totalorder %s14, 1
      %p100 = por %p98, %p99
      %p101 = scmp.ne.s32.totalorder %s90, %s91
      %p102 = scmp.eq.s32.totalorder %s14, 0
      %p103 = por %p101, %p102
      %p104 = scmp.ne.s32.totalorder %s90, %s91
      %p105 = scmp.eq.s32.totalorder %s15, 1
      %p106 = por %p104, %p105
      %p108 = scmp.ne.s32.totalorder %s91, %s107
      %p109 = scmp.eq.s32.totalorder %s15, 0
      %p110 = por %p108, %p109
      %p111 = scmp.le.s32.totalorder 1, %s9
      %p112 = scmp.lt.s32.totalorder %s9, 3
      %p113 = pnand %p111, %p112
      %p114 = pneg %p113
      // Predicated region
      $region9: #{wiki_autoencoder2_forward.14} parent=5 // pred_check
        _
      $region10: #{wiki_autoencoder2_forward.14} parent=5 // pred_check_branch
        %116 = sbr.rel (%p113) target = $region12
      $region11: #{wiki_autoencoder2_forward.14} parent=5 // pred_region
        %s117 = ssub.s32 %s9, 1
        // Predicated region
        $region13: #{wiki_autoencoder2_forward.14} parent=11 // pred_check
          %p118 = pneg %p30
        $region14: #{wiki_autoencoder2_forward.14} parent=11 // pred_check_branch
          %120 = sbr.rel (%p118) target = $region16
        $region15: #{wiki_autoencoder2_forward.14} parent=11 // pred_region
          _
        $region16: #{wiki_autoencoder2_forward.14} parent=11 // pred_fallthru
          _
        // Predicated region
        $region17: #{wiki_autoencoder2_forward.14} parent=11 // pred_check
          %p121 = pneg %p77
        $region18: #{wiki_autoencoder2_forward.14} parent=11 // pred_check_branch
          %123 = sbr.rel (%p121) target = $region20
        $region19: #{wiki_autoencoder2_forward.14} parent=11 // pred_region
          _
        $region20: #{wiki_autoencoder2_forward.14} parent=11 // pred_fallthru
          _
      $region12: #{wiki_autoencoder2_forward.14} parent=5 // pred_fallthru
        _
      %p124 = scmp.lt.s32.totalorder %s9, 2
      // Predicated region
      $region21: #{wiki_autoencoder2_forward.14} parent=5 // pred_check
        %p125 = pneg %p124
      $region22: #{wiki_autoencoder2_forward.14} parent=5 // pred_check_branch
        %127 = sbr.rel (%p125) target = $region24
      $region23: #{wiki_autoencoder2_forward.14} parent=5 // pred_region
        // Predicated region
        $region25: #{wiki_autoencoder2_forward.14} parent=23 // pred_check
          %p128 = pneg %p50
        $region26: #{wiki_autoencoder2_forward.14} parent=23 // pred_check_branch
          %130 = sbr.rel (%p128) target = $region28
        $region27: #{wiki_autoencoder2_forward.14} parent=23 // pred_region
          %s131 = sand.u32 %s40, 1
          %s132 = sand.u32 %s40, 1
          %s133 = smul.addr %s132, 32
          %s134 = scalar_lea.vmem [#allocation2], %s133
          %s135 = smul.u32 2, %s9
          %s136 = smul.addr %s135, 4
          %s137 = scalar_lea.vmem %s1, %s136
          // Predicated region
          $region29: #{wiki_autoencoder2_forward.14} parent=27 // pred_check
            _
          $region30: #{wiki_autoencoder2_forward.14} parent=27 // pred_check_branch
            %139 = sbr.rel (0) target = $region32
          $region31: #{wiki_autoencoder2_forward.14} parent=27 // pred_region
            // Predicated region
            $region33: #{wiki_autoencoder2_forward.14} parent=31 // pred_check
              _
            $region34: #{wiki_autoencoder2_forward.14} parent=31 // pred_check_branch
              %141 = sbr.rel (0) target = $region36
            $region35: #{wiki_autoencoder2_forward.14} parent=31 // pred_region
              // Predicated region
              $region48: #{wiki_autoencoder2_forward.14} parent=35 // pred_check
                _
              $region49: #{wiki_autoencoder2_forward.14} parent=35 // pred_check_branch
                %163 = sbr.rel (0) target = $region51
              $region50: #{wiki_autoencoder2_forward.14} parent=35 // pred_region
                loop: start=0, step=1, limit=1
                $region52: #{wiki_autoencoder2_forward.14} parent=50 // loop_pre_header
                  _
                $region53: #{wiki_autoencoder2_forward.14} parent=50 // loop_header
                  %s165 = sphi 0, %s169
                  %p166 = scmp.ge.s32.totalorder %s165, 1
                  %s170 = sphi %s137, %s137
                  %s171 = sphi %s134, %s134
                $region54: #{wiki_autoencoder2_forward.14} parent=50 // loop_header_branch
                  %168 = sbr.rel (%p166) target = $region58
                $region55: #{wiki_autoencoder2_forward.14} parent=50 // loop_body
                  %v172 = vld [vmem:[%s170] sm:$0xff]
                  %173 = vst [vmem:[%s171] sm:$0xff] %v172
                  %v174 = vld [vmem:[%s170 + $0x10] sm:$0xff]
                  %175 = vst [vmem:[%s171 + $0x8] sm:$0xff] %v174
                  %v176 = vld [vmem:[%s170 + $0x20] sm:$0xff]
                  %177 = vst [vmem:[%s171 + $0x10] sm:$0xff] %v176
                  %v178 = vld [vmem:[%s170 + $0x30] sm:$0xff]
                  %179 = vst [vmem:[%s171 + $0x18] sm:$0xff] %v178
                $region56: #{wiki_autoencoder2_forward.14} parent=50 // loop_footer
                  %s169 = sadd.s32 1, %s165
                $region57: #{wiki_autoencoder2_forward.14} parent=50 // loop_footer_branch
                  %164 = sbr.rel target = $region53
                $region58: #{wiki_autoencoder2_forward.14} parent=50 // loop_exit
                  _
              $region51: #{wiki_autoencoder2_forward.14} parent=35 // pred_fallthru
                _
              // Predicated region
              $region59: #{wiki_autoencoder2_forward.14} parent=35 // pred_check
                _
              $region60: #{wiki_autoencoder2_forward.14} parent=35 // pred_check_branch
                %181 = sbr.rel target = $region62
              $region61: #{wiki_autoencoder2_forward.14} parent=35 // pred_region
                _
              $region62: #{wiki_autoencoder2_forward.14} parent=35 // pred_fallthru
                _
            $region36: #{wiki_autoencoder2_forward.14} parent=31 // pred_fallthru
              _
            // Predicated region
            $region37: #{wiki_autoencoder2_forward.14} parent=31 // pred_check
              _
            $region38: #{wiki_autoencoder2_forward.14} parent=31 // pred_check_branch
              %143 = sbr.rel target = $region40
            $region39: #{wiki_autoencoder2_forward.14} parent=31 // pred_region
              %s145 = ssub.s32 256, 1
              loop: start=0, step=1, limit=1
              $region41: #{wiki_autoencoder2_forward.14} parent=39 // loop_pre_header
                _
              $region42: #{wiki_autoencoder2_forward.14} parent=39 // loop_header
                %s147 = sphi 0, %s151
                %p148 = scmp.ge.s32.totalorder %s147, 1
                %s152 = sphi %s137, %s137
                %s153 = sphi %s134, %s134
              $region43: #{wiki_autoencoder2_forward.14} parent=39 // loop_header_branch
                %150 = sbr.rel (%p148) target = $region47
              $region44: #{wiki_autoencoder2_forward.14} parent=39 // loop_body
                %v154 = vld [vmem:[%s152] sm:%s145]
                %155 = vst [vmem:[%s153] sm:%s145] %v154
                %v156 = vld [vmem:[%s152 + $0x10] sm:%s145]
                %157 = vst [vmem:[%s153 + $0x8] sm:%s145] %v156
                %v158 = vld [vmem:[%s152 + $0x20] sm:%s145]
                %159 = vst [vmem:[%s153 + $0x10] sm:%s145] %v158
                %v160 = vld [vmem:[%s152 + $0x30] sm:%s145]
                %161 = vst [vmem:[%s153 + $0x18] sm:%s145] %v160
              $region45: #{wiki_autoencoder2_forward.14} parent=39 // loop_footer
                %s151 = sadd.s32 1, %s147
              $region46: #{wiki_autoencoder2_forward.14} parent=39 // loop_footer_branch
                %146 = sbr.rel target = $region42
              $region47: #{wiki_autoencoder2_forward.14} parent=39 // loop_exit
                _
            $region40: #{wiki_autoencoder2_forward.14} parent=31 // pred_fallthru
              _
          $region32: #{wiki_autoencoder2_forward.14} parent=27 // pred_fallthru
            _
          %182 = vnop
        $region28: #{wiki_autoencoder2_forward.14} parent=23 // pred_fallthru
          _
      $region24: #{wiki_autoencoder2_forward.14} parent=5 // pred_fallthru
        _
      %p183 = scmp.le.s32.totalorder 1, %s9
      %p184 = scmp.lt.s32.totalorder %s9, 3
      %p185 = pnand %p183, %p184
      %p186 = pneg %p185
      // Predicated region
      $region63: #{wiki_autoencoder2_forward.14} parent=5 // pred_check
        _
      $region64: #{wiki_autoencoder2_forward.14} parent=5 // pred_check_branch
        %188 = sbr.rel (%p185) target = $region66
      $region65: #{wiki_autoencoder2_forward.14} parent=5 // pred_region
        %s189 = ssub.s32 %s9, 1
        %s190 = sand.u32 %s43, 1
        %s191 = sand.u32 %s43, 1
        %s192 = smul.addr %s191, 32
        %s193 = scalar_lea.vmem [#allocation2], %s192
        // Predicated region
        $region67: #{wiki_autoencoder2_forward.14} parent=65 // pred_check
          %p194 = pneg %p56
        $region68: #{wiki_autoencoder2_forward.14} parent=65 // pred_check_branch
          %196 = sbr.rel (%p194) target = $region70
        $region69: #{wiki_autoencoder2_forward.14} parent=65 // pred_region
          _
        $region70: #{wiki_autoencoder2_forward.14} parent=65 // pred_fallthru
          _
        %p197 = pneg %p30
        %p198 = pneg %p27
        %s199 = sand.u32 %s43, 1
        %s200 = sand.u32 %s43, 1
        %s201 = smul.addr %s200, 32
        %s202 = scalar_lea.vmem [#allocation2], %s201
        %p203 = pneg %p56
        %p204 = pneg %p53
        %p205 = pneg %p77
        %p206 = pneg %p74
        %p207 = pneg %p103
        %p208 = pneg %p100
        %s209 = sand.u32 %s90, 1
        %s210 = sand.u32 %s90, 1
        %s211 = smul.addr %s210, 32
        %s212 = scalar_lea.vmem [#allocation3], %s211
        %s213 = smul.u32 2, %s14
        %s214 = smul.u32 2, %s14
        %v216 = vld [vmem:[%s0] sm:$0xf]
        %v217 = vld [vmem:[%s0 + $0x4] sm:$0x3]
        %v218 = vld [vmem:[%s193] sm:$0xff]
        %v219 = vld [vmem:[%s193 + $0x8] sm:$0xff]
        %v220 = vld [vmem:[%s193 + $0x10] sm:$0xff]
        %v221 = vld [vmem:[%s193 + $0x18] sm:$0x33]
        %v222 = vld [vmem:[%s2] sm:$0xff]
        %v223 = vld [vmem:[%s2 + $0x8] sm:$0xf]
        %225 = vset.pattern.permute.xlu0 0
        %226 = vperm.xlu0 %225, %v222
        %v227 = vpop.permute.xlu0 %226
        %230 = vset.pattern.permute.xlu0 0
        %231 = vperm.xlu0 %230, %v223
        %v232 = vpop.permute.xlu0 %231
        %v236 = vunpack.c.l.b16 %v216
        %v237 = vunpack.c.l.b16 %v217
        %v238 = vpack.c.b16 %v237, %v236
        %v243 = vunpack.c.l.b16 %v218
        %v244 = vunpack.c.h.b16 %v218
        %v245 = vunpack.c.l.b16 %v219
        %v246 = vunpack.c.h.b16 %v219
        %v247 = vunpack.c.l.b16 %v220
        %v248 = vunpack.c.h.b16 %v220
        %v249 = vunpack.c.l.b16 %v221
        %v250 = vunpack.c.h.b16 %v221
        %v251 = vpack.c.b16 %v245, %v243
        %v252 = vpack.c.b16 %v246, %v244
        %v253 = vpack.c.b16 %v249, %v247
        %v254 = vpack.c.b16 %v250, %v248
        %vm257 = vcmask 220160
        %v259 = vsel %vm257, %v238, 0
        %vm261 = vcmask 1044480
        %vm262 = vcmask 1045504
        %v263 = vsel %vm261, 4294967295, 65535
        %v264 = vsel %vm262, %v263, 0
        %v266 = vand.u32 %v253, %v264
        %v269 = vand.u32 %v254, %v264
        %271 = vmatpush.bf16.msra.mxu0 0
        %272 = vmatpush.bf16.msra.mxu0 0
        %273 = vmatpush.bf16.msra.mxu0 0
        %274 = vmatpush.bf16.msra.mxu0 0
        %275 = vmatpush.bf16.msra.mxu0 0
        %276 = vmatpush.bf16.msra.mxu0 0
        %277 = vmatpush.bf16.msra.mxu0 %v266
        %278 = vmatpush.bf16.msra.mxu0 %v251
        %279 = vmatmul.bf16.gmra.mxu0 %v259
        %v280 = vpop.f32.mrf.mxu0
        %v281 = vadd.f32 %v227, %v280
        %v282 = vpop.f32.mrf.mxu0
        %v283 = vadd.f32 %v232, %v282
        %284 = vdwg.mxu0
        %285 = vmatpush.bf16.msra.mxu0 0
        %286 = vmatpush.bf16.msra.mxu0 0
        %287 = vmatpush.bf16.msra.mxu0 0
        %288 = vmatpush.bf16.msra.mxu0 0
        %289 = vmatpush.bf16.msra.mxu0 0
        %290 = vmatpush.bf16.msra.mxu0 0
        %291 = vmatpush.bf16.msra.mxu0 %v269
        %292 = vmatpush.bf16.msra.mxu0 %v252
        %293 = vmatmul.bf16.gmra.mxu0 %v259
        %v294 = vpop.f32.mrf.mxu0
        %v295 = vadd.f32 %v227, %v294
        %v296 = vpop.f32.mrf.mxu0
        %v297 = vadd.f32 %v232, %v296
        %298 = vdwg.mxu0
        %299 = vst [vmem:[%s212] sm:$0xff] %v281
        %300 = vst [vmem:[%s212 + $0x8] sm:$0xff] %v295
        %301 = vst [vmem:[%s212 + $0x10] sm:$0xf] %v283
        %302 = vst [vmem:[%s212 + $0x18] sm:$0xf] %v297
        %s303 = sand.u32 %s90, 1
        %s304 = sand.u32 %s90, 1
        %s305 = smul.addr %s304, 32
        %s306 = scalar_lea.vmem [#allocation3], %s305
        // Predicated region
        $region71: #{wiki_autoencoder2_forward.14} parent=65 // pred_check
          %p307 = pneg %p100
        $region72: #{wiki_autoencoder2_forward.14} parent=65 // pred_check_branch
          %309 = sbr.rel (%p307) target = $region74
        $region73: #{wiki_autoencoder2_forward.14} parent=65 // pred_region
          %s310 = smul.u32 2, %s14
          %s311 = smul.addr %s310, 8
          %s312 = scalar_lea.vmem %s3, %s311
          // Predicated region
          $region75: #{wiki_autoencoder2_forward.14} parent=73 // pred_check
            _
          $region76: #{wiki_autoencoder2_forward.14} parent=73 // pred_check_branch
            %314 = sbr.rel (0) target = $region78
          $region77: #{wiki_autoencoder2_forward.14} parent=73 // pred_region
            // Predicated region
            $region79: #{wiki_autoencoder2_forward.14} parent=77 // pred_check
              _
            $region80: #{wiki_autoencoder2_forward.14} parent=77 // pred_check_branch
              %316 = sbr.rel (0) target = $region82
            $region81: #{wiki_autoencoder2_forward.14} parent=77 // pred_region
              loop: start=0, step=1, limit=1
              $region83: #{wiki_autoencoder2_forward.14} parent=81 // loop_pre_header
                _
              $region84: #{wiki_autoencoder2_forward.14} parent=81 // loop_header
                %s318 = sphi 0, %s322
                %p319 = scmp.ge.s32.totalorder %s318, 1
                %s323 = sphi %s306, %s306
                %s324 = sphi %s312, %s312
              $region85: #{wiki_autoencoder2_forward.14} parent=81 // loop_header_branch
                %321 = sbr.rel (%p319) target = $region89
              $region86: #{wiki_autoencoder2_forward.14} parent=81 // loop_body
                %v325 = vld [vmem:[%s323] sm:$0xff]
                %326 = vst [vmem:[%s324] sm:$0xff] %v325
                %v327 = vld [vmem:[%s323 + $0x8] sm:$0xff]
                %328 = vst [vmem:[%s324 + $0x8] sm:$0xff] %v327
                %v329 = vld [vmem:[%s323 + $0x10] sm:$0xff]
                %330 = vst [vmem:[%s324 + $0x20] sm:$0xff] %v329
                %v331 = vld [vmem:[%s323 + $0x18] sm:$0xff]
                %332 = vst [vmem:[%s324 + $0x28] sm:$0xff] %v331
              $region87: #{wiki_autoencoder2_forward.14} parent=81 // loop_footer
                %s322 = sadd.s32 1, %s318
              $region88: #{wiki_autoencoder2_forward.14} parent=81 // loop_footer_branch
                %317 = sbr.rel target = $region84
              $region89: #{wiki_autoencoder2_forward.14} parent=81 // loop_exit
                _
            $region82: #{wiki_autoencoder2_forward.14} parent=77 // pred_fallthru
              _
            // Predicated region
            $region90: #{wiki_autoencoder2_forward.14} parent=77 // pred_check
              _
            $region91: #{wiki_autoencoder2_forward.14} parent=77 // pred_check_branch
              %334 = sbr.rel target = $region93
            $region92: #{wiki_autoencoder2_forward.14} parent=77 // pred_region
              _
            $region93: #{wiki_autoencoder2_forward.14} parent=77 // pred_fallthru
              _
          $region78: #{wiki_autoencoder2_forward.14} parent=73 // pred_fallthru
            _
          %335 = vnop
        $region74: #{wiki_autoencoder2_forward.14} parent=65 // pred_fallthru
          _
      $region66: #{wiki_autoencoder2_forward.14} parent=5 // pred_fallthru
        _
      %p336 = scmp.le.s32.totalorder 2, %s9
      // Predicated region
      $region94: #{wiki_autoencoder2_forward.14} parent=5 // pred_check
        %p337 = pneg %p336
      $region95: #{wiki_autoencoder2_forward.14} parent=5 // pred_check_branch
        %339 = sbr.rel (%p337) target = $region97
      $region96: #{wiki_autoencoder2_forward.14} parent=5 // pred_region
        %s340 = ssub.s32 %s9, 2
        // Predicated region
        $region98: #{wiki_autoencoder2_forward.14} parent=96 // pred_check
          %p341 = pneg %p106
        $region99: #{wiki_autoencoder2_forward.14} parent=96 // pred_check_branch
          %343 = sbr.rel (%p341) target = $region101
        $region100: #{wiki_autoencoder2_forward.14} parent=96 // pred_region
          %s344 = sand.u32 %s91, 1
          %s345 = sand.u32 %s91, 1
          %s346 = smul.addr %s345, 32
          %s347 = scalar_lea.vmem [#allocation3], %s346
        $region101: #{wiki_autoencoder2_forward.14} parent=96 // pred_fallthru
          _
      $region97: #{wiki_autoencoder2_forward.14} parent=5 // pred_fallthru
        _
    $region6: #{wiki_autoencoder2_forward.14} parent=1 // loop_footer
      %s13 = sadd.s32 1, %s9
    $region7: #{wiki_autoencoder2_forward.14} parent=1 // loop_footer_branch
      %8 = sbr.rel target = $region3
    $region8: #{wiki_autoencoder2_forward.14} parent=1 // loop_exit
      _

// kernel: wiki_autoencoder2_forward.15
$region0: #{wiki_autoencoder2_forward.15}
  #allocation0 [shape = 'u32[]', space=smem, size = 0x4, offset = 0x4, fixed_abs, tag = 'smem constant byte address 0x4 - core index']
  #allocation1 [shape = 'u32[72,128]{1,0:T(1,128)}', space=vmem, size = 0x9000, scoped, tag = 'internal scratch']
  %s0 = inlined_call_operand.vmem [shape: bf16[12,27], index: 0, kind: input, shape index: {}]
  %s1 = inlined_call_operand.vmem [shape: bf16[27,1536], index: 1, kind: input, shape index: {}]
  %s2 = inlined_call_operand.vmem [shape: f32[12,1], index: 2, kind: input, shape index: {}]
  %s3 = inlined_call_operand.vmem [shape: f32[12,1536], index: 3, kind: output, shape index: {}]
  %s4 = sld [smem:[#allocation0]]
  $region87: #{wiki_autoencoder2_forward.15} parent=0
    _
  %s6 = ssub.s32 1, %s4
  %s7 = scalar_select 0, %s6, %s4
  $region1: #{wiki_autoencoder2_forward.15} parent=0
    #allocation2 [shape = 'u8[98304]{0}', space=vmem, size = 0x18000, scoped, tag = 'input window, operand 1']
    #allocation3 [shape = 'u8[98304]{0}', space=vmem, size = 0x18000, scoped, tag = 'output window, operand 0']
    loop: start=0, step=1, limit=4
    $region2: #{wiki_autoencoder2_forward.15} parent=1 // loop_pre_header
      _
    $region3: #{wiki_autoencoder2_forward.15} parent=1 // loop_header
      %s9 = sphi 0, %s13
      %p10 = scmp.ge.s32.totalorder %s9, 4
      %s17 = sphi 0, %s17
      %s19 = sphi 0, %s17
      %s20 = sphi 0, %s19
      %s34 = sphi 0, %s20
      %s40 = sphi 0, %s42
      %s43 = sphi 0, %s40
      %s44 = sphi 0, %s43
      %s60 = sphi 0, %s44
      %s64 = sphi 0, %s64
      %s66 = sphi 0, %s64
      %s67 = sphi 0, %s66
      %s81 = sphi 0, %s67
      %s87 = sphi 0, %s89
      %s90 = sphi 0, %s87
      %s91 = sphi 0, %s90
      %s107 = sphi 0, %s91
    $region4: #{wiki_autoencoder2_forward.15} parent=1 // loop_header_branch
      %12 = sbr.rel (%p10) target = $region8
    $region5: #{wiki_autoencoder2_forward.15} parent=1 // loop_body
      %s14 = ssub.s32 %s9, 1
      %s15 = ssub.s32 %s9, 2
      %s16 = sadd.s32 %s9, 1
      %s18 = sadd.s32 %s17, 1
      %p21 = scmp.eq.s32.totalorder %s9, 1
      %p22 = scmp.ne.s32.totalorder %s17, %s19
      %p23 = scmp.eq.s32.totalorder %s9, 0
      %p24 = por %p22, %p23
      %p25 = scmp.ne.s32.totalorder %s17, %s19
      %p26 = scmp.eq.s32.totalorder %s14, 1
      %p27 = por %p25, %p26
      %p28 = scmp.ne.s32.totalorder %s19, %s20
      %p29 = scmp.eq.s32.totalorder %s14, 0
      %p30 = por %p28, %p29
      %p31 = scmp.ne.s32.totalorder %s19, %s20
      %p32 = scmp.eq.s32.totalorder %s15, 1
      %p33 = por %p31, %p32
      %p35 = scmp.ne.s32.totalorder %s20, %s34
      %p36 = scmp.eq.s32.totalorder %s15, 0
      %p37 = por %p35, %p36
      %s38 = ssub.s32 %s9, %s16
      %p39 = scmp.eq.s32.totalorder %s38, 0
      %s41 = sadd.s32 %s40, 1
      %s42 = scalar_select %p39, %s40, %s41
      %p45 = pneg %p39
      %p46 = scmp.eq.s32.totalorder %s9, 1
      %p47 = por %p45, %p46
      %p48 = scmp.ne.s32.totalorder %s40, %s43
      %p49 = scmp.eq.s32.totalorder %s9, 0
      %p50 = por %p48, %p49
      %p51 = scmp.ne.s32.totalorder %s40, %s43
      %p52 = scmp.eq.s32.totalorder %s14, 1
      %p53 = por %p51, %p52
      %p54 = scmp.ne.s32.totalorder %s43, %s44
      %p55 = scmp.eq.s32.totalorder %s14, 0
      %p56 = por %p54, %p55
      %p57 = scmp.ne.s32.totalorder %s43, %s44
      %p58 = scmp.eq.s32.totalorder %s15, 1
      %p59 = por %p57, %p58
      %p61 = scmp.ne.s32.totalorder %s44, %s60
      %p62 = scmp.eq.s32.totalorder %s15, 0
      %p63 = por %p61, %p62
      %s65 = sadd.s32 %s64, 1
      %p68 = scmp.eq.s32.totalorder %s9, 1
      %p69 = scmp.ne.s32.totalorder %s64, %s66
      %p70 = scmp.eq.s32.totalorder %s9, 0
      %p71 = por %p69, %p70
      %p72 = scmp.ne.s32.totalorder %s64, %s66
      %p73 = scmp.eq.s32.totalorder %s14, 1
      %p74 = por %p72, %p73
      %p75 = scmp.ne.s32.totalorder %s66, %s67
      %p76 = scmp.eq.s32.totalorder %s14, 0
      %p77 = por %p75, %p76
      %p78 = scmp.ne.s32.totalorder %s66, %s67
      %p79 = scmp.eq.s32.totalorder %s15, 1
      %p80 = por %p78, %p79
      %p82 = scmp.ne.s32.totalorder %s67, %s81
      %p83 = scmp.eq.s32.totalorder %s15, 0
      %p84 = por %p82, %p83
      %s85 = ssub.s32 %s9, %s16
      %p86 = scmp.eq.s32.totalorder %s85, 0
      %s88 = sadd.s32 %s87, 1
      %s89 = scalar_select %p86, %s87, %s88
      %p92 = pneg %p86
      %p93 = scmp.eq.s32.totalorder %s9, 1
      %p94 = por %p92, %p93
      %p95 = scmp.ne.s32.totalorder %s87, %s90
      %p96 = scmp.eq.s32.totalorder %s9, 0
      %p97 = por %p95, %p96
      %p98 = scmp.ne.s32.totalorder %s87, %s90
      %p99 = scmp.eq.s32.totalorder %s14, 1
      %p100 = por %p98, %p99
      %p101 = scmp.ne.s32.totalorder %s90, %s91
      %p102 = scmp.eq.s32.totalorder %s14, 0
      %p103 = por %p101, %p102
      %p104 = scmp.ne.s32.totalorder %s90, %s91
      %p105 = scmp.eq.s32.totalorder %s15, 1
      %p106 = por %p104, %p105
      %p108 = scmp.ne.s32.totalorder %s91, %s107
      %p109 = scmp.eq.s32.totalorder %s15, 0
      %p110 = por %p108, %p109
      %p111 = scmp.le.s32.totalorder 1, %s9
      %p112 = scmp.lt.s32.totalorder %s9, 3
      %p113 = pnand %p111, %p112
      %p114 = pneg %p113
      // Predicated region
      $region9: #{wiki_autoencoder2_forward.15} parent=5 // pred_check
        _
      $region10: #{wiki_autoencoder2_forward.15} parent=5 // pred_check_branch
        %116 = sbr.rel (%p113) target = $region12
      $region11: #{wiki_autoencoder2_forward.15} parent=5 // pred_region
        %s117 = ssub.s32 %s9, 1
        // Predicated region
        $region13: #{wiki_autoencoder2_forward.15} parent=11 // pred_check
          %p118 = pneg %p30
        $region14: #{wiki_autoencoder2_forward.15} parent=11 // pred_check_branch
          %120 = sbr.rel (%p118) target = $region16
        $region15: #{wiki_autoencoder2_forward.15} parent=11 // pred_region
          _
        $region16: #{wiki_autoencoder2_forward.15} parent=11 // pred_fallthru
          _
        // Predicated region
        $region17: #{wiki_autoencoder2_forward.15} parent=11 // pred_check
          %p121 = pneg %p77
        $region18: #{wiki_autoencoder2_forward.15} parent=11 // pred_check_branch
          %123 = sbr.rel (%p121) target = $region20
        $region19: #{wiki_autoencoder2_forward.15} parent=11 // pred_region
          _
        $region20: #{wiki_autoencoder2_forward.15} parent=11 // pred_fallthru
          _
      $region12: #{wiki_autoencoder2_forward.15} parent=5 // pred_fallthru
        _
      %p124 = scmp.lt.s32.totalorder %s9, 2
      // Predicated region
      $region21: #{wiki_autoencoder2_forward.15} parent=5 // pred_check
        %p125 = pneg %p124
      $region22: #{wiki_autoencoder2_forward.15} parent=5 // pred_check_branch
        %127 = sbr.rel (%p125) target = $region24
      $region23: #{wiki_autoencoder2_forward.15} parent=5 // pred_region
        // Predicated region
        $region25: #{wiki_autoencoder2_forward.15} parent=23 // pred_check
          %p128 = pneg %p50
        $region26: #{wiki_autoencoder2_forward.15} parent=23 // pred_check_branch
          %130 = sbr.rel (%p128) target = $region28
        $region27: #{wiki_autoencoder2_forward.15} parent=23 // pred_region
          %s131 = sand.u32 %s40, 1
          %s132 = sand.u32 %s40, 1
          %s133 = smul.addr %s132, 96
          %s134 = scalar_lea.vmem [#allocation2], %s133
          %s135 = smul.u32 6, %s9
          %s136 = smul.addr %s135, 4
          %s137 = scalar_lea.vmem %s1, %s136
          // Predicated region
          $region29: #{wiki_autoencoder2_forward.15} parent=27 // pred_check
            _
          $region30: #{wiki_autoencoder2_forward.15} parent=27 // pred_check_branch
            %139 = sbr.rel (0) target = $region32
          $region31: #{wiki_autoencoder2_forward.15} parent=27 // pred_region
            // Predicated region
            $region33: #{wiki_autoencoder2_forward.15} parent=31 // pred_check
              _
            $region34: #{wiki_autoencoder2_forward.15} parent=31 // pred_check_branch
              %141 = sbr.rel (0) target = $region36
            $region35: #{wiki_autoencoder2_forward.15} parent=31 // pred_region
              loop: start=0, step=1, limit=1
              $region37: #{wiki_autoencoder2_forward.15} parent=35 // loop_pre_header
                _
              $region38: #{wiki_autoencoder2_forward.15} parent=35 // loop_header
                %s143 = sphi 0, %s147
                %p144 = scmp.ge.s32.totalorder %s143, 1
                %s148 = sphi %s137, %s137
                %s149 = sphi %s134, %s134
              $region39: #{wiki_autoencoder2_forward.15} parent=35 // loop_header_branch
                %146 = sbr.rel (%p144) target = $region43
              $region40: #{wiki_autoencoder2_forward.15} parent=35 // loop_body
                %v150 = vld [vmem:[%s148] sm:$0xff]
                %151 = vst [vmem:[%s149] sm:$0xff] %v150
                %v152 = vld [vmem:[%s148 + $0x8] sm:$0xff]
                %153 = vst [vmem:[%s149 + $0x8] sm:$0xff] %v152
                %v154 = vld [vmem:[%s148 + $0x10] sm:$0xff]
                %155 = vst [vmem:[%s149 + $0x10] sm:$0xff] %v154
                %v156 = vld [vmem:[%s148 + $0x30] sm:$0xff]
                %157 = vst [vmem:[%s149 + $0x18] sm:$0xff] %v156
                %v158 = vld [vmem:[%s148 + $0x38] sm:$0xff]
                %159 = vst [vmem:[%s149 + $0x20] sm:$0xff] %v158
                %v160 = vld [vmem:[%s148 + $0x40] sm:$0xff]
                %161 = vst [vmem:[%s149 + $0x28] sm:$0xff] %v160
                %v162 = vld [vmem:[%s148 + $0x60] sm:$0xff]
                %163 = vst [vmem:[%s149 + $0x30] sm:$0xff] %v162
                %v164 = vld [vmem:[%s148 + $0x68] sm:$0xff]
                %165 = vst [vmem:[%s149 + $0x38] sm:$0xff] %v164
                %v166 = vld [vmem:[%s148 + $0x70] sm:$0xff]
                %167 = vst [vmem:[%s149 + $0x40] sm:$0xff] %v166
                %v168 = vld [vmem:[%s148 + $0x90] sm:$0xff]
                %169 = vst [vmem:[%s149 + $0x48] sm:$0xff] %v168
                %v170 = vld [vmem:[%s148 + $0x98] sm:$0xff]
                %171 = vst [vmem:[%s149 + $0x50] sm:$0xff] %v170
                %v172 = vld [vmem:[%s148 + $0xa0] sm:$0xff]
                %173 = vst [vmem:[%s149 + $0x58] sm:$0xff] %v172
              $region41: #{wiki_autoencoder2_forward.15} parent=35 // loop_footer
                %s147 = sadd.s32 1, %s143
              $region42: #{wiki_autoencoder2_forward.15} parent=35 // loop_footer_branch
                %142 = sbr.rel target = $region38
              $region43: #{wiki_autoencoder2_forward.15} parent=35 // loop_exit
                _
            $region36: #{wiki_autoencoder2_forward.15} parent=31 // pred_fallthru
              _
            // Predicated region
            $region44: #{wiki_autoencoder2_forward.15} parent=31 // pred_check
              _
            $region45: #{wiki_autoencoder2_forward.15} parent=31 // pred_check_branch
              %175 = sbr.rel target = $region47
            $region46: #{wiki_autoencoder2_forward.15} parent=31 // pred_region
              _
            $region47: #{wiki_autoencoder2_forward.15} parent=31 // pred_fallthru
              _
          $region32: #{wiki_autoencoder2_forward.15} parent=27 // pred_fallthru
            _
          %176 = vnop
        $region28: #{wiki_autoencoder2_forward.15} parent=23 // pred_fallthru
          _
      $region24: #{wiki_autoencoder2_forward.15} parent=5 // pred_fallthru
        _
      %p177 = scmp.le.s32.totalorder 1, %s9
      %p178 = scmp.lt.s32.totalorder %s9, 3
      %p179 = pnand %p177, %p178
      %p180 = pneg %p179
      // Predicated region
      $region48: #{wiki_autoencoder2_forward.15} parent=5 // pred_check
        _
      $region49: #{wiki_autoencoder2_forward.15} parent=5 // pred_check_branch
        %182 = sbr.rel (%p179) target = $region51
      $region50: #{wiki_autoencoder2_forward.15} parent=5 // pred_region
        %s183 = ssub.s32 %s9, 1
        %s184 = sand.u32 %s43, 1
        %s185 = sand.u32 %s43, 1
        %s186 = smul.addr %s185, 96
        %s187 = scalar_lea.vmem [#allocation2], %s186
        // Predicated region
        $region52: #{wiki_autoencoder2_forward.15} parent=50 // pred_check
          %p188 = pneg %p56
        $region53: #{wiki_autoencoder2_forward.15} parent=50 // pred_check_branch
          %190 = sbr.rel (%p188) target = $region55
        $region54: #{wiki_autoencoder2_forward.15} parent=50 // pred_region
          _
        $region55: #{wiki_autoencoder2_forward.15} parent=50 // pred_fallthru
          _
        %p191 = pneg %p30
        %p192 = pneg %p27
        %s193 = sand.u32 %s43, 1
        %s194 = sand.u32 %s43, 1
        %s195 = smul.addr %s194, 96
        %s196 = scalar_lea.vmem [#allocation2], %s195
        %p197 = pneg %p56
        %p198 = pneg %p53
        %p199 = pneg %p77
        %p200 = pneg %p74
        %p201 = pneg %p103
        %p202 = pneg %p100
        %s203 = sand.u32 %s90, 1
        %s204 = sand.u32 %s90, 1
        %s205 = smul.addr %s204, 96
        %s206 = scalar_lea.vmem [#allocation3], %s205
        %s207 = smul.u32 6, %s14
        %s208 = smul.u32 6, %s14
        %v210 = vld [vmem:[%s0] sm:$0xf]
        %v211 = vld [vmem:[%s0 + $0x4] sm:$0x3]
        %v212 = vld [vmem:[%s187] sm:$0xff]
        %v213 = vld [vmem:[%s187 + $0x8] sm:$0xff]
        %v214 = vld [vmem:[%s187 + $0x10] sm:$0xff]
        %v215 = vld [vmem:[%s187 + $0x18] sm:$0xff]
        %v216 = vld [vmem:[%s187 + $0x20] sm:$0xff]
        %v217 = vld [vmem:[%s187 + $0x28] sm:$0xff]
        %v218 = vld [vmem:[%s187 + $0x30] sm:$0xff]
        %v219 = vld [vmem:[%s187 + $0x38] sm:$0xff]
        %v220 = vld [vmem:[%s187 + $0x40] sm:$0xff]
        %v221 = vld [vmem:[%s187 + $0x48] sm:$0x33]
        %v222 = vld [vmem:[%s187 + $0x50] sm:$0x33]
        %v223 = vld [vmem:[%s187 + $0x58] sm:$0x33]
        %v224 = vld [vmem:[%s2] sm:$0xff]
        %v225 = vld [vmem:[%s2 + $0x8] sm:$0xf]
        %227 = vset.pattern.permute.xlu0 0
        %228 = vperm.xlu0 %227, %v224
        %v229 = vpop.permute.xlu0 %228
        %232 = vset.pattern.permute.xlu0 0
        %233 = vperm.xlu0 %232, %v225
        %v234 = vpop.permute.xlu0 %233
        %v238 = vunpack.c.l.b16 %v210
        %v239 = vunpack.c.l.b16 %v211
        %v240 = vpack.c.b16 %v239, %v238
        %v253 = vunpack.c.l.b16 %v212
        %v254 = vunpack.c.h.b16 %v212
        %v255 = vunpack.c.l.b16 %v213
        %v256 = vunpack.c.h.b16 %v213
        %v257 = vunpack.c.l.b16 %v214
        %v258 = vunpack.c.h.b16 %v214
        %v259 = vunpack.c.l.b16 %v215
        %v260 = vunpack.c.h.b16 %v215
        %v261 = vunpack.c.l.b16 %v216
        %v262 = vunpack.c.h.b16 %v216
        %v263 = vunpack.c.l.b16 %v217
        %v264 = vunpack.c.h.b16 %v217
        %v265 = vunpack.c.l.b16 %v218
        %v266 = vunpack.c.h.b16 %v218
        %v267 = vunpack.c.l.b16 %v219
        %v268 = vunpack.c.h.b16 %v219
        %v269 = vunpack.c.l.b16 %v220
        %v270 = vunpack.c.h.b16 %v220
        %v271 = vunpack.c.l.b16 %v221
        %v272 = vunpack.c.h.b16 %v221
        %v273 = vunpack.c.l.b16 %v222
        %v274 = vunpack.c.h.b16 %v222
        %v275 = vunpack.c.l.b16 %v223
        %v276 = vunpack.c.h.b16 %v223
        %v277 = vpack.c.b16 %v259, %v253
        %v278 = vpack.c.b16 %v260, %v254
        %v279 = vpack.c.b16 %v261, %v255
        %v280 = vpack.c.b16 %v262, %v256
        %v281 = vpack.c.b16 %v263, %v257
        %v282 = vpack.c.b16 %v264, %v258
        %v283 = vpack.c.b16 %v271, %v265
        %v284 = vpack.c.b16 %v272, %v266
        %v285 = vpack.c.b16 %v273, %v267
        %v286 = vpack.c.b16 %v274, %v268
        %v287 = vpack.c.b16 %v275, %v269
        %v288 = vpack.c.b16 %v276, %v270
        %vm295 = vcmask 220160
        %v297 = vsel %vm295, %v240, 0
        %vm299 = vcmask 1044480
        %vm300 = vcmask 1045504
        %v301 = vsel %vm299, 4294967295, 65535
        %v302 = vsel %vm300, %v301, 0
        %v304 = vand.u32 %v283, %v302
        %v307 = vand.u32 %v284, %v302
        %v310 = vand.u32 %v285, %v302
        %v313 = vand.u32 %v286, %v302
        %v316 = vand.u32 %v287, %v302
        %v319 = vand.u32 %v288, %v302
        %321 = vmatpush.bf16.msra.mxu0 0
        %322 = vmatpush.bf16.msra.mxu0 0
        %323 = vmatpush.bf16.msra.mxu0 0
        %324 = vmatpush.bf16.msra.mxu0 0
        %325 = vmatpush.bf16.msra.mxu0 0
        %326 = vmatpush.bf16.msra.mxu0 0
        %327 = vmatpush.bf16.msra.mxu0 %v304
        %328 = vmatpush.bf16.msra.mxu0 %v277
        %329 = vmatmul.bf16.gmra.mxu0 %v297
        %v330 = vpop.f32.mrf.mxu0
        %v331 = vadd.f32 %v229, %v330
        %v332 = vpop.f32.mrf.mxu0
        %v333 = vadd.f32 %v234, %v332
        %334 = vdwg.mxu0
        %335 = vmatpush.bf16.msra.mxu0 0
        %336 = vmatpush.bf16.msra.mxu0 0
        %337 = vmatpush.bf16.msra.mxu0 0
        %338 = vmatpush.bf16.msra.mxu0 0
        %339 = vmatpush.bf16.msra.mxu0 0
        %340 = vmatpush.bf16.msra.mxu0 0
        %341 = vmatpush.bf16.msra.mxu0 %v307
        %342 = vmatpush.bf16.msra.mxu0 %v278
        %343 = vmatmul.bf16.gmra.mxu0 %v297
        %v344 = vpop.f32.mrf.mxu0
        %v345 = vadd.f32 %v229, %v344
        %v346 = vpop.f32.mrf.mxu0
        %v347 = vadd.f32 %v234, %v346
        %348 = vdwg.mxu0
        %349 = vmatpush.bf16.msra.mxu0 0
        %350 = vmatpush.bf16.msra.mxu0 0
        %351 = vmatpush.bf16.msra.mxu0 0
        %352 = vmatpush.bf16.msra.mxu0 0
        %353 = vmatpush.bf16.msra.mxu0 0
        %354 = vmatpush.bf16.msra.mxu0 0
        %355 = vmatpush.bf16.msra.mxu0 %v310
        %356 = vmatpush.bf16.msra.mxu0 %v279
        %357 = vmatmul.bf16.gmra.mxu0 %v297
        %v358 = vpop.f32.mrf.mxu0
        %v359 = vadd.f32 %v229, %v358
        %v360 = vpop.f32.mrf.mxu0
        %v361 = vadd.f32 %v234, %v360
        %362 = vdwg.mxu0
        %363 = vmatpush.bf16.msra.mxu0 0
        %364 = vmatpush.bf16.msra.mxu0 0
        %365 = vmatpush.bf16.msra.mxu0 0
        %366 = vmatpush.bf16.msra.mxu0 0
        %367 = vmatpush.bf16.msra.mxu0 0
        %368 = vmatpush.bf16.msra.mxu0 0
        %369 = vmatpush.bf16.msra.mxu0 %v313
        %370 = vmatpush.bf16.msra.mxu0 %v280
        %371 = vmatmul.bf16.gmra.mxu0 %v297
        %v372 = vpop.f32.mrf.mxu0
        %v373 = vadd.f32 %v229, %v372
        %v374 = vpop.f32.mrf.mxu0
        %v375 = vadd.f32 %v234, %v374
        %376 = vdwg.mxu0
        %377 = vmatpush.bf16.msra.mxu0 0
        %378 = vmatpush.bf16.msra.mxu0 0
        %379 = vmatpush.bf16.msra.mxu0 0
        %380 = vmatpush.bf16.msra.mxu0 0
        %381 = vmatpush.bf16.msra.mxu0 0
        %382 = vmatpush.bf16.msra.mxu0 0
        %383 = vmatpush.bf16.msra.mxu0 %v316
        %384 = vmatpush.bf16.msra.mxu0 %v281
        %385 = vmatmul.bf16.gmra.mxu0 %v297
        %v386 = vpop.f32.mrf.mxu0
        %v387 = vadd.f32 %v229, %v386
        %v388 = vpop.f32.mrf.mxu0
        %v389 = vadd.f32 %v234, %v388
        %390 = vdwg.mxu0
        %391 = vmatpush.bf16.msra.mxu0 0
        %392 = vmatpush.bf16.msra.mxu0 0
        %393 = vmatpush.bf16.msra.mxu0 0
        %394 = vmatpush.bf16.msra.mxu0 0
        %395 = vmatpush.bf16.msra.mxu0 0
        %396 = vmatpush.bf16.msra.mxu0 0
        %397 = vmatpush.bf16.msra.mxu0 %v319
        %398 = vmatpush.bf16.msra.mxu0 %v282
        %399 = vmatmul.bf16.gmra.mxu0 %v297
        %v400 = vpop.f32.mrf.mxu0
        %v401 = vadd.f32 %v229, %v400
        %v402 = vpop.f32.mrf.mxu0
        %v403 = vadd.f32 %v234, %v402
        %404 = vdwg.mxu0
        %405 = vst [vmem:[%s206] sm:$0xff] %v331
        %406 = vst [vmem:[%s206 + $0x8] sm:$0xff] %v345
        %407 = vst [vmem:[%s206 + $0x10] sm:$0xff] %v359
        %408 = vst [vmem:[%s206 + $0x18] sm:$0xff] %v373
        %409 = vst [vmem:[%s206 + $0x20] sm:$0xff] %v387
        %410 = vst [vmem:[%s206 + $0x28] sm:$0xff] %v401
        %411 = vst [vmem:[%s206 + $0x30] sm:$0xf] %v333
        %412 = vst [vmem:[%s206 + $0x38] sm:$0xf] %v347
        %413 = vst [vmem:[%s206 + $0x40] sm:$0xf] %v361
        %414 = vst [vmem:[%s206 + $0x48] sm:$0xf] %v375
        %415 = vst [vmem:[%s206 + $0x50] sm:$0xf] %v389
        %416 = vst [vmem:[%s206 + $0x58] sm:$0xf] %v403
        %s417 = sand.u32 %s90, 1
        %s418 = sand.u32 %s90, 1
        %s419 = smul.addr %s418, 96
        %s420 = scalar_lea.vmem [#allocation3], %s419
        // Predicated region
        $region56: #{wiki_autoencoder2_forward.15} parent=50 // pred_check
          %p421 = pneg %p100
        $region57: #{wiki_autoencoder2_forward.15} parent=50 // pred_check_branch
          %423 = sbr.rel (%p421) target = $region59
        $region58: #{wiki_autoencoder2_forward.15} parent=50 // pred_region
          %s424 = smul.u32 6, %s14
          %s425 = smul.addr %s424, 8
          %s426 = scalar_lea.vmem %s3, %s425
          // Predicated region
          $region60: #{wiki_autoencoder2_forward.15} parent=58 // pred_check
            _
          $region61: #{wiki_autoencoder2_forward.15} parent=58 // pred_check_branch
            %428 = sbr.rel (0) target = $region63
          $region62: #{wiki_autoencoder2_forward.15} parent=58 // pred_region
            // Predicated region
            $region64: #{wiki_autoencoder2_forward.15} parent=62 // pred_check
              _
            $region65: #{wiki_autoencoder2_forward.15} parent=62 // pred_check_branch
              %430 = sbr.rel (0) target = $region67
            $region66: #{wiki_autoencoder2_forward.15} parent=62 // pred_region
              loop: start=0, step=1, limit=1
              $region68: #{wiki_autoencoder2_forward.15} parent=66 // loop_pre_header
                _
              $region69: #{wiki_autoencoder2_forward.15} parent=66 // loop_header
                %s432 = sphi 0, %s436
                %p433 = scmp.ge.s32.totalorder %s432, 1
                %s437 = sphi %s420, %s420
                %s438 = sphi %s426, %s426
              $region70: #{wiki_autoencoder2_forward.15} parent=66 // loop_header_branch
                %435 = sbr.rel (%p433) target = $region74
              $region71: #{wiki_autoencoder2_forward.15} parent=66 // loop_body
                %v439 = vld [vmem:[%s437] sm:$0xff]
                %440 = vst [vmem:[%s438] sm:$0xff] %v439
                %v441 = vld [vmem:[%s437 + $0x8] sm:$0xff]
                %442 = vst [vmem:[%s438 + $0x8] sm:$0xff] %v441
                %v443 = vld [vmem:[%s437 + $0x10] sm:$0xff]
                %444 = vst [vmem:[%s438 + $0x10] sm:$0xff] %v443
                %v445 = vld [vmem:[%s437 + $0x18] sm:$0xff]
                %446 = vst [vmem:[%s438 + $0x18] sm:$0xff] %v445
                %v447 = vld [vmem:[%s437 + $0x20] sm:$0xff]
                %448 = vst [vmem:[%s438 + $0x20] sm:$0xff] %v447
                %v449 = vld [vmem:[%s437 + $0x28] sm:$0xff]
                %450 = vst [vmem:[%s438 + $0x28] sm:$0xff] %v449
                %v451 = vld [vmem:[%s437 + $0x30] sm:$0xff]
                %452 = vst [vmem:[%s438 + $0x60] sm:$0xff] %v451
                %v453 = vld [vmem:[%s437 + $0x38] sm:$0xff]
                %454 = vst [vmem:[%s438 + $0x68] sm:$0xff] %v453
                %v455 = vld [vmem:[%s437 + $0x40] sm:$0xff]
                %456 = vst [vmem:[%s438 + $0x70] sm:$0xff] %v455
                %v457 = vld [vmem:[%s437 + $0x48] sm:$0xff]
                %458 = vst [vmem:[%s438 + $0x78] sm:$0xff] %v457
                %v459 = vld [vmem:[%s437 + $0x50] sm:$0xff]
                %460 = vst [vmem:[%s438 + $0x80] sm:$0xff] %v459
                %v461 = vld [vmem:[%s437 + $0x58] sm:$0xff]
                %462 = vst [vmem:[%s438 + $0x88] sm:$0xff] %v461
              $region72: #{wiki_autoencoder2_forward.15} parent=66 // loop_footer
                %s436 = sadd.s32 1, %s432
              $region73: #{wiki_autoencoder2_forward.15} parent=66 // loop_footer_branch
                %431 = sbr.rel target = $region69
              $region74: #{wiki_autoencoder2_forward.15} parent=66 // loop_exit
                _
            $region67: #{wiki_autoencoder2_forward.15} parent=62 // pred_fallthru
              _
            // Predicated region
            $region75: #{wiki_autoencoder2_forward.15} parent=62 // pred_check
              _
            $region76: #{wiki_autoencoder2_forward.15} parent=62 // pred_check_branch
              %464 = sbr.rel target = $region78
            $region77: #{wiki_autoencoder2_forward.15} parent=62 // pred_region
              _
            $region78: #{wiki_autoencoder2_forward.15} parent=62 // pred_fallthru
              _
          $region63: #{wiki_autoencoder2_forward.15} parent=58 // pred_fallthru
            _
          %465 = vnop
        $region59: #{wiki_autoencoder2_forward.15} parent=50 // pred_fallthru
          _
      $region51: #{wiki_autoencoder2_forward.15} parent=5 // pred_fallthru
        _
      %p466 = scmp.le.s32.totalorder 2, %s9
      // Predicated region
      $region79: #{wiki_autoencoder2_forward.15} parent=5 // pred_check
        %p467 = pneg %p466
      $region80: #{wiki_autoencoder2_forward.15} parent=5 // pred_check_branch
        %469 = sbr.rel (%p467) target = $region82
      $region81: #{wiki_autoencoder2_forward.15} parent=5 // pred_region
        %s470 = ssub.s32 %s9, 2
        // Predicated region
        $region83: #{wiki_autoencoder2_forward.15} parent=81 // pred_check
          %p471 = pneg %p106
        $region84: #{wiki_autoencoder2_forward.15} parent=81 // pred_check_branch
          %473 = sbr.rel (%p471) target = $region86
        $region85: #{wiki_autoencoder2_forward.15} parent=81 // pred_region
          %s474 = sand.u32 %s91, 1
          %s475 = sand.u32 %s91, 1
          %s476 = smul.addr %s475, 96
          %s477 = scalar_lea.vmem [#allocation3], %s476
        $region86: #{wiki_autoencoder2_forward.15} parent=81 // pred_fallthru
          _
      $region82: #{wiki_autoencoder2_forward.15} parent=5 // pred_fallthru
        _
    $region6: #{wiki_autoencoder2_forward.15} parent=1 // loop_footer
      %s13 = sadd.s32 1, %s9
    $region7: #{wiki_autoencoder2_forward.15} parent=1 // loop_footer_branch
      %8 = sbr.rel target = $region3
    $region8: #{wiki_autoencoder2_forward.15} parent=1 // loop_exit
      _

// kernel: wiki_autoencoder2_forward.16
$region0: #{wiki_autoencoder2_forward.16}
  #allocation0 [shape = 'u32[]', space=smem, size = 0x4, offset = 0x4, fixed_abs, tag = 'smem constant byte address 0x4 - core index']
  #allocation1 [shape = 'u32[72,128]{1,0:T(1,128)}', space=vmem, size = 0x9000, scoped, tag = 'internal scratch']
  %s0 = inlined_call_operand.vmem [shape: bf16[12,27], index: 0, kind: input, shape index: {}]
  %s1 = inlined_call_operand.vmem [shape: bf16[27,5888], index: 1, kind: input, shape index: {}]
  %s2 = inlined_call_operand.vmem [shape: f32[12,1], index: 2, kind: input, shape index: {}]
  %s3 = inlined_call_operand.vmem [shape: f32[12,5888], index: 3, kind: output, shape index: {}]
  %s4 = sld [smem:[#allocation0]]
  $region90: #{wiki_autoencoder2_forward.16} parent=0
    _
  %s6 = ssub.s32 1, %s4
  %s7 = scalar_select 0, %s6, %s4
  $region1: #{wiki_autoencoder2_forward.16} parent=0
    #allocation2 [shape = 'u8[376832]{0}', space=vmem, size = 0x5c000, scoped, tag = 'input window, operand 1']
    #allocation3 [shape = 'u8[376832]{0}', space=vmem, size = 0x5c000, scoped, tag = 'output window, operand 0']
    loop: start=0, step=1, limit=4
    $region2: #{wiki_autoencoder2_forward.16} parent=1 // loop_pre_header
      _
    $region3: #{wiki_autoencoder2_forward.16} parent=1 // loop_header
      %s9 = sphi 0, %s13
      %p10 = scmp.ge.s32.totalorder %s9, 4
      %s17 = sphi 0, %s17
      %s19 = sphi 0, %s17
      %s20 = sphi 0, %s19
      %s34 = sphi 0, %s20
      %s40 = sphi 0, %s42
      %s43 = sphi 0, %s40
      %s44 = sphi 0, %s43
      %s60 = sphi 0, %s44
      %s64 = sphi 0, %s64
      %s66 = sphi 0, %s64
      %s67 = sphi 0, %s66
      %s81 = sphi 0, %s67
      %s87 = sphi 0, %s89
      %s90 = sphi 0, %s87
      %s91 = sphi 0, %s90
      %s107 = sphi 0, %s91
    $region4: #{wiki_autoencoder2_forward.16} parent=1 // loop_header_branch
      %12 = sbr.rel (%p10) target = $region8
    $region5: #{wiki_autoencoder2_forward.16} parent=1 // loop_body
      %s14 = ssub.s32 %s9, 1
      %s15 = ssub.s32 %s9, 2
      %s16 = sadd.s32 %s9, 1
      %s18 = sadd.s32 %s17, 1
      %p21 = scmp.eq.s32.totalorder %s9, 1
      %p22 = scmp.ne.s32.totalorder %s17, %s19
      %p23 = scmp.eq.s32.totalorder %s9, 0
      %p24 = por %p22, %p23
      %p25 = scmp.ne.s32.totalorder %s17, %s19
      %p26 = scmp.eq.s32.totalorder %s14, 1
      %p27 = por %p25, %p26
      %p28 = scmp.ne.s32.totalorder %s19, %s20
      %p29 = scmp.eq.s32.totalorder %s14, 0
      %p30 = por %p28, %p29
      %p31 = scmp.ne.s32.totalorder %s19, %s20
      %p32 = scmp.eq.s32.totalorder %s15, 1
      %p33 = por %p31, %p32
      %p35 = scmp.ne.s32.totalorder %s20, %s34
      %p36 = scmp.eq.s32.totalorder %s15, 0
      %p37 = por %p35, %p36
      %s38 = ssub.s32 %s9, %s16
      %p39 = scmp.eq.s32.totalorder %s38, 0
      %s41 = sadd.s32 %s40, 1
      %s42 = scalar_select %p39, %s40, %s41
      %p45 = pneg %p39
      %p46 = scmp.eq.s32.totalorder %s9, 1
      %p47 = por %p45, %p46
      %p48 = scmp.ne.s32.totalorder %s40, %s43
      %p49 = scmp.eq.s32.totalorder %s9, 0
      %p50 = por %p48, %p49
      %p51 = scmp.ne.s32.totalorder %s40, %s43
      %p52 = scmp.eq.s32.totalorder %s14, 1
      %p53 = por %p51, %p52
      %p54 = scmp.ne.s32.totalorder %s43, %s44
      %p55 = scmp.eq.s32.totalorder %s14, 0
      %p56 = por %p54, %p55
      %p57 = scmp.ne.s32.totalorder %s43, %s44
      %p58 = scmp.eq.s32.totalorder %s15, 1
      %p59 = por %p57, %p58
      %p61 = scmp.ne.s32.totalorder %s44, %s60
      %p62 = scmp.eq.s32.totalorder %s15, 0
      %p63 = por %p61, %p62
      %s65 = sadd.s32 %s64, 1
      %p68 = scmp.eq.s32.totalorder %s9, 1
      %p69 = scmp.ne.s32.totalorder %s64, %s66
      %p70 = scmp.eq.s32.totalorder %s9, 0
      %p71 = por %p69, %p70
      %p72 = scmp.ne.s32.totalorder %s64, %s66
      %p73 = scmp.eq.s32.totalorder %s14, 1
      %p74 = por %p72, %p73
      %p75 = scmp.ne.s32.totalorder %s66, %s67
      %p76 = scmp.eq.s32.totalorder %s14, 0
      %p77 = por %p75, %p76
      %p78 = scmp.ne.s32.totalorder %s66, %s67
      %p79 = scmp.eq.s32.totalorder %s15, 1
      %p80 = por %p78, %p79
      %p82 = scmp.ne.s32.totalorder %s67, %s81
      %p83 = scmp.eq.s32.totalorder %s15, 0
      %p84 = por %p82, %p83
      %s85 = ssub.s32 %s9, %s16
      %p86 = scmp.eq.s32.totalorder %s85, 0
      %s88 = sadd.s32 %s87, 1
      %s89 = scalar_select %p86, %s87, %s88
      %p92 = pneg %p86
      %p93 = scmp.eq.s32.totalorder %s9, 1
      %p94 = por %p92, %p93
      %p95 = scmp.ne.s32.totalorder %s87, %s90
      %p96 = scmp.eq.s32.totalorder %s9, 0
      %p97 = por %p95, %p96
      %p98 = scmp.ne.s32.totalorder %s87, %s90
      %p99 = scmp.eq.s32.totalorder %s14, 1
      %p100 = por %p98, %p99
      %p101 = scmp.ne.s32.totalorder %s90, %s91
      %p102 = scmp.eq.s32.totalorder %s14, 0
      %p103 = por %p101, %p102
      %p104 = scmp.ne.s32.totalorder %s90, %s91
      %p105 = scmp.eq.s32.totalorder %s15, 1
      %p106 = por %p104, %p105
      %p108 = scmp.ne.s32.totalorder %s91, %s107
      %p109 = scmp.eq.s32.totalorder %s15, 0
      %p110 = por %p108, %p109
      %p111 = scmp.le.s32.totalorder 1, %s9
      %p112 = scmp.lt.s32.totalorder %s9, 3
      %p113 = pnand %p111, %p112
      %p114 = pneg %p113
      // Predicated region
      $region9: #{wiki_autoencoder2_forward.16} parent=5 // pred_check
        _
      $region10: #{wiki_autoencoder2_forward.16} parent=5 // pred_check_branch
        %116 = sbr.rel (%p113) target = $region12
      $region11: #{wiki_autoencoder2_forward.16} parent=5 // pred_region
        %s117 = ssub.s32 %s9, 1
        // Predicated region
        $region13: #{wiki_autoencoder2_forward.16} parent=11 // pred_check
          %p118 = pneg %p30
        $region14: #{wiki_autoencoder2_forward.16} parent=11 // pred_check_branch
          %120 = sbr.rel (%p118) target = $region16
        $region15: #{wiki_autoencoder2_forward.16} parent=11 // pred_region
          _
        $region16: #{wiki_autoencoder2_forward.16} parent=11 // pred_fallthru
          _
        // Predicated region
        $region17: #{wiki_autoencoder2_forward.16} parent=11 // pred_check
          %p121 = pneg %p77
        $region18: #{wiki_autoencoder2_forward.16} parent=11 // pred_check_branch
          %123 = sbr.rel (%p121) target = $region20
        $region19: #{wiki_autoencoder2_forward.16} parent=11 // pred_region
          _
        $region20: #{wiki_autoencoder2_forward.16} parent=11 // pred_fallthru
          _
      $region12: #{wiki_autoencoder2_forward.16} parent=5 // pred_fallthru
        _
      %p124 = scmp.lt.s32.totalorder %s9, 2
      // Predicated region
      $region21: #{wiki_autoencoder2_forward.16} parent=5 // pred_check
        %p125 = pneg %p124
      $region22: #{wiki_autoencoder2_forward.16} parent=5 // pred_check_branch
        %127 = sbr.rel (%p125) target = $region24
      $region23: #{wiki_autoencoder2_forward.16} parent=5 // pred_region
        // Predicated region
        $region25: #{wiki_autoencoder2_forward.16} parent=23 // pred_check
          %p128 = pneg %p50
        $region26: #{wiki_autoencoder2_forward.16} parent=23 // pred_check_branch
          %130 = sbr.rel (%p128) target = $region28
        $region27: #{wiki_autoencoder2_forward.16} parent=23 // pred_region
          %s131 = sand.u32 %s40, 1
          %s132 = sand.u32 %s40, 1
          %s133 = smul.addr %s132, 368
          %s134 = scalar_lea.vmem [#allocation2], %s133
          %s135 = smul.u32 23, %s9
          %s136 = smul.addr %s135, 4
          %s137 = scalar_lea.vmem %s1, %s136
          // Predicated region
          $region29: #{wiki_autoencoder2_forward.16} parent=27 // pred_check
            _
          $region30: #{wiki_autoencoder2_forward.16} parent=27 // pred_check_branch
            %139 = sbr.rel (0) target = $region32
          $region31: #{wiki_autoencoder2_forward.16} parent=27 // pred_region
            // Predicated region
            $region33: #{wiki_autoencoder2_forward.16} parent=31 // pred_check
              _
            $region34: #{wiki_autoencoder2_forward.16} parent=31 // pred_check_branch
              %141 = sbr.rel (0) target = $region36
            $region35: #{wiki_autoencoder2_forward.16} parent=31 // pred_region
              %s142 = scalar_lea.vmem %s137, 88
              %s143 = scalar_lea.vmem %s134, 88 [#allocation2]
              loop: start=0, step=1, limit=1
              $region37: #{wiki_autoencoder2_forward.16} parent=35 // loop_pre_header
                _
              $region38: #{wiki_autoencoder2_forward.16} parent=35 // loop_header
                %s145 = sphi 0, %s149
                %p146 = scmp.ge.s32.totalorder %s145, 1
                %s150 = sphi %s137, %s137
                %s151 = sphi %s134, %s134
              $region39: #{wiki_autoencoder2_forward.16} parent=35 // loop_header_branch
                %148 = sbr.rel (%p146) target = $region43
              $region40: #{wiki_autoencoder2_forward.16} parent=35 // loop_body
                %v152 = vld [vmem:[%s150] sm:$0xff]
                %153 = vst [vmem:[%s151] sm:$0xff] %v152
                %v154 = vld [vmem:[%s150 + $0x8] sm:$0xff]
                %155 = vst [vmem:[%s151 + $0x8] sm:$0xff] %v154
                %v156 = vld [vmem:[%s150 + $0x10] sm:$0xff]
                %157 = vst [vmem:[%s151 + $0x10] sm:$0xff] %v156
                %v158 = vld [vmem:[%s150 + $0x18] sm:$0xff]
                %159 = vst [vmem:[%s151 + $0x18] sm:$0xff] %v158
                %v160 = vld [vmem:[%s150 + $0x20] sm:$0xff]
                %161 = vst [vmem:[%s151 + $0x20] sm:$0xff] %v160
                %v162 = vld [vmem:[%s150 + $0x28] sm:$0xff]
                %163 = vst [vmem:[%s151 + $0x28] sm:$0xff] %v162
                %v164 = vld [vmem:[%s150 + $0x30] sm:$0xff]
                %165 = vst [vmem:[%s151 + $0x30] sm:$0xff] %v164
                %v166 = vld [vmem:[%s150 + $0x38] sm:$0xff]
                %167 = vst [vmem:[%s151 + $0x38] sm:$0xff] %v166
                %v168 = vld [vmem:[%s150 + $0x40] sm:$0xff]
                %169 = vst [vmem:[%s151 + $0x40] sm:$0xff] %v168
                %v170 = vld [vmem:[%s150 + $0x48] sm:$0xff]
                %171 = vst [vmem:[%s151 + $0x48] sm:$0xff] %v170
                %v172 = vld [vmem:[%s150 + $0x50] sm:$0xff]
                %173 = vst [vmem:[%s151 + $0x50] sm:$0xff] %v172
                %v174 = vld [vmem:[%s150 + $0xb8] sm:$0xff]
                %175 = vst [vmem:[%s151 + $0x5c] sm:$0xff] %v174
                %v176 = vld [vmem:[%s150 + $0xc0] sm:$0xff]
                %177 = vst [vmem:[%s151 + $0x64] sm:$0xff] %v176
                %v178 = vld [vmem:[%s150 + $0xc8] sm:$0xff]
                %179 = vst [vmem:[%s151 + $0x6c] sm:$0xff] %v178
                %v180 = vld [vmem:[%s150 + $0xd0] sm:$0xff]
                %181 = vst [vmem:[%s151 + $0x74] sm:$0xff] %v180
                %v182 = vld [vmem:[%s150 + $0xd8] sm:$0xff]
                %183 = vst [vmem:[%s151 + $0x7c] sm:$0xff] %v182
                %v184 = vld [vmem:[%s150 + $0xe0] sm:$0xff]
                %185 = vst [vmem:[%s151 + $0x84] sm:$0xff] %v184
                %v186 = vld [vmem:[%s150 + $0xe8] sm:$0xff]
                %187 = vst [vmem:[%s151 + $0x8c] sm:$0xff] %v186
                %v188 = vld [vmem:[%s150 + $0xf0] sm:$0xff]
                %189 = vst [vmem:[%s151 + $0x94] sm:$0xff] %v188
                %v190 = vld [vmem:[%s150 + $0xf8] sm:$0xff]
                %191 = vst [vmem:[%s151 + $0x9c] sm:$0xff] %v190
                %v192 = vld [vmem:[%s150 + $0x100] sm:$0xff]
                %193 = vst [vmem:[%s151 + $0xa4] sm:$0xff] %v192
                %v194 = vld [vmem:[%s150 + $0x108] sm:$0xff]
                %195 = vst [vmem:[%s151 + $0xac] sm:$0xff] %v194
                %v196 = vld [vmem:[%s150 + $0x170] sm:$0xff]
                %197 = vst [vmem:[%s151 + $0xb8] sm:$0xff] %v196
                %v198 = vld [vmem:[%s150 + $0x178] sm:$0xff]
                %199 = vst [vmem:[%s151 + $0xc0] sm:$0xff] %v198
                %v200 = vld [vmem:[%s150 + $0x180] sm:$0xff]
                %201 = vst [vmem:[%s151 + $0xc8] sm:$0xff] %v200
                %v202 = vld [vmem:[%s150 + $0x188] sm:$0xff]
                %203 = vst [vmem:[%s151 + $0xd0] sm:$0xff] %v202
                %v204 = vld [vmem:[%s150 + $0x190] sm:$0xff]
                %205 = vst [vmem:[%s151 + $0xd8] sm:$0xff] %v204
                %v206 = vld [vmem:[%s150 + $0x198] sm:$0xff]
                %207 = vst [vmem:[%s151 + $0xe0] sm:$0xff] %v206
                %v208 = vld [vmem:[%s150 + $0x1a0] sm:$0xff]
                %209 = vst [vmem:[%s151 + $0xe8] sm:$0xff] %v208
                %v210 = vld [vmem:[%s150 + $0x1a8] sm:$0xff]
                %211 = vst [vmem:[%s151 + $0xf0] sm:$0xff] %v210
                %v212 = vld [vmem:[%s150 + $0x1b0] sm:$0xff]
                %213 = vst [vmem:[%s151 + $0xf8] sm:$0xff] %v212
                %v214 = vld [vmem:[%s150 + $0x1b8] sm:$0xff]
                %215 = vst [vmem:[%s151 + $0x100] sm:$0xff] %v214
                %v216 = vld [vmem:[%s150 + $0x1c0] sm:$0xff]
                %217 = vst [vmem:[%s151 + $0x108] sm:$0xff] %v216
                %v218 = vld [vmem:[%s150 + $0x228] sm:$0xff]
                %219 = vst [vmem:[%s151 + $0x114] sm:$0xff] %v218
                %v220 = vld [vmem:[%s150 + $0x230] sm:$0xff]
                %221 = vst [vmem:[%s151 + $0x11c] sm:$0xff] %v220
                %v222 = vld [vmem:[%s150 + $0x238] sm:$0xff]
                %223 = vst [vmem:[%s151 + $0x124] sm:$0xff] %v222
                %v224 = vld [vmem:[%s150 + $0x240] sm:$0xff]
                %225 = vst [vmem:[%s151 + $0x12c] sm:$0xff] %v224
                %v226 = vld [vmem:[%s150 + $0x248] sm:$0xff]
                %227 = vst [vmem:[%s151 + $0x134] sm:$0xff] %v226
                %v228 = vld [vmem:[%s150 + $0x250] sm:$0xff]
                %229 = vst [vmem:[%s151 + $0x13c] sm:$0xff] %v228
                %v230 = vld [vmem:[%s150 + $0x258] sm:$0xff]
                %231 = vst [vmem:[%s151 + $0x144] sm:$0xff] %v230
                %v232 = vld [vmem:[%s150 + $0x260] sm:$0xff]
                %233 = vst [vmem:[%s151 + $0x14c] sm:$0xff] %v232
                %v234 = vld [vmem:[%s150 + $0x268] sm:$0xff]
                %235 = vst [vmem:[%s151 + $0x154] sm:$0xff] %v234
                %v236 = vld [vmem:[%s150 + $0x270] sm:$0xff]
                %237 = vst [vmem:[%s151 + $0x15c] sm:$0xff] %v236
                %v238 = vld [vmem:[%s150 + $0x278] sm:$0xff]
                %239 = vst [vmem:[%s151 + $0x164] sm:$0xff] %v238
              $region41: #{wiki_autoencoder2_forward.16} parent=35 // loop_footer
                %s149 = sadd.s32 1, %s145
              $region42: #{wiki_autoencoder2_forward.16} parent=35 // loop_footer_branch
                %144 = sbr.rel target = $region38
              $region43: #{wiki_autoencoder2_forward.16} parent=35 // loop_exit
                _
              %s241 = ssub.s32 16, 1
              loop: start=0, step=1, limit=1
              $region44: #{wiki_autoencoder2_forward.16} parent=35 // loop_pre_header
                _
              $region45: #{wiki_autoencoder2_forward.16} parent=35 // loop_header
                %s243 = sphi 0, %s247
                %p244 = scmp.ge.s32.totalorder %s243, 1
                %s248 = sphi %s142, %s142
                %s249 = sphi %s143, %s143
              $region46: #{wiki_autoencoder2_forward.16} parent=35 // loop_header_branch
                %246 = sbr.rel (%p244) target = $region50
              $region47: #{wiki_autoencoder2_forward.16} parent=35 // loop_body
                %v250 = vld [vmem:[%s248] sm:%s241]
                %251 = vst [vmem:[%s249] sm:%s241] %v250
                %v252 = vld [vmem:[%s248 + $0xb8] sm:%s241]
                %253 = vst [vmem:[%s249 + $0x5c] sm:%s241] %v252
                %v254 = vld [vmem:[%s248 + $0x170] sm:%s241]
                %255 = vst [vmem:[%s249 + $0xb8] sm:%s241] %v254
                %v256 = vld [vmem:[%s248 + $0x228] sm:%s241]
                %257 = vst [vmem:[%s249 + $0x114] sm:%s241] %v256
              $region48: #{wiki_autoencoder2_forward.16} parent=35 // loop_footer
                %s247 = sadd.s32 1, %s243
              $region49: #{wiki_autoencoder2_forward.16} parent=35 // loop_footer_branch
                %242 = sbr.rel target = $region45
              $region50: #{wiki_autoencoder2_forward.16} parent=35 // loop_exit
                _
            $region36: #{wiki_autoencoder2_forward.16} parent=31 // pred_fallthru
              _
          $region32: #{wiki_autoencoder2_forward.16} parent=27 // pred_fallthru
            _
          %258 = vnop
        $region28: #{wiki_autoencoder2_forward.16} parent=23 // pred_fallthru
          _
      $region24: #{wiki_autoencoder2_forward.16} parent=5 // pred_fallthru
        _
      %p259 = scmp.le.s32.totalorder 1, %s9
      %p260 = scmp.lt.s32.totalorder %s9, 3
      %p261 = pnand %p259, %p260
      %p262 = pneg %p261
      // Predicated region
      $region51: #{wiki_autoencoder2_forward.16} parent=5 // pred_check
        _
      $region52: #{wiki_autoencoder2_forward.16} parent=5 // pred_check_branch
        %264 = sbr.rel (%p261) target = $region54
      $region53: #{wiki_autoencoder2_forward.16} parent=5 // pred_region
        %s265 = ssub.s32 %s9, 1
        %s266 = sand.u32 %s43, 1
        %s267 = sand.u32 %s43, 1
        %s268 = smul.addr %s267, 368
        %s269 = scalar_lea.vmem [#allocation2], %s268
        // Predicated region
        $region55: #{wiki_autoencoder2_forward.16} parent=53 // pred_check
          %p270 = pneg %p56
        $region56: #{wiki_autoencoder2_forward.16} parent=53 // pred_check_branch
          %272 = sbr.rel (%p270) target = $region58
        $region57: #{wiki_autoencoder2_forward.16} parent=53 // pred_region
          _
        $region58: #{wiki_autoencoder2_forward.16} parent=53 // pred_fallthru
          _
        %p273 = pneg %p30
        %p274 = pneg %p27
        %s275 = sand.u32 %s43, 1
        %s276 = sand.u32 %s43, 1
        %s277 = smul.addr %s276, 368
        %s278 = scalar_lea.vmem [#allocation2], %s277
        %p279 = pneg %p56
        %p280 = pneg %p53
        %p281 = pneg %p77
        %p282 = pneg %p74
        %p283 = pneg %p103
        %p284 = pneg %p100
        %s285 = sand.u32 %s90, 1
        %s286 = sand.u32 %s90, 1
        %s287 = smul.addr %s286, 368
        %s288 = scalar_lea.vmem [#allocation3], %s287
        %s289 = smul.u32 23, %s14
        %s290 = smul.u32 23, %s14
        %v292 = vld [vmem:[%s0] sm:$0xf]
        %v293 = vld [vmem:[%s0 + $0x4] sm:$0x3]
        %v294 = vld [vmem:[%s269] sm:$0xff]
        %v295 = vld [vmem:[%s269 + $0x8] sm:$0xff]
        %v296 = vld [vmem:[%s269 + $0x10] sm:$0xff]
        %v297 = vld [vmem:[%s269 + $0x18] sm:$0xff]
        %v298 = vld [vmem:[%s269 + $0x20] sm:$0xff]
        %v299 = vld [vmem:[%s269 + $0x28] sm:$0xff]
        %v300 = vld [vmem:[%s269 + $0x30] sm:$0xff]
        %v301 = vld [vmem:[%s269 + $0x38] sm:$0xff]
        %v302 = vld [vmem:[%s269 + $0x40] sm:$0xff]
        %v303 = vld [vmem:[%s269 + $0x48] sm:$0xff]
        %v304 = vld [vmem:[%s269 + $0x50] sm:$0xff]
        %v305 = vld [vmem:[%s269 + $0x58] sm:$0xf]
        %v306 = vld [vmem:[%s269 + $0x5c] sm:$0xff]
        %v307 = vld [vmem:[%s269 + $0x64] sm:$0xff]
        %v308 = vld [vmem:[%s269 + $0x6c] sm:$0xff]
        %v309 = vld [vmem:[%s269 + $0x74] sm:$0xff]
        %v310 = vld [vmem:[%s269 + $0x7c] sm:$0xff]
        %v311 = vld [vmem:[%s269 + $0x84] sm:$0xff]
        %v312 = vld [vmem:[%s269 + $0x8c] sm:$0xff]
        %v313 = vld [vmem:[%s269 + $0x94] sm:$0xff]
        %v314 = vld [vmem:[%s269 + $0x9c] sm:$0xff]
        %v315 = vld [vmem:[%s269 + $0xa4] sm:$0xff]
        %v316 = vld [vmem:[%s269 + $0xac] sm:$0xff]
        %v317 = vld [vmem:[%s269 + $0xb4] sm:$0xf]
        %v318 = vld [vmem:[%s269 + $0xb8] sm:$0xff]
        %v319 = vld [vmem:[%s269 + $0xc0] sm:$0xff]
        %v320 = vld [vmem:[%s269 + $0xc8] sm:$0xff]
        %v321 = vld [vmem:[%s269 + $0xd0] sm:$0xff]
        %v322 = vld [vmem:[%s269 + $0xd8] sm:$0xff]
        %v323 = vld [vmem:[%s269 + $0xe0] sm:$0xff]
        %v324 = vld [vmem:[%s269 + $0xe8] sm:$0xff]
        %v325 = vld [vmem:[%s269 + $0xf0] sm:$0xff]
        %v326 = vld [vmem:[%s269 + $0xf8] sm:$0xff]
        %v327 = vld [vmem:[%s269 + $0x100] sm:$0xff]
        %v328 = vld [vmem:[%s269 + $0x108] sm:$0xff]
        %v329 = vld [vmem:[%s269 + $0x110] sm:$0xf]
        %v330 = vld [vmem:[%s269 + $0x114] sm:$0x33]
        %v331 = vld [vmem:[%s269 + $0x11c] sm:$0x33]
        %v332 = vld [vmem:[%s269 + $0x124] sm:$0x33]
        %v333 = vld [vmem:[%s269 + $0x12c] sm:$0x33]
        %v334 = vld [vmem:[%s269 + $0x134] sm:$0x33]
        %v335 = vld [vmem:[%s269 + $0x13c] sm:$0x33]
        %v336 = vld [vmem:[%s269 + $0x144] sm:$0x33]
        %v337 = vld [vmem:[%s269 + $0x14c] sm:$0x33]
        %v338 = vld [vmem:[%s269 + $0x154] sm:$0x33]
        %v339 = vld [vmem:[%s269 + $0x15c] sm:$0x33]
        %v340 = vld [vmem:[%s269 + $0x164] sm:$0x33]
        %v341 = vld [vmem:[%s269 + $0x16c] sm:$0x3]
        %v342 = vld [vmem:[%s2] sm:$0xff]
        %v343 = vld [vmem:[%s2 + $0x8] sm:$0xf]
        %345 = vset.pattern.permute.xlu0 0
        %346 = vperm.xlu0 %345, %v342
        %v347 = vpop.permute.xlu0 %346
        %350 = vset.pattern.permute.xlu0 0
        %351 = vperm.xlu0 %350, %v343
        %v352 = vpop.permute.xlu0 %351
        %v356 = vunpack.c.l.b16 %v292
        %v357 = vunpack.c.l.b16 %v293
        %v358 = vpack.c.b16 %v357, %v356
        %v407 = vunpack.c.l.b16 %v294
        %v408 = vunpack.c.h.b16 %v294
        %v409 = vunpack.c.l.b16 %v295
        %v410 = vunpack.c.h.b16 %v295
        %v411 = vunpack.c.l.b16 %v296
        %v412 = vunpack.c.h.b16 %v296
        %v413 = vunpack.c.l.b16 %v297
        %v414 = vunpack.c.h.b16 %v297
        %v415 = vunpack.c.l.b16 %v298
        %v416 = vunpack.c.h.b16 %v298
        %v417 = vunpack.c.l.b16 %v299
        %v418 = vunpack.c.h.b16 %v299
        %v419 = vunpack.c.l.b16 %v300
        %v420 = vunpack.c.h.b16 %v300
        %v421 = vunpack.c.l.b16 %v301
        %v422 = vunpack.c.h.b16 %v301
        %v423 = vunpack.c.l.b16 %v302
        %v424 = vunpack.c.h.b16 %v302
        %v425 = vunpack.c.l.b16 %v303
        %v426 = vunpack.c.h.b16 %v303
        %v427 = vunpack.c.l.b16 %v304
        %v428 = vunpack.c.h.b16 %v304
        %v429 = vunpack.c.l.b16 %v305
        %v430 = vunpack.c.l.b16 %v306
        %v431 = vunpack.c.h.b16 %v306
        %v432 = vunpack.c.l.b16 %v307
        %v433 = vunpack.c.h.b16 %v307
        %v434 = vunpack.c.l.b16 %v308
        %v435 = vunpack.c.h.b16 %v308
        %v436 = vunpack.c.l.b16 %v309
        %v437 = vunpack.c.h.b16 %v309
        %v438 = vunpack.c.l.b16 %v310
        %v439 = vunpack.c.h.b16 %v310
        %v440 = vunpack.c.l.b16 %v311
        %v441 = vunpack.c.h.b16 %v311
        %v442 = vunpack.c.l.b16 %v312
        %v443 = vunpack.c.h.b16 %v312
        %v444 = vunpack.c.l.b16 %v313
        %v445 = vunpack.c.h.b16 %v313
        %v446 = vunpack.c.l.b16 %v314
        %v447 = vunpack.c.h.b16 %v314
        %v448 = vunpack.c.l.b16 %v315
        %v449 = vunpack.c.h.b16 %v315
        %v450 = vunpack.c.l.b16 %v316
        %v451 = vunpack.c.h.b16 %v316
        %v452 = vunpack.c.l.b16 %v317
        %v453 = vunpack.c.l.b16 %v318
        %v454 = vunpack.c.h.b16 %v318
        %v455 = vunpack.c.l.b16 %v319
        %v456 = vunpack.c.h.b16 %v319
        %v457 = vunpack.c.l.b16 %v320
        %v458 = vunpack.c.h.b16 %v320
        %v459 = vunpack.c.l.b16 %v321
        %v460 = vunpack.c.h.b16 %v321
        %v461 = vunpack.c.l.b16 %v322
        %v462 = vunpack.c.h.b16 %v322
        %v463 = vunpack.c.l.b16 %v323
        %v464 = vunpack.c.h.b16 %v323
        %v465 = vunpack.c.l.b16 %v324
        %v466 = vunpack.c.h.b16 %v324
        %v467 = vunpack.c.l.b16 %v325
        %v468 = vunpack.c.h.b16 %v325
        %v469 = vunpack.c.l.b16 %v326
        %v470 = vunpack.c.h.b16 %v326
        %v471 = vunpack.c.l.b16 %v327
        %v472 = vunpack.c.h.b16 %v327
        %v473 = vunpack.c.l.b16 %v328
        %v474 = vunpack.c.h.b16 %v328
        %v475 = vunpack.c.l.b16 %v329
        %v476 = vunpack.c.l.b16 %v330
        %v477 = vunpack.c.h.b16 %v330
        %v478 = vunpack.c.l.b16 %v331
        %v479 = vunpack.c.h.b16 %v331
        %v480 = vunpack.c.l.b16 %v332
        %v481 = vunpack.c.h.b16 %v332
        %v482 = vunpack.c.l.b16 %v333
        %v483 = vunpack.c.h.b16 %v333
        %v484 = vunpack.c.l.b16 %v334
        %v485 = vunpack.c.h.b16 %v334
        %v486 = vunpack.c.l.b16 %v335
        %v487 = vunpack.c.h.b16 %v335
        %v488 = vunpack.c.l.b16 %v336
        %v489 = vunpack.c.h.b16 %v336
        %v490 = vunpack.c.l.b16 %v337
        %v491 = vunpack.c.h.b16 %v337
        %v492 = vunpack.c.l.b16 %v338
        %v493 = vunpack.c.h.b16 %v338
        %v494 = vunpack.c.l.b16 %v339
        %v495 = vunpack.c.h.b16 %v339
        %v496 = vunpack.c.l.b16 %v340
        %v497 = vunpack.c.h.b16 %v340
        %v498 = vunpack.c.l.b16 %v341
        %v499 = vpack.c.b16 %v430, %v407
        %v500 = vpack.c.b16 %v431, %v408
        %v501 = vpack.c.b16 %v432, %v409
        %v502 = vpack.c.b16 %v433, %v410
        %v503 = vpack.c.b16 %v434, %v411
        %v504 = vpack.c.b16 %v435, %v412
        %v505 = vpack.c.b16 %v436, %v413
        %v506 = vpack.c.b16 %v437, %v414
        %v507 = vpack.c.b16 %v438, %v415
        %v508 = vpack.c.b16 %v439, %v416
        %v509 = vpack.c.b16 %v440, %v417
        %v510 = vpack.c.b16 %v441, %v418
        %v511 = vpack.c.b16 %v442, %v419
        %v512 = vpack.c.b16 %v443, %v420
        %v513 = vpack.c.b16 %v444, %v421
        %v514 = vpack.c.b16 %v445, %v422
        %v515 = vpack.c.b16 %v446, %v423
        %v516 = vpack.c.b16 %v447, %v424
        %v517 = vpack.c.b16 %v448, %v425
        %v518 = vpack.c.b16 %v449, %v426
        %v519 = vpack.c.b16 %v450, %v427
        %v520 = vpack.c.b16 %v451, %v428
        %v521 = vpack.c.b16 %v452, %v429
        %v522 = vpack.c.b16 %v476, %v453
        %v523 = vpack.c.b16 %v477, %v454
        %v524 = vpack.c.b16 %v478, %v455
        %v525 = vpack.c.b16 %v479, %v456
        %v526 = vpack.c.b16 %v480, %v457
        %v527 = vpack.c.b16 %v481, %v458
        %v528 = vpack.c.b16 %v482, %v459
        %v529 = vpack.c.b16 %v483, %v460
        %v530 = vpack.c.b16 %v484, %v461
        %v531 = vpack.c.b16 %v485, %v462
        %v532 = vpack.c.b16 %v486, %v463
        %v533 = vpack.c.b16 %v487, %v464
        %v534 = vpack.c.b16 %v488, %v465
        %v535 = vpack.c.b16 %v489, %v466
        %v536 = vpack.c.b16 %v490, %v467
        %v537 = vpack.c.b16 %v491, %v468
        %v538 = vpack.c.b16 %v492, %v469
        %v539 = vpack.c.b16 %v493, %v470
        %v540 = vpack.c.b16 %v494, %v471
        %v541 = vpack.c.b16 %v495, %v472
        %v542 = vpack.c.b16 %v496, %v473
        %v543 = vpack.c.b16 %v497, %v474
        %v544 = vpack.c.b16 %v498, %v475
        %vm568 = vcmask 220160
        %v570 = vsel %vm568, %v358, 0
        %vm572 = vcmask 1044480
        %vm573 = vcmask 1045504
        %v574 = vsel %vm572, 4294967295, 65535
        %v575 = vsel %vm573, %v574, 0
        %v577 = vand.u32 %v522, %v575
        %v580 = vand.u32 %v523, %v575
        %v583 = vand.u32 %v524, %v575
        %v586 = vand.u32 %v525, %v575
        %v589 = vand.u32 %v526, %v575
        %v592 = vand.u32 %v527, %v575
        %v595 = vand.u32 %v528, %v575
        %v598 = vand.u32 %v529, %v575
        %v601 = vand.u32 %v530, %v575
        %v604 = vand.u32 %v531, %v575
        %v607 = vand.u32 %v532, %v575
        %v610 = vand.u32 %v533, %v575
        %v613 = vand.u32 %v534, %v575
        %v616 = vand.u32 %v535, %v575
        %v619 = vand.u32 %v536, %v575
        %v622 = vand.u32 %v537, %v575
        %v625 = vand.u32 %v538, %v575
        %v628 = vand.u32 %v539, %v575
        %v631 = vand.u32 %v540, %v575
        %v634 = vand.u32 %v541, %v575
        %v637 = vand.u32 %v542, %v575
        %v640 = vand.u32 %v543, %v575
        %v643 = vand.u32 %v544, %v575
        %645 = vmatpush.bf16.msra.mxu0 0
        %646 = vmatpush.bf16.msra.mxu0 0
        %647 = vmatpush.bf16.msra.mxu0 0
        %648 = vmatpush.bf16.msra.mxu0 0
        %649 = vmatpush.bf16.msra.mxu0 0
        %650 = vmatpush.bf16.msra.mxu0 0
        %651 = vmatpush.bf16.msra.mxu0 %v577
        %652 = vmatpush.bf16.msra.mxu0 %v499
        %653 = vmatmul.bf16.gmra.mxu0 %v570
        %v654 = vpop.f32.mrf.mxu0
        %v655 = vadd.f32 %v347, %v654
        %v656 = vpop.f32.mrf.mxu0
        %v657 = vadd.f32 %v352, %v656
        %658 = vdwg.mxu0
        %659 = vmatpush.bf16.msra.mxu0 0
        %660 = vmatpush.bf16.msra.mxu0 0
        %661 = vmatpush.bf16.msra.mxu0 0
        %662 = vmatpush.bf16.msra.mxu0 0
        %663 = vmatpush.bf16.msra.mxu0 0
        %664 = vmatpush.bf16.msra.mxu0 0
        %665 = vmatpush.bf16.msra.mxu0 %v580
        %666 = vmatpush.bf16.msra.mxu0 %v500
        %667 = vmatmul.bf16.gmra.mxu0 %v570
        %v668 = vpop.f32.mrf.mxu0
        %v669 = vadd.f32 %v347, %v668
        %v670 = vpop.f32.mrf.mxu0
        %v671 = vadd.f32 %v352, %v670
        %672 = vdwg.mxu0
        %673 = vmatpush.bf16.msra.mxu0 0
        %674 = vmatpush.bf16.msra.mxu0 0
        %675 = vmatpush.bf16.msra.mxu0 0
        %676 = vmatpush.bf16.msra.mxu0 0
        %677 = vmatpush.bf16.msra.mxu0 0
        %678 = vmatpush.bf16.msra.mxu0 0
        %679 = vmatpush.bf16.msra.mxu0 %v583
        %680 = vmatpush.bf16.msra.mxu0 %v501
        %681 = vmatmul.bf16.gmra.mxu0 %v570
        %v682 = vpop.f32.mrf.mxu0
        %v683 = vadd.f32 %v347, %v682
        %v684 = vpop.f32.mrf.mxu0
        %v685 = vadd.f32 %v352, %v684
        %686 = vdwg.mxu0
        %687 = vmatpush.bf16.msra.mxu0 0
        %688 = vmatpush.bf16.msra.mxu0 0
        %689 = vmatpush.bf16.msra.mxu0 0
        %690 = vmatpush.bf16.msra.mxu0 0
        %691 = vmatpush.bf16.msra.mxu0 0
        %692 = vmatpush.bf16.msra.mxu0 0
        %693 = vmatpush.bf16.msra.mxu0 %v586
        %694 = vmatpush.bf16.msra.mxu0 %v502
        %695 = vmatmul.bf16.gmra.mxu0 %v570
        %v696 = vpop.f32.mrf.mxu0
        %v697 = vadd.f32 %v347, %v696
        %v698 = vpop.f32.mrf.mxu0
        %v699 = vadd.f32 %v352, %v698
        %700 = vdwg.mxu0
        %701 = vmatpush.bf16.msra.mxu0 0
        %702 = vmatpush.bf16.msra.mxu0 0
        %703 = vmatpush.bf16.msra.mxu0 0
        %704 = vmatpush.bf16.msra.mxu0 0
        %705 = vmatpush.bf16.msra.mxu0 0
        %706 = vmatpush.bf16.msra.mxu0 0
        %707 = vmatpush.bf16.msra.mxu0 %v589
        %708 = vmatpush.bf16.msra.mxu0 %v503
        %709 = vmatmul.bf16.gmra.mxu0 %v570
        %v710 = vpop.f32.mrf.mxu0
        %v711 = vadd.f32 %v347, %v710
        %v712 = vpop.f32.mrf.mxu0
        %v713 = vadd.f32 %v352, %v712
        %714 = vdwg.mxu0
        %715 = vmatpush.bf16.msra.mxu0 0
        %716 = vmatpush.bf16.msra.mxu0 0
        %717 = vmatpush.bf16.msra.mxu0 0
        %718 = vmatpush.bf16.msra.mxu0 0
        %719 = vmatpush.bf16.msra.mxu0 0
        %720 = vmatpush.bf16.msra.mxu0 0
        %721 = vmatpush.bf16.msra.mxu0 %v592
        %722 = vmatpush.bf16.msra.mxu0 %v504
        %723 = vmatmul.bf16.gmra.mxu0 %v570
        %v724 = vpop.f32.mrf.mxu0
        %v725 = vadd.f32 %v347, %v724
        %v726 = vpop.f32.mrf.mxu0
        %v727 = vadd.f32 %v352, %v726
        %728 = vdwg.mxu0
        %729 = vmatpush.bf16.msra.mxu0 0
        %730 = vmatpush.bf16.msra.mxu0 0
        %731 = vmatpush.bf16.msra.mxu0 0
        %732 = vmatpush.bf16.msra.mxu0 0
        %733 = vmatpush.bf16.msra.mxu0 0
        %734 = vmatpush.bf16.msra.mxu0 0
        %735 = vmatpush.bf16.msra.mxu0 %v595
        %736 = vmatpush.bf16.msra.mxu0 %v505
        %737 = vmatmul.bf16.gmra.mxu0 %v570
        %v738 = vpop.f32.mrf.mxu0
        %v739 = vadd.f32 %v347, %v738
        %v740 = vpop.f32.mrf.mxu0
        %v741 = vadd.f32 %v352, %v740
        %742 = vdwg.mxu0
        %743 = vmatpush.bf16.msra.mxu0 0
        %744 = vmatpush.bf16.msra.mxu0 0
        %745 = vmatpush.bf16.msra.mxu0 0
        %746 = vmatpush.bf16.msra.mxu0 0
        %747 = vmatpush.bf16.msra.mxu0 0
        %748 = vmatpush.bf16.msra.mxu0 0
        %749 = vmatpush.bf16.msra.mxu0 %v598
        %750 = vmatpush.bf16.msra.mxu0 %v506
        %751 = vmatmul.bf16.gmra.mxu0 %v570
        %v752 = vpop.f32.mrf.mxu0
        %v753 = vadd.f32 %v347, %v752
        %v754 = vpop.f32.mrf.mxu0
        %v755 = vadd.f32 %v352, %v754
        %756 = vdwg.mxu0
        %757 = vmatpush.bf16.msra.mxu0 0
        %758 = vmatpush.bf16.msra.mxu0 0
        %759 = vmatpush.bf16.msra.mxu0 0
        %760 = vmatpush.bf16.msra.mxu0 0
        %761 = vmatpush.bf16.msra.mxu0 0
        %762 = vmatpush.bf16.msra.mxu0 0
        %763 = vmatpush.bf16.msra.mxu0 %v601
        %764 = vmatpush.bf16.msra.mxu0 %v507
        %765 = vmatmul.bf16.gmra.mxu0 %v570
        %v766 = vpop.f32.mrf.mxu0
        %v767 = vadd.f32 %v347, %v766
        %v768 = vpop.f32.mrf.mxu0
        %v769 = vadd.f32 %v352, %v768
        %770 = vdwg.mxu0
        %771 = vmatpush.bf16.msra.mxu0 0
        %772 = vmatpush.bf16.msra.mxu0 0
        %773 = vmatpush.bf16.msra.mxu0 0
        %774 = vmatpush.bf16.msra.mxu0 0
        %775 = vmatpush.bf16.msra.mxu0 0
        %776 = vmatpush.bf16.msra.mxu0 0
        %777 = vmatpush.bf16.msra.mxu0 %v604
        %778 = vmatpush.bf16.msra.mxu0 %v508
        %779 = vmatmul.bf16.gmra.mxu0 %v570
        %v780 = vpop.f32.mrf.mxu0
        %v781 = vadd.f32 %v347, %v780
        %v782 = vpop.f32.mrf.mxu0
        %v783 = vadd.f32 %v352, %v782
        %784 = vdwg.mxu0
        %785 = vmatpush.bf16.msra.mxu0 0
        %786 = vmatpush.bf16.msra.mxu0 0
        %787 = vmatpush.bf16.msra.mxu0 0
        %788 = vmatpush.bf16.msra.mxu0 0
        %789 = vmatpush.bf16.msra.mxu0 0
        %790 = vmatpush.bf16.msra.mxu0 0
        %791 = vmatpush.bf16.msra.mxu0 %v607
        %792 = vmatpush.bf16.msra.mxu0 %v509
        %793 = vmatmul.bf16.gmra.mxu0 %v570
        %v794 = vpop.f32.mrf.mxu0
        %v795 = vadd.f32 %v347, %v794
        %v796 = vpop.f32.mrf.mxu0
        %v797 = vadd.f32 %v352, %v796
        %798 = vdwg.mxu0
        %799 = vmatpush.bf16.msra.mxu0 0
        %800 = vmatpush.bf16.msra.mxu0 0
        %801 = vmatpush.bf16.msra.mxu0 0
        %802 = vmatpush.bf16.msra.mxu0 0
        %803 = vmatpush.bf16.msra.mxu0 0
        %804 = vmatpush.bf16.msra.mxu0 0
        %805 = vmatpush.bf16.msra.mxu0 %v610
        %806 = vmatpush.bf16.msra.mxu0 %v510
        %807 = vmatmul.bf16.gmra.mxu0 %v570
        %v808 = vpop.f32.mrf.mxu0
        %v809 = vadd.f32 %v347, %v808
        %v810 = vpop.f32.mrf.mxu0
        %v811 = vadd.f32 %v352, %v810
        %812 = vdwg.mxu0
        %813 = vmatpush.bf16.msra.mxu0 0
        %814 = vmatpush.bf16.msra.mxu0 0
        %815 = vmatpush.bf16.msra.mxu0 0
        %816 = vmatpush.bf16.msra.mxu0 0
        %817 = vmatpush.bf16.msra.mxu0 0
        %818 = vmatpush.bf16.msra.mxu0 0
        %819 = vmatpush.bf16.msra.mxu0 %v613
        %820 = vmatpush.bf16.msra.mxu0 %v511
        %821 = vmatmul.bf16.gmra.mxu0 %v570
        %v822 = vpop.f32.mrf.mxu0
        %v823 = vadd.f32 %v347, %v822
        %v824 = vpop.f32.mrf.mxu0
        %v825 = vadd.f32 %v352, %v824
        %826 = vdwg.mxu0
        %827 = vmatpush.bf16.msra.mxu0 0
        %828 = vmatpush.bf16.msra.mxu0 0
        %829 = vmatpush.bf16.msra.mxu0 0
        %830 = vmatpush.bf16.msra.mxu0 0
        %831 = vmatpush.bf16.msra.mxu0 0
        %832 = vmatpush.bf16.msra.mxu0 0
        %833 = vmatpush.bf16.msra.mxu0 %v616
        %834 = vmatpush.bf16.msra.mxu0 %v512
        %835 = vmatmul.bf16.gmra.mxu0 %v570
        %v836 = vpop.f32.mrf.mxu0
        %v837 = vadd.f32 %v347, %v836
        %v838 = vpop.f32.mrf.mxu0
        %v839 = vadd.f32 %v352, %v838
        %840 = vdwg.mxu0
        %841 = vmatpush.bf16.msra.mxu0 0
        %842 = vmatpush.bf16.msra.mxu0 0
        %843 = vmatpush.bf16.msra.mxu0 0
        %844 = vmatpush.bf16.msra.mxu0 0
        %845 = vmatpush.bf16.msra.mxu0 0
        %846 = vmatpush.bf16.msra.mxu0 0
        %847 = vmatpush.bf16.msra.mxu0 %v619
        %848 = vmatpush.bf16.msra.mxu0 %v513
        %849 = vmatmul.bf16.gmra.mxu0 %v570
        %v850 = vpop.f32.mrf.mxu0
        %v851 = vadd.f32 %v347, %v850
        %v852 = vpop.f32.mrf.mxu0
        %v853 = vadd.f32 %v352, %v852
        %854 = vdwg.mxu0
        %855 = vmatpush.bf16.msra.mxu0 0
        %856 = vmatpush.bf16.msra.mxu0 0
        %857 = vmatpush.bf16.msra.mxu0 0
        %858 = vmatpush.bf16.msra.mxu0 0
        %859 = vmatpush.bf16.msra.mxu0 0
        %860 = vmatpush.bf16.msra.mxu0 0
        %861 = vmatpush.bf16.msra.mxu0 %v622
        %862 = vmatpush.bf16.msra.mxu0 %v514
        %863 = vmatmul.bf16.gmra.mxu0 %v570
        %v864 = vpop.f32.mrf.mxu0
        %v865 = vadd.f32 %v347, %v864
        %v866 = vpop.f32.mrf.mxu0
        %v867 = vadd.f32 %v352, %v866
        %868 = vdwg.mxu0
        %869 = vmatpush.bf16.msra.mxu0 0
        %870 = vmatpush.bf16.msra.mxu0 0
        %871 = vmatpush.bf16.msra.mxu0 0
        %872 = vmatpush.bf16.msra.mxu0 0
        %873 = vmatpush.bf16.msra.mxu0 0
        %874 = vmatpush.bf16.msra.mxu0 0
        %875 = vmatpush.bf16.msra.mxu0 %v625
        %876 = vmatpush.bf16.msra.mxu0 %v515
        %877 = vmatmul.bf16.gmra.mxu0 %v570
        %v878 = vpop.f32.mrf.mxu0
        %v879 = vadd.f32 %v347, %v878
        %v880 = vpop.f32.mrf.mxu0
        %v881 = vadd.f32 %v352, %v880
        %882 = vdwg.mxu0
        %883 = vmatpush.bf16.msra.mxu0 0
        %884 = vmatpush.bf16.msra.mxu0 0
        %885 = vmatpush.bf16.msra.mxu0 0
        %886 = vmatpush.bf16.msra.mxu0 0
        %887 = vmatpush.bf16.msra.mxu0 0
        %888 = vmatpush.bf16.msra.mxu0 0
        %889 = vmatpush.bf16.msra.mxu0 %v628
        %890 = vmatpush.bf16.msra.mxu0 %v516
        %891 = vmatmul.bf16.gmra.mxu0 %v570
        %v892 = vpop.f32.mrf.mxu0
        %v893 = vadd.f32 %v347, %v892
        %v894 = vpop.f32.mrf.mxu0
        %v895 = vadd.f32 %v352, %v894
        %896 = vdwg.mxu0
        %897 = vmatpush.bf16.msra.mxu0 0
        %898 = vmatpush.bf16.msra.mxu0 0
        %899 = vmatpush.bf16.msra.mxu0 0
        %900 = vmatpush.bf16.msra.mxu0 0
        %901 = vmatpush.bf16.msra.mxu0 0
        %902 = vmatpush.bf16.msra.mxu0 0
        %903 = vmatpush.bf16.msra.mxu0 %v631
        %904 = vmatpush.bf16.msra.mxu0 %v517
        %905 = vmatmul.bf16.gmra.mxu0 %v570
        %v906 = vpop.f32.mrf.mxu0
        %v907 = vadd.f32 %v347, %v906
        %v908 = vpop.f32.mrf.mxu0
        %v909 = vadd.f32 %v352, %v908
        %910 = vdwg.mxu0
        %911 = vmatpush.bf16.msra.mxu0 0
        %912 = vmatpush.bf16.msra.mxu0 0
        %913 = vmatpush.bf16.msra.mxu0 0
        %914 = vmatpush.bf16.msra.mxu0 0
        %915 = vmatpush.bf16.msra.mxu0 0
        %916 = vmatpush.bf16.msra.mxu0 0
        %917 = vmatpush.bf16.msra.mxu0 %v634
        %918 = vmatpush.bf16.msra.mxu0 %v518
        %919 = vmatmul.bf16.gmra.mxu0 %v570
        %v920 = vpop.f32.mrf.mxu0
        %v921 = vadd.f32 %v347, %v920
        %v922 = vpop.f32.mrf.mxu0
        %v923 = vadd.f32 %v352, %v922
        %924 = vdwg.mxu0
        %925 = vmatpush.bf16.msra.mxu0 0
        %926 = vmatpush.bf16.msra.mxu0 0
        %927 = vmatpush.bf16.msra.mxu0 0
        %928 = vmatpush.bf16.msra.mxu0 0
        %929 = vmatpush.bf16.msra.mxu0 0
        %930 = vmatpush.bf16.msra.mxu0 0
        %931 = vmatpush.bf16.msra.mxu0 %v637
        %932 = vmatpush.bf16.msra.mxu0 %v519
        %933 = vmatmul.bf16.gmra.mxu0 %v570
        %v934 = vpop.f32.mrf.mxu0
        %v935 = vadd.f32 %v347, %v934
        %v936 = vpop.f32.mrf.mxu0
        %v937 = vadd.f32 %v352, %v936
        %938 = vdwg.mxu0
        %939 = vmatpush.bf16.msra.mxu0 0
        %940 = vmatpush.bf16.msra.mxu0 0
        %941 = vmatpush.bf16.msra.mxu0 0
        %942 = vmatpush.bf16.msra.mxu0 0
        %943 = vmatpush.bf16.msra.mxu0 0
        %944 = vmatpush.bf16.msra.mxu0 0
        %945 = vmatpush.bf16.msra.mxu0 %v640
        %946 = vmatpush.bf16.msra.mxu0 %v520
        %947 = vmatmul.bf16.gmra.mxu0 %v570
        %v948 = vpop.f32.mrf.mxu0
        %v949 = vadd.f32 %v347, %v948
        %v950 = vpop.f32.mrf.mxu0
        %v951 = vadd.f32 %v352, %v950
        %952 = vdwg.mxu0
        %953 = vmatpush.bf16.msra.mxu0 0
        %954 = vmatpush.bf16.msra.mxu0 0
        %955 = vmatpush.bf16.msra.mxu0 0
        %956 = vmatpush.bf16.msra.mxu0 0
        %957 = vmatpush.bf16.msra.mxu0 0
        %958 = vmatpush.bf16.msra.mxu0 0
        %959 = vmatpush.bf16.msra.mxu0 %v643
        %960 = vmatpush.bf16.msra.mxu0 %v521
        %961 = vmatmul.bf16.gmra.mxu0 %v570
        %v962 = vpop.f32.mrf.mxu0
        %v963 = vadd.f32 %v347, %v962
        %v964 = vpop.f32.mrf.mxu0
        %v965 = vadd.f32 %v352, %v964
        %966 = vdwg.mxu0
        %967 = vst [vmem:[%s288] sm:$0xff] %v655
        %968 = vst [vmem:[%s288 + $0x8] sm:$0xff] %v669
        %969 = vst [vmem:[%s288 + $0x10] sm:$0xff] %v683
        %970 = vst [vmem:[%s288 + $0x18] sm:$0xff] %v697
        %971 = vst [vmem:[%s288 + $0x20] sm:$0xff] %v711
        %972 = vst [vmem:[%s288 + $0x28] sm:$0xff] %v725
        %973 = vst [vmem:[%s288 + $0x30] sm:$0xff] %v739
        %974 = vst [vmem:[%s288 + $0x38] sm:$0xff] %v753
        %975 = vst [vmem:[%s288 + $0x40] sm:$0xff] %v767
        %976 = vst [vmem:[%s288 + $0x48] sm:$0xff] %v781
        %977 = vst [vmem:[%s288 + $0x50] sm:$0xff] %v795
        %978 = vst [vmem:[%s288 + $0x58] sm:$0xff] %v809
        %979 = vst [vmem:[%s288 + $0x60] sm:$0xff] %v823
        %980 = vst [vmem:[%s288 + $0x68] sm:$0xff] %v837
        %981 = vst [vmem:[%s288 + $0x70] sm:$0xff] %v851
        %982 = vst [vmem:[%s288 + $0x78] sm:$0xff] %v865
        %983 = vst [vmem:[%s288 + $0x80] sm:$0xff] %v879
        %984 = vst [vmem:[%s288 + $0x88] sm:$0xff] %v893
        %985 = vst [vmem:[%s288 + $0x90] sm:$0xff] %v907
        %986 = vst [vmem:[%s288 + $0x98] sm:$0xff] %v921
        %987 = vst [vmem:[%s288 + $0xa0] sm:$0xff] %v935
        %988 = vst [vmem:[%s288 + $0xa8] sm:$0xff] %v949
        %989 = vst [vmem:[%s288 + $0xb0] sm:$0xff] %v963
        %990 = vst [vmem:[%s288 + $0xb8] sm:$0xf] %v657
        %991 = vst [vmem:[%s288 + $0xc0] sm:$0xf] %v671
        %992 = vst [vmem:[%s288 + $0xc8] sm:$0xf] %v685
        %993 = vst [vmem:[%s288 + $0xd0] sm:$0xf] %v699
        %994 = vst [vmem:[%s288 + $0xd8] sm:$0xf] %v713
        %995 = vst [vmem:[%s288 + $0xe0] sm:$0xf] %v727
        %996 = vst [vmem:[%s288 + $0xe8] sm:$0xf] %v741
        %997 = vst [vmem:[%s288 + $0xf0] sm:$0xf] %v755
        %998 = vst [vmem:[%s288 + $0xf8] sm:$0xf] %v769
        %999 = vst [vmem:[%s288 + $0x100] sm:$0xf] %v783
        %1000 = vst [vmem:[%s288 + $0x108] sm:$0xf] %v797
        %1001 = vst [vmem:[%s288 + $0x110] sm:$0xf] %v811
        %1002 = vst [vmem:[%s288 + $0x118] sm:$0xf] %v825
        %1003 = vst [vmem:[%s288 + $0x120] sm:$0xf] %v839
        %1004 = vst [vmem:[%s288 + $0x128] sm:$0xf] %v853
        %1005 = vst [vmem:[%s288 + $0x130] sm:$0xf] %v867
        %1006 = vst [vmem:[%s288 + $0x138] sm:$0xf] %v881
        %1007 = vst [vmem:[%s288 + $0x140] sm:$0xf] %v895
        %1008 = vst [vmem:[%s288 + $0x148] sm:$0xf] %v909
        %1009 = vst [vmem:[%s288 + $0x150] sm:$0xf] %v923
        %1010 = vst [vmem:[%s288 + $0x158] sm:$0xf] %v937
        %1011 = vst [vmem:[%s288 + $0x160] sm:$0xf] %v951
        %1012 = vst [vmem:[%s288 + $0x168] sm:$0xf] %v965
        %s1013 = sand.u32 %s90, 1
        %s1014 = sand.u32 %s90, 1
        %s1015 = smul.addr %s1014, 368
        %s1016 = scalar_lea.vmem [#allocation3], %s1015
        // Predicated region
        $region59: #{wiki_autoencoder2_forward.16} parent=53 // pred_check
          %p1017 = pneg %p100
        $region60: #{wiki_autoencoder2_forward.16} parent=53 // pred_check_branch
          %1019 = sbr.rel (%p1017) target = $region62
        $region61: #{wiki_autoencoder2_forward.16} parent=53 // pred_region
          %s1020 = smul.u32 23, %s14
          %s1021 = smul.addr %s1020, 8
          %s1022 = scalar_lea.vmem %s3, %s1021
          // Predicated region
          $region63: #{wiki_autoencoder2_forward.16} parent=61 // pred_check
            _
          $region64: #{wiki_autoencoder2_forward.16} parent=61 // pred_check_branch
            %1024 = sbr.rel (0) target = $region66
          $region65: #{wiki_autoencoder2_forward.16} parent=61 // pred_region
            // Predicated region
            $region67: #{wiki_autoencoder2_forward.16} parent=65 // pred_check
              _
            $region68: #{wiki_autoencoder2_forward.16} parent=65 // pred_check_branch
              %1026 = sbr.rel (0) target = $region70
            $region69: #{wiki_autoencoder2_forward.16} parent=65 // pred_region
              loop: start=0, step=1, limit=1
              $region71: #{wiki_autoencoder2_forward.16} parent=69 // loop_pre_header
                _
              $region72: #{wiki_autoencoder2_forward.16} parent=69 // loop_header
                %s1028 = sphi 0, %s1032
                %p1029 = scmp.ge.s32.totalorder %s1028, 1
                %s1033 = sphi %s1016, %s1016
                %s1034 = sphi %s1022, %s1022
              $region73: #{wiki_autoencoder2_forward.16} parent=69 // loop_header_branch
                %1031 = sbr.rel (%p1029) target = $region77
              $region74: #{wiki_autoencoder2_forward.16} parent=69 // loop_body
                %v1035 = vld [vmem:[%s1033] sm:$0xff]
                %1036 = vst [vmem:[%s1034] sm:$0xff] %v1035
                %v1037 = vld [vmem:[%s1033 + $0x8] sm:$0xff]
                %1038 = vst [vmem:[%s1034 + $0x8] sm:$0xff] %v1037
                %v1039 = vld [vmem:[%s1033 + $0x10] sm:$0xff]
                %1040 = vst [vmem:[%s1034 + $0x10] sm:$0xff] %v1039
                %v1041 = vld [vmem:[%s1033 + $0x18] sm:$0xff]
                %1042 = vst [vmem:[%s1034 + $0x18] sm:$0xff] %v1041
                %v1043 = vld [vmem:[%s1033 + $0x20] sm:$0xff]
                %1044 = vst [vmem:[%s1034 + $0x20] sm:$0xff] %v1043
                %v1045 = vld [vmem:[%s1033 + $0x28] sm:$0xff]
                %1046 = vst [vmem:[%s1034 + $0x28] sm:$0xff] %v1045
                %v1047 = vld [vmem:[%s1033 + $0x30] sm:$0xff]
                %1048 = vst [vmem:[%s1034 + $0x30] sm:$0xff] %v1047
                %v1049 = vld [vmem:[%s1033 + $0x38] sm:$0xff]
                %1050 = vst [vmem:[%s1034 + $0x38] sm:$0xff] %v1049
                %v1051 = vld [vmem:[%s1033 + $0x40] sm:$0xff]
                %1052 = vst [vmem:[%s1034 + $0x40] sm:$0xff] %v1051
                %v1053 = vld [vmem:[%s1033 + $0x48] sm:$0xff]
                %1054 = vst [vmem:[%s1034 + $0x48] sm:$0xff] %v1053
                %v1055 = vld [vmem:[%s1033 + $0x50] sm:$0xff]
                %1056 = vst [vmem:[%s1034 + $0x50] sm:$0xff] %v1055
                %v1057 = vld [vmem:[%s1033 + $0x58] sm:$0xff]
                %1058 = vst [vmem:[%s1034 + $0x58] sm:$0xff] %v1057
                %v1059 = vld [vmem:[%s1033 + $0x60] sm:$0xff]
                %1060 = vst [vmem:[%s1034 + $0x60] sm:$0xff] %v1059
                %v1061 = vld [vmem:[%s1033 + $0x68] sm:$0xff]
                %1062 = vst [vmem:[%s1034 + $0x68] sm:$0xff] %v1061
                %v1063 = vld [vmem:[%s1033 + $0x70] sm:$0xff]
                %1064 = vst [vmem:[%s1034 + $0x70] sm:$0xff] %v1063
                %v1065 = vld [vmem:[%s1033 + $0x78] sm:$0xff]
                %1066 = vst [vmem:[%s1034 + $0x78] sm:$0xff] %v1065
                %v1067 = vld [vmem:[%s1033 + $0x80] sm:$0xff]
                %1068 = vst [vmem:[%s1034 + $0x80] sm:$0xff] %v1067
                %v1069 = vld [vmem:[%s1033 + $0x88] sm:$0xff]
                %1070 = vst [vmem:[%s1034 + $0x88] sm:$0xff] %v1069
                %v1071 = vld [vmem:[%s1033 + $0x90] sm:$0xff]
                %1072 = vst [vmem:[%s1034 + $0x90] sm:$0xff] %v1071
                %v1073 = vld [vmem:[%s1033 + $0x98] sm:$0xff]
                %1074 = vst [vmem:[%s1034 + $0x98] sm:$0xff] %v1073
                %v1075 = vld [vmem:[%s1033 + $0xa0] sm:$0xff]
                %1076 = vst [vmem:[%s1034 + $0xa0] sm:$0xff] %v1075
                %v1077 = vld [vmem:[%s1033 + $0xa8] sm:$0xff]
                %1078 = vst [vmem:[%s1034 + $0xa8] sm:$0xff] %v1077
                %v1079 = vld [vmem:[%s1033 + $0xb0] sm:$0xff]
                %1080 = vst [vmem:[%s1034 + $0xb0] sm:$0xff] %v1079
                %v1081 = vld [vmem:[%s1033 + $0xb8] sm:$0xff]
                %1082 = vst [vmem:[%s1034 + $0x170] sm:$0xff] %v1081
                %v1083 = vld [vmem:[%s1033 + $0xc0] sm:$0xff]
                %1084 = vst [vmem:[%s1034 + $0x178] sm:$0xff] %v1083
                %v1085 = vld [vmem:[%s1033 + $0xc8] sm:$0xff]
                %1086 = vst [vmem:[%s1034 + $0x180] sm:$0xff] %v1085
                %v1087 = vld [vmem:[%s1033 + $0xd0] sm:$0xff]
                %1088 = vst [vmem:[%s1034 + $0x188] sm:$0xff] %v1087
                %v1089 = vld [vmem:[%s1033 + $0xd8] sm:$0xff]
                %1090 = vst [vmem:[%s1034 + $0x190] sm:$0xff] %v1089
                %v1091 = vld [vmem:[%s1033 + $0xe0] sm:$0xff]
                %1092 = vst [vmem:[%s1034 + $0x198] sm:$0xff] %v1091
                %v1093 = vld [vmem:[%s1033 + $0xe8] sm:$0xff]
                %1094 = vst [vmem:[%s1034 + $0x1a0] sm:$0xff] %v1093
                %v1095 = vld [vmem:[%s1033 + $0xf0] sm:$0xff]
                %1096 = vst [vmem:[%s1034 + $0x1a8] sm:$0xff] %v1095
                %v1097 = vld [vmem:[%s1033 + $0xf8] sm:$0xff]
                %1098 = vst [vmem:[%s1034 + $0x1b0] sm:$0xff] %v1097
                %v1099 = vld [vmem:[%s1033 + $0x100] sm:$0xff]
                %1100 = vst [vmem:[%s1034 + $0x1b8] sm:$0xff] %v1099
                %v1101 = vld [vmem:[%s1033 + $0x108] sm:$0xff]
                %1102 = vst [vmem:[%s1034 + $0x1c0] sm:$0xff] %v1101
                %v1103 = vld [vmem:[%s1033 + $0x110] sm:$0xff]
                %1104 = vst [vmem:[%s1034 + $0x1c8] sm:$0xff] %v1103
                %v1105 = vld [vmem:[%s1033 + $0x118] sm:$0xff]
                %1106 = vst [vmem:[%s1034 + $0x1d0] sm:$0xff] %v1105
                %v1107 = vld [vmem:[%s1033 + $0x120] sm:$0xff]
                %1108 = vst [vmem:[%s1034 + $0x1d8] sm:$0xff] %v1107
                %v1109 = vld [vmem:[%s1033 + $0x128] sm:$0xff]
                %1110 = vst [vmem:[%s1034 + $0x1e0] sm:$0xff] %v1109
                %v1111 = vld [vmem:[%s1033 + $0x130] sm:$0xff]
                %1112 = vst [vmem:[%s1034 + $0x1e8] sm:$0xff] %v1111
                %v1113 = vld [vmem:[%s1033 + $0x138] sm:$0xff]
                %1114 = vst [vmem:[%s1034 + $0x1f0] sm:$0xff] %v1113
                %v1115 = vld [vmem:[%s1033 + $0x140] sm:$0xff]
                %1116 = vst [vmem:[%s1034 + $0x1f8] sm:$0xff] %v1115
                %v1117 = vld [vmem:[%s1033 + $0x148] sm:$0xff]
                %1118 = vst [vmem:[%s1034 + $0x200] sm:$0xff] %v1117
                %v1119 = vld [vmem:[%s1033 + $0x150] sm:$0xff]
                %1120 = vst [vmem:[%s1034 + $0x208] sm:$0xff] %v1119
                %v1121 = vld [vmem:[%s1033 + $0x158] sm:$0xff]
                %1122 = vst [vmem:[%s1034 + $0x210] sm:$0xff] %v1121
                %v1123 = vld [vmem:[%s1033 + $0x160] sm:$0xff]
                %1124 = vst [vmem:[%s1034 + $0x218] sm:$0xff] %v1123
                %v1125 = vld [vmem:[%s1033 + $0x168] sm:$0xff]
                %1126 = vst [vmem:[%s1034 + $0x220] sm:$0xff] %v1125
              $region75: #{wiki_autoencoder2_forward.16} parent=69 // loop_footer
                %s1032 = sadd.s32 1, %s1028
              $region76: #{wiki_autoencoder2_forward.16} parent=69 // loop_footer_branch
                %1027 = sbr.rel target = $region72
              $region77: #{wiki_autoencoder2_forward.16} parent=69 // loop_exit
                _
            $region70: #{wiki_autoencoder2_forward.16} parent=65 // pred_fallthru
              _
            // Predicated region
            $region78: #{wiki_autoencoder2_forward.16} parent=65 // pred_check
              _
            $region79: #{wiki_autoencoder2_forward.16} parent=65 // pred_check_branch
              %1128 = sbr.rel target = $region81
            $region80: #{wiki_autoencoder2_forward.16} parent=65 // pred_region
              _
            $region81: #{wiki_autoencoder2_forward.16} parent=65 // pred_fallthru
              _
          $region66: #{wiki_autoencoder2_forward.16} parent=61 // pred_fallthru
            _
          %1129 = vnop
        $region62: #{wiki_autoencoder2_forward.16} parent=53 // pred_fallthru
          _
      $region54: #{wiki_autoencoder2_forward.16} parent=5 // pred_fallthru
        _
      %p1130 = scmp.le.s32.totalorder 2, %s9
      // Predicated region
      $region82: #{wiki_autoencoder2_forward.16} parent=5 // pred_check
        %p1131 = pneg %p1130
      $region83: #{wiki_autoencoder2_forward.16} parent=5 // pred_check_branch
        %1133 = sbr.rel (%p1131) target = $region85
      $region84: #{wiki_autoencoder2_forward.16} parent=5 // pred_region
        %s1134 = ssub.s32 %s9, 2
        // Predicated region
        $region86: #{wiki_autoencoder2_forward.16} parent=84 // pred_check
          %p1135 = pneg %p106
        $region87: #{wiki_autoencoder2_forward.16} parent=84 // pred_check_branch
          %1137 = sbr.rel (%p1135) target = $region89
        $region88: #{wiki_autoencoder2_forward.16} parent=84 // pred_region
          %s1138 = sand.u32 %s91, 1
          %s1139 = sand.u32 %s91, 1
          %s1140 = smul.addr %s1139, 368
          %s1141 = scalar_lea.vmem [#allocation3], %s1140
        $region89: #{wiki_autoencoder2_forward.16} parent=84 // pred_fallthru
          _
      $region85: #{wiki_autoencoder2_forward.16} parent=5 // pred_fallthru
        _
    $region6: #{wiki_autoencoder2_forward.16} parent=1 // loop_footer
      %s13 = sadd.s32 1, %s9
    $region7: #{wiki_autoencoder2_forward.16} parent=1 // loop_footer_branch
      %8 = sbr.rel target = $region3
    $region8: #{wiki_autoencoder2_forward.16} parent=1 // loop_exit
      _

// kernel: wiki_autoencoder2_forward.17
$region0: #{wiki_autoencoder2_forward.17}
  #allocation0 [shape = 'u32[]', space=smem, size = 0x4, offset = 0x4, fixed_abs, tag = 'smem constant byte address 0x4 - core index']
  #allocation1 [shape = 'u32[72,128]{1,0:T(1,128)}', space=vmem, size = 0x9000, scoped, tag = 'internal scratch']
  %s0 = inlined_call_operand.vmem [shape: f32[6,108,108], index: 0, kind: input, shape index: {}]
  %s1 = inlined_call_operand.vmem [shape: f32[416,108], index: 1, kind: input, shape index: {}]
  %s2 = inlined_call_operand.vmem [shape: f32[108,416], index: 2, kind: input, shape index: {}]
  %s3 = inlined_call_operand.vmem [shape: f32[2496,416], index: 3, kind: output, shape index: {}]
  %s4 = sld [smem:[#allocation0]]
  $region45: #{wiki_autoencoder2_forward.17} parent=0
    _
  %s6 = ssub.s32 1, %s4
  %s7 = scalar_select 0, %s6, %s4
  loop: start=0, step=1, limit=4
  $region2: #{wiki_autoencoder2_forward.17} parent=0 // loop_pre_header
    _
  $region3: #{wiki_autoencoder2_forward.17} parent=0 // loop_header
    %s9 = sphi 0, %s13
    %p10 = scmp.ge.s32.totalorder %s9, 4
    %s19 = sphi 0, %s21
    %s22 = sphi 0, %s19
    %s23 = sphi 0, %s22
    %s39 = sphi 0, %s23
    %s43 = sphi 0, %s43
    %s45 = sphi 0, %s43
    %s46 = sphi 0, %s45
    %s60 = sphi 0, %s46
    %s64 = sphi 0, %s64
    %s66 = sphi 0, %s64
    %s67 = sphi 0, %s66
    %s81 = sphi 0, %s67
    %s87 = sphi 0, %s89
    %s90 = sphi 0, %s87
    %s91 = sphi 0, %s90
    %s107 = sphi 0, %s91
  $region4: #{wiki_autoencoder2_forward.17} parent=0 // loop_header_branch
    %12 = sbr.rel (%p10) target = $region8
  $region5: #{wiki_autoencoder2_forward.17} parent=0 // loop_body
    %s14 = ssub.s32 %s9, 1
    %s15 = ssub.s32 %s9, 2
    %s16 = sadd.s32 %s9, 1
    %s17 = ssub.s32 %s9, %s16
    %p18 = scmp.eq.s32.totalorder %s17, 0
    %s20 = sadd.s32 %s19, 1
    %s21 = scalar_select %p18, %s19, %s20
    %p24 = pneg %p18
    %p25 = scmp.eq.s32.totalorder %s9, 1
    %p26 = por %p24, %p25
    %p27 = scmp.ne.s32.totalorder %s19, %s22
    %p28 = scmp.eq.s32.totalorder %s9, 0
    %p29 = por %p27, %p28
    %p30 = scmp.ne.s32.totalorder %s19, %s22
    %p31 = scmp.eq.s32.totalorder %s14, 1
    %p32 = por %p30, %p31
    %p33 = scmp.ne.s32.totalorder %s22, %s23
    %p34 = scmp.eq.s32.totalorder %s14, 0
    %p35 = por %p33, %p34
    %p36 = scmp.ne.s32.totalorder %s22, %s23
    %p37 = scmp.eq.s32.totalorder %s15, 1
    %p38 = por %p36, %p37
    %p40 = scmp.ne.s32.totalorder %s23, %s39
    %p41 = scmp.eq.s32.totalorder %s15, 0
    %p42 = por %p40, %p41
    %s44 = sadd.s32 %s43, 1
    %p47 = scmp.eq.s32.totalorder %s9, 1
    %p48 = scmp.ne.s32.totalorder %s43, %s45
    %p49 = scmp.eq.s32.totalorder %s9, 0
    %p50 = por %p48, %p49
    %p51 = scmp.ne.s32.totalorder %s43, %s45
    %p52 = scmp.eq.s32.totalorder %s14, 1
    %p53 = por %p51, %p52
    %p54 = scmp.ne.s32.totalorder %s45, %s46
    %p55 = scmp.eq.s32.totalorder %s14, 0
    %p56 = por %p54, %p55
    %p57 = scmp.ne.s32.totalorder %s45, %s46
    %p58 = scmp.eq.s32.totalorder %s15, 1
    %p59 = por %p57, %p58
    %p61 = scmp.ne.s32.totalorder %s46, %s60
    %p62 = scmp.eq.s32.totalorder %s15, 0
    %p63 = por %p61, %p62
    %s65 = sadd.s32 %s64, 1
    %p68 = scmp.eq.s32.totalorder %s9, 1
    %p69 = scmp.ne.s32.totalorder %s64, %s66
    %p70 = scmp.eq.s32.totalorder %s9, 0
    %p71 = por %p69, %p70
    %p72 = scmp.ne.s32.totalorder %s64, %s66
    %p73 = scmp.eq.s32.totalorder %s14, 1
    %p74 = por %p72, %p73
    %p75 = scmp.ne.s32.totalorder %s66, %s67
    %p76 = scmp.eq.s32.totalorder %s14, 0
    %p77 = por %p75, %p76
    %p78 = scmp.ne.s32.totalorder %s66, %s67
    %p79 = scmp.eq.s32.totalorder %s15, 1
    %p80 = por %p78, %p79
    %p82 = scmp.ne.s32.totalorder %s67, %s81
    %p83 = scmp.eq.s32.totalorder %s15, 0
    %p84 = por %p82, %p83
    %s85 = ssub.s32 %s9, %s16
    %p86 = scmp.eq.s32.totalorder %s85, 0
    %s88 = sadd.s32 %s87, 1
    %s89 = scalar_select %p86, %s87, %s88
    %p92 = pneg %p86
    %p93 = scmp.eq.s32.totalorder %s9, 1
    %p94 = por %p92, %p93
    %p95 = scmp.ne.s32.totalorder %s87, %s90
    %p96 = scmp.eq.s32.totalorder %s9, 0
    %p97 = por %p95, %p96
    %p98 = scmp.ne.s32.totalorder %s87, %s90
    %p99 = scmp.eq.s32.totalorder %s14, 1
    %p100 = por %p98, %p99
    %p101 = scmp.ne.s32.totalorder %s90, %s91
    %p102 = scmp.eq.s32.totalorder %s14, 0
    %p103 = por %p101, %p102
    %p104 = scmp.ne.s32.totalorder %s90, %s91
    %p105 = scmp.eq.s32.totalorder %s15, 1
    %p106 = por %p104, %p105
    %p108 = scmp.ne.s32.totalorder %s91, %s107
    %p109 = scmp.eq.s32.totalorder %s15, 0
    %p110 = por %p108, %p109
    %p111 = scmp.le.s32.totalorder 1, %s9
    %p112 = scmp.lt.s32.totalorder %s9, 3
    %p113 = pnand %p111, %p112
    %p114 = pneg %p113
    // Predicated region
    $region9: #{wiki_autoencoder2_forward.17} parent=5 // pred_check
      _
    $region10: #{wiki_autoencoder2_forward.17} parent=5 // pred_check_branch
      %116 = sbr.rel (%p113) target = $region12
    $region11: #{wiki_autoencoder2_forward.17} parent=5 // pred_region
      %s117 = ssub.s32 %s9, 1
      // Predicated region
      $region13: #{wiki_autoencoder2_forward.17} parent=11 // pred_check
        %p118 = pneg %p56
      $region14: #{wiki_autoencoder2_forward.17} parent=11 // pred_check_branch
        %120 = sbr.rel (%p118) target = $region16
      $region15: #{wiki_autoencoder2_forward.17} parent=11 // pred_region
        _
      $region16: #{wiki_autoencoder2_forward.17} parent=11 // pred_fallthru
        _
      // Predicated region
      $region17: #{wiki_autoencoder2_forward.17} parent=11 // pred_check
        %p121 = pneg %p77
      $region18: #{wiki_autoencoder2_forward.17} parent=11 // pred_check_branch
        %123 = sbr.rel (%p121) target = $region20
      $region19: #{wiki_autoencoder2_forward.17} parent=11 // pred_region
        _
      $region20: #{wiki_autoencoder2_forward.17} parent=11 // pred_fallthru
        _
    $region12: #{wiki_autoencoder2_forward.17} parent=5 // pred_fallthru
      _
    %p124 = scmp.lt.s32.totalorder %s9, 2
    // Predicated region
    $region21: #{wiki_autoencoder2_forward.17} parent=5 // pred_check
      %p125 = pneg %p124
    $region22: #{wiki_autoencoder2_forward.17} parent=5 // pred_check_branch
      %127 = sbr.rel (%p125) target = $region24
    $region23: #{wiki_autoencoder2_forward.17} parent=5 // pred_region
      // Predicated region
      $region25: #{wiki_autoencoder2_forward.17} parent=23 // pred_check
        %p128 = pneg %p29
      $region26: #{wiki_autoencoder2_forward.17} parent=23 // pred_check_branch
        %130 = sbr.rel (%p128) target = $region28
      $region27: #{wiki_autoencoder2_forward.17} parent=23 // pred_region
        %s131 = smul.u32 3, %s9
        %p132 = scmp.lt.s32.totalorder %s131, 5
        %s133 = scalar_select %p132, %s131, 5
        %s134 = smul.addr %s133, 14
        %s135 = smul.addr %s134, 8
        %s136 = scalar_lea.vmem %s0, %s135
        %s137 = smul.u32 3, %s9
      $region28: #{wiki_autoencoder2_forward.17} parent=23 // pred_fallthru
        _
    $region24: #{wiki_autoencoder2_forward.17} parent=5 // pred_fallthru
      _
    %p138 = scmp.le.s32.totalorder 1, %s9
    %p139 = scmp.lt.s32.totalorder %s9, 3
    %p140 = pnand %p138, %p139
    %p141 = pneg %p140
    // Predicated region
    $region29: #{wiki_autoencoder2_forward.17} parent=5 // pred_check
      _
    $region30: #{wiki_autoencoder2_forward.17} parent=5 // pred_check_branch
      %143 = sbr.rel (%p140) target = $region32
    $region31: #{wiki_autoencoder2_forward.17} parent=5 // pred_region
      %s144 = ssub.s32 %s9, 1
      %s145 = smul.u32 3, %s14
      %p146 = scmp.lt.s32.totalorder %s145, 5
      %s147 = scalar_select %p146, %s145, 5
      %s148 = smul.addr %s147, 14
      %s149 = smul.addr %s148, 8
      %s150 = scalar_lea.vmem %s0, %s149
      %p151 = pneg %p35
      %p152 = pneg %p32
      %p153 = pneg %p56
      %p154 = pneg %p53
      %p155 = pneg %p77
      %p156 = pneg %p74
      %p157 = pneg %p103
      %p158 = pneg %p100
      %s159 = smul.u32 156, %s14
      %p160 = scmp.lt.s32.totalorder %s159, 311
      %s161 = scalar_select %p160, %s159, 311
      %s162 = smul.addr %s161, 4
      %s163 = smul.addr %s162, 8
      %s164 = scalar_lea.vmem %s3, %s163
      %s165 = smul.u32 3, %s14
      %p166 = scmp.lt.s32.totalorder %s165, 5
      %s167 = scalar_select %p166, %s165, 5
      %s168 = smul.addr %s167, 14
      %s169 = smul.addr %s168, 8
      %s170 = scalar_lea.vmem %s0, %s169
      %s171 = smul.u32 3, %s14
      %s172 = smul.u32 156, %s14
      %p173 = scmp.lt.s32.totalorder %s172, 311
      %s174 = scalar_select %p173, %s172, 311
      %s175 = smul.addr %s174, 4
      %s176 = smul.addr %s175, 8
      %s177 = scalar_lea.vmem %s3, %s176
      %s178 = smul.u32 156, %s14
      %v179 = vld [vmem:[%s1] sm:$0xff]
      %v180 = vld [vmem:[%s1 + $0x8] sm:$0xff]
      %v181 = vld [vmem:[%s1 + $0x10] sm:$0xff]
      %v182 = vld [vmem:[%s1 + $0x18] sm:$0xff]
      %v183 = vld [vmem:[%s1 + $0x20] sm:$0xff]
      %v184 = vld [vmem:[%s1 + $0x28] sm:$0xff]
      %v185 = vld [vmem:[%s1 + $0x30] sm:$0xff]
      %v186 = vld [vmem:[%s1 + $0x38] sm:$0xff]
      %v187 = vld [vmem:[%s1 + $0x40] sm:$0xff]
      %v188 = vld [vmem:[%s1 + $0x48] sm:$0xff]
      %v189 = vld [vmem:[%s1 + $0x50] sm:$0xff]
      %v190 = vld [vmem:[%s1 + $0x58] sm:$0xff]
      %v191 = vld [vmem:[%s1 + $0x60] sm:$0xff]
      %v192 = vld [vmem:[%s1 + $0x68] sm:$0xff]
      %v193 = vld [vmem:[%s1 + $0x70] sm:$0xff]
      %v194 = vld [vmem:[%s1 + $0x78] sm:$0xff]
      %v195 = vld [vmem:[%s1 + $0x80] sm:$0xff]
      %v196 = vld [vmem:[%s1 + $0x88] sm:$0xff]
      %v197 = vld [vmem:[%s1 + $0x90] sm:$0xff]
      %v198 = vld [vmem:[%s1 + $0x98] sm:$0xff]
      %v199 = vld [vmem:[%s1 + $0xa0] sm:$0xff]
      %v200 = vld [vmem:[%s1 + $0xa8] sm:$0xff]
      %v201 = vld [vmem:[%s1 + $0xb0] sm:$0xff]
      %v202 = vld [vmem:[%s1 + $0xb8] sm:$0xff]
      %v203 = vld [vmem:[%s1 + $0xc0] sm:$0xff]
      %v204 = vld [vmem:[%s1 + $0xc8] sm:$0xff]
      %v205 = vld [vmem:[%s1 + $0xd0] sm:$0xff]
      %v206 = vld [vmem:[%s1 + $0xd8] sm:$0xff]
      %v207 = vld [vmem:[%s1 + $0xe0] sm:$0xff]
      %v208 = vld [vmem:[%s1 + $0xe8] sm:$0xff]
      %v209 = vld [vmem:[%s1 + $0xf0] sm:$0xff]
      %v210 = vld [vmem:[%s1 + $0xf8] sm:$0xff]
      %v211 = vld [vmem:[%s1 + $0x100] sm:$0xff]
      %v212 = vld [vmem:[%s1 + $0x108] sm:$0xff]
      %v213 = vld [vmem:[%s1 + $0x110] sm:$0xff]
      %v214 = vld [vmem:[%s1 + $0x118] sm:$0xff]
      %v215 = vld [vmem:[%s1 + $0x120] sm:$0xff]
      %v216 = vld [vmem:[%s1 + $0x128] sm:$0xff]
      %v217 = vld [vmem:[%s1 + $0x130] sm:$0xff]
      %v218 = vld [vmem:[%s1 + $0x138] sm:$0xff]
      %v219 = vld [vmem:[%s1 + $0x140] sm:$0xff]
      %v220 = vld [vmem:[%s1 + $0x148] sm:$0xff]
      %v221 = vld [vmem:[%s1 + $0x150] sm:$0xff]
      %v222 = vld [vmem:[%s1 + $0x158] sm:$0xff]
      %v223 = vld [vmem:[%s1 + $0x160] sm:$0xff]
      %v224 = vld [vmem:[%s1 + $0x168] sm:$0xff]
      %v225 = vld [vmem:[%s1 + $0x170] sm:$0xff]
      %v226 = vld [vmem:[%s1 + $0x178] sm:$0xff]
      %v227 = vld [vmem:[%s1 + $0x180] sm:$0xff]
      %v228 = vld [vmem:[%s1 + $0x188] sm:$0xff]
      %v229 = vld [vmem:[%s1 + $0x190] sm:$0xff]
      %v230 = vld [vmem:[%s1 + $0x198] sm:$0xff]
      %v231 = vld [vmem:[%s170] sm:$0xff]
      %v232 = vld [vmem:[%s170 + $0x8] sm:$0xff]
      %v233 = vld [vmem:[%s170 + $0x10] sm:$0xff]
      %v234 = vld [vmem:[%s170 + $0x18] sm:$0xff]
      %v235 = vld [vmem:[%s170 + $0x20] sm:$0xff]
      %v236 = vld [vmem:[%s170 + $0x28] sm:$0xff]
      %v237 = vld [vmem:[%s170 + $0x30] sm:$0xff]
      %v238 = vld [vmem:[%s170 + $0x38] sm:$0xff]
      %v239 = vld [vmem:[%s170 + $0x40] sm:$0xff]
      %v240 = vld [vmem:[%s170 + $0x48] sm:$0xff]
      %v241 = vld [vmem:[%s170 + $0x50] sm:$0xff]
      %v242 = vld [vmem:[%s170 + $0x58] sm:$0xff]
      %v243 = vld [vmem:[%s170 + $0x60] sm:$0xff]
      %v244 = vld [vmem:[%s170 + $0x68] sm:$0xf]
      %vm245 = vcmask 883712
      %v247 = vsel %vm245, %v179, 0
      %v250 = vsel %vm245, %v180, 0
      %v253 = vsel %vm245, %v181, 0
      %v256 = vsel %vm245, %v182, 0
      %v259 = vsel %vm245, %v183, 0
      %v262 = vsel %vm245, %v184, 0
      %v265 = vsel %vm245, %v185, 0
      %v268 = vsel %vm245, %v186, 0
      %v271 = vsel %vm245, %v187, 0
      %v274 = vsel %vm245, %v188, 0
      %v277 = vsel %vm245, %v189, 0
      %v280 = vsel %vm245, %v190, 0
      %v283 = vsel %vm245, %v191, 0
      %v286 = vsel %vm245, %v192, 0
      %v289 = vsel %vm245, %v193, 0
      %v292 = vsel %vm245, %v194, 0
      %v295 = vsel %vm245, %v195, 0
      %v298 = vsel %vm245, %v196, 0
      %v301 = vsel %vm245, %v197, 0
      %v304 = vsel %vm245, %v198, 0
      %v307 = vsel %vm245, %v199, 0
      %v310 = vsel %vm245, %v200, 0
      %v313 = vsel %vm245, %v201, 0
      %v316 = vsel %vm245, %v202, 0
      %v319 = vsel %vm245, %v203, 0
      %v322 = vsel %vm245, %v204, 0
      %v325 = vsel %vm245, %v205, 0
      %v328 = vsel %vm245, %v206, 0
      %v331 = vsel %vm245, %v207, 0
      %v334 = vsel %vm245, %v208, 0
      %v337 = vsel %vm245, %v209, 0
      %v340 = vsel %vm245, %v210, 0
      %v343 = vsel %vm245, %v211, 0
      %v346 = vsel %vm245, %v212, 0
      %v349 = vsel %vm245, %v213, 0
      %v352 = vsel %vm245, %v214, 0
      %v355 = vsel %vm245, %v215, 0
      %v358 = vsel %vm245, %v216, 0
      %v361 = vsel %vm245, %v217, 0
      %v364 = vsel %vm245, %v218, 0
      %v367 = vsel %vm245, %v219, 0
      %v370 = vsel %vm245, %v220, 0
      %v373 = vsel %vm245, %v221, 0
      %v376 = vsel %vm245, %v222, 0
      %v379 = vsel %vm245, %v223, 0
      %v382 = vsel %vm245, %v224, 0
      %v385 = vsel %vm245, %v225, 0
      %v388 = vsel %vm245, %v226, 0
      %v391 = vsel %vm245, %v227, 0
      %v394 = vsel %vm245, %v228, 0
      %v397 = vsel %vm245, %v229, 0
      %v400 = vsel %vm245, %v230, 0
      %vm402 = vcmask 1043456
      %v404 = vsel %vm402, %v244, 0
      %406 = vmatpush.msra.mxu0 0.0
      %407 = vmatpush.msra.mxu0 0.0
      %408 = vmatpush.msra.mxu0 %v404
      %409 = vmatpush.msra.mxu0 %v243
      %410 = vmatpush.msra.mxu0 %v242
      %411 = vmatpush.msra.mxu0 %v241
      %412 = vmatpush.msra.mxu0 %v240
      %413 = vmatpush.msra.mxu0 %v239
      %414 = vmatpush.msra.mxu0 %v238
      %415 = vmatpush.msra.mxu0 %v237
      %416 = vmatpush.msra.mxu0 %v236
      %417 = vmatpush.msra.mxu0 %v235
      %418 = vmatpush.msra.mxu0 %v234
      %419 = vmatpush.msra.mxu0 %v233
      %420 = vmatpush.msra.mxu0 %v232
      %421 = vmatpush.msra.mxu0 %v231
      %422 = vmatmul.f32.gmra.mxu0 %v247
      %v423 = vpop.f32.mrf.mxu0
      %v424 = vadd.f32 0.0, %v423
      %425 = vmatmul.f32.gmra.mxu0 %v250
      %v426 = vpop.f32.mrf.mxu0
      %v427 = vadd.f32 0.0, %v426
      %428 = vmatmul.f32.gmra.mxu0 %v253
      %v429 = vpop.f32.mrf.mxu0
      %v430 = vadd.f32 0.0, %v429
      %431 = vmatmul.f32.gmra.mxu0 %v256
      %v432 = vpop.f32.mrf.mxu0
      %v433 = vadd.f32 0.0, %v432
      %434 = vmatmul.f32.gmra.mxu0 %v259
      %v435 = vpop.f32.mrf.mxu0
      %v436 = vadd.f32 0.0, %v435
      %437 = vmatmul.f32.gmra.mxu0 %v262
      %v438 = vpop.f32.mrf.mxu0
      %v439 = vadd.f32 0.0, %v438
      %440 = vmatmul.f32.gmra.mxu0 %v265
      %v441 = vpop.f32.mrf.mxu0
      %v442 = vadd.f32 0.0, %v441
      %443 = vmatmul.f32.gmra.mxu0 %v268
      %v444 = vpop.f32.mrf.mxu0
      %v445 = vadd.f32 0.0, %v444
      %446 = vmatmul.f32.gmra.mxu0 %v271
      %v447 = vpop.f32.mrf.mxu0
      %v448 = vadd.f32 0.0, %v447
      %449 = vmatmul.f32.gmra.mxu0 %v274
      %v450 = vpop.f32.mrf.mxu0
      %v451 = vadd.f32 0.0, %v450
      %452 = vmatmul.f32.gmra.mxu0 %v277
      %v453 = vpop.f32.mrf.mxu0
      %v454 = vadd.f32 0.0, %v453
      %455 = vmatmul.f32.gmra.mxu0 %v280
      %v456 = vpop.f32.mrf.mxu0
      %v457 = vadd.f32 0.0, %v456
      %458 = vmatmul.f32.gmra.mxu0 %v283
      %v459 = vpop.f32.mrf.mxu0
      %v460 = vadd.f32 0.0, %v459
      %461 = vmatmul.f32.gmra.mxu0 %v286
      %v462 = vpop.f32.mrf.mxu0
      %v463 = vadd.f32 0.0, %v462
      %464 = vmatmul.f32.gmra.mxu0 %v289
      %v465 = vpop.f32.mrf.mxu0
      %v466 = vadd.f32 0.0, %v465
      %467 = vmatmul.f32.gmra.mxu0 %v292
      %v468 = vpop.f32.mrf.mxu0
      %v469 = vadd.f32 0.0, %v468
      %470 = vmatmul.f32.gmra.mxu0 %v295
      %v471 = vpop.f32.mrf.mxu0
      %v472 = vadd.f32 0.0, %v471
      %473 = vmatmul.f32.gmra.mxu0 %v298
      %v474 = vpop.f32.mrf.mxu0
      %v475 = vadd.f32 0.0, %v474
      %476 = vmatmul.f32.gmra.mxu0 %v301
      %v477 = vpop.f32.mrf.mxu0
      %v478 = vadd.f32 0.0, %v477
      %479 = vmatmul.f32.gmra.mxu0 %v304
      %v480 = vpop.f32.mrf.mxu0
      %v481 = vadd.f32 0.0, %v480
      %482 = vmatmul.f32.gmra.mxu0 %v307
      %v483 = vpop.f32.mrf.mxu0
      %v484 = vadd.f32 0.0, %v483
      %485 = vmatmul.f32.gmra.mxu0 %v310
      %v486 = vpop.f32.mrf.mxu0
      %v487 = vadd.f32 0.0, %v486
      %488 = vmatmul.f32.gmra.mxu0 %v313
      %v489 = vpop.f32.mrf.mxu0
      %v490 = vadd.f32 0.0, %v489
      %491 = vmatmul.f32.gmra.mxu0 %v316
      %v492 = vpop.f32.mrf.mxu0
      %v493 = vadd.f32 0.0, %v492
      %494 = vmatmul.f32.gmra.mxu0 %v319
      %v495 = vpop.f32.mrf.mxu0
      %v496 = vadd.f32 0.0, %v495
      %497 = vmatmul.f32.gmra.mxu0 %v322
      %v498 = vpop.f32.mrf.mxu0
      %v499 = vadd.f32 0.0, %v498
      %500 = vmatmul.f32.gmra.mxu0 %v325
      %v501 = vpop.f32.mrf.mxu0
      %v502 = vadd.f32 0.0, %v501
      %503 = vmatmul.f32.gmra.mxu0 %v328
      %v504 = vpop.f32.mrf.mxu0
      %v505 = vadd.f32 0.0, %v504
      %506 = vmatmul.f32.gmra.mxu0 %v331
      %v507 = vpop.f32.mrf.mxu0
      %v508 = vadd.f32 0.0, %v507
      %509 = vmatmul.f32.gmra.mxu0 %v334
      %v510 = vpop.f32.mrf.mxu0
      %v511 = vadd.f32 0.0, %v510
      %512 = vmatmul.f32.gmra.mxu0 %v337
      %v513 = vpop.f32.mrf.mxu0
      %v514 = vadd.f32 0.0, %v513
      %515 = vmatmul.f32.gmra.mxu0 %v340
      %v516 = vpop.f32.mrf.mxu0
      %v517 = vadd.f32 0.0, %v516
      %518 = vmatmul.f32.gmra.mxu0 %v343
      %v519 = vpop.f32.mrf.mxu0
      %v520 = vadd.f32 0.0, %v519
      %521 = vmatmul.f32.gmra.mxu0 %v346
      %v522 = vpop.f32.mrf.mxu0
      %v523 = vadd.f32 0.0, %v522
      %524 = vmatmul.f32.gmra.mxu0 %v349
      %v525 = vpop.f32.mrf.mxu0
      %v526 = vadd.f32 0.0, %v525
      %527 = vmatmul.f32.gmra.mxu0 %v352
      %v528 = vpop.f32.mrf.mxu0
      %v529 = vadd.f32 0.0, %v528
      %530 = vmatmul.f32.gmra.mxu0 %v355
      %v531 = vpop.f32.mrf.mxu0
      %v532 = vadd.f32 0.0, %v531
      %533 = vmatmul.f32.gmra.mxu0 %v358
      %v534 = vpop.f32.mrf.mxu0
      %v535 = vadd.f32 0.0, %v534
      %536 = vmatmul.f32.gmra.mxu0 %v361
      %v537 = vpop.f32.mrf.mxu0
      %v538 = vadd.f32 0.0, %v537
      %539 = vmatmul.f32.gmra.mxu0 %v364
      %v540 = vpop.f32.mrf.mxu0
      %v541 = vadd.f32 0.0, %v540
      %542 = vmatmul.f32.gmra.mxu0 %v367
      %v543 = vpop.f32.mrf.mxu0
      %v544 = vadd.f32 0.0, %v543
      %545 = vmatmul.f32.gmra.mxu0 %v370
      %v546 = vpop.f32.mrf.mxu0
      %v547 = vadd.f32 0.0, %v546
      %548 = vmatmul.f32.gmra.mxu0 %v373
      %v549 = vpop.f32.mrf.mxu0
      %v550 = vadd.f32 0.0, %v549
      %551 = vmatmul.f32.gmra.mxu0 %v376
      %v552 = vpop.f32.mrf.mxu0
      %v553 = vadd.f32 0.0, %v552
      %554 = vmatmul.f32.gmra.mxu0 %v379
      %v555 = vpop.f32.mrf.mxu0
      %v556 = vadd.f32 0.0, %v555
      %557 = vmatmul.f32.gmra.mxu0 %v382
      %v558 = vpop.f32.mrf.mxu0
      %v559 = vadd.f32 0.0, %v558
      %560 = vmatmul.f32.gmra.mxu0 %v385
      %v561 = vpop.f32.mrf.mxu0
      %v562 = vadd.f32 0.0, %v561
      %563 = vmatmul.f32.gmra.mxu0 %v388
      %v564 = vpop.f32.mrf.mxu0
      %v565 = vadd.f32 0.0, %v564
      %566 = vmatmul.f32.gmra.mxu0 %v391
      %v567 = vpop.f32.mrf.mxu0
      %v568 = vadd.f32 0.0, %v567
      %569 = vmatmul.f32.gmra.mxu0 %v394
      %v570 = vpop.f32.mrf.mxu0
      %v571 = vadd.f32 0.0, %v570
      %572 = vmatmul.f32.gmra.mxu0 %v397
      %v573 = vpop.f32.mrf.mxu0
      %v574 = vadd.f32 0.0, %v573
      %575 = vmatmul.f32.gmra.mxu0 %v400
      %v576 = vpop.f32.mrf.mxu0
      %v577 = vadd.f32 0.0, %v576
      %578 = vdwg.mxu0
      %s579 = scalar_lea.vmem %s170, 112
      %v580 = vld [vmem:[%s579] sm:$0xff]
      %v581 = vld [vmem:[%s579 + $0x8] sm:$0xff]
      %v582 = vld [vmem:[%s579 + $0x10] sm:$0xff]
      %v583 = vld [vmem:[%s579 + $0x18] sm:$0xff]
      %v584 = vld [vmem:[%s579 + $0x20] sm:$0xff]
      %v585 = vld [vmem:[%s579 + $0x28] sm:$0xff]
      %v586 = vld [vmem:[%s579 + $0x30] sm:$0xff]
      %v587 = vld [vmem:[%s579 + $0x38] sm:$0xff]
      %v588 = vld [vmem:[%s579 + $0x40] sm:$0xff]
      %v589 = vld [vmem:[%s579 + $0x48] sm:$0xff]
      %v590 = vld [vmem:[%s579 + $0x50] sm:$0xff]
      %v591 = vld [vmem:[%s579 + $0x58] sm:$0xff]
      %v592 = vld [vmem:[%s579 + $0x60] sm:$0xff]
      %v593 = vld [vmem:[%s579 + $0x68] sm:$0xf]
      %v595 = vsel %vm402, %v593, 0
      %597 = vmatpush.msra.mxu0 0.0
      %598 = vmatpush.msra.mxu0 0.0
      %599 = vmatpush.msra.mxu0 %v595
      %600 = vmatpush.msra.mxu0 %v592
      %601 = vmatpush.msra.mxu0 %v591
      %602 = vmatpush.msra.mxu0 %v590
      %603 = vmatpush.msra.mxu0 %v589
      %604 = vmatpush.msra.mxu0 %v588
      %605 = vmatpush.msra.mxu0 %v587
      %606 = vmatpush.msra.mxu0 %v586
      %607 = vmatpush.msra.mxu0 %v585
      %608 = vmatpush.msra.mxu0 %v584
      %609 = vmatpush.msra.mxu0 %v583
      %610 = vmatpush.msra.mxu0 %v582
      %611 = vmatpush.msra.mxu0 %v581
      %612 = vmatpush.msra.mxu0 %v580
      %613 = vmatmul.f32.gmra.mxu0 %v247
      %v614 = vpop.f32.mrf.mxu0
      %v615 = vadd.f32 0.0, %v614
      %616 = vmatmul.f32.gmra.mxu0 %v250
      %v617 = vpop.f32.mrf.mxu0
      %v618 = vadd.f32 0.0, %v617
      %619 = vmatmul.f32.gmra.mxu0 %v253
      %v620 = vpop.f32.mrf.mxu0
      %v621 = vadd.f32 0.0, %v620
      %622 = vmatmul.f32.gmra.mxu0 %v256
      %v623 = vpop.f32.mrf.mxu0
      %v624 = vadd.f32 0.0, %v623
      %625 = vmatmul.f32.gmra.mxu0 %v259
      %v626 = vpop.f32.mrf.mxu0
      %v627 = vadd.f32 0.0, %v626
      %628 = vmatmul.f32.gmra.mxu0 %v262
      %v629 = vpop.f32.mrf.mxu0
      %v630 = vadd.f32 0.0, %v629
      %631 = vmatmul.f32.gmra.mxu0 %v265
      %v632 = vpop.f32.mrf.mxu0
      %v633 = vadd.f32 0.0, %v632
      %634 = vmatmul.f32.gmra.mxu0 %v268
      %v635 = vpop.f32.mrf.mxu0
      %v636 = vadd.f32 0.0, %v635
      %637 = vmatmul.f32.gmra.mxu0 %v271
      %v638 = vpop.f32.mrf.mxu0
      %v639 = vadd.f32 0.0, %v638
      %640 = vmatmul.f32.gmra.mxu0 %v274
      %v641 = vpop.f32.mrf.mxu0
      %v642 = vadd.f32 0.0, %v641
      %643 = vmatmul.f32.gmra.mxu0 %v277
      %v644 = vpop.f32.mrf.mxu0
      %v645 = vadd.f32 0.0, %v644
      %646 = vmatmul.f32.gmra.mxu0 %v280
      %v647 = vpop.f32.mrf.mxu0
      %v648 = vadd.f32 0.0, %v647
      %649 = vmatmul.f32.gmra.mxu0 %v283
      %v650 = vpop.f32.mrf.mxu0
      %v651 = vadd.f32 0.0, %v650
      %652 = vmatmul.f32.gmra.mxu0 %v286
      %v653 = vpop.f32.mrf.mxu0
      %v654 = vadd.f32 0.0, %v653
      %655 = vmatmul.f32.gmra.mxu0 %v289
      %v656 = vpop.f32.mrf.mxu0
      %v657 = vadd.f32 0.0, %v656
      %658 = vmatmul.f32.gmra.mxu0 %v292
      %v659 = vpop.f32.mrf.mxu0
      %v660 = vadd.f32 0.0, %v659
      %661 = vmatmul.f32.gmra.mxu0 %v295
      %v662 = vpop.f32.mrf.mxu0
      %v663 = vadd.f32 0.0, %v662
      %664 = vmatmul.f32.gmra.mxu0 %v298
      %v665 = vpop.f32.mrf.mxu0
      %v666 = vadd.f32 0.0, %v665
      %667 = vmatmul.f32.gmra.mxu0 %v301
      %v668 = vpop.f32.mrf.mxu0
      %v669 = vadd.f32 0.0, %v668
      %670 = vmatmul.f32.gmra.mxu0 %v304
      %v671 = vpop.f32.mrf.mxu0
      %v672 = vadd.f32 0.0, %v671
      %673 = vmatmul.f32.gmra.mxu0 %v307
      %v674 = vpop.f32.mrf.mxu0
      %v675 = vadd.f32 0.0, %v674
      %676 = vmatmul.f32.gmra.mxu0 %v310
      %v677 = vpop.f32.mrf.mxu0
      %v678 = vadd.f32 0.0, %v677
      %679 = vmatmul.f32.gmra.mxu0 %v313
      %v680 = vpop.f32.mrf.mxu0
      %v681 = vadd.f32 0.0, %v680
      %682 = vmatmul.f32.gmra.mxu0 %v316
      %v683 = vpop.f32.mrf.mxu0
      %v684 = vadd.f32 0.0, %v683
      %685 = vmatmul.f32.gmra.mxu0 %v319
      %v686 = vpop.f32.mrf.mxu0
      %v687 = vadd.f32 0.0, %v686
      %688 = vmatmul.f32.gmra.mxu0 %v322
      %v689 = vpop.f32.mrf.mxu0
      %v690 = vadd.f32 0.0, %v689
      %691 = vmatmul.f32.gmra.mxu0 %v325
      %v692 = vpop.f32.mrf.mxu0
      %v693 = vadd.f32 0.0, %v692
      %694 = vmatmul.f32.gmra.mxu0 %v328
      %v695 = vpop.f32.mrf.mxu0
      %v696 = vadd.f32 0.0, %v695
      %697 = vmatmul.f32.gmra.mxu0 %v331
      %v698 = vpop.f32.mrf.mxu0
      %v699 = vadd.f32 0.0, %v698
      %700 = vmatmul.f32.gmra.mxu0 %v334
      %v701 = vpop.f32.mrf.mxu0
      %v702 = vadd.f32 0.0, %v701
      %703 = vmatmul.f32.gmra.mxu0 %v337
      %v704 = vpop.f32.mrf.mxu0
      %v705 = vadd.f32 0.0, %v704
      %706 = vmatmul.f32.gmra.mxu0 %v340
      %v707 = vpop.f32.mrf.mxu0
      %v708 = vadd.f32 0.0, %v707
      %709 = vmatmul.f32.gmra.mxu0 %v343
      %v710 = vpop.f32.mrf.mxu0
      %v711 = vadd.f32 0.0, %v710
      %712 = vmatmul.f32.gmra.mxu0 %v346
      %v713 = vpop.f32.mrf.mxu0
      %v714 = vadd.f32 0.0, %v713
      %715 = vmatmul.f32.gmra.mxu0 %v349
      %v716 = vpop.f32.mrf.mxu0
      %v717 = vadd.f32 0.0, %v716
      %718 = vmatmul.f32.gmra.mxu0 %v352
      %v719 = vpop.f32.mrf.mxu0
      %v720 = vadd.f32 0.0, %v719
      %721 = vmatmul.f32.gmra.mxu0 %v355
      %v722 = vpop.f32.mrf.mxu0
      %v723 = vadd.f32 0.0, %v722
      %724 = vmatmul.f32.gmra.mxu0 %v358
      %v725 = vpop.f32.mrf.mxu0
      %v726 = vadd.f32 0.0, %v725
      %727 = vmatmul.f32.gmra.mxu0 %v361
      %v728 = vpop.f32.mrf.mxu0
      %v729 = vadd.f32 0.0, %v728
      %730 = vmatmul.f32.gmra.mxu0 %v364
      %v731 = vpop.f32.mrf.mxu0
      %v732 = vadd.f32 0.0, %v731
      %733 = vmatmul.f32.gmra.mxu0 %v367
      %v734 = vpop.f32.mrf.mxu0
      %v735 = vadd.f32 0.0, %v734
      %736 = vmatmul.f32.gmra.mxu0 %v370
      %v737 = vpop.f32.mrf.mxu0
      %v738 = vadd.f32 0.0, %v737
      %739 = vmatmul.f32.gmra.mxu0 %v373
      %v740 = vpop.f32.mrf.mxu0
      %v741 = vadd.f32 0.0, %v740
      %742 = vmatmul.f32.gmra.mxu0 %v376
      %v743 = vpop.f32.mrf.mxu0
      %v744 = vadd.f32 0.0, %v743
      %745 = vmatmul.f32.gmra.mxu0 %v379
      %v746 = vpop.f32.mrf.mxu0
      %v747 = vadd.f32 0.0, %v746
      %748 = vmatmul.f32.gmra.mxu0 %v382
      %v749 = vpop.f32.mrf.mxu0
      %v750 = vadd.f32 0.0, %v749
      %751 = vmatmul.f32.gmra.mxu0 %v385
      %v752 = vpop.f32.mrf.mxu0
      %v753 = vadd.f32 0.0, %v752
      %754 = vmatmul.f32.gmra.mxu0 %v388
      %v755 = vpop.f32.mrf.mxu0
      %v756 = vadd.f32 0.0, %v755
      %757 = vmatmul.f32.gmra.mxu0 %v391
      %v758 = vpop.f32.mrf.mxu0
      %v759 = vadd.f32 0.0, %v758
      %760 = vmatmul.f32.gmra.mxu0 %v394
      %v761 = vpop.f32.mrf.mxu0
      %v762 = vadd.f32 0.0, %v761
      %763 = vmatmul.f32.gmra.mxu0 %v397
      %v764 = vpop.f32.mrf.mxu0
      %v765 = vadd.f32 0.0, %v764
      %766 = vmatmul.f32.gmra.mxu0 %v400
      %v767 = vpop.f32.mrf.mxu0
      %v768 = vadd.f32 0.0, %v767
      %769 = vdwg.mxu0
      %s770 = scalar_lea.vmem %s170, 224
      %v771 = vld [vmem:[%s770] sm:$0xff]
      %v772 = vld [vmem:[%s770 + $0x8] sm:$0xff]
      %v773 = vld [vmem:[%s770 + $0x10] sm:$0xff]
      %v774 = vld [vmem:[%s770 + $0x18] sm:$0xff]
      %v775 = vld [vmem:[%s770 + $0x20] sm:$0xff]
      %v776 = vld [vmem:[%s770 + $0x28] sm:$0xff]
      %v777 = vld [vmem:[%s770 + $0x30] sm:$0xff]
      %v778 = vld [vmem:[%s770 + $0x38] sm:$0xff]
      %v779 = vld [vmem:[%s770 + $0x40] sm:$0xff]
      %v780 = vld [vmem:[%s770 + $0x48] sm:$0xff]
      %v781 = vld [vmem:[%s770 + $0x50] sm:$0xff]
      %v782 = vld [vmem:[%s770 + $0x58] sm:$0xff]
      %v783 = vld [vmem:[%s770 + $0x60] sm:$0xff]
      %v784 = vld [vmem:[%s770 + $0x68] sm:$0xf]
      %v786 = vsel %vm402, %v784, 0
      %788 = vmatpush.msra.mxu0 0.0
      %789 = vmatpush.msra.mxu0 0.0
      %790 = vmatpush.msra.mxu0 %v786
      %791 = vmatpush.msra.mxu0 %v783
      %792 = vmatpush.msra.mxu0 %v782
      %793 = vmatpush.msra.mxu0 %v781
      %794 = vmatpush.msra.mxu0 %v780
      %795 = vmatpush.msra.mxu0 %v779
      %796 = vmatpush.msra.mxu0 %v778
      %797 = vmatpush.msra.mxu0 %v777
      %798 = vmatpush.msra.mxu0 %v776
      %799 = vmatpush.msra.mxu0 %v775
      %800 = vmatpush.msra.mxu0 %v774
      %801 = vmatpush.msra.mxu0 %v773
      %802 = vmatpush.msra.mxu0 %v772
      %803 = vmatpush.msra.mxu0 %v771
      %804 = vmatmul.f32.gmra.mxu0 %v247
      %v805 = vpop.f32.mrf.mxu0
      %v806 = vadd.f32 0.0, %v805
      %807 = vmatmul.f32.gmra.mxu0 %v250
      %v808 = vpop.f32.mrf.mxu0
      %v809 = vadd.f32 0.0, %v808
      %810 = vmatmul.f32.gmra.mxu0 %v253
      %v811 = vpop.f32.mrf.mxu0
      %v812 = vadd.f32 0.0, %v811
      %813 = vmatmul.f32.gmra.mxu0 %v256
      %v814 = vpop.f32.mrf.mxu0
      %v815 = vadd.f32 0.0, %v814
      %816 = vmatmul.f32.gmra.mxu0 %v259
      %v817 = vpop.f32.mrf.mxu0
      %v818 = vadd.f32 0.0, %v817
      %819 = vmatmul.f32.gmra.mxu0 %v262
      %v820 = vpop.f32.mrf.mxu0
      %v821 = vadd.f32 0.0, %v820
      %822 = vmatmul.f32.gmra.mxu0 %v265
      %v823 = vpop.f32.mrf.mxu0
      %v824 = vadd.f32 0.0, %v823
      %825 = vmatmul.f32.gmra.mxu0 %v268
      %v826 = vpop.f32.mrf.mxu0
      %v827 = vadd.f32 0.0, %v826
      %828 = vmatmul.f32.gmra.mxu0 %v271
      %v829 = vpop.f32.mrf.mxu0
      %v830 = vadd.f32 0.0, %v829
      %831 = vmatmul.f32.gmra.mxu0 %v274
      %v832 = vpop.f32.mrf.mxu0
      %v833 = vadd.f32 0.0, %v832
      %834 = vmatmul.f32.gmra.mxu0 %v277
      %v835 = vpop.f32.mrf.mxu0
      %v836 = vadd.f32 0.0, %v835
      %837 = vmatmul.f32.gmra.mxu0 %v280
      %v838 = vpop.f32.mrf.mxu0
      %v839 = vadd.f32 0.0, %v838
      %840 = vmatmul.f32.gmra.mxu0 %v283
      %v841 = vpop.f32.mrf.mxu0
      %v842 = vadd.f32 0.0, %v841
      %843 = vmatmul.f32.gmra.mxu0 %v286
      %v844 = vpop.f32.mrf.mxu0
      %v845 = vadd.f32 0.0, %v844
      %846 = vmatmul.f32.gmra.mxu0 %v289
      %v847 = vpop.f32.mrf.mxu0
      %v848 = vadd.f32 0.0, %v847
      %849 = vmatmul.f32.gmra.mxu0 %v292
      %v850 = vpop.f32.mrf.mxu0
      %v851 = vadd.f32 0.0, %v850
      %852 = vmatmul.f32.gmra.mxu0 %v295
      %v853 = vpop.f32.mrf.mxu0
      %v854 = vadd.f32 0.0, %v853
      %855 = vmatmul.f32.gmra.mxu0 %v298
      %v856 = vpop.f32.mrf.mxu0
      %v857 = vadd.f32 0.0, %v856
      %858 = vmatmul.f32.gmra.mxu0 %v301
      %v859 = vpop.f32.mrf.mxu0
      %v860 = vadd.f32 0.0, %v859
      %861 = vmatmul.f32.gmra.mxu0 %v304
      %v862 = vpop.f32.mrf.mxu0
      %v863 = vadd.f32 0.0, %v862
      %864 = vmatmul.f32.gmra.mxu0 %v307
      %v865 = vpop.f32.mrf.mxu0
      %v866 = vadd.f32 0.0, %v865
      %867 = vmatmul.f32.gmra.mxu0 %v310
      %v868 = vpop.f32.mrf.mxu0
      %v869 = vadd.f32 0.0, %v868
      %870 = vmatmul.f32.gmra.mxu0 %v313
      %v871 = vpop.f32.mrf.mxu0
      %v872 = vadd.f32 0.0, %v871
      %873 = vmatmul.f32.gmra.mxu0 %v316
      %v874 = vpop.f32.mrf.mxu0
      %v875 = vadd.f32 0.0, %v874
      %876 = vmatmul.f32.gmra.mxu0 %v319
      %v877 = vpop.f32.mrf.mxu0
      %v878 = vadd.f32 0.0, %v877
      %879 = vmatmul.f32.gmra.mxu0 %v322
      %v880 = vpop.f32.mrf.mxu0
      %v881 = vadd.f32 0.0, %v880
      %882 = vmatmul.f32.gmra.mxu0 %v325
      %v883 = vpop.f32.mrf.mxu0
      %v884 = vadd.f32 0.0, %v883
      %885 = vmatmul.f32.gmra.mxu0 %v328
      %v886 = vpop.f32.mrf.mxu0
      %v887 = vadd.f32 0.0, %v886
      %888 = vmatmul.f32.gmra.mxu0 %v331
      %v889 = vpop.f32.mrf.mxu0
      %v890 = vadd.f32 0.0, %v889
      %891 = vmatmul.f32.gmra.mxu0 %v334
      %v892 = vpop.f32.mrf.mxu0
      %v893 = vadd.f32 0.0, %v892
      %894 = vmatmul.f32.gmra.mxu0 %v337
      %v895 = vpop.f32.mrf.mxu0
      %v896 = vadd.f32 0.0, %v895
      %897 = vmatmul.f32.gmra.mxu0 %v340
      %v898 = vpop.f32.mrf.mxu0
      %v899 = vadd.f32 0.0, %v898
      %900 = vmatmul.f32.gmra.mxu0 %v343
      %v901 = vpop.f32.mrf.mxu0
      %v902 = vadd.f32 0.0, %v901
      %903 = vmatmul.f32.gmra.mxu0 %v346
      %v904 = vpop.f32.mrf.mxu0
      %v905 = vadd.f32 0.0, %v904
      %906 = vmatmul.f32.gmra.mxu0 %v349
      %v907 = vpop.f32.mrf.mxu0
      %v908 = vadd.f32 0.0, %v907
      %909 = vmatmul.f32.gmra.mxu0 %v352
      %v910 = vpop.f32.mrf.mxu0
      %v911 = vadd.f32 0.0, %v910
      %912 = vmatmul.f32.gmra.mxu0 %v355
      %v913 = vpop.f32.mrf.mxu0
      %v914 = vadd.f32 0.0, %v913
      %915 = vmatmul.f32.gmra.mxu0 %v358
      %v916 = vpop.f32.mrf.mxu0
      %v917 = vadd.f32 0.0, %v916
      %918 = vmatmul.f32.gmra.mxu0 %v361
      %v919 = vpop.f32.mrf.mxu0
      %v920 = vadd.f32 0.0, %v919
      %921 = vmatmul.f32.gmra.mxu0 %v364
      %v922 = vpop.f32.mrf.mxu0
      %v923 = vadd.f32 0.0, %v922
      %924 = vmatmul.f32.gmra.mxu0 %v367
      %v925 = vpop.f32.mrf.mxu0
      %v926 = vadd.f32 0.0, %v925
      %927 = vmatmul.f32.gmra.mxu0 %v370
      %v928 = vpop.f32.mrf.mxu0
      %v929 = vadd.f32 0.0, %v928
      %930 = vmatmul.f32.gmra.mxu0 %v373
      %v931 = vpop.f32.mrf.mxu0
      %v932 = vadd.f32 0.0, %v931
      %933 = vmatmul.f32.gmra.mxu0 %v376
      %v934 = vpop.f32.mrf.mxu0
      %v935 = vadd.f32 0.0, %v934
      %936 = vmatmul.f32.gmra.mxu0 %v379
      %v937 = vpop.f32.mrf.mxu0
      %v938 = vadd.f32 0.0, %v937
      %939 = vmatmul.f32.gmra.mxu0 %v382
      %v940 = vpop.f32.mrf.mxu0
      %v941 = vadd.f32 0.0, %v940
      %942 = vmatmul.f32.gmra.mxu0 %v385
      %v943 = vpop.f32.mrf.mxu0
      %v944 = vadd.f32 0.0, %v943
      %945 = vmatmul.f32.gmra.mxu0 %v388
      %v946 = vpop.f32.mrf.mxu0
      %v947 = vadd.f32 0.0, %v946
      %948 = vmatmul.f32.gmra.mxu0 %v391
      %v949 = vpop.f32.mrf.mxu0
      %v950 = vadd.f32 0.0, %v949
      %951 = vmatmul.f32.gmra.mxu0 %v394
      %v952 = vpop.f32.mrf.mxu0
      %v953 = vadd.f32 0.0, %v952
      %954 = vmatmul.f32.gmra.mxu0 %v397
      %v955 = vpop.f32.mrf.mxu0
      %v956 = vadd.f32 0.0, %v955
      %957 = vmatmul.f32.gmra.mxu0 %v400
      %v958 = vpop.f32.mrf.mxu0
      %v959 = vadd.f32 0.0, %v958
      %960 = vdwg.mxu0
      %v961 = vld [vmem:[%s2] sm:$0xff]
      %v962 = vld [vmem:[%s2 + $0x8] sm:$0xff]
      %v963 = vld [vmem:[%s2 + $0x10] sm:$0xff]
      %v964 = vld [vmem:[%s2 + $0x18] sm:$0xff]
      %v965 = vld [vmem:[%s2 + $0x20] sm:$0xff]
      %v966 = vld [vmem:[%s2 + $0x28] sm:$0xff]
      %v967 = vld [vmem:[%s2 + $0x30] sm:$0xff]
      %v968 = vld [vmem:[%s2 + $0x38] sm:$0xff]
      %v969 = vld [vmem:[%s2 + $0x40] sm:$0xff]
      %v970 = vld [vmem:[%s2 + $0x48] sm:$0xff]
      %v971 = vld [vmem:[%s2 + $0x50] sm:$0xff]
      %v972 = vld [vmem:[%s2 + $0x58] sm:$0xff]
      %v973 = vld [vmem:[%s2 + $0x60] sm:$0xff]
      %v974 = vld [vmem:[%s2 + $0x68] sm:$0xff]
      %v975 = vld [vmem:[%s2 + $0x70] sm:$0xff]
      %v976 = vld [vmem:[%s2 + $0x78] sm:$0xff]
      %v977 = vld [vmem:[%s2 + $0x80] sm:$0xff]
      %v978 = vld [vmem:[%s2 + $0x88] sm:$0xff]
      %v979 = vld [vmem:[%s2 + $0x90] sm:$0xff]
      %v980 = vld [vmem:[%s2 + $0x98] sm:$0xff]
      %v981 = vld [vmem:[%s2 + $0xa0] sm:$0xff]
      %v982 = vld [vmem:[%s2 + $0xa8] sm:$0xff]
      %v983 = vld [vmem:[%s2 + $0xb0] sm:$0xff]
      %v984 = vld [vmem:[%s2 + $0xb8] sm:$0xff]
      %v985 = vld [vmem:[%s2 + $0xc0] sm:$0xff]
      %v986 = vld [vmem:[%s2 + $0xc8] sm:$0xff]
      %v987 = vld [vmem:[%s2 + $0xd0] sm:$0xff]
      %v988 = vld [vmem:[%s2 + $0xd8] sm:$0xff]
      %v989 = vld [vmem:[%s2 + $0xe0] sm:$0xff]
      %v990 = vld [vmem:[%s2 + $0xe8] sm:$0xff]
      %v991 = vld [vmem:[%s2 + $0xf0] sm:$0xff]
      %v992 = vld [vmem:[%s2 + $0xf8] sm:$0xff]
      %v993 = vld [vmem:[%s2 + $0x100] sm:$0xff]
      %v994 = vld [vmem:[%s2 + $0x108] sm:$0xff]
      %v995 = vld [vmem:[%s2 + $0x110] sm:$0xff]
      %v996 = vld [vmem:[%s2 + $0x118] sm:$0xff]
      %v997 = vld [vmem:[%s2 + $0x120] sm:$0xff]
      %v998 = vld [vmem:[%s2 + $0x128] sm:$0xff]
      %v999 = vld [vmem:[%s2 + $0x130] sm:$0xff]
      %v1000 = vld [vmem:[%s2 + $0x138] sm:$0xff]
      %v1001 = vld [vmem:[%s2 + $0x140] sm:$0xff]
      %v1002 = vld [vmem:[%s2 + $0x148] sm:$0xff]
      %v1003 = vld [vmem:[%s2 + $0x150] sm:$0xff]
      %v1004 = vld [vmem:[%s2 + $0x158] sm:$0xff]
      %v1005 = vld [vmem:[%s2 + $0x160] sm:$0xff]
      %v1006 = vld [vmem:[%s2 + $0x168] sm:$0xff]
      %v1007 = vld [vmem:[%s2 + $0x170] sm:$0xff]
      %v1008 = vld [vmem:[%s2 + $0x178] sm:$0xff]
      %v1009 = vld [vmem:[%s2 + $0x180] sm:$0xff]
      %v1010 = vld [vmem:[%s2 + $0x188] sm:$0xff]
      %v1011 = vld [vmem:[%s2 + $0x190] sm:$0xff]
      %v1012 = vld [vmem:[%s2 + $0x198] sm:$0xff]
      %v1013 = vld [vmem:[%s2 + $0x1a0] sm:$0xf]
      %v1014 = vld [vmem:[%s2 + $0x1a8] sm:$0xf]
      %v1015 = vld [vmem:[%s2 + $0x1b0] sm:$0xf]
      %v1016 = vld [vmem:[%s2 + $0x1b8] sm:$0xf]
      %v1018 = vsel %vm245, %v424, 0
      %v1021 = vsel %vm245, %v427, 0
      %v1024 = vsel %vm245, %v430, 0
      %v1027 = vsel %vm245, %v433, 0
      %v1030 = vsel %vm245, %v436, 0
      %v1033 = vsel %vm245, %v439, 0
      %v1036 = vsel %vm245, %v442, 0
      %v1039 = vsel %vm245, %v445, 0
      %v1042 = vsel %vm245, %v448, 0
      %v1045 = vsel %vm245, %v451, 0
      %v1048 = vsel %vm245, %v454, 0
      %v1051 = vsel %vm245, %v457, 0
      %v1054 = vsel %vm245, %v460, 0
      %v1057 = vsel %vm245, %v463, 0
      %v1060 = vsel %vm245, %v466, 0
      %v1063 = vsel %vm245, %v469, 0
      %v1066 = vsel %vm245, %v472, 0
      %v1069 = vsel %vm245, %v475, 0
      %v1072 = vsel %vm245, %v478, 0
      %v1075 = vsel %vm245, %v481, 0
      %v1078 = vsel %vm245, %v484, 0
      %v1081 = vsel %vm245, %v487, 0
      %v1084 = vsel %vm245, %v490, 0
      %v1087 = vsel %vm245, %v493, 0
      %v1090 = vsel %vm245, %v496, 0
      %v1093 = vsel %vm245, %v499, 0
      %v1096 = vsel %vm245, %v502, 0
      %v1099 = vsel %vm245, %v505, 0
      %v1102 = vsel %vm245, %v508, 0
      %v1105 = vsel %vm245, %v511, 0
      %v1108 = vsel %vm245, %v514, 0
      %v1111 = vsel %vm245, %v517, 0
      %v1114 = vsel %vm245, %v520, 0
      %v1117 = vsel %vm245, %v523, 0
      %v1120 = vsel %vm245, %v526, 0
      %v1123 = vsel %vm245, %v529, 0
      %v1126 = vsel %vm245, %v532, 0
      %v1129 = vsel %vm245, %v535, 0
      %v1132 = vsel %vm245, %v538, 0
      %v1135 = vsel %vm245, %v541, 0
      %v1138 = vsel %vm245, %v544, 0
      %v1141 = vsel %vm245, %v547, 0
      %v1144 = vsel %vm245, %v550, 0
      %v1147 = vsel %vm245, %v553, 0
      %v1150 = vsel %vm245, %v556, 0
      %v1153 = vsel %vm245, %v559, 0
      %v1156 = vsel %vm245, %v562, 0
      %v1159 = vsel %vm245, %v565, 0
      %v1162 = vsel %vm245, %v568, 0
      %v1165 = vsel %vm245, %v571, 0
      %v1168 = vsel %vm245, %v574, 0
      %v1171 = vsel %vm245, %v577, 0
      %v1174 = vsel %vm245, %v615, 0
      %v1177 = vsel %vm245, %v618, 0
      %v1180 = vsel %vm245, %v621, 0
      %v1183 = vsel %vm245, %v624, 0
      %v1186 = vsel %vm245, %v627, 0
      %v1189 = vsel %vm245, %v630, 0
      %v1192 = vsel %vm245, %v633, 0
      %v1195 = vsel %vm245, %v636, 0
      %v1198 = vsel %vm245, %v639, 0
      %v1201 = vsel %vm245, %v642, 0
      %v1204 = vsel %vm245, %v645, 0
      %v1207 = vsel %vm245, %v648, 0
      %v1210 = vsel %vm245, %v651, 0
      %v1213 = vsel %vm245, %v654, 0
      %v1216 = vsel %vm245, %v657, 0
      %v1219 = vsel %vm245, %v660, 0
      %v1222 = vsel %vm245, %v663, 0
      %v1225 = vsel %vm245, %v666, 0
      %v1228 = vsel %vm245, %v669, 0
      %v1231 = vsel %vm245, %v672, 0
      %v1234 = vsel %vm245, %v675, 0
      %v1237 = vsel %vm245, %v678, 0
      %v1240 = vsel %vm245, %v681, 0
      %v1243 = vsel %vm245, %v684, 0
      %v1246 = vsel %vm245, %v687, 0
      %v1249 = vsel %vm245, %v690, 0
      %v1252 = vsel %vm245, %v693, 0
      %v1255 = vsel %vm245, %v696, 0
      %v1258 = vsel %vm245, %v699, 0
      %v1261 = vsel %vm245, %v702, 0
      %v1264 = vsel %vm245, %v705, 0
      %v1267 = vsel %vm245, %v708, 0
      %v1270 = vsel %vm245, %v711, 0
      %v1273 = vsel %vm245, %v714, 0
      %v1276 = vsel %vm245, %v717, 0
      %v1279 = vsel %vm245, %v720, 0
      %v1282 = vsel %vm245, %v723, 0
      %v1285 = vsel %vm245, %v726, 0
      %v1288 = vsel %vm245, %v729, 0
      %v1291 = vsel %vm245, %v732, 0
      %v1294 = vsel %vm245, %v735, 0
      %v1297 = vsel %vm245, %v738, 0
      %v1300 = vsel %vm245, %v741, 0
      %v1303 = vsel %vm245, %v744, 0
      %v1306 = vsel %vm245, %v747, 0
      %v1309 = vsel %vm245, %v750, 0
      %v1312 = vsel %vm245, %v753, 0
      %v1315 = vsel %vm245, %v756, 0
      %v1318 = vsel %vm245, %v759, 0
      %v1321 = vsel %vm245, %v762, 0
      %v1324 = vsel %vm245, %v765, 0
      %v1327 = vsel %vm245, %v768, 0
      %v1330 = vsel %vm245, %v806, 0
      %v1333 = vsel %vm245, %v809, 0
      %v1336 = vsel %vm245, %v812, 0
      %v1339 = vsel %vm245, %v815, 0
      %v1342 = vsel %vm245, %v818, 0
      %v1345 = vsel %vm245, %v821, 0
      %v1348 = vsel %vm245, %v824, 0
      %v1351 = vsel %vm245, %v827, 0
      %v1354 = vsel %vm245, %v830, 0
      %v1357 = vsel %vm245, %v833, 0
      %v1360 = vsel %vm245, %v836, 0
      %v1363 = vsel %vm245, %v839, 0
      %v1366 = vsel %vm245, %v842, 0
      %v1369 = vsel %vm245, %v845, 0
      %v1372 = vsel %vm245, %v848, 0
      %v1375 = vsel %vm245, %v851, 0
      %v1378 = vsel %vm245, %v854, 0
      %v1381 = vsel %vm245, %v857, 0
      %v1384 = vsel %vm245, %v860, 0
      %v1387 = vsel %vm245, %v863, 0
      %v1390 = vsel %vm245, %v866, 0
      %v1393 = vsel %vm245, %v869, 0
      %v1396 = vsel %vm245, %v872, 0
      %v1399 = vsel %vm245, %v875, 0
      %v1402 = vsel %vm245, %v878, 0
      %v1405 = vsel %vm245, %v881, 0
      %v1408 = vsel %vm245, %v884, 0
      %v1411 = vsel %vm245, %v887, 0
      %v1414 = vsel %vm245, %v890, 0
      %v1417 = vsel %vm245, %v893, 0
      %v1420 = vsel %vm245, %v896, 0
      %v1423 = vsel %vm245, %v899, 0
      %v1426 = vsel %vm245, %v902, 0
      %v1429 = vsel %vm245, %v905, 0
      %v1432 = vsel %vm245, %v908, 0
      %v1435 = vsel %vm245, %v911, 0
      %v1438 = vsel %vm245, %v914, 0
      %v1441 = vsel %vm245, %v917, 0
      %v1444 = vsel %vm245, %v920, 0
      %v1447 = vsel %vm245, %v923, 0
      %v1450 = vsel %vm245, %v926, 0
      %v1453 = vsel %vm245, %v929, 0
      %v1456 = vsel %vm245, %v932, 0
      %v1459 = vsel %vm245, %v935, 0
      %v1462 = vsel %vm245, %v938, 0
      %v1465 = vsel %vm245, %v941, 0
      %v1468 = vsel %vm245, %v944, 0
      %v1471 = vsel %vm245, %v947, 0
      %v1474 = vsel %vm245, %v950, 0
      %v1477 = vsel %vm245, %v953, 0
      %v1480 = vsel %vm245, %v956, 0
      %v1483 = vsel %vm245, %v959, 0
      %v1486 = vsel %vm402, %v1013, 0
      %v1489 = vsel %vm402, %v1014, 0
      %v1492 = vsel %vm402, %v1015, 0
      %v1495 = vsel %vm402, %v1016, 0
      %1497 = vmatpush.msra.mxu0 0.0
      %1498 = vmatpush.msra.mxu0 0.0
      %1499 = vmatpush.msra.mxu0 %v1486
      %1500 = vmatpush.msra.mxu0 %v1009
      %1501 = vmatpush.msra.mxu0 %v1005
      %1502 = vmatpush.msra.mxu0 %v1001
      %1503 = vmatpush.msra.mxu0 %v997
      %1504 = vmatpush.msra.mxu0 %v993
      %1505 = vmatpush.msra.mxu0 %v989
      %1506 = vmatpush.msra.mxu0 %v985
      %1507 = vmatpush.msra.mxu0 %v981
      %1508 = vmatpush.msra.mxu0 %v977
      %1509 = vmatpush.msra.mxu0 %v973
      %1510 = vmatpush.msra.mxu0 %v969
      %1511 = vmatpush.msra.mxu0 %v965
      %1512 = vmatpush.msra.mxu0 %v961
      %1513 = vmatmul.f32.gmra.mxu0 %v1018
      %v1514 = vpop.f32.mrf.mxu0
      %v1515 = vadd.f32 0.0, %v1514
      %1516 = vmatmul.f32.gmra.mxu0 %v1021
      %v1517 = vpop.f32.mrf.mxu0
      %v1518 = vadd.f32 0.0, %v1517
      %1519 = vmatmul.f32.gmra.mxu0 %v1024
      %v1520 = vpop.f32.mrf.mxu0
      %v1521 = vadd.f32 0.0, %v1520
      %1522 = vmatmul.f32.gmra.mxu0 %v1027
      %v1523 = vpop.f32.mrf.mxu0
      %v1524 = vadd.f32 0.0, %v1523
      %1525 = vmatmul.f32.gmra.mxu0 %v1030
      %v1526 = vpop.f32.mrf.mxu0
      %v1527 = vadd.f32 0.0, %v1526
      %1528 = vmatmul.f32.gmra.mxu0 %v1033
      %v1529 = vpop.f32.mrf.mxu0
      %v1530 = vadd.f32 0.0, %v1529
      %1531 = vmatmul.f32.gmra.mxu0 %v1036
      %v1532 = vpop.f32.mrf.mxu0
      %v1533 = vadd.f32 0.0, %v1532
      %1534 = vmatmul.f32.gmra.mxu0 %v1039
      %v1535 = vpop.f32.mrf.mxu0
      %v1536 = vadd.f32 0.0, %v1535
      %1537 = vmatmul.f32.gmra.mxu0 %v1042
      %v1538 = vpop.f32.mrf.mxu0
      %v1539 = vadd.f32 0.0, %v1538
      %1540 = vmatmul.f32.gmra.mxu0 %v1045
      %v1541 = vpop.f32.mrf.mxu0
      %v1542 = vadd.f32 0.0, %v1541
      %1543 = vmatmul.f32.gmra.mxu0 %v1048
      %v1544 = vpop.f32.mrf.mxu0
      %v1545 = vadd.f32 0.0, %v1544
      %1546 = vmatmul.f32.gmra.mxu0 %v1051
      %v1547 = vpop.f32.mrf.mxu0
      %v1548 = vadd.f32 0.0, %v1547
      %1549 = vmatmul.f32.gmra.mxu0 %v1054
      %v1550 = vpop.f32.mrf.mxu0
      %v1551 = vadd.f32 0.0, %v1550
      %1552 = vmatmul.f32.gmra.mxu0 %v1057
      %v1553 = vpop.f32.mrf.mxu0
      %v1554 = vadd.f32 0.0, %v1553
      %1555 = vmatmul.f32.gmra.mxu0 %v1060
      %v1556 = vpop.f32.mrf.mxu0
      %v1557 = vadd.f32 0.0, %v1556
      %1558 = vmatmul.f32.gmra.mxu0 %v1063
      %v1559 = vpop.f32.mrf.mxu0
      %v1560 = vadd.f32 0.0, %v1559
      %1561 = vmatmul.f32.gmra.mxu0 %v1066
      %v1562 = vpop.f32.mrf.mxu0
      %v1563 = vadd.f32 0.0, %v1562
      %1564 = vmatmul.f32.gmra.mxu0 %v1069
      %v1565 = vpop.f32.mrf.mxu0
      %v1566 = vadd.f32 0.0, %v1565
      %1567 = vmatmul.f32.gmra.mxu0 %v1072
      %v1568 = vpop.f32.mrf.mxu0
      %v1569 = vadd.f32 0.0, %v1568
      %1570 = vmatmul.f32.gmra.mxu0 %v1075
      %v1571 = vpop.f32.mrf.mxu0
      %v1572 = vadd.f32 0.0, %v1571
      %1573 = vmatmul.f32.gmra.mxu0 %v1078
      %v1574 = vpop.f32.mrf.mxu0
      %v1575 = vadd.f32 0.0, %v1574
      %1576 = vmatmul.f32.gmra.mxu0 %v1081
      %v1577 = vpop.f32.mrf.mxu0
      %v1578 = vadd.f32 0.0, %v1577
      %1579 = vmatmul.f32.gmra.mxu0 %v1084
      %v1580 = vpop.f32.mrf.mxu0
      %v1581 = vadd.f32 0.0, %v1580
      %1582 = vmatmul.f32.gmra.mxu0 %v1087
      %v1583 = vpop.f32.mrf.mxu0
      %v1584 = vadd.f32 0.0, %v1583
      %1585 = vmatmul.f32.gmra.mxu0 %v1090
      %v1586 = vpop.f32.mrf.mxu0
      %v1587 = vadd.f32 0.0, %v1586
      %1588 = vmatmul.f32.gmra.mxu0 %v1093
      %v1589 = vpop.f32.mrf.mxu0
      %v1590 = vadd.f32 0.0, %v1589
      %1591 = vmatmul.f32.gmra.mxu0 %v1096
      %v1592 = vpop.f32.mrf.mxu0
      %v1593 = vadd.f32 0.0, %v1592
      %1594 = vmatmul.f32.gmra.mxu0 %v1099
      %v1595 = vpop.f32.mrf.mxu0
      %v1596 = vadd.f32 0.0, %v1595
      %1597 = vmatmul.f32.gmra.mxu0 %v1102
      %v1598 = vpop.f32.mrf.mxu0
      %v1599 = vadd.f32 0.0, %v1598
      %1600 = vmatmul.f32.gmra.mxu0 %v1105
      %v1601 = vpop.f32.mrf.mxu0
      %v1602 = vadd.f32 0.0, %v1601
      %1603 = vmatmul.f32.gmra.mxu0 %v1108
      %v1604 = vpop.f32.mrf.mxu0
      %v1605 = vadd.f32 0.0, %v1604
      %1606 = vmatmul.f32.gmra.mxu0 %v1111
      %v1607 = vpop.f32.mrf.mxu0
      %v1608 = vadd.f32 0.0, %v1607
      %1609 = vmatmul.f32.gmra.mxu0 %v1114
      %v1610 = vpop.f32.mrf.mxu0
      %v1611 = vadd.f32 0.0, %v1610
      %1612 = vmatmul.f32.gmra.mxu0 %v1117
      %v1613 = vpop.f32.mrf.mxu0
      %v1614 = vadd.f32 0.0, %v1613
      %1615 = vmatmul.f32.gmra.mxu0 %v1120
      %v1616 = vpop.f32.mrf.mxu0
      %v1617 = vadd.f32 0.0, %v1616
      %1618 = vmatmul.f32.gmra.mxu0 %v1123
      %v1619 = vpop.f32.mrf.mxu0
      %v1620 = vadd.f32 0.0, %v1619
      %1621 = vmatmul.f32.gmra.mxu0 %v1126
      %v1622 = vpop.f32.mrf.mxu0
      %v1623 = vadd.f32 0.0, %v1622
      %1624 = vmatmul.f32.gmra.mxu0 %v1129
      %v1625 = vpop.f32.mrf.mxu0
      %v1626 = vadd.f32 0.0, %v1625
      %1627 = vmatmul.f32.gmra.mxu0 %v1132
      %v1628 = vpop.f32.mrf.mxu0
      %v1629 = vadd.f32 0.0, %v1628
      %1630 = vmatmul.f32.gmra.mxu0 %v1135
      %v1631 = vpop.f32.mrf.mxu0
      %v1632 = vadd.f32 0.0, %v1631
      %1633 = vmatmul.f32.gmra.mxu0 %v1138
      %v1634 = vpop.f32.mrf.mxu0
      %v1635 = vadd.f32 0.0, %v1634
      %1636 = vmatmul.f32.gmra.mxu0 %v1141
      %v1637 = vpop.f32.mrf.mxu0
      %v1638 = vadd.f32 0.0, %v1637
      %1639 = vmatmul.f32.gmra.mxu0 %v1144
      %v1640 = vpop.f32.mrf.mxu0
      %v1641 = vadd.f32 0.0, %v1640
      %1642 = vmatmul.f32.gmra.mxu0 %v1147
      %v1643 = vpop.f32.mrf.mxu0
      %v1644 = vadd.f32 0.0, %v1643
      %1645 = vmatmul.f32.gmra.mxu0 %v1150
      %v1646 = vpop.f32.mrf.mxu0
      %v1647 = vadd.f32 0.0, %v1646
      %1648 = vmatmul.f32.gmra.mxu0 %v1153
      %v1649 = vpop.f32.mrf.mxu0
      %v1650 = vadd.f32 0.0, %v1649
      %1651 = vmatmul.f32.gmra.mxu0 %v1156
      %v1652 = vpop.f32.mrf.mxu0
      %v1653 = vadd.f32 0.0, %v1652
      %1654 = vmatmul.f32.gmra.mxu0 %v1159
      %v1655 = vpop.f32.mrf.mxu0
      %v1656 = vadd.f32 0.0, %v1655
      %1657 = vmatmul.f32.gmra.mxu0 %v1162
      %v1658 = vpop.f32.mrf.mxu0
      %v1659 = vadd.f32 0.0, %v1658
      %1660 = vmatmul.f32.gmra.mxu0 %v1165
      %v1661 = vpop.f32.mrf.mxu0
      %v1662 = vadd.f32 0.0, %v1661
      %1663 = vmatmul.f32.gmra.mxu0 %v1168
      %v1664 = vpop.f32.mrf.mxu0
      %v1665 = vadd.f32 0.0, %v1664
      %1666 = vmatmul.f32.gmra.mxu0 %v1171
      %v1667 = vpop.f32.mrf.mxu0
      %v1668 = vadd.f32 0.0, %v1667
      %1669 = vmatmul.f32.gmra.mxu0 %v1174
      %v1670 = vpop.f32.mrf.mxu0
      %v1671 = vadd.f32 0.0, %v1670
      %1672 = vmatmul.f32.gmra.mxu0 %v1177
      %v1673 = vpop.f32.mrf.mxu0
      %v1674 = vadd.f32 0.0, %v1673
      %1675 = vmatmul.f32.gmra.mxu0 %v1180
      %v1676 = vpop.f32.mrf.mxu0
      %v1677 = vadd.f32 0.0, %v1676
      %1678 = vmatmul.f32.gmra.mxu0 %v1183
      %v1679 = vpop.f32.mrf.mxu0
      %v1680 = vadd.f32 0.0, %v1679
      %1681 = vmatmul.f32.gmra.mxu0 %v1186
      %v1682 = vpop.f32.mrf.mxu0
      %v1683 = vadd.f32 0.0, %v1682
      %1684 = vmatmul.f32.gmra.mxu0 %v1189
      %v1685 = vpop.f32.mrf.mxu0
      %v1686 = vadd.f32 0.0, %v1685
      %1687 = vmatmul.f32.gmra.mxu0 %v1192
      %v1688 = vpop.f32.mrf.mxu0
      %v1689 = vadd.f32 0.0, %v1688
      %1690 = vmatmul.f32.gmra.mxu0 %v1195
      %v1691 = vpop.f32.mrf.mxu0
      %v1692 = vadd.f32 0.0, %v1691
      %1693 = vmatmul.f32.gmra.mxu0 %v1198
      %v1694 = vpop.f32.mrf.mxu0
      %v1695 = vadd.f32 0.0, %v1694
      %1696 = vmatmul.f32.gmra.mxu0 %v1201
      %v1697 = vpop.f32.mrf.mxu0
      %v1698 = vadd.f32 0.0, %v1697
      %1699 = vmatmul.f32.gmra.mxu0 %v1204
      %v1700 = vpop.f32.mrf.mxu0
      %v1701 = vadd.f32 0.0, %v1700
      %1702 = vmatmul.f32.gmra.mxu0 %v1207
      %v1703 = vpop.f32.mrf.mxu0
      %v1704 = vadd.f32 0.0, %v1703
      %1705 = vmatmul.f32.gmra.mxu0 %v1210
      %v1706 = vpop.f32.mrf.mxu0
      %v1707 = vadd.f32 0.0, %v1706
      %1708 = vmatmul.f32.gmra.mxu0 %v1213
      %v1709 = vpop.f32.mrf.mxu0
      %v1710 = vadd.f32 0.0, %v1709
      %1711 = vmatmul.f32.gmra.mxu0 %v1216
      %v1712 = vpop.f32.mrf.mxu0
      %v1713 = vadd.f32 0.0, %v1712
      %1714 = vmatmul.f32.gmra.mxu0 %v1219
      %v1715 = vpop.f32.mrf.mxu0
      %v1716 = vadd.f32 0.0, %v1715
      %1717 = vmatmul.f32.gmra.mxu0 %v1222
      %v1718 = vpop.f32.mrf.mxu0
      %v1719 = vadd.f32 0.0, %v1718
      %1720 = vmatmul.f32.gmra.mxu0 %v1225
      %v1721 = vpop.f32.mrf.mxu0
      %v1722 = vadd.f32 0.0, %v1721
      %1723 = vmatmul.f32.gmra.mxu0 %v1228
      %v1724 = vpop.f32.mrf.mxu0
      %v1725 = vadd.f32 0.0, %v1724
      %1726 = vmatmul.f32.gmra.mxu0 %v1231
      %v1727 = vpop.f32.mrf.mxu0
      %v1728 = vadd.f32 0.0, %v1727
      %1729 = vmatmul.f32.gmra.mxu0 %v1234
      %v1730 = vpop.f32.mrf.mxu0
      %v1731 = vadd.f32 0.0, %v1730
      %1732 = vmatmul.f32.gmra.mxu0 %v1237
      %v1733 = vpop.f32.mrf.mxu0
      %v1734 = vadd.f32 0.0, %v1733
      %1735 = vmatmul.f32.gmra.mxu0 %v1240
      %v1736 = vpop.f32.mrf.mxu0
      %v1737 = vadd.f32 0.0, %v1736
      %1738 = vmatmul.f32.gmra.mxu0 %v1243
      %v1739 = vpop.f32.mrf.mxu0
      %v1740 = vadd.f32 0.0, %v1739
      %1741 = vmatmul.f32.gmra.mxu0 %v1246
      %v1742 = vpop.f32.mrf.mxu0
      %v1743 = vadd.f32 0.0, %v1742
      %1744 = vmatmul.f32.gmra.mxu0 %v1249
      %v1745 = vpop.f32.mrf.mxu0
      %v1746 = vadd.f32 0.0, %v1745
      %1747 = vmatmul.f32.gmra.mxu0 %v1252
      %v1748 = vpop.f32.mrf.mxu0
      %v1749 = vadd.f32 0.0, %v1748
      %1750 = vmatmul.f32.gmra.mxu0 %v1255
      %v1751 = vpop.f32.mrf.mxu0
      %v1752 = vadd.f32 0.0, %v1751
      %1753 = vmatmul.f32.gmra.mxu0 %v1258
      %v1754 = vpop.f32.mrf.mxu0
      %v1755 = vadd.f32 0.0, %v1754
      %1756 = vmatmul.f32.gmra.mxu0 %v1261
      %v1757 = vpop.f32.mrf.mxu0
      %v1758 = vadd.f32 0.0, %v1757
      %1759 = vmatmul.f32.gmra.mxu0 %v1264
      %v1760 = vpop.f32.mrf.mxu0
      %v1761 = vadd.f32 0.0, %v1760
      %1762 = vmatmul.f32.gmra.mxu0 %v1267
      %v1763 = vpop.f32.mrf.mxu0
      %v1764 = vadd.f32 0.0, %v1763
      %1765 = vmatmul.f32.gmra.mxu0 %v1270
      %v1766 = vpop.f32.mrf.mxu0
      %v1767 = vadd.f32 0.0, %v1766
      %1768 = vmatmul.f32.gmra.mxu0 %v1273
      %v1769 = vpop.f32.mrf.mxu0
      %v1770 = vadd.f32 0.0, %v1769
      %1771 = vmatmul.f32.gmra.mxu0 %v1276
      %v1772 = vpop.f32.mrf.mxu0
      %v1773 = vadd.f32 0.0, %v1772
      %1774 = vmatmul.f32.gmra.mxu0 %v1279
      %v1775 = vpop.f32.mrf.mxu0
      %v1776 = vadd.f32 0.0, %v1775
      %1777 = vmatmul.f32.gmra.mxu0 %v1282
      %v1778 = vpop.f32.mrf.mxu0
      %v1779 = vadd.f32 0.0, %v1778
      %1780 = vmatmul.f32.gmra.mxu0 %v1285
      %v1781 = vpop.f32.mrf.mxu0
      %v1782 = vadd.f32 0.0, %v1781
      %1783 = vmatmul.f32.gmra.mxu0 %v1288
      %v1784 = vpop.f32.mrf.mxu0
      %v1785 = vadd.f32 0.0, %v1784
      %1786 = vmatmul.f32.gmra.mxu0 %v1291
      %v1787 = vpop.f32.mrf.mxu0
      %v1788 = vadd.f32 0.0, %v1787
      %1789 = vmatmul.f32.gmra.mxu0 %v1294
      %v1790 = vpop.f32.mrf.mxu0
      %v1791 = vadd.f32 0.0, %v1790
      %1792 = vmatmul.f32.gmra.mxu0 %v1297
      %v1793 = vpop.f32.mrf.mxu0
      %v1794 = vadd.f32 0.0, %v1793
      %1795 = vmatmul.f32.gmra.mxu0 %v1300
      %v1796 = vpop.f32.mrf.mxu0
      %v1797 = vadd.f32 0.0, %v1796
      %1798 = vmatmul.f32.gmra.mxu0 %v1303
      %v1799 = vpop.f32.mrf.mxu0
      %v1800 = vadd.f32 0.0, %v1799
      %1801 = vmatmul.f32.gmra.mxu0 %v1306
      %v1802 = vpop.f32.mrf.mxu0
      %v1803 = vadd.f32 0.0, %v1802
      %1804 = vmatmul.f32.gmra.mxu0 %v1309
      %v1805 = vpop.f32.mrf.mxu0
      %v1806 = vadd.f32 0.0, %v1805
      %1807 = vmatmul.f32.gmra.mxu0 %v1312
      %v1808 = vpop.f32.mrf.mxu0
      %v1809 = vadd.f32 0.0, %v1808
      %1810 = vmatmul.f32.gmra.mxu0 %v1315
      %v1811 = vpop.f32.mrf.mxu0
      %v1812 = vadd.f32 0.0, %v1811
      %1813 = vmatmul.f32.gmra.mxu0 %v1318
      %v1814 = vpop.f32.mrf.mxu0
      %v1815 = vadd.f32 0.0, %v1814
      %1816 = vmatmul.f32.gmra.mxu0 %v1321
      %v1817 = vpop.f32.mrf.mxu0
      %v1818 = vadd.f32 0.0, %v1817
      %1819 = vmatmul.f32.gmra.mxu0 %v1324
      %v1820 = vpop.f32.mrf.mxu0
      %v1821 = vadd.f32 0.0, %v1820
      %1822 = vmatmul.f32.gmra.mxu0 %v1327
      %v1823 = vpop.f32.mrf.mxu0
      %v1824 = vadd.f32 0.0, %v1823
      %1825 = vmatmul.f32.gmra.mxu0 %v1330
      %v1826 = vpop.f32.mrf.mxu0
      %v1827 = vadd.f32 0.0, %v1826
      %1828 = vmatmul.f32.gmra.mxu0 %v1333
      %v1829 = vpop.f32.mrf.mxu0
      %v1830 = vadd.f32 0.0, %v1829
      %1831 = vmatmul.f32.gmra.mxu0 %v1336
      %v1832 = vpop.f32.mrf.mxu0
      %v1833 = vadd.f32 0.0, %v1832
      %1834 = vmatmul.f32.gmra.mxu0 %v1339
      %v1835 = vpop.f32.mrf.mxu0
      %v1836 = vadd.f32 0.0, %v1835
      %1837 = vmatmul.f32.gmra.mxu0 %v1342
      %v1838 = vpop.f32.mrf.mxu0
      %v1839 = vadd.f32 0.0, %v1838
      %1840 = vmatmul.f32.gmra.mxu0 %v1345
      %v1841 = vpop.f32.mrf.mxu0
      %v1842 = vadd.f32 0.0, %v1841
      %1843 = vmatmul.f32.gmra.mxu0 %v1348
      %v1844 = vpop.f32.mrf.mxu0
      %v1845 = vadd.f32 0.0, %v1844
      %1846 = vmatmul.f32.gmra.mxu0 %v1351
      %v1847 = vpop.f32.mrf.mxu0
      %v1848 = vadd.f32 0.0, %v1847
      %1849 = vmatmul.f32.gmra.mxu0 %v1354
      %v1850 = vpop.f32.mrf.mxu0
      %v1851 = vadd.f32 0.0, %v1850
      %1852 = vmatmul.f32.gmra.mxu0 %v1357
      %v1853 = vpop.f32.mrf.mxu0
      %v1854 = vadd.f32 0.0, %v1853
      %1855 = vmatmul.f32.gmra.mxu0 %v1360
      %v1856 = vpop.f32.mrf.mxu0
      %v1857 = vadd.f32 0.0, %v1856
      %1858 = vmatmul.f32.gmra.mxu0 %v1363
      %v1859 = vpop.f32.mrf.mxu0
      %v1860 = vadd.f32 0.0, %v1859
      %1861 = vmatmul.f32.gmra.mxu0 %v1366
      %v1862 = vpop.f32.mrf.mxu0
      %v1863 = vadd.f32 0.0, %v1862
      %1864 = vmatmul.f32.gmra.mxu0 %v1369
      %v1865 = vpop.f32.mrf.mxu0
      %v1866 = vadd.f32 0.0, %v1865
      %1867 = vmatmul.f32.gmra.mxu0 %v1372
      %v1868 = vpop.f32.mrf.mxu0
      %v1869 = vadd.f32 0.0, %v1868
      %1870 = vmatmul.f32.gmra.mxu0 %v1375
      %v1871 = vpop.f32.mrf.mxu0
      %v1872 = vadd.f32 0.0, %v1871
      %1873 = vmatmul.f32.gmra.mxu0 %v1378
      %v1874 = vpop.f32.mrf.mxu0
      %v1875 = vadd.f32 0.0, %v1874
      %1876 = vmatmul.f32.gmra.mxu0 %v1381
      %v1877 = vpop.f32.mrf.mxu0
      %v1878 = vadd.f32 0.0, %v1877
      %1879 = vmatmul.f32.gmra.mxu0 %v1384
      %v1880 = vpop.f32.mrf.mxu0
      %v1881 = vadd.f32 0.0, %v1880
      %1882 = vmatmul.f32.gmra.mxu0 %v1387
      %v1883 = vpop.f32.mrf.mxu0
      %v1884 = vadd.f32 0.0, %v1883
      %1885 = vmatmul.f32.gmra.mxu0 %v1390
      %v1886 = vpop.f32.mrf.mxu0
      %v1887 = vadd.f32 0.0, %v1886
      %1888 = vmatmul.f32.gmra.mxu0 %v1393
      %v1889 = vpop.f32.mrf.mxu0
      %v1890 = vadd.f32 0.0, %v1889
      %1891 = vmatmul.f32.gmra.mxu0 %v1396
      %v1892 = vpop.f32.mrf.mxu0
      %v1893 = vadd.f32 0.0, %v1892
      %1894 = vmatmul.f32.gmra.mxu0 %v1399
      %v1895 = vpop.f32.mrf.mxu0
      %v1896 = vadd.f32 0.0, %v1895
      %1897 = vmatmul.f32.gmra.mxu0 %v1402
      %v1898 = vpop.f32.mrf.mxu0
      %v1899 = vadd.f32 0.0, %v1898
      %1900 = vmatmul.f32.gmra.mxu0 %v1405
      %v1901 = vpop.f32.mrf.mxu0
      %v1902 = vadd.f32 0.0, %v1901
      %1903 = vmatmul.f32.gmra.mxu0 %v1408
      %v1904 = vpop.f32.mrf.mxu0
      %v1905 = vadd.f32 0.0, %v1904
      %1906 = vmatmul.f32.gmra.mxu0 %v1411
      %v1907 = vpop.f32.mrf.mxu0
      %v1908 = vadd.f32 0.0, %v1907
      %1909 = vmatmul.f32.gmra.mxu0 %v1414
      %v1910 = vpop.f32.mrf.mxu0
      %v1911 = vadd.f32 0.0, %v1910
      %1912 = vmatmul.f32.gmra.mxu0 %v1417
      %v1913 = vpop.f32.mrf.mxu0
      %v1914 = vadd.f32 0.0, %v1913
      %1915 = vmatmul.f32.gmra.mxu0 %v1420
      %v1916 = vpop.f32.mrf.mxu0
      %v1917 = vadd.f32 0.0, %v1916
      %1918 = vmatmul.f32.gmra.mxu0 %v1423
      %v1919 = vpop.f32.mrf.mxu0
      %v1920 = vadd.f32 0.0, %v1919
      %1921 = vmatmul.f32.gmra.mxu0 %v1426
      %v1922 = vpop.f32.mrf.mxu0
      %v1923 = vadd.f32 0.0, %v1922
      %1924 = vmatmul.f32.gmra.mxu0 %v1429
      %v1925 = vpop.f32.mrf.mxu0
      %v1926 = vadd.f32 0.0, %v1925
      %1927 = vmatmul.f32.gmra.mxu0 %v1432
      %v1928 = vpop.f32.mrf.mxu0
      %v1929 = vadd.f32 0.0, %v1928
      %1930 = vmatmul.f32.gmra.mxu0 %v1435
      %v1931 = vpop.f32.mrf.mxu0
      %v1932 = vadd.f32 0.0, %v1931
      %1933 = vmatmul.f32.gmra.mxu0 %v1438
      %v1934 = vpop.f32.mrf.mxu0
      %v1935 = vadd.f32 0.0, %v1934
      %1936 = vmatmul.f32.gmra.mxu0 %v1441
      %v1937 = vpop.f32.mrf.mxu0
      %v1938 = vadd.f32 0.0, %v1937
      %1939 = vmatmul.f32.gmra.mxu0 %v1444
      %v1940 = vpop.f32.mrf.mxu0
      %v1941 = vadd.f32 0.0, %v1940
      %1942 = vmatmul.f32.gmra.mxu0 %v1447
      %v1943 = vpop.f32.mrf.mxu0
      %v1944 = vadd.f32 0.0, %v1943
      %1945 = vmatmul.f32.gmra.mxu0 %v1450
      %v1946 = vpop.f32.mrf.mxu0
      %v1947 = vadd.f32 0.0, %v1946
      %1948 = vmatmul.f32.gmra.mxu0 %v1453
      %v1949 = vpop.f32.mrf.mxu0
      %v1950 = vadd.f32 0.0, %v1949
      %1951 = vmatmul.f32.gmra.mxu0 %v1456
      %v1952 = vpop.f32.mrf.mxu0
      %v1953 = vadd.f32 0.0, %v1952
      %1954 = vmatmul.f32.gmra.mxu0 %v1459
      %v1955 = vpop.f32.mrf.mxu0
      %v1956 = vadd.f32 0.0, %v1955
      %1957 = vmatmul.f32.gmra.mxu0 %v1462
      %v1958 = vpop.f32.mrf.mxu0
      %v1959 = vadd.f32 0.0, %v1958
      %1960 = vmatmul.f32.gmra.mxu0 %v1465
      %v1961 = vpop.f32.mrf.mxu0
      %v1962 = vadd.f32 0.0, %v1961
      %1963 = vmatmul.f32.gmra.mxu0 %v1468
      %v1964 = vpop.f32.mrf.mxu0
      %v1965 = vadd.f32 0.0, %v1964
      %1966 = vmatmul.f32.gmra.mxu0 %v1471
      %v1967 = vpop.f32.mrf.mxu0
      %v1968 = vadd.f32 0.0, %v1967
      %1969 = vmatmul.f32.gmra.mxu0 %v1474
      %v1970 = vpop.f32.mrf.mxu0
      %v1971 = vadd.f32 0.0, %v1970
      %1972 = vmatmul.f32.gmra.mxu0 %v1477
      %v1973 = vpop.f32.mrf.mxu0
      %v1974 = vadd.f32 0.0, %v1973
      %1975 = vmatmul.f32.gmra.mxu0 %v1480
      %v1976 = vpop.f32.mrf.mxu0
      %v1977 = vadd.f32 0.0, %v1976
      %1978 = vmatmul.f32.gmra.mxu0 %v1483
      %v1979 = vpop.f32.mrf.mxu0
      %v1980 = vadd.f32 0.0, %v1979
      %1981 = vdwg.mxu0
      %1982 = vmatpush.msra.mxu0 0.0
      %1983 = vmatpush.msra.mxu0 0.0
      %1984 = vmatpush.msra.mxu0 %v1489
      %1985 = vmatpush.msra.mxu0 %v1010
      %1986 = vmatpush.msra.mxu0 %v1006
      %1987 = vmatpush.msra.mxu0 %v1002
      %1988 = vmatpush.msra.mxu0 %v998
      %1989 = vmatpush.msra.mxu0 %v994
      %1990 = vmatpush.msra.mxu0 %v990
      %1991 = vmatpush.msra.mxu0 %v986
      %1992 = vmatpush.msra.mxu0 %v982
      %1993 = vmatpush.msra.mxu0 %v978
      %1994 = vmatpush.msra.mxu0 %v974
      %1995 = vmatpush.msra.mxu0 %v970
      %1996 = vmatpush.msra.mxu0 %v966
      %1997 = vmatpush.msra.mxu0 %v962
      %1998 = vmatmul.f32.gmra.mxu0 %v1018
      %v1999 = vpop.f32.mrf.mxu0
      %v2000 = vadd.f32 0.0, %v1999
      %2001 = vmatmul.f32.gmra.mxu0 %v1021
      %v2002 = vpop.f32.mrf.mxu0
      %v2003 = vadd.f32 0.0, %v2002
      %2004 = vmatmul.f32.gmra.mxu0 %v1024
      %v2005 = vpop.f32.mrf.mxu0
      %v2006 = vadd.f32 0.0, %v2005
      %2007 = vmatmul.f32.gmra.mxu0 %v1027
      %v2008 = vpop.f32.mrf.mxu0
      %v2009 = vadd.f32 0.0, %v2008
      %2010 = vmatmul.f32.gmra.mxu0 %v1030
      %v2011 = vpop.f32.mrf.mxu0
      %v2012 = vadd.f32 0.0, %v2011
      %2013 = vmatmul.f32.gmra.mxu0 %v1033
      %v2014 = vpop.f32.mrf.mxu0
      %v2015 = vadd.f32 0.0, %v2014
      %2016 = vmatmul.f32.gmra.mxu0 %v1036
      %v2017 = vpop.f32.mrf.mxu0
      %v2018 = vadd.f32 0.0, %v2017
      %2019 = vmatmul.f32.gmra.mxu0 %v1039
      %v2020 = vpop.f32.mrf.mxu0
      %v2021 = vadd.f32 0.0, %v2020
      %2022 = vmatmul.f32.gmra.mxu0 %v1042
      %v2023 = vpop.f32.mrf.mxu0
      %v2024 = vadd.f32 0.0, %v2023
      %2025 = vmatmul.f32.gmra.mxu0 %v1045
      %v2026 = vpop.f32.mrf.mxu0
      %v2027 = vadd.f32 0.0, %v2026
      %2028 = vmatmul.f32.gmra.mxu0 %v1048
      %v2029 = vpop.f32.mrf.mxu0
      %v2030 = vadd.f32 0.0, %v2029
      %2031 = vmatmul.f32.gmra.mxu0 %v1051
      %v2032 = vpop.f32.mrf.mxu0
      %v2033 = vadd.f32 0.0, %v2032
      %2034 = vmatmul.f32.gmra.mxu0 %v1054
      %v2035 = vpop.f32.mrf.mxu0
      %v2036 = vadd.f32 0.0, %v2035
      %2037 = vmatmul.f32.gmra.mxu0 %v1057
      %v2038 = vpop.f32.mrf.mxu0
      %v2039 = vadd.f32 0.0, %v2038
      %2040 = vmatmul.f32.gmra.mxu0 %v1060
      %v2041 = vpop.f32.mrf.mxu0
      %v2042 = vadd.f32 0.0, %v2041
      %2043 = vmatmul.f32.gmra.mxu0 %v1063
      %v2044 = vpop.f32.mrf.mxu0
      %v2045 = vadd.f32 0.0, %v2044
      %2046 = vmatmul.f32.gmra.mxu0 %v1066
      %v2047 = vpop.f32.mrf.mxu0
      %v2048 = vadd.f32 0.0, %v2047
      %2049 = vmatmul.f32.gmra.mxu0 %v1069
      %v2050 = vpop.f32.mrf.mxu0
      %v2051 = vadd.f32 0.0, %v2050
      %2052 = vmatmul.f32.gmra.mxu0 %v1072
      %v2053 = vpop.f32.mrf.mxu0
      %v2054 = vadd.f32 0.0, %v2053
      %2055 = vmatmul.f32.gmra.mxu0 %v1075
      %v2056 = vpop.f32.mrf.mxu0
      %v2057 = vadd.f32 0.0, %v2056
      %2058 = vmatmul.f32.gmra.mxu0 %v1078
      %v2059 = vpop.f32.mrf.mxu0
      %v2060 = vadd.f32 0.0, %v2059
      %2061 = vmatmul.f32.gmra.mxu0 %v1081
      %v2062 = vpop.f32.mrf.mxu0
      %v2063 = vadd.f32 0.0, %v2062
      %2064 = vmatmul.f32.gmra.mxu0 %v1084
      %v2065 = vpop.f32.mrf.mxu0
      %v2066 = vadd.f32 0.0, %v2065
      %2067 = vmatmul.f32.gmra.mxu0 %v1087
      %v2068 = vpop.f32.mrf.mxu0
      %v2069 = vadd.f32 0.0, %v2068
      %2070 = vmatmul.f32.gmra.mxu0 %v1090
      %v2071 = vpop.f32.mrf.mxu0
      %v2072 = vadd.f32 0.0, %v2071
      %2073 = vmatmul.f32.gmra.mxu0 %v1093
      %v2074 = vpop.f32.mrf.mxu0
      %v2075 = vadd.f32 0.0, %v2074
      %2076 = vmatmul.f32.gmra.mxu0 %v1096
      %v2077 = vpop.f32.mrf.mxu0
      %v2078 = vadd.f32 0.0, %v2077
      %2079 = vmatmul.f32.gmra.mxu0 %v1099
      %v2080 = vpop.f32.mrf.mxu0
      %v2081 = vadd.f32 0.0, %v2080
      %2082 = vmatmul.f32.gmra.mxu0 %v1102
      %v2083 = vpop.f32.mrf.mxu0
      %v2084 = vadd.f32 0.0, %v2083
      %2085 = vmatmul.f32.gmra.mxu0 %v1105
      %v2086 = vpop.f32.mrf.mxu0
      %v2087 = vadd.f32 0.0, %v2086
      %2088 = vmatmul.f32.gmra.mxu0 %v1108
      %v2089 = vpop.f32.mrf.mxu0
      %v2090 = vadd.f32 0.0, %v2089
      %2091 = vmatmul.f32.gmra.mxu0 %v1111
      %v2092 = vpop.f32.mrf.mxu0
      %v2093 = vadd.f32 0.0, %v2092
      %2094 = vmatmul.f32.gmra.mxu0 %v1114
      %v2095 = vpop.f32.mrf.mxu0
      %v2096 = vadd.f32 0.0, %v2095
      %2097 = vmatmul.f32.gmra.mxu0 %v1117
      %v2098 = vpop.f32.mrf.mxu0
      %v2099 = vadd.f32 0.0, %v2098
      %2100 = vmatmul.f32.gmra.mxu0 %v1120
      %v2101 = vpop.f32.mrf.mxu0
      %v2102 = vadd.f32 0.0, %v2101
      %2103 = vmatmul.f32.gmra.mxu0 %v1123
      %v2104 = vpop.f32.mrf.mxu0
      %v2105 = vadd.f32 0.0, %v2104
      %2106 = vmatmul.f32.gmra.mxu0 %v1126
      %v2107 = vpop.f32.mrf.mxu0
      %v2108 = vadd.f32 0.0, %v2107
      %2109 = vmatmul.f32.gmra.mxu0 %v1129
      %v2110 = vpop.f32.mrf.mxu0
      %v2111 = vadd.f32 0.0, %v2110
      %2112 = vmatmul.f32.gmra.mxu0 %v1132
      %v2113 = vpop.f32.mrf.mxu0
      %v2114 = vadd.f32 0.0, %v2113
      %2115 = vmatmul.f32.gmra.mxu0 %v1135
      %v2116 = vpop.f32.mrf.mxu0
      %v2117 = vadd.f32 0.0, %v2116
      %2118 = vmatmul.f32.gmra.mxu0 %v1138
      %v2119 = vpop.f32.mrf.mxu0
      %v2120 = vadd.f32 0.0, %v2119
      %2121 = vmatmul.f32.gmra.mxu0 %v1141
      %v2122 = vpop.f32.mrf.mxu0
      %v2123 = vadd.f32 0.0, %v2122
      %2124 = vmatmul.f32.gmra.mxu0 %v1144
      %v2125 = vpop.f32.mrf.mxu0
      %v2126 = vadd.f32 0.0, %v2125
      %2127 = vmatmul.f32.gmra.mxu0 %v1147
      %v2128 = vpop.f32.mrf.mxu0
      %v2129 = vadd.f32 0.0, %v2128
      %2130 = vmatmul.f32.gmra.mxu0 %v1150
      %v2131 = vpop.f32.mrf.mxu0
      %v2132 = vadd.f32 0.0, %v2131
      %2133 = vmatmul.f32.gmra.mxu0 %v1153
      %v2134 = vpop.f32.mrf.mxu0
      %v2135 = vadd.f32 0.0, %v2134
      %2136 = vmatmul.f32.gmra.mxu0 %v1156
      %v2137 = vpop.f32.mrf.mxu0
      %v2138 = vadd.f32 0.0, %v2137
      %2139 = vmatmul.f32.gmra.mxu0 %v1159
      %v2140 = vpop.f32.mrf.mxu0
      %v2141 = vadd.f32 0.0, %v2140
      %2142 = vmatmul.f32.gmra.mxu0 %v1162
      %v2143 = vpop.f32.mrf.mxu0
      %v2144 = vadd.f32 0.0, %v2143
      %2145 = vmatmul.f32.gmra.mxu0 %v1165
      %v2146 = vpop.f32.mrf.mxu0
      %v2147 = vadd.f32 0.0, %v2146
      %2148 = vmatmul.f32.gmra.mxu0 %v1168
      %v2149 = vpop.f32.mrf.mxu0
      %v2150 = vadd.f32 0.0, %v2149
      %2151 = vmatmul.f32.gmra.mxu0 %v1171
      %v2152 = vpop.f32.mrf.mxu0
      %v2153 = vadd.f32 0.0, %v2152
      %2154 = vmatmul.f32.gmra.mxu0 %v1174
      %v2155 = vpop.f32.mrf.mxu0
      %v2156 = vadd.f32 0.0, %v2155
      %2157 = vmatmul.f32.gmra.mxu0 %v1177
      %v2158 = vpop.f32.mrf.mxu0
      %v2159 = vadd.f32 0.0, %v2158
      %2160 = vmatmul.f32.gmra.mxu0 %v1180
      %v2161 = vpop.f32.mrf.mxu0
      %v2162 = vadd.f32 0.0, %v2161
      %2163 = vmatmul.f32.gmra.mxu0 %v1183
      %v2164 = vpop.f32.mrf.mxu0
      %v2165 = vadd.f32 0.0, %v2164
      %2166 = vmatmul.f32.gmra.mxu0 %v1186
      %v2167 = vpop.f32.mrf.mxu0
      %v2168 = vadd.f32 0.0, %v2167
      %2169 = vmatmul.f32.gmra.mxu0 %v1189
      %v2170 = vpop.f32.mrf.mxu0
      %v2171 = vadd.f32 0.0, %v2170
      %2172 = vmatmul.f32.gmra.mxu0 %v1192
      %v2173 = vpop.f32.mrf.mxu0
      %v2174 = vadd.f32 0.0, %v2173
      %2175 = vmatmul.f32.gmra.mxu0 %v1195
      %v2176 = vpop.f32.mrf.mxu0
      %v2177 = vadd.f32 0.0, %v2176
      %2178 = vmatmul.f32.gmra.mxu0 %v1198
      %v2179 = vpop.f32.mrf.mxu0
      %v2180 = vadd.f32 0.0, %v2179
      %2181 = vmatmul.f32.gmra.mxu0 %v1201
      %v2182 = vpop.f32.mrf.mxu0
      %v2183 = vadd.f32 0.0, %v2182
      %2184 = vmatmul.f32.gmra.mxu0 %v1204
      %v2185 = vpop.f32.mrf.mxu0
      %v2186 = vadd.f32 0.0, %v2185
      %2187 = vmatmul.f32.gmra.mxu0 %v1207
      %v2188 = vpop.f32.mrf.mxu0
      %v2189 = vadd.f32 0.0, %v2188
      %2190 = vmatmul.f32.gmra.mxu0 %v1210
      %v2191 = vpop.f32.mrf.mxu0
      %v2192 = vadd.f32 0.0, %v2191
      %2193 = vmatmul.f32.gmra.mxu0 %v1213
      %v2194 = vpop.f32.mrf.mxu0
      %v2195 = vadd.f32 0.0, %v2194
      %2196 = vmatmul.f32.gmra.mxu0 %v1216
      %v2197 = vpop.f32.mrf.mxu0
      %v2198 = vadd.f32 0.0, %v2197
      %2199 = vmatmul.f32.gmra.mxu0 %v1219
      %v2200 = vpop.f32.mrf.mxu0
      %v2201 = vadd.f32 0.0, %v2200
      %2202 = vmatmul.f32.gmra.mxu0 %v1222
      %v2203 = vpop.f32.mrf.mxu0
      %v2204 = vadd.f32 0.0, %v2203
      %2205 = vmatmul.f32.gmra.mxu0 %v1225
      %v2206 = vpop.f32.mrf.mxu0
      %v2207 = vadd.f32 0.0, %v2206
      %2208 = vmatmul.f32.gmra.mxu0 %v1228
      %v2209 = vpop.f32.mrf.mxu0
      %v2210 = vadd.f32 0.0, %v2209
      %2211 = vmatmul.f32.gmra.mxu0 %v1231
      %v2212 = vpop.f32.mrf.mxu0
      %v2213 = vadd.f32 0.0, %v2212
      %2214 = vmatmul.f32.gmra.mxu0 %v1234
      %v2215 = vpop.f32.mrf.mxu0
      %v2216 = vadd.f32 0.0, %v2215
      %2217 = vmatmul.f32.gmra.mxu0 %v1237
      %v2218 = vpop.f32.mrf.mxu0
      %v2219 = vadd.f32 0.0, %v2218
      %2220 = vmatmul.f32.gmra.mxu0 %v1240
      %v2221 = vpop.f32.mrf.mxu0
      %v2222 = vadd.f32 0.0, %v2221
      %2223 = vmatmul.f32.gmra.mxu0 %v1243
      %v2224 = vpop.f32.mrf.mxu0
      %v2225 = vadd.f32 0.0, %v2224
      %2226 = vmatmul.f32.gmra.mxu0 %v1246
      %v2227 = vpop.f32.mrf.mxu0
      %v2228 = vadd.f32 0.0, %v2227
      %2229 = vmatmul.f32.gmra.mxu0 %v1249
      %v2230 = vpop.f32.mrf.mxu0
      %v2231 = vadd.f32 0.0, %v2230
      %2232 = vmatmul.f32.gmra.mxu0 %v1252
      %v2233 = vpop.f32.mrf.mxu0
      %v2234 = vadd.f32 0.0, %v2233
      %2235 = vmatmul.f32.gmra.mxu0 %v1255
      %v2236 = vpop.f32.mrf.mxu0
      %v2237 = vadd.f32 0.0, %v2236
      %2238 = vmatmul.f32.gmra.mxu0 %v1258
      %v2239 = vpop.f32.mrf.mxu0
      %v2240 = vadd.f32 0.0, %v2239
      %2241 = vmatmul.f32.gmra.mxu0 %v1261
      %v2242 = vpop.f32.mrf.mxu0
      %v2243 = vadd.f32 0.0, %v2242
      %2244 = vmatmul.f32.gmra.mxu0 %v1264
      %v2245 = vpop.f32.mrf.mxu0
      %v2246 = vadd.f32 0.0, %v2245
      %2247 = vmatmul.f32.gmra.mxu0 %v1267
      %v2248 = vpop.f32.mrf.mxu0
      %v2249 = vadd.f32 0.0, %v2248
      %2250 = vmatmul.f32.gmra.mxu0 %v1270
      %v2251 = vpop.f32.mrf.mxu0
      %v2252 = vadd.f32 0.0, %v2251
      %2253 = vmatmul.f32.gmra.mxu0 %v1273
      %v2254 = vpop.f32.mrf.mxu0
      %v2255 = vadd.f32 0.0, %v2254
      %2256 = vmatmul.f32.gmra.mxu0 %v1276
      %v2257 = vpop.f32.mrf.mxu0
      %v2258 = vadd.f32 0.0, %v2257
      %2259 = vmatmul.f32.gmra.mxu0 %v1279
      %v2260 = vpop.f32.mrf.mxu0
      %v2261 = vadd.f32 0.0, %v2260
      %2262 = vmatmul.f32.gmra.mxu0 %v1282
      %v2263 = vpop.f32.mrf.mxu0
      %v2264 = vadd.f32 0.0, %v2263
      %2265 = vmatmul.f32.gmra.mxu0 %v1285
      %v2266 = vpop.f32.mrf.mxu0
      %v2267 = vadd.f32 0.0, %v2266
      %2268 = vmatmul.f32.gmra.mxu0 %v1288
      %v2269 = vpop.f32.mrf.mxu0
      %v2270 = vadd.f32 0.0, %v2269
      %2271 = vmatmul.f32.gmra.mxu0 %v1291
      %v2272 = vpop.f32.mrf.mxu0
      %v2273 = vadd.f32 0.0, %v2272
      %2274 = vmatmul.f32.gmra.mxu0 %v1294
      %v2275 = vpop.f32.mrf.mxu0
      %v2276 = vadd.f32 0.0, %v2275
      %2277 = vmatmul.f32.gmra.mxu0 %v1297
      %v2278 = vpop.f32.mrf.mxu0
      %v2279 = vadd.f32 0.0, %v2278
      %2280 = vmatmul.f32.gmra.mxu0 %v1300
      %v2281 = vpop.f32.mrf.mxu0
      %v2282 = vadd.f32 0.0, %v2281
      %2283 = vmatmul.f32.gmra.mxu0 %v1303
      %v2284 = vpop.f32.mrf.mxu0
      %v2285 = vadd.f32 0.0, %v2284
      %2286 = vmatmul.f32.gmra.mxu0 %v1306
      %v2287 = vpop.f32.mrf.mxu0
      %v2288 = vadd.f32 0.0, %v2287
      %2289 = vmatmul.f32.gmra.mxu0 %v1309
      %v2290 = vpop.f32.mrf.mxu0
      %v2291 = vadd.f32 0.0, %v2290
      %2292 = vmatmul.f32.gmra.mxu0 %v1312
      %v2293 = vpop.f32.mrf.mxu0
      %v2294 = vadd.f32 0.0, %v2293
      %2295 = vmatmul.f32.gmra.mxu0 %v1315
      %v2296 = vpop.f32.mrf.mxu0
      %v2297 = vadd.f32 0.0, %v2296
      %2298 = vmatmul.f32.gmra.mxu0 %v1318
      %v2299 = vpop.f32.mrf.mxu0
      %v2300 = vadd.f32 0.0, %v2299
      %2301 = vmatmul.f32.gmra.mxu0 %v1321
      %v2302 = vpop.f32.mrf.mxu0
      %v2303 = vadd.f32 0.0, %v2302
      %2304 = vmatmul.f32.gmra.mxu0 %v1324
      %v2305 = vpop.f32.mrf.mxu0
      %v2306 = vadd.f32 0.0, %v2305
      %2307 = vmatmul.f32.gmra.mxu0 %v1327
      %v2308 = vpop.f32.mrf.mxu0
      %v2309 = vadd.f32 0.0, %v2308
      %2310 = vmatmul.f32.gmra.mxu0 %v1330
      %v2311 = vpop.f32.mrf.mxu0
      %v2312 = vadd.f32 0.0, %v2311
      %2313 = vmatmul.f32.gmra.mxu0 %v1333
      %v2314 = vpop.f32.mrf.mxu0
      %v2315 = vadd.f32 0.0, %v2314
      %2316 = vmatmul.f32.gmra.mxu0 %v1336
      %v2317 = vpop.f32.mrf.mxu0
      %v2318 = vadd.f32 0.0, %v2317
      %2319 = vmatmul.f32.gmra.mxu0 %v1339
      %v2320 = vpop.f32.mrf.mxu0
      %v2321 = vadd.f32 0.0, %v2320
      %2322 = vmatmul.f32.gmra.mxu0 %v1342
      %v2323 = vpop.f32.mrf.mxu0
      %v2324 = vadd.f32 0.0, %v2323
      %2325 = vmatmul.f32.gmra.mxu0 %v1345
      %v2326 = vpop.f32.mrf.mxu0
      %v2327 = vadd.f32 0.0, %v2326
      %2328 = vmatmul.f32.gmra.mxu0 %v1348
      %v2329 = vpop.f32.mrf.mxu0
      %v2330 = vadd.f32 0.0, %v2329
      %2331 = vmatmul.f32.gmra.mxu0 %v1351
      %v2332 = vpop.f32.mrf.mxu0
      %v2333 = vadd.f32 0.0, %v2332
      %2334 = vmatmul.f32.gmra.mxu0 %v1354
      %v2335 = vpop.f32.mrf.mxu0
      %v2336 = vadd.f32 0.0, %v2335
      %2337 = vmatmul.f32.gmra.mxu0 %v1357
      %v2338 = vpop.f32.mrf.mxu0
      %v2339 = vadd.f32 0.0, %v2338
      %2340 = vmatmul.f32.gmra.mxu0 %v1360
      %v2341 = vpop.f32.mrf.mxu0
      %v2342 = vadd.f32 0.0, %v2341
      %2343 = vmatmul.f32.gmra.mxu0 %v1363
      %v2344 = vpop.f32.mrf.mxu0
      %v2345 = vadd.f32 0.0, %v2344
      %2346 = vmatmul.f32.gmra.mxu0 %v1366
      %v2347 = vpop.f32.mrf.mxu0
      %v2348 = vadd.f32 0.0, %v2347
      %2349 = vmatmul.f32.gmra.mxu0 %v1369
      %v2350 = vpop.f32.mrf.mxu0
      %v2351 = vadd.f32 0.0, %v2350
      %2352 = vmatmul.f32.gmra.mxu0 %v1372
      %v2353 = vpop.f32.mrf.mxu0
      %v2354 = vadd.f32 0.0, %v2353
      %2355 = vmatmul.f32.gmra.mxu0 %v1375
      %v2356 = vpop.f32.mrf.mxu0
      %v2357 = vadd.f32 0.0, %v2356
      %2358 = vmatmul.f32.gmra.mxu0 %v1378
      %v2359 = vpop.f32.mrf.mxu0
      %v2360 = vadd.f32 0.0, %v2359
      %2361 = vmatmul.f32.gmra.mxu0 %v1381
      %v2362 = vpop.f32.mrf.mxu0
      %v2363 = vadd.f32 0.0, %v2362
      %2364 = vmatmul.f32.gmra.mxu0 %v1384
      %v2365 = vpop.f32.mrf.mxu0
      %v2366 = vadd.f32 0.0, %v2365
      %2367 = vmatmul.f32.gmra.mxu0 %v1387
      %v2368 = vpop.f32.mrf.mxu0
      %v2369 = vadd.f32 0.0, %v2368
      %2370 = vmatmul.f32.gmra.mxu0 %v1390
      %v2371 = vpop.f32.mrf.mxu0
      %v2372 = vadd.f32 0.0, %v2371
      %2373 = vmatmul.f32.gmra.mxu0 %v1393
      %v2374 = vpop.f32.mrf.mxu0
      %v2375 = vadd.f32 0.0, %v2374
      %2376 = vmatmul.f32.gmra.mxu0 %v1396
      %v2377 = vpop.f32.mrf.mxu0
      %v2378 = vadd.f32 0.0, %v2377
      %2379 = vmatmul.f32.gmra.mxu0 %v1399
      %v2380 = vpop.f32.mrf.mxu0
      %v2381 = vadd.f32 0.0, %v2380
      %2382 = vmatmul.f32.gmra.mxu0 %v1402
      %v2383 = vpop.f32.mrf.mxu0
      %v2384 = vadd.f32 0.0, %v2383
      %2385 = vmatmul.f32.gmra.mxu0 %v1405
      %v2386 = vpop.f32.mrf.mxu0
      %v2387 = vadd.f32 0.0, %v2386
      %2388 = vmatmul.f32.gmra.mxu0 %v1408
      %v2389 = vpop.f32.mrf.mxu0
      %v2390 = vadd.f32 0.0, %v2389
      %2391 = vmatmul.f32.gmra.mxu0 %v1411
      %v2392 = vpop.f32.mrf.mxu0
      %v2393 = vadd.f32 0.0, %v2392
      %2394 = vmatmul.f32.gmra.mxu0 %v1414
      %v2395 = vpop.f32.mrf.mxu0
      %v2396 = vadd.f32 0.0, %v2395
      %2397 = vmatmul.f32.gmra.mxu0 %v1417
      %v2398 = vpop.f32.mrf.mxu0
      %v2399 = vadd.f32 0.0, %v2398
      %2400 = vmatmul.f32.gmra.mxu0 %v1420
      %v2401 = vpop.f32.mrf.mxu0
      %v2402 = vadd.f32 0.0, %v2401
      %2403 = vmatmul.f32.gmra.mxu0 %v1423
      %v2404 = vpop.f32.mrf.mxu0
      %v2405 = vadd.f32 0.0, %v2404
      %2406 = vmatmul.f32.gmra.mxu0 %v1426
      %v2407 = vpop.f32.mrf.mxu0
      %v2408 = vadd.f32 0.0, %v2407
      %2409 = vmatmul.f32.gmra.mxu0 %v1429
      %v2410 = vpop.f32.mrf.mxu0
      %v2411 = vadd.f32 0.0, %v2410
      %2412 = vmatmul.f32.gmra.mxu0 %v1432
      %v2413 = vpop.f32.mrf.mxu0
      %v2414 = vadd.f32 0.0, %v2413
      %2415 = vmatmul.f32.gmra.mxu0 %v1435
      %v2416 = vpop.f32.mrf.mxu0
      %v2417 = vadd.f32 0.0, %v2416
      %2418 = vmatmul.f32.gmra.mxu0 %v1438
      %v2419 = vpop.f32.mrf.mxu0
      %v2420 = vadd.f32 0.0, %v2419
      %2421 = vmatmul.f32.gmra.mxu0 %v1441
      %v2422 = vpop.f32.mrf.mxu0
      %v2423 = vadd.f32 0.0, %v2422
      %2424 = vmatmul.f32.gmra.mxu0 %v1444
      %v2425 = vpop.f32.mrf.mxu0
      %v2426 = vadd.f32 0.0, %v2425
      %2427 = vmatmul.f32.gmra.mxu0 %v1447
      %v2428 = vpop.f32.mrf.mxu0
      %v2429 = vadd.f32 0.0, %v2428
      %2430 = vmatmul.f32.gmra.mxu0 %v1450
      %v2431 = vpop.f32.mrf.mxu0
      %v2432 = vadd.f32 0.0, %v2431
      %2433 = vmatmul.f32.gmra.mxu0 %v1453
      %v2434 = vpop.f32.mrf.mxu0
      %v2435 = vadd.f32 0.0, %v2434
      %2436 = vmatmul.f32.gmra.mxu0 %v1456
      %v2437 = vpop.f32.mrf.mxu0
      %v2438 = vadd.f32 0.0, %v2437
      %2439 = vmatmul.f32.gmra.mxu0 %v1459
      %v2440 = vpop.f32.mrf.mxu0
      %v2441 = vadd.f32 0.0, %v2440
      %2442 = vmatmul.f32.gmra.mxu0 %v1462
      %v2443 = vpop.f32.mrf.mxu0
      %v2444 = vadd.f32 0.0, %v2443
      %2445 = vmatmul.f32.gmra.mxu0 %v1465
      %v2446 = vpop.f32.mrf.mxu0
      %v2447 = vadd.f32 0.0, %v2446
      %2448 = vmatmul.f32.gmra.mxu0 %v1468
      %v2449 = vpop.f32.mrf.mxu0
      %v2450 = vadd.f32 0.0, %v2449
      %2451 = vmatmul.f32.gmra.mxu0 %v1471
      %v2452 = vpop.f32.mrf.mxu0
      %v2453 = vadd.f32 0.0, %v2452
      %2454 = vmatmul.f32.gmra.mxu0 %v1474
      %v2455 = vpop.f32.mrf.mxu0
      %v2456 = vadd.f32 0.0, %v2455
      %2457 = vmatmul.f32.gmra.mxu0 %v1477
      %v2458 = vpop.f32.mrf.mxu0
      %v2459 = vadd.f32 0.0, %v2458
      %2460 = vmatmul.f32.gmra.mxu0 %v1480
      %v2461 = vpop.f32.mrf.mxu0
      %v2462 = vadd.f32 0.0, %v2461
      %2463 = vmatmul.f32.gmra.mxu0 %v1483
      %v2464 = vpop.f32.mrf.mxu0
      %v2465 = vadd.f32 0.0, %v2464
      %2466 = vdwg.mxu0
      %2467 = vmatpush.msra.mxu0 0.0
      %2468 = vmatpush.msra.mxu0 0.0
      %2469 = vmatpush.msra.mxu0 %v1492
      %2470 = vmatpush.msra.mxu0 %v1011
      %2471 = vmatpush.msra.mxu0 %v1007
      %2472 = vmatpush.msra.mxu0 %v1003
      %2473 = vmatpush.msra.mxu0 %v999
      %2474 = vmatpush.msra.mxu0 %v995
      %2475 = vmatpush.msra.mxu0 %v991
      %2476 = vmatpush.msra.mxu0 %v987
      %2477 = vmatpush.msra.mxu0 %v983
      %2478 = vmatpush.msra.mxu0 %v979
      %2479 = vmatpush.msra.mxu0 %v975
      %2480 = vmatpush.msra.mxu0 %v971
      %2481 = vmatpush.msra.mxu0 %v967
      %2482 = vmatpush.msra.mxu0 %v963
      %2483 = vmatmul.f32.gmra.mxu0 %v1018
      %v2484 = vpop.f32.mrf.mxu0
      %v2485 = vadd.f32 0.0, %v2484
      %2486 = vmatmul.f32.gmra.mxu0 %v1021
      %v2487 = vpop.f32.mrf.mxu0
      %v2488 = vadd.f32 0.0, %v2487
      %2489 = vmatmul.f32.gmra.mxu0 %v1024
      %v2490 = vpop.f32.mrf.mxu0
      %v2491 = vadd.f32 0.0, %v2490
      %2492 = vmatmul.f32.gmra.mxu0 %v1027
      %v2493 = vpop.f32.mrf.mxu0
      %v2494 = vadd.f32 0.0, %v2493
      %2495 = vmatmul.f32.gmra.mxu0 %v1030
      %v2496 = vpop.f32.mrf.mxu0
      %v2497 = vadd.f32 0.0, %v2496
      %2498 = vmatmul.f32.gmra.mxu0 %v1033
      %v2499 = vpop.f32.mrf.mxu0
      %v2500 = vadd.f32 0.0, %v2499
      %2501 = vmatmul.f32.gmra.mxu0 %v1036
      %v2502 = vpop.f32.mrf.mxu0
      %v2503 = vadd.f32 0.0, %v2502
      %2504 = vmatmul.f32.gmra.mxu0 %v1039
      %v2505 = vpop.f32.mrf.mxu0
      %v2506 = vadd.f32 0.0, %v2505
      %2507 = vmatmul.f32.gmra.mxu0 %v1042
      %v2508 = vpop.f32.mrf.mxu0
      %v2509 = vadd.f32 0.0, %v2508
      %2510 = vmatmul.f32.gmra.mxu0 %v1045
      %v2511 = vpop.f32.mrf.mxu0
      %v2512 = vadd.f32 0.0, %v2511
      %2513 = vmatmul.f32.gmra.mxu0 %v1048
      %v2514 = vpop.f32.mrf.mxu0
      %v2515 = vadd.f32 0.0, %v2514
      %2516 = vmatmul.f32.gmra.mxu0 %v1051
      %v2517 = vpop.f32.mrf.mxu0
      %v2518 = vadd.f32 0.0, %v2517
      %2519 = vmatmul.f32.gmra.mxu0 %v1054
      %v2520 = vpop.f32.mrf.mxu0
      %v2521 = vadd.f32 0.0, %v2520
      %2522 = vmatmul.f32.gmra.mxu0 %v1057
      %v2523 = vpop.f32.mrf.mxu0
      %v2524 = vadd.f32 0.0, %v2523
      %2525 = vmatmul.f32.gmra.mxu0 %v1060
      %v2526 = vpop.f32.mrf.mxu0
      %v2527 = vadd.f32 0.0, %v2526
      %2528 = vmatmul.f32.gmra.mxu0 %v1063
      %v2529 = vpop.f32.mrf.mxu0
      %v2530 = vadd.f32 0.0, %v2529
      %2531 = vmatmul.f32.gmra.mxu0 %v1066
      %v2532 = vpop.f32.mrf.mxu0
      %v2533 = vadd.f32 0.0, %v2532
      %2534 = vmatmul.f32.gmra.mxu0 %v1069
      %v2535 = vpop.f32.mrf.mxu0
      %v2536 = vadd.f32 0.0, %v2535
      %2537 = vmatmul.f32.gmra.mxu0 %v1072
      %v2538 = vpop.f32.mrf.mxu0
      %v2539 = vadd.f32 0.0, %v2538
      %2540 = vmatmul.f32.gmra.mxu0 %v1075
      %v2541 = vpop.f32.mrf.mxu0
      %v2542 = vadd.f32 0.0, %v2541
      %2543 = vmatmul.f32.gmra.mxu0 %v1078
      %v2544 = vpop.f32.mrf.mxu0
      %v2545 = vadd.f32 0.0, %v2544
      %2546 = vmatmul.f32.gmra.mxu0 %v1081
      %v2547 = vpop.f32.mrf.mxu0
      %v2548 = vadd.f32 0.0, %v2547
      %2549 = vmatmul.f32.gmra.mxu0 %v1084
      %v2550 = vpop.f32.mrf.mxu0
      %v2551 = vadd.f32 0.0, %v2550
      %2552 = vmatmul.f32.gmra.mxu0 %v1087
      %v2553 = vpop.f32.mrf.mxu0
      %v2554 = vadd.f32 0.0, %v2553
      %2555 = vmatmul.f32.gmra.mxu0 %v1090
      %v2556 = vpop.f32.mrf.mxu0
      %v2557 = vadd.f32 0.0, %v2556
      %2558 = vmatmul.f32.gmra.mxu0 %v1093
      %v2559 = vpop.f32.mrf.mxu0
      %v2560 = vadd.f32 0.0, %v2559
      %2561 = vmatmul.f32.gmra.mxu0 %v1096
      %v2562 = vpop.f32.mrf.mxu0
      %v2563 = vadd.f32 0.0, %v2562
      %2564 = vmatmul.f32.gmra.mxu0 %v1099
      %v2565 = vpop.f32.mrf.mxu0
      %v2566 = vadd.f32 0.0, %v2565
      %2567 = vmatmul.f32.gmra.mxu0 %v1102
      %v2568 = vpop.f32.mrf.mxu0
      %v2569 = vadd.f32 0.0, %v2568
      %2570 = vmatmul.f32.gmra.mxu0 %v1105
      %v2571 = vpop.f32.mrf.mxu0
      %v2572 = vadd.f32 0.0, %v2571
      %2573 = vmatmul.f32.gmra.mxu0 %v1108
      %v2574 = vpop.f32.mrf.mxu0
      %v2575 = vadd.f32 0.0, %v2574
      %2576 = vmatmul.f32.gmra.mxu0 %v1111
      %v2577 = vpop.f32.mrf.mxu0
      %v2578 = vadd.f32 0.0, %v2577
      %2579 = vmatmul.f32.gmra.mxu0 %v1114
      %v2580 = vpop.f32.mrf.mxu0
      %v2581 = vadd.f32 0.0, %v2580
      %2582 = vmatmul.f32.gmra.mxu0 %v1117
      %v2583 = vpop.f32.mrf.mxu0
      %v2584 = vadd.f32 0.0, %v2583
      %2585 = vmatmul.f32.gmra.mxu0 %v1120
      %v2586 = vpop.f32.mrf.mxu0
      %v2587 = vadd.f32 0.0, %v2586
      %2588 = vmatmul.f32.gmra.mxu0 %v1123
      %v2589 = vpop.f32.mrf.mxu0
      %v2590 = vadd.f32 0.0, %v2589
      %2591 = vmatmul.f32.gmra.mxu0 %v1126
      %v2592 = vpop.f32.mrf.mxu0
      %v2593 = vadd.f32 0.0, %v2592
      %2594 = vmatmul.f32.gmra.mxu0 %v1129
      %v2595 = vpop.f32.mrf.mxu0
      %v2596 = vadd.f32 0.0, %v2595
      %2597 = vmatmul.f32.gmra.mxu0 %v1132
      %v2598 = vpop.f32.mrf.mxu0
      %v2599 = vadd.f32 0.0, %v2598
      %2600 = vmatmul.f32.gmra.mxu0 %v1135
      %v2601 = vpop.f32.mrf.mxu0
      %v2602 = vadd.f32 0.0, %v2601
      %2603 = vmatmul.f32.gmra.mxu0 %v1138
      %v2604 = vpop.f32.mrf.mxu0
      %v2605 = vadd.f32 0.0, %v2604
      %2606 = vmatmul.f32.gmra.mxu0 %v1141
      %v2607 = vpop.f32.mrf.mxu0
      %v2608 = vadd.f32 0.0, %v2607
      %2609 = vmatmul.f32.gmra.mxu0 %v1144
      %v2610 = vpop.f32.mrf.mxu0
      %v2611 = vadd.f32 0.0, %v2610
      %2612 = vmatmul.f32.gmra.mxu0 %v1147
      %v2613 = vpop.f32.mrf.mxu0
      %v2614 = vadd.f32 0.0, %v2613
      %2615 = vmatmul.f32.gmra.mxu0 %v1150
      %v2616 = vpop.f32.mrf.mxu0
      %v2617 = vadd.f32 0.0, %v2616
      %2618 = vmatmul.f32.gmra.mxu0 %v1153
      %v2619 = vpop.f32.mrf.mxu0
      %v2620 = vadd.f32 0.0, %v2619
      %2621 = vmatmul.f32.gmra.mxu0 %v1156
      %v2622 = vpop.f32.mrf.mxu0
      %v2623 = vadd.f32 0.0, %v2622
      %2624 = vmatmul.f32.gmra.mxu0 %v1159
      %v2625 = vpop.f32.mrf.mxu0
      %v2626 = vadd.f32 0.0, %v2625
      %2627 = vmatmul.f32.gmra.mxu0 %v1162
      %v2628 = vpop.f32.mrf.mxu0
      %v2629 = vadd.f32 0.0, %v2628
      %2630 = vmatmul.f32.gmra.mxu0 %v1165
      %v2631 = vpop.f32.mrf.mxu0
      %v2632 = vadd.f32 0.0, %v2631
      %2633 = vmatmul.f32.gmra.mxu0 %v1168
      %v2634 = vpop.f32.mrf.mxu0
      %v2635 = vadd.f32 0.0, %v2634
      %2636 = vmatmul.f32.gmra.mxu0 %v1171
      %v2637 = vpop.f32.mrf.mxu0
      %v2638 = vadd.f32 0.0, %v2637
      %2639 = vmatmul.f32.gmra.mxu0 %v1174
      %v2640 = vpop.f32.mrf.mxu0
      %v2641 = vadd.f32 0.0, %v2640
      %2642 = vmatmul.f32.gmra.mxu0 %v1177
      %v2643 = vpop.f32.mrf.mxu0
      %v2644 = vadd.f32 0.0, %v2643
      %2645 = vmatmul.f32.gmra.mxu0 %v1180
      %v2646 = vpop.f32.mrf.mxu0
      %v2647 = vadd.f32 0.0, %v2646
      %2648 = vmatmul.f32.gmra.mxu0 %v1183
      %v2649 = vpop.f32.mrf.mxu0
      %v2650 = vadd.f32 0.0, %v2649
      %2651 = vmatmul.f32.gmra.mxu0 %v1186
      %v2652 = vpop.f32.mrf.mxu0
      %v2653 = vadd.f32 0.0, %v2652
      %2654 = vmatmul.f32.gmra.mxu0 %v1189
      %v2655 = vpop.f32.mrf.mxu0
      %v2656 = vadd.f32 0.0, %v2655
      %2657 = vmatmul.f32.gmra.mxu0 %v1192
      %v2658 = vpop.f32.mrf.mxu0
      %v2659 = vadd.f32 0.0, %v2658
      %2660 = vmatmul.f32.gmra.mxu0 %v1195
      %v2661 = vpop.f32.mrf.mxu0
      %v2662 = vadd.f32 0.0, %v2661
      %2663 = vmatmul.f32.gmra.mxu0 %v1198
      %v2664 = vpop.f32.mrf.mxu0
      %v2665 = vadd.f32 0.0, %v2664
      %2666 = vmatmul.f32.gmra.mxu0 %v1201
      %v2667 = vpop.f32.mrf.mxu0
      %v2668 = vadd.f32 0.0, %v2667
      %2669 = vmatmul.f32.gmra.mxu0 %v1204
      %v2670 = vpop.f32.mrf.mxu0
      %v2671 = vadd.f32 0.0, %v2670
      %2672 = vmatmul.f32.gmra.mxu0 %v1207
      %v2673 = vpop.f32.mrf.mxu0
      %v2674 = vadd.f32 0.0, %v2673
      %2675 = vmatmul.f32.gmra.mxu0 %v1210
      %v2676 = vpop.f32.mrf.mxu0
      %v2677 = vadd.f32 0.0, %v2676
      %2678 = vmatmul.f32.gmra.mxu0 %v1213
      %v2679 = vpop.f32.mrf.mxu0
      %v2680 = vadd.f32 0.0, %v2679
      %2681 = vmatmul.f32.gmra.mxu0 %v1216
      %v2682 = vpop.f32.mrf.mxu0
      %v2683 = vadd.f32 0.0, %v2682
      %2684 = vmatmul.f32.gmra.mxu0 %v1219
      %v2685 = vpop.f32.mrf.mxu0
      %v2686 = vadd.f32 0.0, %v2685
      %2687 = vmatmul.f32.gmra.mxu0 %v1222
      %v2688 = vpop.f32.mrf.mxu0
      %v2689 = vadd.f32 0.0, %v2688
      %2690 = vmatmul.f32.gmra.mxu0 %v1225
      %v2691 = vpop.f32.mrf.mxu0
      %v2692 = vadd.f32 0.0, %v2691
      %2693 = vmatmul.f32.gmra.mxu0 %v1228
      %v2694 = vpop.f32.mrf.mxu0
      %v2695 = vadd.f32 0.0, %v2694
      %2696 = vmatmul.f32.gmra.mxu0 %v1231
      %v2697 = vpop.f32.mrf.mxu0
      %v2698 = vadd.f32 0.0, %v2697
      %2699 = vmatmul.f32.gmra.mxu0 %v1234
      %v2700 = vpop.f32.mrf.mxu0
      %v2701 = vadd.f32 0.0, %v2700
      %2702 = vmatmul.f32.gmra.mxu0 %v1237
      %v2703 = vpop.f32.mrf.mxu0
      %v2704 = vadd.f32 0.0, %v2703
      %2705 = vmatmul.f32.gmra.mxu0 %v1240
      %v2706 = vpop.f32.mrf.mxu0
      %v2707 = vadd.f32 0.0, %v2706
      %2708 = vmatmul.f32.gmra.mxu0 %v1243
      %v2709 = vpop.f32.mrf.mxu0
      %v2710 = vadd.f32 0.0, %v2709
      %2711 = vmatmul.f32.gmra.mxu0 %v1246
      %v2712 = vpop.f32.mrf.mxu0
      %v2713 = vadd.f32 0.0, %v2712
      %2714 = vmatmul.f32.gmra.mxu0 %v1249
      %v2715 = vpop.f32.mrf.mxu0
      %v2716 = vadd.f32 0.0, %v2715
      %2717 = vmatmul.f32.gmra.mxu0 %v1252
      %v2718 = vpop.f32.mrf.mxu0
      %v2719 = vadd.f32 0.0, %v2718
      %2720 = vmatmul.f32.gmra.mxu0 %v1255
      %v2721 = vpop.f32.mrf.mxu0
      %v2722 = vadd.f32 0.0, %v2721
      %2723 = vmatmul.f32.gmra.mxu0 %v1258
      %v2724 = vpop.f32.mrf.mxu0
      %v2725 = vadd.f32 0.0, %v2724
      %2726 = vmatmul.f32.gmra.mxu0 %v1261
      %v2727 = vpop.f32.mrf.mxu0
      %v2728 = vadd.f32 0.0, %v2727
      %2729 = vmatmul.f32.gmra.mxu0 %v1264
      %v2730 = vpop.f32.mrf.mxu0
      %v2731 = vadd.f32 0.0, %v2730
      %2732 = vmatmul.f32.gmra.mxu0 %v1267
      %v2733 = vpop.f32.mrf.mxu0
      %v2734 = vadd.f32 0.0, %v2733
      %2735 = vmatmul.f32.gmra.mxu0 %v1270
      %v2736 = vpop.f32.mrf.mxu0
      %v2737 = vadd.f32 0.0, %v2736
      %2738 = vmatmul.f32.gmra.mxu0 %v1273
      %v2739 = vpop.f32.mrf.mxu0
      %v2740 = vadd.f32 0.0, %v2739
      %2741 = vmatmul.f32.gmra.mxu0 %v1276
      %v2742 = vpop.f32.mrf.mxu0
      %v2743 = vadd.f32 0.0, %v2742
      %2744 = vmatmul.f32.gmra.mxu0 %v1279
      %v2745 = vpop.f32.mrf.mxu0
      %v2746 = vadd.f32 0.0, %v2745
      %2747 = vmatmul.f32.gmra.mxu0 %v1282
      %v2748 = vpop.f32.mrf.mxu0
      %v2749 = vadd.f32 0.0, %v2748
      %2750 = vmatmul.f32.gmra.mxu0 %v1285
      %v2751 = vpop.f32.mrf.mxu0
      %v2752 = vadd.f32 0.0, %v2751
      %2753 = vmatmul.f32.gmra.mxu0 %v1288
      %v2754 = vpop.f32.mrf.mxu0
      %v2755 = vadd.f32 0.0, %v2754
      %2756 = vmatmul.f32.gmra.mxu0 %v1291
      %v2757 = vpop.f32.mrf.mxu0
      %v2758 = vadd.f32 0.0, %v2757
      %2759 = vmatmul.f32.gmra.mxu0 %v1294
      %v2760 = vpop.f32.mrf.mxu0
      %v2761 = vadd.f32 0.0, %v2760
      %2762 = vmatmul.f32.gmra.mxu0 %v1297
      %v2763 = vpop.f32.mrf.mxu0
      %v2764 = vadd.f32 0.0, %v2763
      %2765 = vmatmul.f32.gmra.mxu0 %v1300
      %v2766 = vpop.f32.mrf.mxu0
      %v2767 = vadd.f32 0.0, %v2766
      %2768 = vmatmul.f32.gmra.mxu0 %v1303
      %v2769 = vpop.f32.mrf.mxu0
      %v2770 = vadd.f32 0.0, %v2769
      %2771 = vmatmul.f32.gmra.mxu0 %v1306
      %v2772 = vpop.f32.mrf.mxu0
      %v2773 = vadd.f32 0.0, %v2772
      %2774 = vmatmul.f32.gmra.mxu0 %v1309
      %v2775 = vpop.f32.mrf.mxu0
      %v2776 = vadd.f32 0.0, %v2775
      %2777 = vmatmul.f32.gmra.mxu0 %v1312
      %v2778 = vpop.f32.mrf.mxu0
      %v2779 = vadd.f32 0.0, %v2778
      %2780 = vmatmul.f32.gmra.mxu0 %v1315
      %v2781 = vpop.f32.mrf.mxu0
      %v2782 = vadd.f32 0.0, %v2781
      %2783 = vmatmul.f32.gmra.mxu0 %v1318
      %v2784 = vpop.f32.mrf.mxu0
      %v2785 = vadd.f32 0.0, %v2784
      %2786 = vmatmul.f32.gmra.mxu0 %v1321
      %v2787 = vpop.f32.mrf.mxu0
      %v2788 = vadd.f32 0.0, %v2787
      %2789 = vmatmul.f32.gmra.mxu0 %v1324
      %v2790 = vpop.f32.mrf.mxu0
      %v2791 = vadd.f32 0.0, %v2790
      %2792 = vmatmul.f32.gmra.mxu0 %v1327
      %v2793 = vpop.f32.mrf.mxu0
      %v2794 = vadd.f32 0.0, %v2793
      %2795 = vmatmul.f32.gmra.mxu0 %v1330
      %v2796 = vpop.f32.mrf.mxu0
      %v2797 = vadd.f32 0.0, %v2796
      %2798 = vmatmul.f32.gmra.mxu0 %v1333
      %v2799 = vpop.f32.mrf.mxu0
      %v2800 = vadd.f32 0.0, %v2799
      %2801 = vmatmul.f32.gmra.mxu0 %v1336
      %v2802 = vpop.f32.mrf.mxu0
      %v2803 = vadd.f32 0.0, %v2802
      %2804 = vmatmul.f32.gmra.mxu0 %v1339
      %v2805 = vpop.f32.mrf.mxu0
      %v2806 = vadd.f32 0.0, %v2805
      %2807 = vmatmul.f32.gmra.mxu0 %v1342
      %v2808 = vpop.f32.mrf.mxu0
      %v2809 = vadd.f32 0.0, %v2808
      %2810 = vmatmul.f32.gmra.mxu0 %v1345
      %v2811 = vpop.f32.mrf.mxu0
      %v2812 = vadd.f32 0.0, %v2811
      %2813 = vmatmul.f32.gmra.mxu0 %v1348
      %v2814 = vpop.f32.mrf.mxu0
      %v2815 = vadd.f32 0.0, %v2814
      %2816 = vmatmul.f32.gmra.mxu0 %v1351
      %v2817 = vpop.f32.mrf.mxu0
      %v2818 = vadd.f32 0.0, %v2817
      %2819 = vmatmul.f32.gmra.mxu0 %v1354
      %v2820 = vpop.f32.mrf.mxu0
      %v2821 = vadd.f32 0.0, %v2820
      %2822 = vmatmul.f32.gmra.mxu0 %v1357
      %v2823 = vpop.f32.mrf.mxu0
      %v2824 = vadd.f32 0.0, %v2823
      %2825 = vmatmul.f32.gmra.mxu0 %v1360
      %v2826 = vpop.f32.mrf.mxu0
      %v2827 = vadd.f32 0.0, %v2826
      %2828 = vmatmul.f32.gmra.mxu0 %v1363
      %v2829 = vpop.f32.mrf.mxu0
      %v2830 = vadd.f32 0.0, %v2829
      %2831 = vmatmul.f32.gmra.mxu0 %v1366
      %v2832 = vpop.f32.mrf.mxu0
      %v2833 = vadd.f32 0.0, %v2832
      %2834 = vmatmul.f32.gmra.mxu0 %v1369
      %v2835 = vpop.f32.mrf.mxu0
      %v2836 = vadd.f32 0.0, %v2835
      %2837 = vmatmul.f32.gmra.mxu0 %v1372
      %v2838 = vpop.f32.mrf.mxu0
      %v2839 = vadd.f32 0.0, %v2838
      %2840 = vmatmul.f32.gmra.mxu0 %v1375
      %v2841 = vpop.f32.mrf.mxu0
      %v2842 = vadd.f32 0.0, %v2841
      %2843 = vmatmul.f32.gmra.mxu0 %v1378
      %v2844 = vpop.f32.mrf.mxu0
      %v2845 = vadd.f32 0.0, %v2844
      %2846 = vmatmul.f32.gmra.mxu0 %v1381
      %v2847 = vpop.f32.mrf.mxu0
      %v2848 = vadd.f32 0.0, %v2847
      %2849 = vmatmul.f32.gmra.mxu0 %v1384
      %v2850 = vpop.f32.mrf.mxu0
      %v2851 = vadd.f32 0.0, %v2850
      %2852 = vmatmul.f32.gmra.mxu0 %v1387
      %v2853 = vpop.f32.mrf.mxu0
      %v2854 = vadd.f32 0.0, %v2853
      %2855 = vmatmul.f32.gmra.mxu0 %v1390
      %v2856 = vpop.f32.mrf.mxu0
      %v2857 = vadd.f32 0.0, %v2856
      %2858 = vmatmul.f32.gmra.mxu0 %v1393
      %v2859 = vpop.f32.mrf.mxu0
      %v2860 = vadd.f32 0.0, %v2859
      %2861 = vmatmul.f32.gmra.mxu0 %v1396
      %v2862 = vpop.f32.mrf.mxu0
      %v2863 = vadd.f32 0.0, %v2862
      %2864 = vmatmul.f32.gmra.mxu0 %v1399
      %v2865 = vpop.f32.mrf.mxu0
      %v2866 = vadd.f32 0.0, %v2865
      %2867 = vmatmul.f32.gmra.mxu0 %v1402
      %v2868 = vpop.f32.mrf.mxu0
      %v2869 = vadd.f32 0.0, %v2868
      %2870 = vmatmul.f32.gmra.mxu0 %v1405
      %v2871 = vpop.f32.mrf.mxu0
      %v2872 = vadd.f32 0.0, %v2871
      %2873 = vmatmul.f32.gmra.mxu0 %v1408
      %v2874 = vpop.f32.mrf.mxu0
      %v2875 = vadd.f32 0.0, %v2874
      %2876 = vmatmul.f32.gmra.mxu0 %v1411
      %v2877 = vpop.f32.mrf.mxu0
      %v2878 = vadd.f32 0.0, %v2877
      %2879 = vmatmul.f32.gmra.mxu0 %v1414
      %v2880 = vpop.f32.mrf.mxu0
      %v2881 = vadd.f32 0.0, %v2880
      %2882 = vmatmul.f32.gmra.mxu0 %v1417
      %v2883 = vpop.f32.mrf.mxu0
      %v2884 = vadd.f32 0.0, %v2883
      %2885 = vmatmul.f32.gmra.mxu0 %v1420
      %v2886 = vpop.f32.mrf.mxu0
      %v2887 = vadd.f32 0.0, %v2886
      %2888 = vmatmul.f32.gmra.mxu0 %v1423
      %v2889 = vpop.f32.mrf.mxu0
      %v2890 = vadd.f32 0.0, %v2889
      %2891 = vmatmul.f32.gmra.mxu0 %v1426
      %v2892 = vpop.f32.mrf.mxu0
      %v2893 = vadd.f32 0.0, %v2892
      %2894 = vmatmul.f32.gmra.mxu0 %v1429
      %v2895 = vpop.f32.mrf.mxu0
      %v2896 = vadd.f32 0.0, %v2895
      %2897 = vmatmul.f32.gmra.mxu0 %v1432
      %v2898 = vpop.f32.mrf.mxu0
      %v2899 = vadd.f32 0.0, %v2898
      %2900 = vmatmul.f32.gmra.mxu0 %v1435
      %v2901 = vpop.f32.mrf.mxu0
      %v2902 = vadd.f32 0.0, %v2901
      %2903 = vmatmul.f32.gmra.mxu0 %v1438
      %v2904 = vpop.f32.mrf.mxu0
      %v2905 = vadd.f32 0.0, %v2904
      %2906 = vmatmul.f32.gmra.mxu0 %v1441
      %v2907 = vpop.f32.mrf.mxu0
      %v2908 = vadd.f32 0.0, %v2907
      %2909 = vmatmul.f32.gmra.mxu0 %v1444
      %v2910 = vpop.f32.mrf.mxu0
      %v2911 = vadd.f32 0.0, %v2910
      %2912 = vmatmul.f32.gmra.mxu0 %v1447
      %v2913 = vpop.f32.mrf.mxu0
      %v2914 = vadd.f32 0.0, %v2913
      %2915 = vmatmul.f32.gmra.mxu0 %v1450
      %v2916 = vpop.f32.mrf.mxu0
      %v2917 = vadd.f32 0.0, %v2916
      %2918 = vmatmul.f32.gmra.mxu0 %v1453
      %v2919 = vpop.f32.mrf.mxu0
      %v2920 = vadd.f32 0.0, %v2919
      %2921 = vmatmul.f32.gmra.mxu0 %v1456
      %v2922 = vpop.f32.mrf.mxu0
      %v2923 = vadd.f32 0.0, %v2922
      %2924 = vmatmul.f32.gmra.mxu0 %v1459
      %v2925 = vpop.f32.mrf.mxu0
      %v2926 = vadd.f32 0.0, %v2925
      %2927 = vmatmul.f32.gmra.mxu0 %v1462
      %v2928 = vpop.f32.mrf.mxu0
      %v2929 = vadd.f32 0.0, %v2928
      %2930 = vmatmul.f32.gmra.mxu0 %v1465
      %v2931 = vpop.f32.mrf.mxu0
      %v2932 = vadd.f32 0.0, %v2931
      %2933 = vmatmul.f32.gmra.mxu0 %v1468
      %v2934 = vpop.f32.mrf.mxu0
      %v2935 = vadd.f32 0.0, %v2934
      %2936 = vmatmul.f32.gmra.mxu0 %v1471
      %v2937 = vpop.f32.mrf.mxu0
      %v2938 = vadd.f32 0.0, %v2937
      %2939 = vmatmul.f32.gmra.mxu0 %v1474
      %v2940 = vpop.f32.mrf.mxu0
      %v2941 = vadd.f32 0.0, %v2940
      %2942 = vmatmul.f32.gmra.mxu0 %v1477
      %v2943 = vpop.f32.mrf.mxu0
      %v2944 = vadd.f32 0.0, %v2943
      %2945 = vmatmul.f32.gmra.mxu0 %v1480
      %v2946 = vpop.f32.mrf.mxu0
      %v2947 = vadd.f32 0.0, %v2946
      %2948 = vmatmul.f32.gmra.mxu0 %v1483
      %v2949 = vpop.f32.mrf.mxu0
      %v2950 = vadd.f32 0.0, %v2949
      %2951 = vdwg.mxu0
      %2952 = vmatpush.msra.mxu0 0.0
      %2953 = vmatpush.msra.mxu0 0.0
      %2954 = vmatpush.msra.mxu0 %v1495
      %2955 = vmatpush.msra.mxu0 %v1012
      %2956 = vmatpush.msra.mxu0 %v1008
      %2957 = vmatpush.msra.mxu0 %v1004
      %2958 = vmatpush.msra.mxu0 %v1000
      %2959 = vmatpush.msra.mxu0 %v996
      %2960 = vmatpush.msra.mxu0 %v992
      %2961 = vmatpush.msra.mxu0 %v988
      %2962 = vmatpush.msra.mxu0 %v984
      %2963 = vmatpush.msra.mxu0 %v980
      %2964 = vmatpush.msra.mxu0 %v976
      %2965 = vmatpush.msra.mxu0 %v972
      %2966 = vmatpush.msra.mxu0 %v968
      %2967 = vmatpush.msra.mxu0 %v964
      %2968 = vmatmul.f32.gmra.mxu0 %v1018
      %v2969 = vpop.f32.mrf.mxu0
      %v2970 = vadd.f32 0.0, %v2969
      %2971 = vmatmul.f32.gmra.mxu0 %v1021
      %v2972 = vpop.f32.mrf.mxu0
      %v2973 = vadd.f32 0.0, %v2972
      %2974 = vmatmul.f32.gmra.mxu0 %v1024
      %v2975 = vpop.f32.mrf.mxu0
      %v2976 = vadd.f32 0.0, %v2975
      %2977 = vmatmul.f32.gmra.mxu0 %v1027
      %v2978 = vpop.f32.mrf.mxu0
      %v2979 = vadd.f32 0.0, %v2978
      %2980 = vmatmul.f32.gmra.mxu0 %v1030
      %v2981 = vpop.f32.mrf.mxu0
      %v2982 = vadd.f32 0.0, %v2981
      %2983 = vmatmul.f32.gmra.mxu0 %v1033
      %v2984 = vpop.f32.mrf.mxu0
      %v2985 = vadd.f32 0.0, %v2984
      %2986 = vmatmul.f32.gmra.mxu0 %v1036
      %v2987 = vpop.f32.mrf.mxu0
      %v2988 = vadd.f32 0.0, %v2987
      %2989 = vmatmul.f32.gmra.mxu0 %v1039
      %v2990 = vpop.f32.mrf.mxu0
      %v2991 = vadd.f32 0.0, %v2990
      %2992 = vmatmul.f32.gmra.mxu0 %v1042
      %v2993 = vpop.f32.mrf.mxu0
      %v2994 = vadd.f32 0.0, %v2993
      %2995 = vmatmul.f32.gmra.mxu0 %v1045
      %v2996 = vpop.f32.mrf.mxu0
      %v2997 = vadd.f32 0.0, %v2996
      %2998 = vmatmul.f32.gmra.mxu0 %v1048
      %v2999 = vpop.f32.mrf.mxu0
      %v3000 = vadd.f32 0.0, %v2999
      %3001 = vmatmul.f32.gmra.mxu0 %v1051
      %v3002 = vpop.f32.mrf.mxu0
      %v3003 = vadd.f32 0.0, %v3002
      %3004 = vmatmul.f32.gmra.mxu0 %v1054
      %v3005 = vpop.f32.mrf.mxu0
      %v3006 = vadd.f32 0.0, %v3005
      %3007 = vmatmul.f32.gmra.mxu0 %v1057
      %v3008 = vpop.f32.mrf.mxu0
      %v3009 = vadd.f32 0.0, %v3008
      %3010 = vmatmul.f32.gmra.mxu0 %v1060
      %v3011 = vpop.f32.mrf.mxu0
      %v3012 = vadd.f32 0.0, %v3011
      %3013 = vmatmul.f32.gmra.mxu0 %v1063
      %v3014 = vpop.f32.mrf.mxu0
      %v3015 = vadd.f32 0.0, %v3014
      %3016 = vmatmul.f32.gmra.mxu0 %v1066
      %v3017 = vpop.f32.mrf.mxu0
      %v3018 = vadd.f32 0.0, %v3017
      %3019 = vmatmul.f32.gmra.mxu0 %v1069
      %v3020 = vpop.f32.mrf.mxu0
      %v3021 = vadd.f32 0.0, %v3020
      %3022 = vmatmul.f32.gmra.mxu0 %v1072
      %v3023 = vpop.f32.mrf.mxu0
      %v3024 = vadd.f32 0.0, %v3023
      %3025 = vmatmul.f32.gmra.mxu0 %v1075
      %v3026 = vpop.f32.mrf.mxu0
      %v3027 = vadd.f32 0.0, %v3026
      %3028 = vmatmul.f32.gmra.mxu0 %v1078
      %v3029 = vpop.f32.mrf.mxu0
      %v3030 = vadd.f32 0.0, %v3029
      %3031 = vmatmul.f32.gmra.mxu0 %v1081
      %v3032 = vpop.f32.mrf.mxu0
      %v3033 = vadd.f32 0.0, %v3032
      %3034 = vmatmul.f32.gmra.mxu0 %v1084
      %v3035 = vpop.f32.mrf.mxu0
      %v3036 = vadd.f32 0.0, %v3035
      %3037 = vmatmul.f32.gmra.mxu0 %v1087
      %v3038 = vpop.f32.mrf.mxu0
      %v3039 = vadd.f32 0.0, %v3038
      %3040 = vmatmul.f32.gmra.mxu0 %v1090
      %v3041 = vpop.f32.mrf.mxu0
      %v3042 = vadd.f32 0.0, %v3041
      %3043 = vmatmul.f32.gmra.mxu0 %v1093
      %v3044 = vpop.f32.mrf.mxu0
      %v3045 = vadd.f32 0.0, %v3044
      %3046 = vmatmul.f32.gmra.mxu0 %v1096
      %v3047 = vpop.f32.mrf.mxu0
      %v3048 = vadd.f32 0.0, %v3047
      %3049 = vmatmul.f32.gmra.mxu0 %v1099
      %v3050 = vpop.f32.mrf.mxu0
      %v3051 = vadd.f32 0.0, %v3050
      %3052 = vmatmul.f32.gmra.mxu0 %v1102
      %v3053 = vpop.f32.mrf.mxu0
      %v3054 = vadd.f32 0.0, %v3053
      %3055 = vmatmul.f32.gmra.mxu0 %v1105
      %v3056 = vpop.f32.mrf.mxu0
      %v3057 = vadd.f32 0.0, %v3056
      %3058 = vmatmul.f32.gmra.mxu0 %v1108
      %v3059 = vpop.f32.mrf.mxu0
      %v3060 = vadd.f32 0.0, %v3059
      %3061 = vmatmul.f32.gmra.mxu0 %v1111
      %v3062 = vpop.f32.mrf.mxu0
      %v3063 = vadd.f32 0.0, %v3062
      %3064 = vmatmul.f32.gmra.mxu0 %v1114
      %v3065 = vpop.f32.mrf.mxu0
      %v3066 = vadd.f32 0.0, %v3065
      %3067 = vmatmul.f32.gmra.mxu0 %v1117
      %v3068 = vpop.f32.mrf.mxu0
      %v3069 = vadd.f32 0.0, %v3068
      %3070 = vmatmul.f32.gmra.mxu0 %v1120
      %v3071 = vpop.f32.mrf.mxu0
      %v3072 = vadd.f32 0.0, %v3071
      %3073 = vmatmul.f32.gmra.mxu0 %v1123
      %v3074 = vpop.f32.mrf.mxu0
      %v3075 = vadd.f32 0.0, %v3074
      %3076 = vmatmul.f32.gmra.mxu0 %v1126
      %v3077 = vpop.f32.mrf.mxu0
      %v3078 = vadd.f32 0.0, %v3077
      %3079 = vmatmul.f32.gmra.mxu0 %v1129
      %v3080 = vpop.f32.mrf.mxu0
      %v3081 = vadd.f32 0.0, %v3080
      %3082 = vmatmul.f32.gmra.mxu0 %v1132
      %v3083 = vpop.f32.mrf.mxu0
      %v3084 = vadd.f32 0.0, %v3083
      %3085 = vmatmul.f32.gmra.mxu0 %v1135
      %v3086 = vpop.f32.mrf.mxu0
      %v3087 = vadd.f32 0.0, %v3086
      %3088 = vmatmul.f32.gmra.mxu0 %v1138
      %v3089 = vpop.f32.mrf.mxu0
      %v3090 = vadd.f32 0.0, %v3089
      %3091 = vmatmul.f32.gmra.mxu0 %v1141
      %v3092 = vpop.f32.mrf.mxu0
      %v3093 = vadd.f32 0.0, %v3092
      %3094 = vmatmul.f32.gmra.mxu0 %v1144
      %v3095 = vpop.f32.mrf.mxu0
      %v3096 = vadd.f32 0.0, %v3095
      %3097 = vmatmul.f32.gmra.mxu0 %v1147
      %v3098 = vpop.f32.mrf.mxu0
      %v3099 = vadd.f32 0.0, %v3098
      %3100 = vmatmul.f32.gmra.mxu0 %v1150
      %v3101 = vpop.f32.mrf.mxu0
      %v3102 = vadd.f32 0.0, %v3101
      %3103 = vmatmul.f32.gmra.mxu0 %v1153
      %v3104 = vpop.f32.mrf.mxu0
      %v3105 = vadd.f32 0.0, %v3104
      %3106 = vmatmul.f32.gmra.mxu0 %v1156
      %v3107 = vpop.f32.mrf.mxu0
      %v3108 = vadd.f32 0.0, %v3107
      %3109 = vmatmul.f32.gmra.mxu0 %v1159
      %v3110 = vpop.f32.mrf.mxu0
      %v3111 = vadd.f32 0.0, %v3110
      %3112 = vmatmul.f32.gmra.mxu0 %v1162
      %v3113 = vpop.f32.mrf.mxu0
      %v3114 = vadd.f32 0.0, %v3113
      %3115 = vmatmul.f32.gmra.mxu0 %v1165
      %v3116 = vpop.f32.mrf.mxu0
      %v3117 = vadd.f32 0.0, %v3116
      %3118 = vmatmul.f32.gmra.mxu0 %v1168
      %v3119 = vpop.f32.mrf.mxu0
      %v3120 = vadd.f32 0.0, %v3119
      %3121 = vmatmul.f32.gmra.mxu0 %v1171
      %v3122 = vpop.f32.mrf.mxu0
      %v3123 = vadd.f32 0.0, %v3122
      %3124 = vmatmul.f32.gmra.mxu0 %v1174
      %v3125 = vpop.f32.mrf.mxu0
      %v3126 = vadd.f32 0.0, %v3125
      %3127 = vmatmul.f32.gmra.mxu0 %v1177
      %v3128 = vpop.f32.mrf.mxu0
      %v3129 = vadd.f32 0.0, %v3128
      %3130 = vmatmul.f32.gmra.mxu0 %v1180
      %v3131 = vpop.f32.mrf.mxu0
      %v3132 = vadd.f32 0.0, %v3131
      %3133 = vmatmul.f32.gmra.mxu0 %v1183
      %v3134 = vpop.f32.mrf.mxu0
      %v3135 = vadd.f32 0.0, %v3134
      %3136 = vmatmul.f32.gmra.mxu0 %v1186
      %v3137 = vpop.f32.mrf.mxu0
      %v3138 = vadd.f32 0.0, %v3137
      %3139 = vmatmul.f32.gmra.mxu0 %v1189
      %v3140 = vpop.f32.mrf.mxu0
      %v3141 = vadd.f32 0.0, %v3140
      %3142 = vmatmul.f32.gmra.mxu0 %v1192
      %v3143 = vpop.f32.mrf.mxu0
      %v3144 = vadd.f32 0.0, %v3143
      %3145 = vmatmul.f32.gmra.mxu0 %v1195
      %v3146 = vpop.f32.mrf.mxu0
      %v3147 = vadd.f32 0.0, %v3146
      %3148 = vmatmul.f32.gmra.mxu0 %v1198
      %v3149 = vpop.f32.mrf.mxu0
      %v3150 = vadd.f32 0.0, %v3149
      %3151 = vmatmul.f32.gmra.mxu0 %v1201
      %v3152 = vpop.f32.mrf.mxu0
      %v3153 = vadd.f32 0.0, %v3152
      %3154 = vmatmul.f32.gmra.mxu0 %v1204
      %v3155 = vpop.f32.mrf.mxu0
      %v3156 = vadd.f32 0.0, %v3155
      %3157 = vmatmul.f32.gmra.mxu0 %v1207
      %v3158 = vpop.f32.mrf.mxu0
      %v3159 = vadd.f32 0.0, %v3158
      %3160 = vmatmul.f32.gmra.mxu0 %v1210
      %v3161 = vpop.f32.mrf.mxu0
      %v3162 = vadd.f32 0.0, %v3161
      %3163 = vmatmul.f32.gmra.mxu0 %v1213
      %v3164 = vpop.f32.mrf.mxu0
      %v3165 = vadd.f32 0.0, %v3164
      %3166 = vmatmul.f32.gmra.mxu0 %v1216
      %v3167 = vpop.f32.mrf.mxu0
      %v3168 = vadd.f32 0.0, %v3167
      %3169 = vmatmul.f32.gmra.mxu0 %v1219
      %v3170 = vpop.f32.mrf.mxu0
      %v3171 = vadd.f32 0.0, %v3170
      %3172 = vmatmul.f32.gmra.mxu0 %v1222
      %v3173 = vpop.f32.mrf.mxu0
      %v3174 = vadd.f32 0.0, %v3173
      %3175 = vmatmul.f32.gmra.mxu0 %v1225
      %v3176 = vpop.f32.mrf.mxu0
      %v3177 = vadd.f32 0.0, %v3176
      %3178 = vmatmul.f32.gmra.mxu0 %v1228
      %v3179 = vpop.f32.mrf.mxu0
      %v3180 = vadd.f32 0.0, %v3179
      %3181 = vmatmul.f32.gmra.mxu0 %v1231
      %v3182 = vpop.f32.mrf.mxu0
      %v3183 = vadd.f32 0.0, %v3182
      %3184 = vmatmul.f32.gmra.mxu0 %v1234
      %v3185 = vpop.f32.mrf.mxu0
      %v3186 = vadd.f32 0.0, %v3185
      %3187 = vmatmul.f32.gmra.mxu0 %v1237
      %v3188 = vpop.f32.mrf.mxu0
      %v3189 = vadd.f32 0.0, %v3188
      %3190 = vmatmul.f32.gmra.mxu0 %v1240
      %v3191 = vpop.f32.mrf.mxu0
      %v3192 = vadd.f32 0.0, %v3191
      %3193 = vmatmul.f32.gmra.mxu0 %v1243
      %v3194 = vpop.f32.mrf.mxu0
      %v3195 = vadd.f32 0.0, %v3194
      %3196 = vmatmul.f32.gmra.mxu0 %v1246
      %v3197 = vpop.f32.mrf.mxu0
      %v3198 = vadd.f32 0.0, %v3197
      %3199 = vmatmul.f32.gmra.mxu0 %v1249
      %v3200 = vpop.f32.mrf.mxu0
      %v3201 = vadd.f32 0.0, %v3200
      %3202 = vmatmul.f32.gmra.mxu0 %v1252
      %v3203 = vpop.f32.mrf.mxu0
      %v3204 = vadd.f32 0.0, %v3203
      %3205 = vmatmul.f32.gmra.mxu0 %v1255
      %v3206 = vpop.f32.mrf.mxu0
      %v3207 = vadd.f32 0.0, %v3206
      %3208 = vmatmul.f32.gmra.mxu0 %v1258
      %v3209 = vpop.f32.mrf.mxu0
      %v3210 = vadd.f32 0.0, %v3209
      %3211 = vmatmul.f32.gmra.mxu0 %v1261
      %v3212 = vpop.f32.mrf.mxu0
      %v3213 = vadd.f32 0.0, %v3212
      %3214 = vmatmul.f32.gmra.mxu0 %v1264
      %v3215 = vpop.f32.mrf.mxu0
      %v3216 = vadd.f32 0.0, %v3215
      %3217 = vmatmul.f32.gmra.mxu0 %v1267
      %v3218 = vpop.f32.mrf.mxu0
      %v3219 = vadd.f32 0.0, %v3218
      %3220 = vmatmul.f32.gmra.mxu0 %v1270
      %v3221 = vpop.f32.mrf.mxu0
      %v3222 = vadd.f32 0.0, %v3221
      %3223 = vmatmul.f32.gmra.mxu0 %v1273
      %v3224 = vpop.f32.mrf.mxu0
      %v3225 = vadd.f32 0.0, %v3224
      %3226 = vmatmul.f32.gmra.mxu0 %v1276
      %v3227 = vpop.f32.mrf.mxu0
      %v3228 = vadd.f32 0.0, %v3227
      %3229 = vmatmul.f32.gmra.mxu0 %v1279
      %v3230 = vpop.f32.mrf.mxu0
      %v3231 = vadd.f32 0.0, %v3230
      %3232 = vmatmul.f32.gmra.mxu0 %v1282
      %v3233 = vpop.f32.mrf.mxu0
      %v3234 = vadd.f32 0.0, %v3233
      %3235 = vmatmul.f32.gmra.mxu0 %v1285
      %v3236 = vpop.f32.mrf.mxu0
      %v3237 = vadd.f32 0.0, %v3236
      %3238 = vmatmul.f32.gmra.mxu0 %v1288
      %v3239 = vpop.f32.mrf.mxu0
      %v3240 = vadd.f32 0.0, %v3239
      %3241 = vmatmul.f32.gmra.mxu0 %v1291
      %v3242 = vpop.f32.mrf.mxu0
      %v3243 = vadd.f32 0.0, %v3242
      %3244 = vmatmul.f32.gmra.mxu0 %v1294
      %v3245 = vpop.f32.mrf.mxu0
      %v3246 = vadd.f32 0.0, %v3245
      %3247 = vmatmul.f32.gmra.mxu0 %v1297
      %v3248 = vpop.f32.mrf.mxu0
      %v3249 = vadd.f32 0.0, %v3248
      %3250 = vmatmul.f32.gmra.mxu0 %v1300
      %v3251 = vpop.f32.mrf.mxu0
      %v3252 = vadd.f32 0.0, %v3251
      %3253 = vmatmul.f32.gmra.mxu0 %v1303
      %v3254 = vpop.f32.mrf.mxu0
      %v3255 = vadd.f32 0.0, %v3254
      %3256 = vmatmul.f32.gmra.mxu0 %v1306
      %v3257 = vpop.f32.mrf.mxu0
      %v3258 = vadd.f32 0.0, %v3257
      %3259 = vmatmul.f32.gmra.mxu0 %v1309
      %v3260 = vpop.f32.mrf.mxu0
      %v3261 = vadd.f32 0.0, %v3260
      %3262 = vmatmul.f32.gmra.mxu0 %v1312
      %v3263 = vpop.f32.mrf.mxu0
      %v3264 = vadd.f32 0.0, %v3263
      %3265 = vmatmul.f32.gmra.mxu0 %v1315
      %v3266 = vpop.f32.mrf.mxu0
      %v3267 = vadd.f32 0.0, %v3266
      %3268 = vmatmul.f32.gmra.mxu0 %v1318
      %v3269 = vpop.f32.mrf.mxu0
      %v3270 = vadd.f32 0.0, %v3269
      %3271 = vmatmul.f32.gmra.mxu0 %v1321
      %v3272 = vpop.f32.mrf.mxu0
      %v3273 = vadd.f32 0.0, %v3272
      %3274 = vmatmul.f32.gmra.mxu0 %v1324
      %v3275 = vpop.f32.mrf.mxu0
      %v3276 = vadd.f32 0.0, %v3275
      %3277 = vmatmul.f32.gmra.mxu0 %v1327
      %v3278 = vpop.f32.mrf.mxu0
      %v3279 = vadd.f32 0.0, %v3278
      %3280 = vmatmul.f32.gmra.mxu0 %v1330
      %v3281 = vpop.f32.mrf.mxu0
      %v3282 = vadd.f32 0.0, %v3281
      %3283 = vmatmul.f32.gmra.mxu0 %v1333
      %v3284 = vpop.f32.mrf.mxu0
      %v3285 = vadd.f32 0.0, %v3284
      %3286 = vmatmul.f32.gmra.mxu0 %v1336
      %v3287 = vpop.f32.mrf.mxu0
      %v3288 = vadd.f32 0.0, %v3287
      %3289 = vmatmul.f32.gmra.mxu0 %v1339
      %v3290 = vpop.f32.mrf.mxu0
      %v3291 = vadd.f32 0.0, %v3290
      %3292 = vmatmul.f32.gmra.mxu0 %v1342
      %v3293 = vpop.f32.mrf.mxu0
      %v3294 = vadd.f32 0.0, %v3293
      %3295 = vmatmul.f32.gmra.mxu0 %v1345
      %v3296 = vpop.f32.mrf.mxu0
      %v3297 = vadd.f32 0.0, %v3296
      %3298 = vmatmul.f32.gmra.mxu0 %v1348
      %v3299 = vpop.f32.mrf.mxu0
      %v3300 = vadd.f32 0.0, %v3299
      %3301 = vmatmul.f32.gmra.mxu0 %v1351
      %v3302 = vpop.f32.mrf.mxu0
      %v3303 = vadd.f32 0.0, %v3302
      %3304 = vmatmul.f32.gmra.mxu0 %v1354
      %v3305 = vpop.f32.mrf.mxu0
      %v3306 = vadd.f32 0.0, %v3305
      %3307 = vmatmul.f32.gmra.mxu0 %v1357
      %v3308 = vpop.f32.mrf.mxu0
      %v3309 = vadd.f32 0.0, %v3308
      %3310 = vmatmul.f32.gmra.mxu0 %v1360
      %v3311 = vpop.f32.mrf.mxu0
      %v3312 = vadd.f32 0.0, %v3311
      %3313 = vmatmul.f32.gmra.mxu0 %v1363
      %v3314 = vpop.f32.mrf.mxu0
      %v3315 = vadd.f32 0.0, %v3314
      %3316 = vmatmul.f32.gmra.mxu0 %v1366
      %v3317 = vpop.f32.mrf.mxu0
      %v3318 = vadd.f32 0.0, %v3317
      %3319 = vmatmul.f32.gmra.mxu0 %v1369
      %v3320 = vpop.f32.mrf.mxu0
      %v3321 = vadd.f32 0.0, %v3320
      %3322 = vmatmul.f32.gmra.mxu0 %v1372
      %v3323 = vpop.f32.mrf.mxu0
      %v3324 = vadd.f32 0.0, %v3323
      %3325 = vmatmul.f32.gmra.mxu0 %v1375
      %v3326 = vpop.f32.mrf.mxu0
      %v3327 = vadd.f32 0.0, %v3326
      %3328 = vmatmul.f32.gmra.mxu0 %v1378
      %v3329 = vpop.f32.mrf.mxu0
      %v3330 = vadd.f32 0.0, %v3329
      %3331 = vmatmul.f32.gmra.mxu0 %v1381
      %v3332 = vpop.f32.mrf.mxu0
      %v3333 = vadd.f32 0.0, %v3332
      %3334 = vmatmul.f32.gmra.mxu0 %v1384
      %v3335 = vpop.f32.mrf.mxu0
      %v3336 = vadd.f32 0.0, %v3335
      %3337 = vmatmul.f32.gmra.mxu0 %v1387
      %v3338 = vpop.f32.mrf.mxu0
      %v3339 = vadd.f32 0.0, %v3338
      %3340 = vmatmul.f32.gmra.mxu0 %v1390
      %v3341 = vpop.f32.mrf.mxu0
      %v3342 = vadd.f32 0.0, %v3341
      %3343 = vmatmul.f32.gmra.mxu0 %v1393
      %v3344 = vpop.f32.mrf.mxu0
      %v3345 = vadd.f32 0.0, %v3344
      %3346 = vmatmul.f32.gmra.mxu0 %v1396
      %v3347 = vpop.f32.mrf.mxu0
      %v3348 = vadd.f32 0.0, %v3347
      %3349 = vmatmul.f32.gmra.mxu0 %v1399
      %v3350 = vpop.f32.mrf.mxu0
      %v3351 = vadd.f32 0.0, %v3350
      %3352 = vmatmul.f32.gmra.mxu0 %v1402
      %v3353 = vpop.f32.mrf.mxu0
      %v3354 = vadd.f32 0.0, %v3353
      %3355 = vmatmul.f32.gmra.mxu0 %v1405
      %v3356 = vpop.f32.mrf.mxu0
      %v3357 = vadd.f32 0.0, %v3356
      %3358 = vmatmul.f32.gmra.mxu0 %v1408
      %v3359 = vpop.f32.mrf.mxu0
      %v3360 = vadd.f32 0.0, %v3359
      %3361 = vmatmul.f32.gmra.mxu0 %v1411
      %v3362 = vpop.f32.mrf.mxu0
      %v3363 = vadd.f32 0.0, %v3362
      %3364 = vmatmul.f32.gmra.mxu0 %v1414
      %v3365 = vpop.f32.mrf.mxu0
      %v3366 = vadd.f32 0.0, %v3365
      %3367 = vmatmul.f32.gmra.mxu0 %v1417
      %v3368 = vpop.f32.mrf.mxu0
      %v3369 = vadd.f32 0.0, %v3368
      %3370 = vmatmul.f32.gmra.mxu0 %v1420
      %v3371 = vpop.f32.mrf.mxu0
      %v3372 = vadd.f32 0.0, %v3371
      %3373 = vmatmul.f32.gmra.mxu0 %v1423
      %v3374 = vpop.f32.mrf.mxu0
      %v3375 = vadd.f32 0.0, %v3374
      %3376 = vmatmul.f32.gmra.mxu0 %v1426
      %v3377 = vpop.f32.mrf.mxu0
      %v3378 = vadd.f32 0.0, %v3377
      %3379 = vmatmul.f32.gmra.mxu0 %v1429
      %v3380 = vpop.f32.mrf.mxu0
      %v3381 = vadd.f32 0.0, %v3380
      %3382 = vmatmul.f32.gmra.mxu0 %v1432
      %v3383 = vpop.f32.mrf.mxu0
      %v3384 = vadd.f32 0.0, %v3383
      %3385 = vmatmul.f32.gmra.mxu0 %v1435
      %v3386 = vpop.f32.mrf.mxu0
      %v3387 = vadd.f32 0.0, %v3386
      %3388 = vmatmul.f32.gmra.mxu0 %v1438
      %v3389 = vpop.f32.mrf.mxu0
      %v3390 = vadd.f32 0.0, %v3389
      %3391 = vmatmul.f32.gmra.mxu0 %v1441
      %v3392 = vpop.f32.mrf.mxu0
      %v3393 = vadd.f32 0.0, %v3392
      %3394 = vmatmul.f32.gmra.mxu0 %v1444
      %v3395 = vpop.f32.mrf.mxu0
      %v3396 = vadd.f32 0.0, %v3395
      %3397 = vmatmul.f32.gmra.mxu0 %v1447
      %v3398 = vpop.f32.mrf.mxu0
      %v3399 = vadd.f32 0.0, %v3398
      %3400 = vmatmul.f32.gmra.mxu0 %v1450
      %v3401 = vpop.f32.mrf.mxu0
      %v3402 = vadd.f32 0.0, %v3401
      %3403 = vmatmul.f32.gmra.mxu0 %v1453
      %v3404 = vpop.f32.mrf.mxu0
      %v3405 = vadd.f32 0.0, %v3404
      %3406 = vmatmul.f32.gmra.mxu0 %v1456
      %v3407 = vpop.f32.mrf.mxu0
      %v3408 = vadd.f32 0.0, %v3407
      %3409 = vmatmul.f32.gmra.mxu0 %v1459
      %v3410 = vpop.f32.mrf.mxu0
      %v3411 = vadd.f32 0.0, %v3410
      %3412 = vmatmul.f32.gmra.mxu0 %v1462
      %v3413 = vpop.f32.mrf.mxu0
      %v3414 = vadd.f32 0.0, %v3413
      %3415 = vmatmul.f32.gmra.mxu0 %v1465
      %v3416 = vpop.f32.mrf.mxu0
      %v3417 = vadd.f32 0.0, %v3416
      %3418 = vmatmul.f32.gmra.mxu0 %v1468
      %v3419 = vpop.f32.mrf.mxu0
      %v3420 = vadd.f32 0.0, %v3419
      %3421 = vmatmul.f32.gmra.mxu0 %v1471
      %v3422 = vpop.f32.mrf.mxu0
      %v3423 = vadd.f32 0.0, %v3422
      %3424 = vmatmul.f32.gmra.mxu0 %v1474
      %v3425 = vpop.f32.mrf.mxu0
      %v3426 = vadd.f32 0.0, %v3425
      %3427 = vmatmul.f32.gmra.mxu0 %v1477
      %v3428 = vpop.f32.mrf.mxu0
      %v3429 = vadd.f32 0.0, %v3428
      %3430 = vmatmul.f32.gmra.mxu0 %v1480
      %v3431 = vpop.f32.mrf.mxu0
      %v3432 = vadd.f32 0.0, %v3431
      %3433 = vmatmul.f32.gmra.mxu0 %v1483
      %v3434 = vpop.f32.mrf.mxu0
      %v3435 = vadd.f32 0.0, %v3434
      %3436 = vdwg.mxu0
      %3437 = vst [vmem:[%s177] sm:$0xff] %v1515
      %3438 = vst [vmem:[%s177 + $0x8] sm:$0xff] %v2000
      %3439 = vst [vmem:[%s177 + $0x10] sm:$0xff] %v2485
      %vm3440 = vcmask 261120
      %3441 = vst.msk [vmem:[%s177 + $0x18] sm:$0xff] %vm3440, %v2970
      %3442 = vst [vmem:[%s177 + $0x20] sm:$0xff] %v1518
      %3443 = vst [vmem:[%s177 + $0x28] sm:$0xff] %v2003
      %3444 = vst [vmem:[%s177 + $0x30] sm:$0xff] %v2488
      %3445 = vst.msk [vmem:[%s177 + $0x38] sm:$0xff] %vm3440, %v2973
      %3446 = vst [vmem:[%s177 + $0x40] sm:$0xff] %v1521
      %3447 = vst [vmem:[%s177 + $0x48] sm:$0xff] %v2006
      %3448 = vst [vmem:[%s177 + $0x50] sm:$0xff] %v2491
      %3449 = vst.msk [vmem:[%s177 + $0x58] sm:$0xff] %vm3440, %v2976
      %3450 = vst [vmem:[%s177 + $0x60] sm:$0xff] %v1524
      %3451 = vst [vmem:[%s177 + $0x68] sm:$0xff] %v2009
      %3452 = vst [vmem:[%s177 + $0x70] sm:$0xff] %v2494
      %3453 = vst.msk [vmem:[%s177 + $0x78] sm:$0xff] %vm3440, %v2979
      %3454 = vst [vmem:[%s177 + $0x80] sm:$0xff] %v1527
      %3455 = vst [vmem:[%s177 + $0x88] sm:$0xff] %v2012
      %3456 = vst [vmem:[%s177 + $0x90] sm:$0xff] %v2497
      %3457 = vst.msk [vmem:[%s177 + $0x98] sm:$0xff] %vm3440, %v2982
      %3458 = vst [vmem:[%s177 + $0xa0] sm:$0xff] %v1530
      %3459 = vst [vmem:[%s177 + $0xa8] sm:$0xff] %v2015
      %3460 = vst [vmem:[%s177 + $0xb0] sm:$0xff] %v2500
      %3461 = vst.msk [vmem:[%s177 + $0xb8] sm:$0xff] %vm3440, %v2985
      %3462 = vst [vmem:[%s177 + $0xc0] sm:$0xff] %v1533
      %3463 = vst [vmem:[%s177 + $0xc8] sm:$0xff] %v2018
      %3464 = vst [vmem:[%s177 + $0xd0] sm:$0xff] %v2503
      %3465 = vst.msk [vmem:[%s177 + $0xd8] sm:$0xff] %vm3440, %v2988
      %3466 = vst [vmem:[%s177 + $0xe0] sm:$0xff] %v1536
      %3467 = vst [vmem:[%s177 + $0xe8] sm:$0xff] %v2021
      %3468 = vst [vmem:[%s177 + $0xf0] sm:$0xff] %v2506
      %3469 = vst.msk [vmem:[%s177 + $0xf8] sm:$0xff] %vm3440, %v2991
      %3470 = vst [vmem:[%s177 + $0x100] sm:$0xff] %v1539
      %3471 = vst [vmem:[%s177 + $0x108] sm:$0xff] %v2024
      %3472 = vst [vmem:[%s177 + $0x110] sm:$0xff] %v2509
      %3473 = vst.msk [vmem:[%s177 + $0x118] sm:$0xff] %vm3440, %v2994
      %3474 = vst [vmem:[%s177 + $0x120] sm:$0xff] %v1542
      %3475 = vst [vmem:[%s177 + $0x128] sm:$0xff] %v2027
      %3476 = vst [vmem:[%s177 + $0x130] sm:$0xff] %v2512
      %3477 = vst.msk [vmem:[%s177 + $0x138] sm:$0xff] %vm3440, %v2997
      %3478 = vst [vmem:[%s177 + $0x140] sm:$0xff] %v1545
      %3479 = vst [vmem:[%s177 + $0x148] sm:$0xff] %v2030
      %3480 = vst [vmem:[%s177 + $0x150] sm:$0xff] %v2515
      %3481 = vst.msk [vmem:[%s177 + $0x158] sm:$0xff] %vm3440, %v3000
      %3482 = vst [vmem:[%s177 + $0x160] sm:$0xff] %v1548
      %3483 = vst [vmem:[%s177 + $0x168] sm:$0xff] %v2033
      %3484 = vst [vmem:[%s177 + $0x170] sm:$0xff] %v2518
      %3485 = vst.msk [vmem:[%s177 + $0x178] sm:$0xff] %vm3440, %v3003
      %3486 = vst [vmem:[%s177 + $0x180] sm:$0xff] %v1551
      %3487 = vst [vmem:[%s177 + $0x188] sm:$0xff] %v2036
      %3488 = vst [vmem:[%s177 + $0x190] sm:$0xff] %v2521
      %3489 = vst.msk [vmem:[%s177 + $0x198] sm:$0xff] %vm3440, %v3006
      %3490 = vst [vmem:[%s177 + $0x1a0] sm:$0xff] %v1554
      %3491 = vst [vmem:[%s177 + $0x1a8] sm:$0xff] %v2039
      %3492 = vst [vmem:[%s177 + $0x1b0] sm:$0xff] %v2524
      %3493 = vst.msk [vmem:[%s177 + $0x1b8] sm:$0xff] %vm3440, %v3009
      %3494 = vst [vmem:[%s177 + $0x1c0] sm:$0xff] %v1557
      %3495 = vst [vmem:[%s177 + $0x1c8] sm:$0xff] %v2042
      %3496 = vst [vmem:[%s177 + $0x1d0] sm:$0xff] %v2527
      %3497 = vst.msk [vmem:[%s177 + $0x1d8] sm:$0xff] %vm3440, %v3012
      %3498 = vst [vmem:[%s177 + $0x1e0] sm:$0xff] %v1560
      %3499 = vst [vmem:[%s177 + $0x1e8] sm:$0xff] %v2045
      %3500 = vst [vmem:[%s177 + $0x1f0] sm:$0xff] %v2530
      %3501 = vst.msk [vmem:[%s177 + $0x1f8] sm:$0xff] %vm3440, %v3015
      %3502 = vst [vmem:[%s177 + $0x200] sm:$0xff] %v1563
      %3503 = vst [vmem:[%s177 + $0x208] sm:$0xff] %v2048
      %3504 = vst [vmem:[%s177 + $0x210] sm:$0xff] %v2533
      %3505 = vst.msk [vmem:[%s177 + $0x218] sm:$0xff] %vm3440, %v3018
      %3506 = vst [vmem:[%s177 + $0x220] sm:$0xff] %v1566
      %3507 = vst [vmem:[%s177 + $0x228] sm:$0xff] %v2051
      %3508 = vst [vmem:[%s177 + $0x230] sm:$0xff] %v2536
      %3509 = vst.msk [vmem:[%s177 + $0x238] sm:$0xff] %vm3440, %v3021
      %3510 = vst [vmem:[%s177 + $0x240] sm:$0xff] %v1569
      %3511 = vst [vmem:[%s177 + $0x248] sm:$0xff] %v2054
      %3512 = vst [vmem:[%s177 + $0x250] sm:$0xff] %v2539
      %3513 = vst.msk [vmem:[%s177 + $0x258] sm:$0xff] %vm3440, %v3024
      %3514 = vst [vmem:[%s177 + $0x260] sm:$0xff] %v1572
      %3515 = vst [vmem:[%s177 + $0x268] sm:$0xff] %v2057
      %3516 = vst [vmem:[%s177 + $0x270] sm:$0xff] %v2542
      %3517 = vst.msk [vmem:[%s177 + $0x278] sm:$0xff] %vm3440, %v3027
      %3518 = vst [vmem:[%s177 + $0x280] sm:$0xff] %v1575
      %3519 = vst [vmem:[%s177 + $0x288] sm:$0xff] %v2060
      %3520 = vst [vmem:[%s177 + $0x290] sm:$0xff] %v2545
      %3521 = vst.msk [vmem:[%s177 + $0x298] sm:$0xff] %vm3440, %v3030
      %3522 = vst [vmem:[%s177 + $0x2a0] sm:$0xff] %v1578
      %3523 = vst [vmem:[%s177 + $0x2a8] sm:$0xff] %v2063
      %3524 = vst [vmem:[%s177 + $0x2b0] sm:$0xff] %v2548
      %3525 = vst.msk [vmem:[%s177 + $0x2b8] sm:$0xff] %vm3440, %v3033
      %3526 = vst [vmem:[%s177 + $0x2c0] sm:$0xff] %v1581
      %3527 = vst [vmem:[%s177 + $0x2c8] sm:$0xff] %v2066
      %3528 = vst [vmem:[%s177 + $0x2d0] sm:$0xff] %v2551
      %3529 = vst.msk [vmem:[%s177 + $0x2d8] sm:$0xff] %vm3440, %v3036
      %3530 = vst [vmem:[%s177 + $0x2e0] sm:$0xff] %v1584
      %3531 = vst [vmem:[%s177 + $0x2e8] sm:$0xff] %v2069
      %3532 = vst [vmem:[%s177 + $0x2f0] sm:$0xff] %v2554
      %3533 = vst.msk [vmem:[%s177 + $0x2f8] sm:$0xff] %vm3440, %v3039
      %3534 = vst [vmem:[%s177 + $0x300] sm:$0xff] %v1587
      %3535 = vst [vmem:[%s177 + $0x308] sm:$0xff] %v2072
      %3536 = vst [vmem:[%s177 + $0x310] sm:$0xff] %v2557
      %3537 = vst.msk [vmem:[%s177 + $0x318] sm:$0xff] %vm3440, %v3042
      %3538 = vst [vmem:[%s177 + $0x320] sm:$0xff] %v1590
      %3539 = vst [vmem:[%s177 + $0x328] sm:$0xff] %v2075
      %3540 = vst [vmem:[%s177 + $0x330] sm:$0xff] %v2560
      %3541 = vst.msk [vmem:[%s177 + $0x338] sm:$0xff] %vm3440, %v3045
      %3542 = vst [vmem:[%s177 + $0x340] sm:$0xff] %v1593
      %3543 = vst [vmem:[%s177 + $0x348] sm:$0xff] %v2078
      %3544 = vst [vmem:[%s177 + $0x350] sm:$0xff] %v2563
      %3545 = vst.msk [vmem:[%s177 + $0x358] sm:$0xff] %vm3440, %v3048
      %3546 = vst [vmem:[%s177 + $0x360] sm:$0xff] %v1596
      %3547 = vst [vmem:[%s177 + $0x368] sm:$0xff] %v2081
      %3548 = vst [vmem:[%s177 + $0x370] sm:$0xff] %v2566
      %3549 = vst.msk [vmem:[%s177 + $0x378] sm:$0xff] %vm3440, %v3051
      %3550 = vst [vmem:[%s177 + $0x380] sm:$0xff] %v1599
      %3551 = vst [vmem:[%s177 + $0x388] sm:$0xff] %v2084
      %3552 = vst [vmem:[%s177 + $0x390] sm:$0xff] %v2569
      %3553 = vst.msk [vmem:[%s177 + $0x398] sm:$0xff] %vm3440, %v3054
      %3554 = vst [vmem:[%s177 + $0x3a0] sm:$0xff] %v1602
      %3555 = vst [vmem:[%s177 + $0x3a8] sm:$0xff] %v2087
      %3556 = vst [vmem:[%s177 + $0x3b0] sm:$0xff] %v2572
      %3557 = vst.msk [vmem:[%s177 + $0x3b8] sm:$0xff] %vm3440, %v3057
      %3558 = vst [vmem:[%s177 + $0x3c0] sm:$0xff] %v1605
      %3559 = vst [vmem:[%s177 + $0x3c8] sm:$0xff] %v2090
      %3560 = vst [vmem:[%s177 + $0x3d0] sm:$0xff] %v2575
      %3561 = vst.msk [vmem:[%s177 + $0x3d8] sm:$0xff] %vm3440, %v3060
      %3562 = vst [vmem:[%s177 + $0x3e0] sm:$0xff] %v1608
      %3563 = vst [vmem:[%s177 + $0x3e8] sm:$0xff] %v2093
      %3564 = vst [vmem:[%s177 + $0x3f0] sm:$0xff] %v2578
      %3565 = vst.msk [vmem:[%s177 + $0x3f8] sm:$0xff] %vm3440, %v3063
      %3566 = vst [vmem:[%s177 + $0x400] sm:$0xff] %v1611
      %3567 = vst [vmem:[%s177 + $0x408] sm:$0xff] %v2096
      %3568 = vst [vmem:[%s177 + $0x410] sm:$0xff] %v2581
      %3569 = vst.msk [vmem:[%s177 + $0x418] sm:$0xff] %vm3440, %v3066
      %3570 = vst [vmem:[%s177 + $0x420] sm:$0xff] %v1614
      %3571 = vst [vmem:[%s177 + $0x428] sm:$0xff] %v2099
      %3572 = vst [vmem:[%s177 + $0x430] sm:$0xff] %v2584
      %3573 = vst.msk [vmem:[%s177 + $0x438] sm:$0xff] %vm3440, %v3069
      %3574 = vst [vmem:[%s177 + $0x440] sm:$0xff] %v1617
      %3575 = vst [vmem:[%s177 + $0x448] sm:$0xff] %v2102
      %3576 = vst [vmem:[%s177 + $0x450] sm:$0xff] %v2587
      %3577 = vst.msk [vmem:[%s177 + $0x458] sm:$0xff] %vm3440, %v3072
      %3578 = vst [vmem:[%s177 + $0x460] sm:$0xff] %v1620
      %3579 = vst [vmem:[%s177 + $0x468] sm:$0xff] %v2105
      %3580 = vst [vmem:[%s177 + $0x470] sm:$0xff] %v2590
      %3581 = vst.msk [vmem:[%s177 + $0x478] sm:$0xff] %vm3440, %v3075
      %3582 = vst [vmem:[%s177 + $0x480] sm:$0xff] %v1623
      %3583 = vst [vmem:[%s177 + $0x488] sm:$0xff] %v2108
      %3584 = vst [vmem:[%s177 + $0x490] sm:$0xff] %v2593
      %3585 = vst.msk [vmem:[%s177 + $0x498] sm:$0xff] %vm3440, %v3078
      %3586 = vst [vmem:[%s177 + $0x4a0] sm:$0xff] %v1626
      %3587 = vst [vmem:[%s177 + $0x4a8] sm:$0xff] %v2111
      %3588 = vst [vmem:[%s177 + $0x4b0] sm:$0xff] %v2596
      %3589 = vst.msk [vmem:[%s177 + $0x4b8] sm:$0xff] %vm3440, %v3081
      %3590 = vst [vmem:[%s177 + $0x4c0] sm:$0xff] %v1629
      %3591 = vst [vmem:[%s177 + $0x4c8] sm:$0xff] %v2114
      %3592 = vst [vmem:[%s177 + $0x4d0] sm:$0xff] %v2599
      %3593 = vst.msk [vmem:[%s177 + $0x4d8] sm:$0xff] %vm3440, %v3084
      %3594 = vst [vmem:[%s177 + $0x4e0] sm:$0xff] %v1632
      %3595 = vst [vmem:[%s177 + $0x4e8] sm:$0xff] %v2117
      %3596 = vst [vmem:[%s177 + $0x4f0] sm:$0xff] %v2602
      %3597 = vst.msk [vmem:[%s177 + $0x4f8] sm:$0xff] %vm3440, %v3087
      %3598 = vst [vmem:[%s177 + $0x500] sm:$0xff] %v1635
      %3599 = vst [vmem:[%s177 + $0x508] sm:$0xff] %v2120
      %3600 = vst [vmem:[%s177 + $0x510] sm:$0xff] %v2605
      %3601 = vst.msk [vmem:[%s177 + $0x518] sm:$0xff] %vm3440, %v3090
      %3602 = vst [vmem:[%s177 + $0x520] sm:$0xff] %v1638
      %3603 = vst [vmem:[%s177 + $0x528] sm:$0xff] %v2123
      %3604 = vst [vmem:[%s177 + $0x530] sm:$0xff] %v2608
      %3605 = vst.msk [vmem:[%s177 + $0x538] sm:$0xff] %vm3440, %v3093
      %3606 = vst [vmem:[%s177 + $0x540] sm:$0xff] %v1641
      %3607 = vst [vmem:[%s177 + $0x548] sm:$0xff] %v2126
      %3608 = vst [vmem:[%s177 + $0x550] sm:$0xff] %v2611
      %3609 = vst.msk [vmem:[%s177 + $0x558] sm:$0xff] %vm3440, %v3096
      %3610 = vst [vmem:[%s177 + $0x560] sm:$0xff] %v1644
      %3611 = vst [vmem:[%s177 + $0x568] sm:$0xff] %v2129
      %3612 = vst [vmem:[%s177 + $0x570] sm:$0xff] %v2614
      %3613 = vst.msk [vmem:[%s177 + $0x578] sm:$0xff] %vm3440, %v3099
      %3614 = vst [vmem:[%s177 + $0x580] sm:$0xff] %v1647
      %3615 = vst [vmem:[%s177 + $0x588] sm:$0xff] %v2132
      %3616 = vst [vmem:[%s177 + $0x590] sm:$0xff] %v2617
      %3617 = vst.msk [vmem:[%s177 + $0x598] sm:$0xff] %vm3440, %v3102
      %3618 = vst [vmem:[%s177 + $0x5a0] sm:$0xff] %v1650
      %3619 = vst [vmem:[%s177 + $0x5a8] sm:$0xff] %v2135
      %3620 = vst [vmem:[%s177 + $0x5b0] sm:$0xff] %v2620
      %3621 = vst.msk [vmem:[%s177 + $0x5b8] sm:$0xff] %vm3440, %v3105
      %3622 = vst [vmem:[%s177 + $0x5c0] sm:$0xff] %v1653
      %3623 = vst [vmem:[%s177 + $0x5c8] sm:$0xff] %v2138
      %3624 = vst [vmem:[%s177 + $0x5d0] sm:$0xff] %v2623
      %3625 = vst.msk [vmem:[%s177 + $0x5d8] sm:$0xff] %vm3440, %v3108
      %3626 = vst [vmem:[%s177 + $0x5e0] sm:$0xff] %v1656
      %3627 = vst [vmem:[%s177 + $0x5e8] sm:$0xff] %v2141
      %3628 = vst [vmem:[%s177 + $0x5f0] sm:$0xff] %v2626
      %3629 = vst.msk [vmem:[%s177 + $0x5f8] sm:$0xff] %vm3440, %v3111
      %3630 = vst [vmem:[%s177 + $0x600] sm:$0xff] %v1659
      %3631 = vst [vmem:[%s177 + $0x608] sm:$0xff] %v2144
      %3632 = vst [vmem:[%s177 + $0x610] sm:$0xff] %v2629
      %3633 = vst.msk [vmem:[%s177 + $0x618] sm:$0xff] %vm3440, %v3114
      %3634 = vst [vmem:[%s177 + $0x620] sm:$0xff] %v1662
      %3635 = vst [vmem:[%s177 + $0x628] sm:$0xff] %v2147
      %3636 = vst [vmem:[%s177 + $0x630] sm:$0xff] %v2632
      %3637 = vst.msk [vmem:[%s177 + $0x638] sm:$0xff] %vm3440, %v3117
      %3638 = vst [vmem:[%s177 + $0x640] sm:$0xff] %v1665
      %3639 = vst [vmem:[%s177 + $0x648] sm:$0xff] %v2150
      %3640 = vst [vmem:[%s177 + $0x650] sm:$0xff] %v2635
      %3641 = vst.msk [vmem:[%s177 + $0x658] sm:$0xff] %vm3440, %v3120
      %3642 = vst [vmem:[%s177 + $0x660] sm:$0xff] %v1668
      %3643 = vst [vmem:[%s177 + $0x668] sm:$0xff] %v2153
      %3644 = vst [vmem:[%s177 + $0x670] sm:$0xff] %v2638
      %3645 = vst.msk [vmem:[%s177 + $0x678] sm:$0xff] %vm3440, %v3123
      %3646 = vst [vmem:[%s177 + $0x680] sm:$0xff] %v1671
      %3647 = vst [vmem:[%s177 + $0x688] sm:$0xff] %v2156
      %3648 = vst [vmem:[%s177 + $0x690] sm:$0xff] %v2641
      %3649 = vst.msk [vmem:[%s177 + $0x698] sm:$0xff] %vm3440, %v3126
      %3650 = vst [vmem:[%s177 + $0x6a0] sm:$0xff] %v1674
      %3651 = vst [vmem:[%s177 + $0x6a8] sm:$0xff] %v2159
      %3652 = vst [vmem:[%s177 + $0x6b0] sm:$0xff] %v2644
      %3653 = vst.msk [vmem:[%s177 + $0x6b8] sm:$0xff] %vm3440, %v3129
      %3654 = vst [vmem:[%s177 + $0x6c0] sm:$0xff] %v1677
      %3655 = vst [vmem:[%s177 + $0x6c8] sm:$0xff] %v2162
      %3656 = vst [vmem:[%s177 + $0x6d0] sm:$0xff] %v2647
      %3657 = vst.msk [vmem:[%s177 + $0x6d8] sm:$0xff] %vm3440, %v3132
      %3658 = vst [vmem:[%s177 + $0x6e0] sm:$0xff] %v1680
      %3659 = vst [vmem:[%s177 + $0x6e8] sm:$0xff] %v2165
      %3660 = vst [vmem:[%s177 + $0x6f0] sm:$0xff] %v2650
      %3661 = vst.msk [vmem:[%s177 + $0x6f8] sm:$0xff] %vm3440, %v3135
      %3662 = vst [vmem:[%s177 + $0x700] sm:$0xff] %v1683
      %3663 = vst [vmem:[%s177 + $0x708] sm:$0xff] %v2168
      %3664 = vst [vmem:[%s177 + $0x710] sm:$0xff] %v2653
      %3665 = vst.msk [vmem:[%s177 + $0x718] sm:$0xff] %vm3440, %v3138
      %3666 = vst [vmem:[%s177 + $0x720] sm:$0xff] %v1686
      %3667 = vst [vmem:[%s177 + $0x728] sm:$0xff] %v2171
      %3668 = vst [vmem:[%s177 + $0x730] sm:$0xff] %v2656
      %3669 = vst.msk [vmem:[%s177 + $0x738] sm:$0xff] %vm3440, %v3141
      %3670 = vst [vmem:[%s177 + $0x740] sm:$0xff] %v1689
      %3671 = vst [vmem:[%s177 + $0x748] sm:$0xff] %v2174
      %3672 = vst [vmem:[%s177 + $0x750] sm:$0xff] %v2659
      %3673 = vst.msk [vmem:[%s177 + $0x758] sm:$0xff] %vm3440, %v3144
      %3674 = vst [vmem:[%s177 + $0x760] sm:$0xff] %v1692
      %3675 = vst [vmem:[%s177 + $0x768] sm:$0xff] %v2177
      %3676 = vst [vmem:[%s177 + $0x770] sm:$0xff] %v2662
      %3677 = vst.msk [vmem:[%s177 + $0x778] sm:$0xff] %vm3440, %v3147
      %3678 = vst [vmem:[%s177 + $0x780] sm:$0xff] %v1695
      %3679 = vst [vmem:[%s177 + $0x788] sm:$0xff] %v2180
      %3680 = vst [vmem:[%s177 + $0x790] sm:$0xff] %v2665
      %3681 = vst.msk [vmem:[%s177 + $0x798] sm:$0xff] %vm3440, %v3150
      %3682 = vst [vmem:[%s177 + $0x7a0] sm:$0xff] %v1698
      %3683 = vst [vmem:[%s177 + $0x7a8] sm:$0xff] %v2183
      %3684 = vst [vmem:[%s177 + $0x7b0] sm:$0xff] %v2668
      %3685 = vst.msk [vmem:[%s177 + $0x7b8] sm:$0xff] %vm3440, %v3153
      %3686 = vst [vmem:[%s177 + $0x7c0] sm:$0xff] %v1701
      %3687 = vst [vmem:[%s177 + $0x7c8] sm:$0xff] %v2186
      %3688 = vst [vmem:[%s177 + $0x7d0] sm:$0xff] %v2671
      %3689 = vst.msk [vmem:[%s177 + $0x7d8] sm:$0xff] %vm3440, %v3156
      %3690 = vst [vmem:[%s177 + $0x7e0] sm:$0xff] %v1704
      %3691 = vst [vmem:[%s177 + $0x7e8] sm:$0xff] %v2189
      %3692 = vst [vmem:[%s177 + $0x7f0] sm:$0xff] %v2674
      %3693 = vst.msk [vmem:[%s177 + $0x7f8] sm:$0xff] %vm3440, %v3159
      %3694 = vst [vmem:[%s177 + $0x800] sm:$0xff] %v1707
      %3695 = vst [vmem:[%s177 + $0x808] sm:$0xff] %v2192
      %3696 = vst [vmem:[%s177 + $0x810] sm:$0xff] %v2677
      %3697 = vst.msk [vmem:[%s177 + $0x818] sm:$0xff] %vm3440, %v3162
      %3698 = vst [vmem:[%s177 + $0x820] sm:$0xff] %v1710
      %3699 = vst [vmem:[%s177 + $0x828] sm:$0xff] %v2195
      %3700 = vst [vmem:[%s177 + $0x830] sm:$0xff] %v2680
      %3701 = vst.msk [vmem:[%s177 + $0x838] sm:$0xff] %vm3440, %v3165
      %3702 = vst [vmem:[%s177 + $0x840] sm:$0xff] %v1713
      %3703 = vst [vmem:[%s177 + $0x848] sm:$0xff] %v2198
      %3704 = vst [vmem:[%s177 + $0x850] sm:$0xff] %v2683
      %3705 = vst.msk [vmem:[%s177 + $0x858] sm:$0xff] %vm3440, %v3168
      %3706 = vst [vmem:[%s177 + $0x860] sm:$0xff] %v1716
      %3707 = vst [vmem:[%s177 + $0x868] sm:$0xff] %v2201
      %3708 = vst [vmem:[%s177 + $0x870] sm:$0xff] %v2686
      %3709 = vst.msk [vmem:[%s177 + $0x878] sm:$0xff] %vm3440, %v3171
      %3710 = vst [vmem:[%s177 + $0x880] sm:$0xff] %v1719
      %3711 = vst [vmem:[%s177 + $0x888] sm:$0xff] %v2204
      %3712 = vst [vmem:[%s177 + $0x890] sm:$0xff] %v2689
      %3713 = vst.msk [vmem:[%s177 + $0x898] sm:$0xff] %vm3440, %v3174
      %3714 = vst [vmem:[%s177 + $0x8a0] sm:$0xff] %v1722
      %3715 = vst [vmem:[%s177 + $0x8a8] sm:$0xff] %v2207
      %3716 = vst [vmem:[%s177 + $0x8b0] sm:$0xff] %v2692
      %3717 = vst.msk [vmem:[%s177 + $0x8b8] sm:$0xff] %vm3440, %v3177
      %3718 = vst [vmem:[%s177 + $0x8c0] sm:$0xff] %v1725
      %3719 = vst [vmem:[%s177 + $0x8c8] sm:$0xff] %v2210
      %3720 = vst [vmem:[%s177 + $0x8d0] sm:$0xff] %v2695
      %3721 = vst.msk [vmem:[%s177 + $0x8d8] sm:$0xff] %vm3440, %v3180
      %3722 = vst [vmem:[%s177 + $0x8e0] sm:$0xff] %v1728
      %3723 = vst [vmem:[%s177 + $0x8e8] sm:$0xff] %v2213
      %3724 = vst [vmem:[%s177 + $0x8f0] sm:$0xff] %v2698
      %3725 = vst.msk [vmem:[%s177 + $0x8f8] sm:$0xff] %vm3440, %v3183
      %3726 = vst [vmem:[%s177 + $0x900] sm:$0xff] %v1731
      %3727 = vst [vmem:[%s177 + $0x908] sm:$0xff] %v2216
      %3728 = vst [vmem:[%s177 + $0x910] sm:$0xff] %v2701
      %3729 = vst.msk [vmem:[%s177 + $0x918] sm:$0xff] %vm3440, %v3186
      %3730 = vst [vmem:[%s177 + $0x920] sm:$0xff] %v1734
      %3731 = vst [vmem:[%s177 + $0x928] sm:$0xff] %v2219
      %3732 = vst [vmem:[%s177 + $0x930] sm:$0xff] %v2704
      %3733 = vst.msk [vmem:[%s177 + $0x938] sm:$0xff] %vm3440, %v3189
      %3734 = vst [vmem:[%s177 + $0x940] sm:$0xff] %v1737
      %3735 = vst [vmem:[%s177 + $0x948] sm:$0xff] %v2222
      %3736 = vst [vmem:[%s177 + $0x950] sm:$0xff] %v2707
      %3737 = vst.msk [vmem:[%s177 + $0x958] sm:$0xff] %vm3440, %v3192
      %3738 = vst [vmem:[%s177 + $0x960] sm:$0xff] %v1740
      %3739 = vst [vmem:[%s177 + $0x968] sm:$0xff] %v2225
      %3740 = vst [vmem:[%s177 + $0x970] sm:$0xff] %v2710
      %3741 = vst.msk [vmem:[%s177 + $0x978] sm:$0xff] %vm3440, %v3195
      %3742 = vst [vmem:[%s177 + $0x980] sm:$0xff] %v1743
      %3743 = vst [vmem:[%s177 + $0x988] sm:$0xff] %v2228
      %3744 = vst [vmem:[%s177 + $0x990] sm:$0xff] %v2713
      %3745 = vst.msk [vmem:[%s177 + $0x998] sm:$0xff] %vm3440, %v3198
      %3746 = vst [vmem:[%s177 + $0x9a0] sm:$0xff] %v1746
      %3747 = vst [vmem:[%s177 + $0x9a8] sm:$0xff] %v2231
      %3748 = vst [vmem:[%s177 + $0x9b0] sm:$0xff] %v2716
      %3749 = vst.msk [vmem:[%s177 + $0x9b8] sm:$0xff] %vm3440, %v3201
      %3750 = vst [vmem:[%s177 + $0x9c0] sm:$0xff] %v1749
      %3751 = vst [vmem:[%s177 + $0x9c8] sm:$0xff] %v2234
      %3752 = vst [vmem:[%s177 + $0x9d0] sm:$0xff] %v2719
      %3753 = vst.msk [vmem:[%s177 + $0x9d8] sm:$0xff] %vm3440, %v3204
      %3754 = vst [vmem:[%s177 + $0x9e0] sm:$0xff] %v1752
      %3755 = vst [vmem:[%s177 + $0x9e8] sm:$0xff] %v2237
      %3756 = vst [vmem:[%s177 + $0x9f0] sm:$0xff] %v2722
      %3757 = vst.msk [vmem:[%s177 + $0x9f8] sm:$0xff] %vm3440, %v3207
      %3758 = vst [vmem:[%s177 + $0xa00] sm:$0xff] %v1755
      %3759 = vst [vmem:[%s177 + $0xa08] sm:$0xff] %v2240
      %3760 = vst [vmem:[%s177 + $0xa10] sm:$0xff] %v2725
      %3761 = vst.msk [vmem:[%s177 + $0xa18] sm:$0xff] %vm3440, %v3210
      %3762 = vst [vmem:[%s177 + $0xa20] sm:$0xff] %v1758
      %3763 = vst [vmem:[%s177 + $0xa28] sm:$0xff] %v2243
      %3764 = vst [vmem:[%s177 + $0xa30] sm:$0xff] %v2728
      %3765 = vst.msk [vmem:[%s177 + $0xa38] sm:$0xff] %vm3440, %v3213
      %3766 = vst [vmem:[%s177 + $0xa40] sm:$0xff] %v1761
      %3767 = vst [vmem:[%s177 + $0xa48] sm:$0xff] %v2246
      %3768 = vst [vmem:[%s177 + $0xa50] sm:$0xff] %v2731
      %3769 = vst.msk [vmem:[%s177 + $0xa58] sm:$0xff] %vm3440, %v3216
      %3770 = vst [vmem:[%s177 + $0xa60] sm:$0xff] %v1764
      %3771 = vst [vmem:[%s177 + $0xa68] sm:$0xff] %v2249
      %3772 = vst [vmem:[%s177 + $0xa70] sm:$0xff] %v2734
      %3773 = vst.msk [vmem:[%s177 + $0xa78] sm:$0xff] %vm3440, %v3219
      %3774 = vst [vmem:[%s177 + $0xa80] sm:$0xff] %v1767
      %3775 = vst [vmem:[%s177 + $0xa88] sm:$0xff] %v2252
      %3776 = vst [vmem:[%s177 + $0xa90] sm:$0xff] %v2737
      %3777 = vst.msk [vmem:[%s177 + $0xa98] sm:$0xff] %vm3440, %v3222
      %3778 = vst [vmem:[%s177 + $0xaa0] sm:$0xff] %v1770
      %3779 = vst [vmem:[%s177 + $0xaa8] sm:$0xff] %v2255
      %3780 = vst [vmem:[%s177 + $0xab0] sm:$0xff] %v2740
      %3781 = vst.msk [vmem:[%s177 + $0xab8] sm:$0xff] %vm3440, %v3225
      %3782 = vst [vmem:[%s177 + $0xac0] sm:$0xff] %v1773
      %3783 = vst [vmem:[%s177 + $0xac8] sm:$0xff] %v2258
      %3784 = vst [vmem:[%s177 + $0xad0] sm:$0xff] %v2743
      %3785 = vst.msk [vmem:[%s177 + $0xad8] sm:$0xff] %vm3440, %v3228
      %3786 = vst [vmem:[%s177 + $0xae0] sm:$0xff] %v1776
      %3787 = vst [vmem:[%s177 + $0xae8] sm:$0xff] %v2261
      %3788 = vst [vmem:[%s177 + $0xaf0] sm:$0xff] %v2746
      %3789 = vst.msk [vmem:[%s177 + $0xaf8] sm:$0xff] %vm3440, %v3231
      %3790 = vst [vmem:[%s177 + $0xb00] sm:$0xff] %v1779
      %3791 = vst [vmem:[%s177 + $0xb08] sm:$0xff] %v2264
      %3792 = vst [vmem:[%s177 + $0xb10] sm:$0xff] %v2749
      %3793 = vst.msk [vmem:[%s177 + $0xb18] sm:$0xff] %vm3440, %v3234
      %3794 = vst [vmem:[%s177 + $0xb20] sm:$0xff] %v1782
      %3795 = vst [vmem:[%s177 + $0xb28] sm:$0xff] %v2267
      %3796 = vst [vmem:[%s177 + $0xb30] sm:$0xff] %v2752
      %3797 = vst.msk [vmem:[%s177 + $0xb38] sm:$0xff] %vm3440, %v3237
      %3798 = vst [vmem:[%s177 + $0xb40] sm:$0xff] %v1785
      %3799 = vst [vmem:[%s177 + $0xb48] sm:$0xff] %v2270
      %3800 = vst [vmem:[%s177 + $0xb50] sm:$0xff] %v2755
      %3801 = vst.msk [vmem:[%s177 + $0xb58] sm:$0xff] %vm3440, %v3240
      %3802 = vst [vmem:[%s177 + $0xb60] sm:$0xff] %v1788
      %3803 = vst [vmem:[%s177 + $0xb68] sm:$0xff] %v2273
      %3804 = vst [vmem:[%s177 + $0xb70] sm:$0xff] %v2758
      %3805 = vst.msk [vmem:[%s177 + $0xb78] sm:$0xff] %vm3440, %v3243
      %3806 = vst [vmem:[%s177 + $0xb80] sm:$0xff] %v1791
      %3807 = vst [vmem:[%s177 + $0xb88] sm:$0xff] %v2276
      %3808 = vst [vmem:[%s177 + $0xb90] sm:$0xff] %v2761
      %3809 = vst.msk [vmem:[%s177 + $0xb98] sm:$0xff] %vm3440, %v3246
      %3810 = vst [vmem:[%s177 + $0xba0] sm:$0xff] %v1794
      %3811 = vst [vmem:[%s177 + $0xba8] sm:$0xff] %v2279
      %3812 = vst [vmem:[%s177 + $0xbb0] sm:$0xff] %v2764
      %3813 = vst.msk [vmem:[%s177 + $0xbb8] sm:$0xff] %vm3440, %v3249
      %3814 = vst [vmem:[%s177 + $0xbc0] sm:$0xff] %v1797
      %3815 = vst [vmem:[%s177 + $0xbc8] sm:$0xff] %v2282
      %3816 = vst [vmem:[%s177 + $0xbd0] sm:$0xff] %v2767
      %3817 = vst.msk [vmem:[%s177 + $0xbd8] sm:$0xff] %vm3440, %v3252
      %3818 = vst [vmem:[%s177 + $0xbe0] sm:$0xff] %v1800
      %3819 = vst [vmem:[%s177 + $0xbe8] sm:$0xff] %v2285
      %3820 = vst [vmem:[%s177 + $0xbf0] sm:$0xff] %v2770
      %3821 = vst.msk [vmem:[%s177 + $0xbf8] sm:$0xff] %vm3440, %v3255
      %3822 = vst [vmem:[%s177 + $0xc00] sm:$0xff] %v1803
      %3823 = vst [vmem:[%s177 + $0xc08] sm:$0xff] %v2288
      %3824 = vst [vmem:[%s177 + $0xc10] sm:$0xff] %v2773
      %3825 = vst.msk [vmem:[%s177 + $0xc18] sm:$0xff] %vm3440, %v3258
      %3826 = vst [vmem:[%s177 + $0xc20] sm:$0xff] %v1806
      %3827 = vst [vmem:[%s177 + $0xc28] sm:$0xff] %v2291
      %3828 = vst [vmem:[%s177 + $0xc30] sm:$0xff] %v2776
      %3829 = vst.msk [vmem:[%s177 + $0xc38] sm:$0xff] %vm3440, %v3261
      %3830 = vst [vmem:[%s177 + $0xc40] sm:$0xff] %v1809
      %3831 = vst [vmem:[%s177 + $0xc48] sm:$0xff] %v2294
      %3832 = vst [vmem:[%s177 + $0xc50] sm:$0xff] %v2779
      %3833 = vst.msk [vmem:[%s177 + $0xc58] sm:$0xff] %vm3440, %v3264
      %3834 = vst [vmem:[%s177 + $0xc60] sm:$0xff] %v1812
      %3835 = vst [vmem:[%s177 + $0xc68] sm:$0xff] %v2297
      %3836 = vst [vmem:[%s177 + $0xc70] sm:$0xff] %v2782
      %3837 = vst.msk [vmem:[%s177 + $0xc78] sm:$0xff] %vm3440, %v3267
      %3838 = vst [vmem:[%s177 + $0xc80] sm:$0xff] %v1815
      %3839 = vst [vmem:[%s177 + $0xc88] sm:$0xff] %v2300
      %3840 = vst [vmem:[%s177 + $0xc90] sm:$0xff] %v2785
      %3841 = vst.msk [vmem:[%s177 + $0xc98] sm:$0xff] %vm3440, %v3270
      %3842 = vst [vmem:[%s177 + $0xca0] sm:$0xff] %v1818
      %3843 = vst [vmem:[%s177 + $0xca8] sm:$0xff] %v2303
      %3844 = vst [vmem:[%s177 + $0xcb0] sm:$0xff] %v2788
      %3845 = vst.msk [vmem:[%s177 + $0xcb8] sm:$0xff] %vm3440, %v3273
      %3846 = vst [vmem:[%s177 + $0xcc0] sm:$0xff] %v1821
      %3847 = vst [vmem:[%s177 + $0xcc8] sm:$0xff] %v2306
      %3848 = vst [vmem:[%s177 + $0xcd0] sm:$0xff] %v2791
      %3849 = vst.msk [vmem:[%s177 + $0xcd8] sm:$0xff] %vm3440, %v3276
      %3850 = vst [vmem:[%s177 + $0xce0] sm:$0xff] %v1824
      %3851 = vst [vmem:[%s177 + $0xce8] sm:$0xff] %v2309
      %3852 = vst [vmem:[%s177 + $0xcf0] sm:$0xff] %v2794
      %3853 = vst.msk [vmem:[%s177 + $0xcf8] sm:$0xff] %vm3440, %v3279
      %3854 = vst [vmem:[%s177 + $0xd00] sm:$0xff] %v1827
      %3855 = vst [vmem:[%s177 + $0xd08] sm:$0xff] %v2312
      %3856 = vst [vmem:[%s177 + $0xd10] sm:$0xff] %v2797
      %3857 = vst.msk [vmem:[%s177 + $0xd18] sm:$0xff] %vm3440, %v3282
      %3858 = vst [vmem:[%s177 + $0xd20] sm:$0xff] %v1830
      %3859 = vst [vmem:[%s177 + $0xd28] sm:$0xff] %v2315
      %3860 = vst [vmem:[%s177 + $0xd30] sm:$0xff] %v2800
      %3861 = vst.msk [vmem:[%s177 + $0xd38] sm:$0xff] %vm3440, %v3285
      %3862 = vst [vmem:[%s177 + $0xd40] sm:$0xff] %v1833
      %3863 = vst [vmem:[%s177 + $0xd48] sm:$0xff] %v2318
      %3864 = vst [vmem:[%s177 + $0xd50] sm:$0xff] %v2803
      %3865 = vst.msk [vmem:[%s177 + $0xd58] sm:$0xff] %vm3440, %v3288
      %3866 = vst [vmem:[%s177 + $0xd60] sm:$0xff] %v1836
      %3867 = vst [vmem:[%s177 + $0xd68] sm:$0xff] %v2321
      %3868 = vst [vmem:[%s177 + $0xd70] sm:$0xff] %v2806
      %3869 = vst.msk [vmem:[%s177 + $0xd78] sm:$0xff] %vm3440, %v3291
      %3870 = vst [vmem:[%s177 + $0xd80] sm:$0xff] %v1839
      %3871 = vst [vmem:[%s177 + $0xd88] sm:$0xff] %v2324
      %3872 = vst [vmem:[%s177 + $0xd90] sm:$0xff] %v2809
      %3873 = vst.msk [vmem:[%s177 + $0xd98] sm:$0xff] %vm3440, %v3294
      %3874 = vst [vmem:[%s177 + $0xda0] sm:$0xff] %v1842
      %3875 = vst [vmem:[%s177 + $0xda8] sm:$0xff] %v2327
      %3876 = vst [vmem:[%s177 + $0xdb0] sm:$0xff] %v2812
      %3877 = vst.msk [vmem:[%s177 + $0xdb8] sm:$0xff] %vm3440, %v3297
      %3878 = vst [vmem:[%s177 + $0xdc0] sm:$0xff] %v1845
      %3879 = vst [vmem:[%s177 + $0xdc8] sm:$0xff] %v2330
      %3880 = vst [vmem:[%s177 + $0xdd0] sm:$0xff] %v2815
      %3881 = vst.msk [vmem:[%s177 + $0xdd8] sm:$0xff] %vm3440, %v3300
      %3882 = vst [vmem:[%s177 + $0xde0] sm:$0xff] %v1848
      %3883 = vst [vmem:[%s177 + $0xde8] sm:$0xff] %v2333
      %3884 = vst [vmem:[%s177 + $0xdf0] sm:$0xff] %v2818
      %3885 = vst.msk [vmem:[%s177 + $0xdf8] sm:$0xff] %vm3440, %v3303
      %3886 = vst [vmem:[%s177 + $0xe00] sm:$0xff] %v1851
      %3887 = vst [vmem:[%s177 + $0xe08] sm:$0xff] %v2336
      %3888 = vst [vmem:[%s177 + $0xe10] sm:$0xff] %v2821
      %3889 = vst.msk [vmem:[%s177 + $0xe18] sm:$0xff] %vm3440, %v3306
      %3890 = vst [vmem:[%s177 + $0xe20] sm:$0xff] %v1854
      %3891 = vst [vmem:[%s177 + $0xe28] sm:$0xff] %v2339
      %3892 = vst [vmem:[%s177 + $0xe30] sm:$0xff] %v2824
      %3893 = vst.msk [vmem:[%s177 + $0xe38] sm:$0xff] %vm3440, %v3309
      %3894 = vst [vmem:[%s177 + $0xe40] sm:$0xff] %v1857
      %3895 = vst [vmem:[%s177 + $0xe48] sm:$0xff] %v2342
      %3896 = vst [vmem:[%s177 + $0xe50] sm:$0xff] %v2827
      %3897 = vst.msk [vmem:[%s177 + $0xe58] sm:$0xff] %vm3440, %v3312
      %3898 = vst [vmem:[%s177 + $0xe60] sm:$0xff] %v1860
      %3899 = vst [vmem:[%s177 + $0xe68] sm:$0xff] %v2345
      %3900 = vst [vmem:[%s177 + $0xe70] sm:$0xff] %v2830
      %3901 = vst.msk [vmem:[%s177 + $0xe78] sm:$0xff] %vm3440, %v3315
      %3902 = vst [vmem:[%s177 + $0xe80] sm:$0xff] %v1863
      %3903 = vst [vmem:[%s177 + $0xe88] sm:$0xff] %v2348
      %3904 = vst [vmem:[%s177 + $0xe90] sm:$0xff] %v2833
      %3905 = vst.msk [vmem:[%s177 + $0xe98] sm:$0xff] %vm3440, %v3318
      %3906 = vst [vmem:[%s177 + $0xea0] sm:$0xff] %v1866
      %3907 = vst [vmem:[%s177 + $0xea8] sm:$0xff] %v2351
      %3908 = vst [vmem:[%s177 + $0xeb0] sm:$0xff] %v2836
      %3909 = vst.msk [vmem:[%s177 + $0xeb8] sm:$0xff] %vm3440, %v3321
      %3910 = vst [vmem:[%s177 + $0xec0] sm:$0xff] %v1869
      %3911 = vst [vmem:[%s177 + $0xec8] sm:$0xff] %v2354
      %3912 = vst [vmem:[%s177 + $0xed0] sm:$0xff] %v2839
      %3913 = vst.msk [vmem:[%s177 + $0xed8] sm:$0xff] %vm3440, %v3324
      %3914 = vst [vmem:[%s177 + $0xee0] sm:$0xff] %v1872
      %3915 = vst [vmem:[%s177 + $0xee8] sm:$0xff] %v2357
      %3916 = vst [vmem:[%s177 + $0xef0] sm:$0xff] %v2842
      %3917 = vst.msk [vmem:[%s177 + $0xef8] sm:$0xff] %vm3440, %v3327
      %3918 = vst [vmem:[%s177 + $0xf00] sm:$0xff] %v1875
      %3919 = vst [vmem:[%s177 + $0xf08] sm:$0xff] %v2360
      %3920 = vst [vmem:[%s177 + $0xf10] sm:$0xff] %v2845
      %3921 = vst.msk [vmem:[%s177 + $0xf18] sm:$0xff] %vm3440, %v3330
      %3922 = vst [vmem:[%s177 + $0xf20] sm:$0xff] %v1878
      %3923 = vst [vmem:[%s177 + $0xf28] sm:$0xff] %v2363
      %3924 = vst [vmem:[%s177 + $0xf30] sm:$0xff] %v2848
      %3925 = vst.msk [vmem:[%s177 + $0xf38] sm:$0xff] %vm3440, %v3333
      %3926 = vst [vmem:[%s177 + $0xf40] sm:$0xff] %v1881
      %3927 = vst [vmem:[%s177 + $0xf48] sm:$0xff] %v2366
      %3928 = vst [vmem:[%s177 + $0xf50] sm:$0xff] %v2851
      %3929 = vst.msk [vmem:[%s177 + $0xf58] sm:$0xff] %vm3440, %v3336
      %3930 = vst [vmem:[%s177 + $0xf60] sm:$0xff] %v1884
      %3931 = vst [vmem:[%s177 + $0xf68] sm:$0xff] %v2369
      %3932 = vst [vmem:[%s177 + $0xf70] sm:$0xff] %v2854
      %3933 = vst.msk [vmem:[%s177 + $0xf78] sm:$0xff] %vm3440, %v3339
      %3934 = vst [vmem:[%s177 + $0xf80] sm:$0xff] %v1887
      %3935 = vst [vmem:[%s177 + $0xf88] sm:$0xff] %v2372
      %3936 = vst [vmem:[%s177 + $0xf90] sm:$0xff] %v2857
      %3937 = vst.msk [vmem:[%s177 + $0xf98] sm:$0xff] %vm3440, %v3342
      %3938 = vst [vmem:[%s177 + $0xfa0] sm:$0xff] %v1890
      %3939 = vst [vmem:[%s177 + $0xfa8] sm:$0xff] %v2375
      %3940 = vst [vmem:[%s177 + $0xfb0] sm:$0xff] %v2860
      %3941 = vst.msk [vmem:[%s177 + $0xfb8] sm:$0xff] %vm3440, %v3345
      %3942 = vst [vmem:[%s177 + $0xfc0] sm:$0xff] %v1893
      %3943 = vst [vmem:[%s177 + $0xfc8] sm:$0xff] %v2378
      %3944 = vst [vmem:[%s177 + $0xfd0] sm:$0xff] %v2863
      %3945 = vst.msk [vmem:[%s177 + $0xfd8] sm:$0xff] %vm3440, %v3348
      %3946 = vst [vmem:[%s177 + $0xfe0] sm:$0xff] %v1896
      %3947 = vst [vmem:[%s177 + $0xfe8] sm:$0xff] %v2381
      %3948 = vst [vmem:[%s177 + $0xff0] sm:$0xff] %v2866
      %3949 = vst.msk [vmem:[%s177 + $0xff8] sm:$0xff] %vm3440, %v3351
      %3950 = vst [vmem:[%s177 + $0x1000] sm:$0xff] %v1899
      %3951 = vst [vmem:[%s177 + $0x1008] sm:$0xff] %v2384
      %3952 = vst [vmem:[%s177 + $0x1010] sm:$0xff] %v2869
      %3953 = vst.msk [vmem:[%s177 + $0x1018] sm:$0xff] %vm3440, %v3354
      %3954 = vst [vmem:[%s177 + $0x1020] sm:$0xff] %v1902
      %3955 = vst [vmem:[%s177 + $0x1028] sm:$0xff] %v2387
      %3956 = vst [vmem:[%s177 + $0x1030] sm:$0xff] %v2872
      %3957 = vst.msk [vmem:[%s177 + $0x1038] sm:$0xff] %vm3440, %v3357
      %3958 = vst [vmem:[%s177 + $0x1040] sm:$0xff] %v1905
      %3959 = vst [vmem:[%s177 + $0x1048] sm:$0xff] %v2390
      %3960 = vst [vmem:[%s177 + $0x1050] sm:$0xff] %v2875
      %3961 = vst.msk [vmem:[%s177 + $0x1058] sm:$0xff] %vm3440, %v3360
      %3962 = vst [vmem:[%s177 + $0x1060] sm:$0xff] %v1908
      %3963 = vst [vmem:[%s177 + $0x1068] sm:$0xff] %v2393
      %3964 = vst [vmem:[%s177 + $0x1070] sm:$0xff] %v2878
      %3965 = vst.msk [vmem:[%s177 + $0x1078] sm:$0xff] %vm3440, %v3363
      %3966 = vst [vmem:[%s177 + $0x1080] sm:$0xff] %v1911
      %3967 = vst [vmem:[%s177 + $0x1088] sm:$0xff] %v2396
      %3968 = vst [vmem:[%s177 + $0x1090] sm:$0xff] %v2881
      %3969 = vst.msk [vmem:[%s177 + $0x1098] sm:$0xff] %vm3440, %v3366
      %3970 = vst [vmem:[%s177 + $0x10a0] sm:$0xff] %v1914
      %3971 = vst [vmem:[%s177 + $0x10a8] sm:$0xff] %v2399
      %3972 = vst [vmem:[%s177 + $0x10b0] sm:$0xff] %v2884
      %3973 = vst.msk [vmem:[%s177 + $0x10b8] sm:$0xff] %vm3440, %v3369
      %3974 = vst [vmem:[%s177 + $0x10c0] sm:$0xff] %v1917
      %3975 = vst [vmem:[%s177 + $0x10c8] sm:$0xff] %v2402
      %3976 = vst [vmem:[%s177 + $0x10d0] sm:$0xff] %v2887
      %3977 = vst.msk [vmem:[%s177 + $0x10d8] sm:$0xff] %vm3440, %v3372
      %3978 = vst [vmem:[%s177 + $0x10e0] sm:$0xff] %v1920
      %3979 = vst [vmem:[%s177 + $0x10e8] sm:$0xff] %v2405
      %3980 = vst [vmem:[%s177 + $0x10f0] sm:$0xff] %v2890
      %3981 = vst.msk [vmem:[%s177 + $0x10f8] sm:$0xff] %vm3440, %v3375
      %3982 = vst [vmem:[%s177 + $0x1100] sm:$0xff] %v1923
      %3983 = vst [vmem:[%s177 + $0x1108] sm:$0xff] %v2408
      %3984 = vst [vmem:[%s177 + $0x1110] sm:$0xff] %v2893
      %3985 = vst.msk [vmem:[%s177 + $0x1118] sm:$0xff] %vm3440, %v3378
      %3986 = vst [vmem:[%s177 + $0x1120] sm:$0xff] %v1926
      %3987 = vst [vmem:[%s177 + $0x1128] sm:$0xff] %v2411
      %3988 = vst [vmem:[%s177 + $0x1130] sm:$0xff] %v2896
      %3989 = vst.msk [vmem:[%s177 + $0x1138] sm:$0xff] %vm3440, %v3381
      %3990 = vst [vmem:[%s177 + $0x1140] sm:$0xff] %v1929
      %3991 = vst [vmem:[%s177 + $0x1148] sm:$0xff] %v2414
      %3992 = vst [vmem:[%s177 + $0x1150] sm:$0xff] %v2899
      %3993 = vst.msk [vmem:[%s177 + $0x1158] sm:$0xff] %vm3440, %v3384
      %3994 = vst [vmem:[%s177 + $0x1160] sm:$0xff] %v1932
      %3995 = vst [vmem:[%s177 + $0x1168] sm:$0xff] %v2417
      %3996 = vst [vmem:[%s177 + $0x1170] sm:$0xff] %v2902
      %3997 = vst.msk [vmem:[%s177 + $0x1178] sm:$0xff] %vm3440, %v3387
      %3998 = vst [vmem:[%s177 + $0x1180] sm:$0xff] %v1935
      %3999 = vst [vmem:[%s177 + $0x1188] sm:$0xff] %v2420
      %4000 = vst [vmem:[%s177 + $0x1190] sm:$0xff] %v2905
      %4001 = vst.msk [vmem:[%s177 + $0x1198] sm:$0xff] %vm3440, %v3390
      %4002 = vst [vmem:[%s177 + $0x11a0] sm:$0xff] %v1938
      %4003 = vst [vmem:[%s177 + $0x11a8] sm:$0xff] %v2423
      %4004 = vst [vmem:[%s177 + $0x11b0] sm:$0xff] %v2908
      %4005 = vst.msk [vmem:[%s177 + $0x11b8] sm:$0xff] %vm3440, %v3393
      %4006 = vst [vmem:[%s177 + $0x11c0] sm:$0xff] %v1941
      %4007 = vst [vmem:[%s177 + $0x11c8] sm:$0xff] %v2426
      %4008 = vst [vmem:[%s177 + $0x11d0] sm:$0xff] %v2911
      %4009 = vst.msk [vmem:[%s177 + $0x11d8] sm:$0xff] %vm3440, %v3396
      %4010 = vst [vmem:[%s177 + $0x11e0] sm:$0xff] %v1944
      %4011 = vst [vmem:[%s177 + $0x11e8] sm:$0xff] %v2429
      %4012 = vst [vmem:[%s177 + $0x11f0] sm:$0xff] %v2914
      %4013 = vst.msk [vmem:[%s177 + $0x11f8] sm:$0xff] %vm3440, %v3399
      %4014 = vst [vmem:[%s177 + $0x1200] sm:$0xff] %v1947
      %4015 = vst [vmem:[%s177 + $0x1208] sm:$0xff] %v2432
      %4016 = vst [vmem:[%s177 + $0x1210] sm:$0xff] %v2917
      %4017 = vst.msk [vmem:[%s177 + $0x1218] sm:$0xff] %vm3440, %v3402
      %4018 = vst [vmem:[%s177 + $0x1220] sm:$0xff] %v1950
      %4019 = vst [vmem:[%s177 + $0x1228] sm:$0xff] %v2435
      %4020 = vst [vmem:[%s177 + $0x1230] sm:$0xff] %v2920
      %4021 = vst.msk [vmem:[%s177 + $0x1238] sm:$0xff] %vm3440, %v3405
      %4022 = vst [vmem:[%s177 + $0x1240] sm:$0xff] %v1953
      %4023 = vst [vmem:[%s177 + $0x1248] sm:$0xff] %v2438
      %4024 = vst [vmem:[%s177 + $0x1250] sm:$0xff] %v2923
      %4025 = vst.msk [vmem:[%s177 + $0x1258] sm:$0xff] %vm3440, %v3408
      %4026 = vst [vmem:[%s177 + $0x1260] sm:$0xff] %v1956
      %4027 = vst [vmem:[%s177 + $0x1268] sm:$0xff] %v2441
      %4028 = vst [vmem:[%s177 + $0x1270] sm:$0xff] %v2926
      %4029 = vst.msk [vmem:[%s177 + $0x1278] sm:$0xff] %vm3440, %v3411
      %4030 = vst [vmem:[%s177 + $0x1280] sm:$0xff] %v1959
      %4031 = vst [vmem:[%s177 + $0x1288] sm:$0xff] %v2444
      %4032 = vst [vmem:[%s177 + $0x1290] sm:$0xff] %v2929
      %4033 = vst.msk [vmem:[%s177 + $0x1298] sm:$0xff] %vm3440, %v3414
      %4034 = vst [vmem:[%s177 + $0x12a0] sm:$0xff] %v1962
      %4035 = vst [vmem:[%s177 + $0x12a8] sm:$0xff] %v2447
      %4036 = vst [vmem:[%s177 + $0x12b0] sm:$0xff] %v2932
      %4037 = vst.msk [vmem:[%s177 + $0x12b8] sm:$0xff] %vm3440, %v3417
      %4038 = vst [vmem:[%s177 + $0x12c0] sm:$0xff] %v1965
      %4039 = vst [vmem:[%s177 + $0x12c8] sm:$0xff] %v2450
      %4040 = vst [vmem:[%s177 + $0x12d0] sm:$0xff] %v2935
      %4041 = vst.msk [vmem:[%s177 + $0x12d8] sm:$0xff] %vm3440, %v3420
      %4042 = vst [vmem:[%s177 + $0x12e0] sm:$0xff] %v1968
      %4043 = vst [vmem:[%s177 + $0x12e8] sm:$0xff] %v2453
      %4044 = vst [vmem:[%s177 + $0x12f0] sm:$0xff] %v2938
      %4045 = vst.msk [vmem:[%s177 + $0x12f8] sm:$0xff] %vm3440, %v3423
      %4046 = vst [vmem:[%s177 + $0x1300] sm:$0xff] %v1971
      %4047 = vst [vmem:[%s177 + $0x1308] sm:$0xff] %v2456
      %4048 = vst [vmem:[%s177 + $0x1310] sm:$0xff] %v2941
      %4049 = vst.msk [vmem:[%s177 + $0x1318] sm:$0xff] %vm3440, %v3426
      %4050 = vst [vmem:[%s177 + $0x1320] sm:$0xff] %v1974
      %4051 = vst [vmem:[%s177 + $0x1328] sm:$0xff] %v2459
      %4052 = vst [vmem:[%s177 + $0x1330] sm:$0xff] %v2944
      %4053 = vst.msk [vmem:[%s177 + $0x1338] sm:$0xff] %vm3440, %v3429
      %4054 = vst [vmem:[%s177 + $0x1340] sm:$0xff] %v1977
      %4055 = vst [vmem:[%s177 + $0x1348] sm:$0xff] %v2462
      %4056 = vst [vmem:[%s177 + $0x1350] sm:$0xff] %v2947
      %4057 = vst.msk [vmem:[%s177 + $0x1358] sm:$0xff] %vm3440, %v3432
      %4058 = vst [vmem:[%s177 + $0x1360] sm:$0xff] %v1980
      %4059 = vst [vmem:[%s177 + $0x1368] sm:$0xff] %v2465
      %4060 = vst [vmem:[%s177 + $0x1370] sm:$0xff] %v2950
      %4061 = vst.msk [vmem:[%s177 + $0x1378] sm:$0xff] %vm3440, %v3435
      %s4062 = smul.u32 156, %s14
      %p4063 = scmp.lt.s32.totalorder %s4062, 311
      %s4064 = scalar_select %p4063, %s4062, 311
      %s4065 = smul.addr %s4064, 4
      %s4066 = smul.addr %s4065, 8
      %s4067 = scalar_lea.vmem %s3, %s4066
      // Predicated region
      $region33: #{wiki_autoencoder2_forward.17} parent=31 // pred_check
        %p4068 = pneg %p100
      $region34: #{wiki_autoencoder2_forward.17} parent=31 // pred_check_branch
        %4070 = sbr.rel (%p4068) target = $region36
      $region35: #{wiki_autoencoder2_forward.17} parent=31 // pred_region
        %s4071 = smul.u32 156, %s14
      $region36: #{wiki_autoencoder2_forward.17} parent=31 // pred_fallthru
        _
    $region32: #{wiki_autoencoder2_forward.17} parent=5 // pred_fallthru
      _
    %p4072 = scmp.le.s32.totalorder 2, %s9
    // Predicated region
    $region37: #{wiki_autoencoder2_forward.17} parent=5 // pred_check
      %p4073 = pneg %p4072
    $region38: #{wiki_autoencoder2_forward.17} parent=5 // pred_check_branch
      %4075 = sbr.rel (%p4073) target = $region40
    $region39: #{wiki_autoencoder2_forward.17} parent=5 // pred_region
      %s4076 = ssub.s32 %s9, 2
      // Predicated region
      $region41: #{wiki_autoencoder2_forward.17} parent=39 // pred_check
        %p4077 = pneg %p106
      $region42: #{wiki_autoencoder2_forward.17} parent=39 // pred_check_branch
        %4079 = sbr.rel (%p4077) target = $region44
      $region43: #{wiki_autoencoder2_forward.17} parent=39 // pred_region
        %s4080 = smul.u32 156, %s15
        %p4081 = scmp.lt.s32.totalorder %s4080, 311
        %s4082 = scalar_select %p4081, %s4080, 311
        %s4083 = smul.addr %s4082, 4
        %s4084 = smul.addr %s4083, 8
        %s4085 = scalar_lea.vmem %s3, %s4084
      $region44: #{wiki_autoencoder2_forward.17} parent=39 // pred_fallthru
        _
    $region40: #{wiki_autoencoder2_forward.17} parent=5 // pred_fallthru
      _
  $region6: #{wiki_autoencoder2_forward.17} parent=0 // loop_footer
    %s13 = sadd.s32 1, %s9
  $region7: #{wiki_autoencoder2_forward.17} parent=0 // loop_footer_branch
    %8 = sbr.rel target = $region3
  $region8: #{wiki_autoencoder2_forward.17} parent=0 // loop_exit
    _

</llo_original>
